<compile_context>
chip_gen: v7x
topology: tpu7x:2x2x1
jax: 0.10.0
libtpu: 0.0.40
codegen_flags: <defaults>
</compile_context>

<pallas_src>
import math
import functools

import jax
import jax.numpy as jnp
from jax import lax
from jax.experimental import pallas as pl
from jax.experimental.pallas import tpu as pltpu


_COMPILER_PARAMS = pltpu.CompilerParams(
    dimension_semantics=("parallel",),
    # <= ~48 MiB keeps headroom on v7x (64 MiB physical); plenty on v5e/v6e.
    vmem_limit_bytes=48 * 1024 * 1024,
)


def _rep_spec(shape):
    """BlockSpec covering the whole array, replicated across the batch grid."""
    zeros = (0,) * len(shape)
    return pl.BlockSpec(shape, lambda b, _z=zeros: _z)


def _layernorm(y, g, beta):
    mu = jnp.mean(y, axis=-1, keepdims=True)
    var = jnp.mean((y - mu) ** 2, axis=-1, keepdims=True)
    return (y - mu) * lax.rsqrt(var + 1e-5) * g + beta


# ----------------------------- attention math ------------------------------ #

def _mha_core(q, k, v, *, nhead, causal):
    """q:(Sq,D) k/v:(Sk,D) f32 -> per-head context (H, Sq, Dh) f32.

    Scores/context are single head-batched dot_generals (no per-head unrolled
    matmul chains).  Q weights are pre-scaled by 1/sqrt(Dh) on the host.
    """
    sq, d = q.shape
    sk = k.shape[0]
    dh = d // nhead

    def heads(t):
        # (S, D) -> (H, S, Dh): static lane slices stacked on a new leading axis.
        return jnp.concatenate(
            [t[None, :, h * dh:(h + 1) * dh] for h in range(nhead)], axis=0)

    qh = heads(q).astype(jnp.bfloat16)
    kh = heads(k).astype(jnp.bfloat16)
    vh = heads(v).astype(jnp.bfloat16)

    # (H, Sq, Sk) scores, f32 accumulation.
    s = lax.dot_general(qh, kh, (((2,), (2,)), ((0,), (0,))),
                        preferred_element_type=jnp.float32)
    if causal:
        row = lax.broadcasted_iota(jnp.int32, (sq, sk), 0)
        col = lax.broadcasted_iota(jnp.int32, (sq, sk), 1)
        s = jnp.where((row >= col)[None], s, -1e30)   # finite mask, no NaN paths

    m = jnp.max(s, axis=-1, keepdims=True)
    p = jnp.exp(s - m)
    p = p / jnp.sum(p, axis=-1, keepdims=True)        # exact div (PyTorch parity)

    # (H, Sq, Dh) context.
    return lax.dot_general(p.astype(jnp.bfloat16), vh, (((2,), (1,)), ((0,), (0,))),
                           preferred_element_type=jnp.float32)


def _out_proj(ctx, wo_ref, bo_ref):
    # ctx: (H, Sq, Dh) f32 ; wo: (H, Dh, D) bf16.  One head-batched dot + sum
    # over heads == the concatenated (Sq,D)@(D,D) projection.
    o = lax.dot_general(ctx.astype(jnp.bfloat16), wo_ref[...],
                        (((2,), (1,)), ((0,), (0,))),
                        preferred_element_type=jnp.float32)
    return jnp.sum(o, axis=0) + bo_ref[...]


def _self_attn(x, wqkv_ref, bqkv_ref, wo_ref, bo_ref, *, nhead):
    d = x.shape[-1]
    # Fused QKV: one MXU-shaped (S,D)@(D,3D) matmul + a single (1,3D) bias add.
    qkv = jnp.dot(x.astype(jnp.bfloat16), wqkv_ref[...],
                  preferred_element_type=jnp.float32) + bqkv_ref[...]
    ctx = _mha_core(qkv[:, :d], qkv[:, d:2 * d], qkv[:, 2 * d:],
                    nhead=nhead, causal=True)
    return _out_proj(ctx, wo_ref, bo_ref)


def _cross_attn(x, mem, wq_ref, bq_ref, wkv_ref, bkv_ref, wo_ref, bo_ref, *, nhead):
    d = x.shape[-1]
    q = jnp.dot(x.astype(jnp.bfloat16), wq_ref[...],
                preferred_element_type=jnp.float32) + bq_ref[...]
    kv = jnp.dot(mem.astype(jnp.bfloat16), wkv_ref[...],
                 preferred_element_type=jnp.float32) + bkv_ref[...]
    ctx = _mha_core(q, kv[:, :d], kv[:, d:], nhead=nhead, causal=False)
    return _out_proj(ctx, wo_ref, bo_ref)


# ----------------------------- Pallas kernels ------------------------------ #

def _embed_kernel(x_ref, w_ref, b_ref, pe_ref, o_ref, *, use_mxu):
    # Linear(input_dim->d_model) (*sqrt(d_model) folded into W/b on host) + PE.
    x = x_ref[0]                                             # (S, Din) f32
    if use_mxu:
        h = jnp.dot(x.astype(jnp.bfloat16), w_ref[...],
                    preferred_element_type=jnp.float32)
    else:
        # K=Din is tiny -> VPU broadcast-MAC instead of a near-empty MXU pass.
        din = x.shape[-1]
        h = x[:, 0:1] * w_ref[0:1, :].astype(jnp.float32)
        for i in range(1, din):
            h = h + x[:, i:i + 1] * w_ref[i:i + 1, :].astype(jnp.float32)
    o_ref[0] = h + b_ref[...] + pe_ref[...]


def _layer_common(x, mem, refs, *, nhead):
    (sa_wqkv, sa_bqkv, sa_wo, sa_bo, n1_g, n1_b,
     ca_wq, ca_bq, ca_wkv, ca_bkv, ca_wo, ca_bo, n2_g, n2_b,
     w1, b1, w2, b2, n3_g, n3_b) = refs

    # self-attention + residual + LayerNorm1 (causal)
    sa = _self_attn(x, sa_wqkv, sa_bqkv, sa_wo, sa_bo, nhead=nhead)
    x = _layernorm(x + sa, n1_g[...], n1_b[...])

    # cross-attention over memory + residual + LayerNorm2
    ca = _cross_attn(x, mem, ca_wq, ca_bq, ca_wkv, ca_bkv, ca_wo, ca_bo,
                     nhead=nhead)
    x = _layernorm(x + ca, n2_g[...], n2_b[...])

    # FFN (linear1 -> ReLU -> linear2) + residual + LayerNorm3
    h = jnp.dot(x.astype(jnp.bfloat16), w1[...],
                preferred_element_type=jnp.float32) + b1[...]
    h = jnp.maximum(h, 0.0)
    f = jnp.dot(h.astype(jnp.bfloat16), w2[...],
                preferred_element_type=jnp.float32) + b2[...]
    return _layernorm(x + f, n3_g[...], n3_b[...])


def _decoder_layer_kernel(x_ref, mem_ref, *rest, nhead):
    o_ref = rest[-1]
    o_ref[0] = _layer_common(x_ref[0], mem_ref[0], rest[:-1], nhead=nhead)


def _decoder_layer_head_kernel(x_ref, mem_ref, *rest, nhead):
    # Last layer: decoder layer + final (D -> 1) projection, written as a
    # lane-dense (1, S) slab instead of a (S, 1) masked column store.
    o_ref, wout_ref, bout_ref = rest[-1], rest[-3], rest[-2]
    y = _layer_common(x_ref[0], mem_ref[0], rest[:-3], nhead=nhead)
    out = lax.dot_general(wout_ref[...], y.astype(jnp.bfloat16),
                          (((1,), (1,)), ((), ())),
                          preferred_element_type=jnp.float32)   # (1, S)
    o_ref[0] = out + bout_ref[...]


# ----------------------------- kernel wrappers ------------------------------ #

def embed(x, w, b, pe):
    B, S, Din = x.shape
    D = w.shape[1]
    return pl.pallas_call(
        functools.partial(_embed_kernel, use_mxu=Din >= 8),
        grid=(B,),
        in_specs=[
            pl.BlockSpec((1, S, Din), lambda bb: (bb, 0, 0)),
            _rep_spec((Din, D)),
            _rep_spec((1, D)),
            _rep_spec((S, D)),
        ],
        out_specs=pl.BlockSpec((1, S, D), lambda bb: (bb, 0, 0)),
        out_shape=jax.ShapeDtypeStruct((B, S, D), jnp.float32),
        compiler_params=_COMPILER_PARAMS,
    )(x, w, b, pe)


_LAYER_KEYS = ("sa_wqkv", "sa_bqkv", "sa_wo", "sa_bo", "n1_g", "n1_b",
               "ca_wq", "ca_bq", "ca_wkv", "ca_bkv", "ca_wo", "ca_bo",
               "n2_g", "n2_b",
               "w1", "b1", "w2", "b2", "n3_g", "n3_b")


def decoder_layer(x, mem, lp, *, nhead, head=None):
    """One fused pallas_call per decoder layer (optionally + final head)."""
    B, S, D = x.shape
    Sm = mem.shape[1]
    weights = [lp[k] for k in _LAYER_KEYS]

    if head is None:
        kernel = functools.partial(_decoder_layer_kernel, nhead=nhead)
        out_specs = pl.BlockSpec((1, S, D), lambda b: (b, 0, 0))
        out_shape = jax.ShapeDtypeStruct((B, S, D), jnp.float32)
    else:
        weights = weights + [head[0], head[1]]
        kernel = functools.partial(_decoder_layer_head_kernel, nhead=nhead)
        out_specs = pl.BlockSpec((1, 1, S), lambda b: (b, 0, 0))
        out_shape = jax.ShapeDtypeStruct((B, 1, S), jnp.float32)

    in_specs = ([pl.BlockSpec((1, S, D), lambda b: (b, 0, 0)),
                 pl.BlockSpec((1, Sm, D), lambda b: (b, 0, 0))]
                + [_rep_spec(a.shape) for a in weights])

    out = pl.pallas_call(
        kernel,
        grid=(B,),
        in_specs=in_specs,
        out_specs=out_specs,
        out_shape=out_shape,
        compiler_params=_COMPILER_PARAMS,
    )(x, mem, *weights)
    if head is not None:
        out = out.reshape(B, S)
    return out


# ----------------------------- model glue ---------------------------------- #

def positional_encoding(max_len, d_model):
    position = jnp.arange(max_len, dtype=jnp.float32)[:, None]
    div_term = jnp.exp(
        jnp.arange(0, d_model, 2, dtype=jnp.float32) * (-math.log(10000.0) / d_model)
    )
    pe = jnp.zeros((max_len, d_model), dtype=jnp.float32)
    pe = pe.at[:, 0::2].set(jnp.sin(position * div_term))
    pe = pe.at[:, 1::2].set(jnp.cos(position * div_term))
    return pe


def init_params(key, input_dim, d_model, nhead, num_layers):
    """Kernel-ready params: bf16 matmul weights, f32 biases/LN, host-side folds
    of sqrt(d_model) (embedding) and 1/sqrt(Dh) (Q projections)."""
    dh = d_model // nhead
    dff = 4 * d_model
    q_scale = 1.0 / math.sqrt(dh)

    keys = iter(jax.random.split(key, 2 + 7 * num_layers))

    def w(shape):
        return 0.02 * jax.random.normal(next(keys), shape, dtype=jnp.float32)

    bf16 = lambda a: a.astype(jnp.bfloat16)
    zeros = lambda shape: jnp.zeros(shape, jnp.float32)
    ones = lambda shape: jnp.ones(shape, jnp.float32)

    params = {
        "emb_w": bf16(w((input_dim, d_model)) * math.sqrt(d_model)),
        "emb_b": zeros((1, d_model)),          # (bias * sqrt(d_model)) == 0
        "out_w": bf16(w((1, d_model))),        # row vector -> lane-dense head
        "out_b": zeros((1, 1)),
        "layers": [],
    }
    for _ in range(num_layers):
        wqkv = w((d_model, 3 * d_model))
        wqkv = wqkv.at[:, :d_model].multiply(q_scale)     # fold attn scale into Q
        wq_c = w((d_model, d_model)) * q_scale
        params["layers"].append({
            "sa_wqkv": bf16(wqkv), "sa_bqkv": zeros((1, 3 * d_model)),
            "sa_wo": bf16(w((nhead, dh, d_model))), "sa_bo": zeros((1, d_model)),
            "ca_wq": bf16(wq_c), "ca_bq": zeros((1, d_model)),
            "ca_wkv": bf16(w((d_model, 2 * d_model))),
            "ca_bkv": zeros((1, 2 * d_model)),
            "ca_wo": bf16(w((nhead, dh, d_model))), "ca_bo": zeros((1, d_model)),
            "w1": bf16(w((d_model, dff))), "b1": zeros((1, dff)),
            "w2": bf16(w((dff, d_model))), "b2": zeros((1, d_model)),
            "n1_g": ones((1, d_model)), "n1_b": zeros((1, d_model)),
            "n2_g": ones((1, d_model)), "n2_b": zeros((1, d_model)),
            "n3_g": ones((1, d_model)), "n3_b": zeros((1, d_model)),
        })
    return params


def transformer_decoder_forward(params, src, tgt, *, d_model, nhead, num_layers):
    B, S_src, _ = src.shape
    _, S_tgt, _ = tgt.shape
    pe = positional_encoding(max(S_src, S_tgt), d_model)

    # embedding (scale folded into weights) + positional encoding
    mem = embed(src, params["emb_w"], params["emb_b"], pe[:S_src])
    x = embed(tgt, params["emb_w"], params["emb_b"], pe[:S_tgt])

    out = None
    for l in range(num_layers):
        lp = params["layers"][l]
        if l < num_layers - 1:
            x = decoder_layer(x, mem, lp, nhead=nhead)
        else:
            out = decoder_layer(x, mem, lp, nhead=nhead,
                                head=(params["out_w"], params["out_b"]))
    return out  # (B, S_tgt)


# ----------------------------- main ----------------------------------------- #

if __name__ == "__main__":
    INPUT_DIM, D_MODEL, NHEAD, NUM_LAYERS = 4, 32, 4, 2
    B, S = 2, 8

    key = jax.random.PRNGKey(0)
    k_param, k_src, k_tgt = jax.random.split(key, 3)

    params = init_params(k_param, INPUT_DIM, D_MODEL, NHEAD, NUM_LAYERS)
    src = jax.random.normal(k_src, (B, S, INPUT_DIM), dtype=jnp.float32)
    tgt = jax.random.normal(k_tgt, (B, S, INPUT_DIM), dtype=jnp.float32)

    fwd = jax.jit(
        functools.partial(
            transformer_decoder_forward,
            d_model=D_MODEL, nhead=NHEAD, num_layers=NUM_LAYERS,
        )
    )
    out = fwd(params, src, tgt)
    jax.block_until_ready(out)
    assert out.shape == (B, S), out.shape
    assert bool(jnp.all(jnp.isfinite(out)))
    print("KERNEL_OK")
</pallas_src>

<mosaic_0001>
module attributes {stable_mosaic.version = 11 : i64} {
  func.func @_embed_kernel(%arg0: i32, %arg1: memref<1x8x4xf32, #tpu.memory_space<vmem>>, %arg2: memref<4x32xbf16, #tpu.memory_space<vmem>>, %arg3: memref<1x32xf32, #tpu.memory_space<vmem>>, %arg4: memref<8x32xf32, #tpu.memory_space<vmem>>, %arg5: memref<1x8x32xf32, #tpu.memory_space<vmem>>) attributes {dimension_semantics = [#tpu.dimension_semantics<parallel>], iteration_bounds = array<i64: 2>, scalar_prefetch = 0 : i64, scratch_operands = 0 : i64, tpu.core_type = #tpu.core_type<tc>, window_params = [{transform_indices = @transform_0, window_bounds = array<i64: 1, 8, 4>}, {pipeline_mode = #tpu.pipeline_mode<synchronous>, transform_indices = @transform_1, window_bounds = array<i64: 4, 32>}, {pipeline_mode = #tpu.pipeline_mode<synchronous>, transform_indices = @transform_2, window_bounds = array<i64: 1, 32>}, {pipeline_mode = #tpu.pipeline_mode<synchronous>, transform_indices = @transform_3, window_bounds = array<i64: 8, 32>}, {transform_indices = @transform_4, window_bounds = array<i64: 1, 8, 32>}]} {
    %c0 = arith.constant 0 : index
    %c0_0 = arith.constant 0 : index
    %c0_1 = arith.constant 0 : index
    %0 = vector.load %arg1[%c0, %c0_0, %c0_1] : memref<1x8x4xf32, #tpu.memory_space<vmem>>, vector<1x8x4xf32>
    %1 = vector.shape_cast %0 : vector<1x8x4xf32> to vector<8x4xf32>
    %2 = vector.extract_strided_slice %1 {offsets = [0, 0], sizes = [8, 1], strides = [1, 1]} : vector<8x4xf32> to vector<8x1xf32>
    %c0_2 = arith.constant 0 : index
    %c0_3 = arith.constant 0 : index
    %3 = vector.load %arg2[%c0_2, %c0_3] : memref<4x32xbf16, #tpu.memory_space<vmem>>, vector<1x32xbf16>
    %4 = arith.extf %3 : vector<1x32xbf16> to vector<1x32xf32>
    %5 = vector.broadcast %2 : vector<8x1xf32> to vector<8x32xf32>
    %6 = vector.broadcast %4 : vector<1x32xf32> to vector<8x32xf32>
    %7 = arith.mulf %5, %6 : vector<8x32xf32>
    %8 = vector.extract_strided_slice %1 {offsets = [0, 1], sizes = [8, 1], strides = [1, 1]} : vector<8x4xf32> to vector<8x1xf32>
    %c1 = arith.constant 1 : index
    %c0_4 = arith.constant 0 : index
    %9 = vector.load %arg2[%c1, %c0_4] : memref<4x32xbf16, #tpu.memory_space<vmem>>, vector<1x32xbf16>
    %10 = arith.extf %9 : vector<1x32xbf16> to vector<1x32xf32>
    %11 = vector.broadcast %8 : vector<8x1xf32> to vector<8x32xf32>
    %12 = vector.broadcast %10 : vector<1x32xf32> to vector<8x32xf32>
    %13 = arith.mulf %11, %12 : vector<8x32xf32>
    %14 = arith.addf %7, %13 : vector<8x32xf32>
    %15 = vector.extract_strided_slice %1 {offsets = [0, 2], sizes = [8, 1], strides = [1, 1]} : vector<8x4xf32> to vector<8x1xf32>
    %c2 = arith.constant 2 : index
    %c0_5 = arith.constant 0 : index
    %16 = vector.load %arg2[%c2, %c0_5] : memref<4x32xbf16, #tpu.memory_space<vmem>>, vector<1x32xbf16>
    %17 = arith.extf %16 : vector<1x32xbf16> to vector<1x32xf32>
    %18 = vector.broadcast %15 : vector<8x1xf32> to vector<8x32xf32>
    %19 = vector.broadcast %17 : vector<1x32xf32> to vector<8x32xf32>
    %20 = arith.mulf %18, %19 : vector<8x32xf32>
    %21 = arith.addf %14, %20 : vector<8x32xf32>
    %22 = vector.extract_strided_slice %1 {offsets = [0, 3], sizes = [8, 1], strides = [1, 1]} : vector<8x4xf32> to vector<8x1xf32>
    %c3 = arith.constant 3 : index
    %c0_6 = arith.constant 0 : index
    %23 = vector.load %arg2[%c3, %c0_6] : memref<4x32xbf16, #tpu.memory_space<vmem>>, vector<1x32xbf16>
    %24 = arith.extf %23 : vector<1x32xbf16> to vector<1x32xf32>
    %25 = vector.broadcast %22 : vector<8x1xf32> to vector<8x32xf32>
    %26 = vector.broadcast %24 : vector<1x32xf32> to vector<8x32xf32>
    %27 = arith.mulf %25, %26 : vector<8x32xf32>
    %28 = arith.addf %21, %27 : vector<8x32xf32>
    %c0_7 = arith.constant 0 : index
    %c0_8 = arith.constant 0 : index
    %29 = vector.load %arg3[%c0_7, %c0_8] : memref<1x32xf32, #tpu.memory_space<vmem>>, vector<1x32xf32>
    %30 = vector.broadcast %29 : vector<1x32xf32> to vector<8x32xf32>
    %31 = arith.addf %28, %30 : vector<8x32xf32>
    %c0_9 = arith.constant 0 : index
    %c0_10 = arith.constant 0 : index
    %32 = vector.load %arg4[%c0_9, %c0_10] : memref<8x32xf32, #tpu.memory_space<vmem>>, vector<8x32xf32>
    %33 = arith.addf %31, %32 : vector<8x32xf32>
    %c0_11 = arith.constant 0 : index
    %c0_12 = arith.constant 0 : index
    %c0_13 = arith.constant 0 : index
    %34 = vector.load %arg5[%c0_11, %c0_12, %c0_13] : memref<1x8x32xf32, #tpu.memory_space<vmem>>, vector<1x8x32xf32>
    %35 = vector.shape_cast %34 : vector<1x8x32xf32> to vector<8x32xf32>
    %36 = vector.shape_cast %33 : vector<8x32xf32> to vector<1x8x32xf32>
    tpu.vector_store %arg5[%c0_11, %c0_12, %c0_13], %36 {strides = array<i32>} : memref<1x8x32xf32, #tpu.memory_space<vmem>>, vector<1x8x32xf32>,
    return
  }
  func.func @transform_0(%arg0: i32) -> (i32, i32, i32) {
    %c0_i32 = arith.constant 0 : i32
    %c0_i32_0 = arith.constant 0 : i32
    %c0_i32_1 = arith.constant 0 : i32
    return %arg0, %c0_i32, %c0_i32_0 : i32, i32, i32
  }
  func.func @transform_1(%arg0: i32) -> (i32, i32) {
    %c0_i32 = arith.constant 0 : i32
    %c0_i32_0 = arith.constant 0 : i32
    %c0_i32_1 = arith.constant 0 : i32
    return %c0_i32, %c0_i32_0 : i32, i32
  }
  func.func @transform_2(%arg0: i32) -> (i32, i32) {
    %c0_i32 = arith.constant 0 : i32
    %c0_i32_0 = arith.constant 0 : i32
    %c0_i32_1 = arith.constant 0 : i32
    return %c0_i32, %c0_i32_0 : i32, i32
  }
  func.func @transform_3(%arg0: i32) -> (i32, i32) {
    %c0_i32 = arith.constant 0 : i32
    %c0_i32_0 = arith.constant 0 : i32
    %c0_i32_1 = arith.constant 0 : i32
    return %c0_i32, %c0_i32_0 : i32, i32
  }
  func.func @transform_4(%arg0: i32) -> (i32, i32, i32) {
    %c0_i32 = arith.constant 0 : i32
    %c0_i32_0 = arith.constant 0 : i32
    %c0_i32_1 = arith.constant 0 : i32
    return %arg0, %c0_i32, %c0_i32_0 : i32, i32, i32
  }
}

module attributes {stable_mosaic.version = 11 : i64} {
  func.func @_decoder_layer_kernel(%arg0: i32, %arg1: memref<1x8x32xf32, #tpu.memory_space<vmem>>, %arg2: memref<1x8x32xf32, #tpu.memory_space<vmem>>, %arg3: memref<32x96xbf16, #tpu.memory_space<vmem>>, %arg4: memref<1x96xf32, #tpu.memory_space<vmem>>, %arg5: memref<4x8x32xbf16, #tpu.memory_space<vmem>>, %arg6: memref<1x32xf32, #tpu.memory_space<vmem>>, %arg7: memref<1x32xf32, #tpu.memory_space<vmem>>, %arg8: memref<1x32xf32, #tpu.memory_space<vmem>>, %arg9: memref<32x32xbf16, #tpu.memory_space<vmem>>, %arg10: memref<1x32xf32, #tpu.memory_space<vmem>>, %arg11: memref<32x64xbf16, #tpu.memory_space<vmem>>, %arg12: memref<1x64xf32, #tpu.memory_space<vmem>>, %arg13: memref<4x8x32xbf16, #tpu.memory_space<vmem>>, %arg14: memref<1x32xf32, #tpu.memory_space<vmem>>, %arg15: memref<1x32xf32, #tpu.memory_space<vmem>>, %arg16: memref<1x32xf32, #tpu.memory_space<vmem>>, %arg17: memref<32x128xbf16, #tpu.memory_space<vmem>>, %arg18: memref<1x128xf32, #tpu.memory_space<vmem>>, %arg19: memref<128x32xbf16, #tpu.memory_space<vmem>>, %arg20: memref<1x32xf32, #tpu.memory_space<vmem>>, %arg21: memref<1x32xf32, #tpu.memory_space<vmem>>, %arg22: memref<1x32xf32, #tpu.memory_space<vmem>>, %arg23: memref<1x8x32xf32, #tpu.memory_space<vmem>>) attributes {dimension_semantics = [#tpu.dimension_semantics<parallel>], iteration_bounds = array<i64: 2>, scalar_prefetch = 0 : i64, scratch_operands = 0 : i64, tpu.core_type = #tpu.core_type<tc>, window_params = [{transform_indices = @transform_0, window_bounds = array<i64: 1, 8, 32>}, {transform_indices = @transform_1, window_bounds = array<i64: 1, 8, 32>}, {pipeline_mode = #tpu.pipeline_mode<synchronous>, transform_indices = @transform_2, window_bounds = array<i64: 32, 96>}, {pipeline_mode = #tpu.pipeline_mode<synchronous>, transform_indices = @transform_3, window_bounds = array<i64: 1, 96>}, {pipeline_mode = #tpu.pipeline_mode<synchronous>, transform_indices = @transform_4, window_bounds = array<i64: 4, 8, 32>}, {pipeline_mode = #tpu.pipeline_mode<synchronous>, transform_indices = @transform_5, window_bounds = array<i64: 1, 32>}, {pipeline_mode = #tpu.pipeline_mode<synchronous>, transform_indices = @transform_6, window_bounds = array<i64: 1, 32>}, {pipeline_mode = #tpu.pipeline_mode<synchronous>, transform_indices = @transform_7, window_bounds = array<i64: 1, 32>}, {pipeline_mode = #tpu.pipeline_mode<synchronous>, transform_indices = @transform_8, window_bounds = array<i64: 32, 32>}, {pipeline_mode = #tpu.pipeline_mode<synchronous>, transform_indices = @transform_9, window_bounds = array<i64: 1, 32>}, {pipeline_mode = #tpu.pipeline_mode<synchronous>, transform_indices = @transform_10, window_bounds = array<i64: 32, 64>}, {pipeline_mode = #tpu.pipeline_mode<synchronous>, transform_indices = @transform_11, window_bounds = array<i64: 1, 64>}, {pipeline_mode = #tpu.pipeline_mode<synchronous>, transform_indices = @transform_12, window_bounds = array<i64: 4, 8, 32>}, {pipeline_mode = #tpu.pipeline_mode<synchronous>, transform_indices = @transform_13, window_bounds = array<i64: 1, 32>}, {pipeline_mode = #tpu.pipeline_mode<synchronous>, transform_indices = @transform_14, window_bounds = array<i64: 1, 32>}, {pipeline_mode = #tpu.pipeline_mode<synchronous>, transform_indices = @transform_15, window_bounds = array<i64: 1, 32>}, {pipeline_mode = #tpu.pipeline_mode<synchronous>, transform_indices = @transform_16, window_bounds = array<i64: 32, 128>}, {pipeline_mode = #tpu.pipeline_mode<synchronous>, transform_indices = @transform_17, window_bounds = array<i64: 1, 128>}, {pipeline_mode = #tpu.pipeline_mode<synchronous>, transform_indices = @transform_18, window_bounds = array<i64: 128, 32>}, {pipeline_mode = #tpu.pipeline_mode<synchronous>, transform_indices = @transform_19, window_bounds = array<i64: 1, 32>}, {pipeline_mode = #tpu.pipeline_mode<synchronous>, transform_indices = @transform_20, window_bounds = array<i64: 1, 32>}, {pipeline_mode = #tpu.pipeline_mode<synchronous>, transform_indices = @transform_21, window_bounds = array<i64: 1, 32>}, {transform_indices = @transform_22, window_bounds = array<i64: 1, 8, 32>}]} {
    %c0 = arith.constant 0 : index
    %c0_0 = arith.constant 0 : index
    %c0_1 = arith.constant 0 : index
    %0 = vector.load %arg1[%c0, %c0_0, %c0_1] : memref<1x8x32xf32, #tpu.memory_space<vmem>>, vector<1x8x32xf32>
    %1 = vector.shape_cast %0 : vector<1x8x32xf32> to vector<8x32xf32>
    %c0_2 = arith.constant 0 : index
    %c0_3 = arith.constant 0 : index
    %c0_4 = arith.constant 0 : index
    %2 = vector.load %arg2[%c0_2, %c0_3, %c0_4] : memref<1x8x32xf32, #tpu.memory_space<vmem>>, vector<1x8x32xf32>
    %3 = vector.shape_cast %2 : vector<1x8x32xf32> to vector<8x32xf32>
    %4 = arith.truncf %1 : vector<8x32xf32> to vector<8x32xbf16>
    %c0_5 = arith.constant 0 : index
    %c0_6 = arith.constant 0 : index
    %5 = vector.load %arg3[%c0_5, %c0_6] : memref<32x96xbf16, #tpu.memory_space<vmem>>, vector<32x96xbf16>
    %cst = arith.constant dense<0.000000e+00> : vector<8x96xf32>
    %6 = tpu.matmul %4, %5, %cst {dimension_numbers = #tpu.dot_dimension_numbers<[1], [0], [0], [1], [0, 0, 1, 1], [], []>} : vector<8x32xbf16>, vector<32x96xbf16>, vector<8x96xf32> -> vector<8x96xf32>
    %c0_7 = arith.constant 0 : index
    %c0_8 = arith.constant 0 : index
    %7 = vector.load %arg4[%c0_7, %c0_8] : memref<1x96xf32, #tpu.memory_space<vmem>>, vector<1x96xf32>
    %8 = vector.broadcast %7 : vector<1x96xf32> to vector<8x96xf32>
    %9 = arith.addf %6, %8 : vector<8x96xf32>
    %10 = vector.extract_strided_slice %9 {offsets = [0, 0], sizes = [8, 32], strides = [1, 1]} : vector<8x96xf32> to vector<8x32xf32>
    %11 = vector.extract_strided_slice %9 {offsets = [0, 32], sizes = [8, 32], strides = [1, 1]} : vector<8x96xf32> to vector<8x32xf32>
    %12 = vector.extract_strided_slice %9 {offsets = [0, 64], sizes = [8, 32], strides = [1, 1]} : vector<8x96xf32> to vector<8x32xf32>
    %13 = vector.extract_strided_slice %10 {offsets = [0, 0], sizes = [8, 8], strides = [1, 1]} : vector<8x32xf32> to vector<8x8xf32>
    %14 = vector.shape_cast %13 : vector<8x8xf32> to vector<1x8x8xf32>
    %15 = vector.extract_strided_slice %10 {offsets = [0, 8], sizes = [8, 8], strides = [1, 1]} : vector<8x32xf32> to vector<8x8xf32>
    %16 = vector.shape_cast %15 : vector<8x8xf32> to vector<1x8x8xf32>
    %17 = vector.extract_strided_slice %10 {offsets = [0, 16], sizes = [8, 8], strides = [1, 1]} : vector<8x32xf32> to vector<8x8xf32>
    %18 = vector.shape_cast %17 : vector<8x8xf32> to vector<1x8x8xf32>
    %19 = vector.extract_strided_slice %10 {offsets = [0, 24], sizes = [8, 8], strides = [1, 1]} : vector<8x32xf32> to vector<8x8xf32>
    %20 = vector.shape_cast %19 : vector<8x8xf32> to vector<1x8x8xf32>
    %21 = tpu.concatenate %14, %16, %18, %20 in 0 : vector<1x8x8xf32>, vector<1x8x8xf32>, vector<1x8x8xf32>, vector<1x8x8xf32> -> vector<4x8x8xf32>
    %22 = arith.truncf %21 : vector<4x8x8xf32> to vector<4x8x8xbf16>
    %23 = vector.extract_strided_slice %11 {offsets = [0, 0], sizes = [8, 8], strides = [1, 1]} : vector<8x32xf32> to vector<8x8xf32>
    %24 = vector.shape_cast %23 : vector<8x8xf32> to vector<1x8x8xf32>
    %25 = vector.extract_strided_slice %11 {offsets = [0, 8], sizes = [8, 8], strides = [1, 1]} : vector<8x32xf32> to vector<8x8xf32>
    %26 = vector.shape_cast %25 : vector<8x8xf32> to vector<1x8x8xf32>
    %27 = vector.extract_strided_slice %11 {offsets = [0, 16], sizes = [8, 8], strides = [1, 1]} : vector<8x32xf32> to vector<8x8xf32>
    %28 = vector.shape_cast %27 : vector<8x8xf32> to vector<1x8x8xf32>
    %29 = vector.extract_strided_slice %11 {offsets = [0, 24], sizes = [8, 8], strides = [1, 1]} : vector<8x32xf32> to vector<8x8xf32>
    %30 = vector.shape_cast %29 : vector<8x8xf32> to vector<1x8x8xf32>
    %31 = tpu.concatenate %24, %26, %28, %30 in 0 : vector<1x8x8xf32>, vector<1x8x8xf32>, vector<1x8x8xf32>, vector<1x8x8xf32> -> vector<4x8x8xf32>
    %32 = arith.truncf %31 : vector<4x8x8xf32> to vector<4x8x8xbf16>
    %33 = vector.extract_strided_slice %12 {offsets = [0, 0], sizes = [8, 8], strides = [1, 1]} : vector<8x32xf32> to vector<8x8xf32>
    %34 = vector.shape_cast %33 : vector<8x8xf32> to vector<1x8x8xf32>
    %35 = vector.extract_strided_slice %12 {offsets = [0, 8], sizes = [8, 8], strides = [1, 1]} : vector<8x32xf32> to vector<8x8xf32>
    %36 = vector.shape_cast %35 : vector<8x8xf32> to vector<1x8x8xf32>
    %37 = vector.extract_strided_slice %12 {offsets = [0, 16], sizes = [8, 8], strides = [1, 1]} : vector<8x32xf32> to vector<8x8xf32>
    %38 = vector.shape_cast %37 : vector<8x8xf32> to vector<1x8x8xf32>
    %39 = vector.extract_strided_slice %12 {offsets = [0, 24], sizes = [8, 8], strides = [1, 1]} : vector<8x32xf32> to vector<8x8xf32>
    %40 = vector.shape_cast %39 : vector<8x8xf32> to vector<1x8x8xf32>
    %41 = tpu.concatenate %34, %36, %38, %40 in 0 : vector<1x8x8xf32>, vector<1x8x8xf32>, vector<1x8x8xf32>, vector<1x8x8xf32> -> vector<4x8x8xf32>
    %42 = arith.truncf %41 : vector<4x8x8xf32> to vector<4x8x8xbf16>
    %cst_9 = arith.constant dense<0.000000e+00> : vector<4x8x8xf32>
    %43 = tpu.matmul %22, %32, %cst_9 {dimension_numbers = #tpu.dot_dimension_numbers<[2], [2], [1], [1], [0, 0, 0, 1, 1, 1], [0], [0]>} : vector<4x8x8xbf16>, vector<4x8x8xbf16>, vector<4x8x8xf32> -> vector<4x8x8xf32>
    %44 = tpu.iota {dimensions = array<i32: 0>} : vector<8x8xi32>
    %45 = tpu.iota {dimensions = array<i32: 1>} : vector<8x8xi32>
    %46 = arith.cmpi sge, %44, %45 : vector<8x8xi32>
    %47 = vector.shape_cast %46 : vector<8x8xi1> to vector<1x8x8xi1>
    %cst_10 = arith.constant -1.000000e+30 : f32
    %48 = vector.shape_cast %47 : vector<1x8x8xi1> to vector<1x8x8xi1>
    %49 = vector.broadcast %48 : vector<1x8x8xi1> to vector<4x8x8xi1>
    %50 = vector.broadcast %cst_10 : f32 to vector<4x8x8xf32>
    %51 = arith.select %49, %43, %50 : vector<4x8x8xi1>, vector<4x8x8xf32>
    %cst_11 = arith.constant dense<0xFF800000> : vector<4x8xf32>
    %52 = vector.multi_reduction <maximumf>, %51, %cst_11 [2] : vector<4x8x8xf32> to vector<4x8xf32>
    %53 = vector.shape_cast %52 : vector<4x8xf32> to vector<4x8x1xf32>
    %54 = vector.broadcast %53 : vector<4x8x1xf32> to vector<4x8x8xf32>
    %55 = arith.subf %51, %54 : vector<4x8x8xf32>
    %56 = math.exp %55 : vector<4x8x8xf32>
    %cst_12 = arith.constant dense<0.000000e+00> : vector<4x8xf32>
    %57 = vector.multi_reduction <add>, %56, %cst_12 [2] : vector<4x8x8xf32> to vector<4x8xf32>
    %58 = vector.shape_cast %57 : vector<4x8xf32> to vector<4x8x1xf32>
    %59 = vector.broadcast %58 : vector<4x8x1xf32> to vector<4x8x8xf32>
    %60 = arith.divf %56, %59 : vector<4x8x8xf32>
    %61 = arith.truncf %60 : vector<4x8x8xf32> to vector<4x8x8xbf16>
    %cst_13 = arith.constant dense<0.000000e+00> : vector<4x8x8xf32>
    %62 = tpu.matmul %61, %42, %cst_13 {dimension_numbers = #tpu.dot_dimension_numbers<[2], [1], [1], [2], [0, 0, 0, 1, 1, 2], [0], [0]>} : vector<4x8x8xbf16>, vector<4x8x8xbf16>, vector<4x8x8xf32> -> vector<4x8x8xf32>
    %63 = arith.truncf %62 : vector<4x8x8xf32> to vector<4x8x8xbf16>
    %c0_14 = arith.constant 0 : index
    %c0_15 = arith.constant 0 : index
    %c0_16 = arith.constant 0 : index
    %64 = vector.load %arg5[%c0_14, %c0_15, %c0_16] : memref<4x8x32xbf16, #tpu.memory_space<vmem>>, vector<4x8x32xbf16>
    %cst_17 = arith.constant dense<0.000000e+00> : vector<4x8x32xf32>
    %65 = tpu.matmul %63, %64, %cst_17 {dimension_numbers = #tpu.dot_dimension_numbers<[2], [1], [1], [2], [0, 0, 0, 1, 1, 2], [0], [0]>} : vector<4x8x8xbf16>, vector<4x8x32xbf16>, vector<4x8x32xf32> -> vector<4x8x32xf32>
    %cst_18 = arith.constant dense<0.000000e+00> : vector<8x32xf32>
    %66 = vector.multi_reduction <add>, %65, %cst_18 [0] : vector<4x8x32xf32> to vector<8x32xf32>
    %c0_19 = arith.constant 0 : index
    %c0_20 = arith.constant 0 : index
    %67 = vector.load %arg6[%c0_19, %c0_20] : memref<1x32xf32, #tpu.memory_space<vmem>>, vector<1x32xf32>
    %68 = vector.broadcast %67 : vector<1x32xf32> to vector<8x32xf32>
    %69 = arith.addf %66, %68 : vector<8x32xf32>
    %70 = arith.addf %1, %69 : vector<8x32xf32>
    %c0_21 = arith.constant 0 : index
    %c0_22 = arith.constant 0 : index
    %71 = vector.load %arg7[%c0_21, %c0_22] : memref<1x32xf32, #tpu.memory_space<vmem>>, vector<1x32xf32>
    %c0_23 = arith.constant 0 : index
    %c0_24 = arith.constant 0 : index
    %72 = vector.load %arg8[%c0_23, %c0_24] : memref<1x32xf32, #tpu.memory_space<vmem>>, vector<1x32xf32>
    %cst_25 = arith.constant dense<0.000000e+00> : vector<8xf32>
    %73 = vector.multi_reduction <add>, %70, %cst_25 [1] : vector<8x32xf32> to vector<8xf32>
    %74 = vector.shape_cast %73 : vector<8xf32> to vector<8x1xf32>
    %cst_26 = arith.constant 3.200000e+01 : f32
    %75 = vector.broadcast %cst_26 : f32 to vector<8x1xf32>
    %76 = arith.divf %74, %75 : vector<8x1xf32>
    %77 = vector.broadcast %76 : vector<8x1xf32> to vector<8x32xf32>
    %78 = arith.subf %70, %77 : vector<8x32xf32>
    %79 = arith.mulf %78, %78 : vector<8x32xf32>
    %cst_27 = arith.constant dense<0.000000e+00> : vector<8xf32>
    %80 = vector.multi_reduction <add>, %79, %cst_27 [1] : vector<8x32xf32> to vector<8xf32>
    %81 = vector.shape_cast %80 : vector<8xf32> to vector<8x1xf32>
    %cst_28 = arith.constant 3.200000e+01 : f32
    %82 = vector.broadcast %cst_28 : f32 to vector<8x1xf32>
    %83 = arith.divf %81, %82 : vector<8x1xf32>
    %84 = vector.broadcast %76 : vector<8x1xf32> to vector<8x32xf32>
    %85 = arith.subf %70, %84 : vector<8x32xf32>
    %cst_29 = arith.constant 9.99999974E-6 : f32
    %86 = vector.broadcast %cst_29 : f32 to vector<8x1xf32>
    %87 = arith.addf %83, %86 : vector<8x1xf32>
    %88 = math.rsqrt %87 : vector<8x1xf32>
    %89 = vector.broadcast %88 : vector<8x1xf32> to vector<8x32xf32>
    %90 = arith.mulf %85, %89 : vector<8x32xf32>
    %91 = vector.broadcast %71 : vector<1x32xf32> to vector<8x32xf32>
    %92 = arith.mulf %90, %91 : vector<8x32xf32>
    %93 = vector.broadcast %72 : vector<1x32xf32> to vector<8x32xf32>
    %94 = arith.addf %92, %93 : vector<8x32xf32>
    %95 = arith.truncf %94 : vector<8x32xf32> to vector<8x32xbf16>
    %c0_30 = arith.constant 0 : index
    %c0_31 = arith.constant 0 : index
    %96 = vector.load %arg9[%c0_30, %c0_31] : memref<32x32xbf16, #tpu.memory_space<vmem>>, vector<32x32xbf16>
    %cst_32 = arith.constant dense<0.000000e+00> : vector<8x32xf32>
    %97 = tpu.matmul %95, %96, %cst_32 {dimension_numbers = #tpu.dot_dimension_numbers<[1], [0], [0], [1], [0, 0, 1, 1], [], []>} : vector<8x32xbf16>, vector<32x32xbf16>, vector<8x32xf32> -> vector<8x32xf32>
    %c0_33 = arith.constant 0 : index
    %c0_34 = arith.constant 0 : index
    %98 = vector.load %arg10[%c0_33, %c0_34] : memref<1x32xf32, #tpu.memory_space<vmem>>, vector<1x32xf32>
    %99 = vector.broadcast %98 : vector<1x32xf32> to vector<8x32xf32>
    %100 = arith.addf %97, %99 : vector<8x32xf32>
    %101 = arith.truncf %3 : vector<8x32xf32> to vector<8x32xbf16>
    %c0_35 = arith.constant 0 : index
    %c0_36 = arith.constant 0 : index
    %102 = vector.load %arg11[%c0_35, %c0_36] : memref<32x64xbf16, #tpu.memory_space<vmem>>, vector<32x64xbf16>
    %cst_37 = arith.constant dense<0.000000e+00> : vector<8x64xf32>
    %103 = tpu.matmul %101, %102, %cst_37 {dimension_numbers = #tpu.dot_dimension_numbers<[1], [0], [0], [1], [0, 0, 1, 1], [], []>} : vector<8x32xbf16>, vector<32x64xbf16>, vector<8x64xf32> -> vector<8x64xf32>
    %c0_38 = arith.constant 0 : index
    %c0_39 = arith.constant 0 : index
    %104 = vector.load %arg12[%c0_38, %c0_39] : memref<1x64xf32, #tpu.memory_space<vmem>>, vector<1x64xf32>
    %105 = vector.broadcast %104 : vector<1x64xf32> to vector<8x64xf32>
    %106 = arith.addf %103, %105 : vector<8x64xf32>
    %107 = vector.extract_strided_slice %106 {offsets = [0, 0], sizes = [8, 32], strides = [1, 1]} : vector<8x64xf32> to vector<8x32xf32>
    %108 = vector.extract_strided_slice %106 {offsets = [0, 32], sizes = [8, 32], strides = [1, 1]} : vector<8x64xf32> to vector<8x32xf32>
    %109 = vector.extract_strided_slice %100 {offsets = [0, 0], sizes = [8, 8], strides = [1, 1]} : vector<8x32xf32> to vector<8x8xf32>
    %110 = vector.shape_cast %109 : vector<8x8xf32> to vector<1x8x8xf32>
    %111 = vector.extract_strided_slice %100 {offsets = [0, 8], sizes = [8, 8], strides = [1, 1]} : vector<8x32xf32> to vector<8x8xf32>
    %112 = vector.shape_cast %111 : vector<8x8xf32> to vector<1x8x8xf32>
    %113 = vector.extract_strided_slice %100 {offsets = [0, 16], sizes = [8, 8], strides = [1, 1]} : vector<8x32xf32> to vector<8x8xf32>
    %114 = vector.shape_cast %113 : vector<8x8xf32> to vector<1x8x8xf32>
    %115 = vector.extract_strided_slice %100 {offsets = [0, 24], sizes = [8, 8], strides = [1, 1]} : vector<8x32xf32> to vector<8x8xf32>
    %116 = vector.shape_cast %115 : vector<8x8xf32> to vector<1x8x8xf32>
    %117 = tpu.concatenate %110, %112, %114, %116 in 0 : vector<1x8x8xf32>, vector<1x8x8xf32>, vector<1x8x8xf32>, vector<1x8x8xf32> -> vector<4x8x8xf32>
    %118 = arith.truncf %117 : vector<4x8x8xf32> to vector<4x8x8xbf16>
    %119 = vector.extract_strided_slice %107 {offsets = [0, 0], sizes = [8, 8], strides = [1, 1]} : vector<8x32xf32> to vector<8x8xf32>
    %120 = vector.shape_cast %119 : vector<8x8xf32> to vector<1x8x8xf32>
    %121 = vector.extract_strided_slice %107 {offsets = [0, 8], sizes = [8, 8], strides = [1, 1]} : vector<8x32xf32> to vector<8x8xf32>
    %122 = vector.shape_cast %121 : vector<8x8xf32> to vector<1x8x8xf32>
    %123 = vector.extract_strided_slice %107 {offsets = [0, 16], sizes = [8, 8], strides = [1, 1]} : vector<8x32xf32> to vector<8x8xf32>
    %124 = vector.shape_cast %123 : vector<8x8xf32> to vector<1x8x8xf32>
    %125 = vector.extract_strided_slice %107 {offsets = [0, 24], sizes = [8, 8], strides = [1, 1]} : vector<8x32xf32> to vector<8x8xf32>
    %126 = vector.shape_cast %125 : vector<8x8xf32> to vector<1x8x8xf32>
    %127 = tpu.concatenate %120, %122, %124, %126 in 0 : vector<1x8x8xf32>, vector<1x8x8xf32>, vector<1x8x8xf32>, vector<1x8x8xf32> -> vector<4x8x8xf32>
    %128 = arith.truncf %127 : vector<4x8x8xf32> to vector<4x8x8xbf16>
    %129 = vector.extract_strided_slice %108 {offsets = [0, 0], sizes = [8, 8], strides = [1, 1]} : vector<8x32xf32> to vector<8x8xf32>
    %130 = vector.shape_cast %129 : vector<8x8xf32> to vector<1x8x8xf32>
    %131 = vector.extract_strided_slice %108 {offsets = [0, 8], sizes = [8, 8], strides = [1, 1]} : vector<8x32xf32> to vector<8x8xf32>
    %132 = vector.shape_cast %131 : vector<8x8xf32> to vector<1x8x8xf32>
    %133 = vector.extract_strided_slice %108 {offsets = [0, 16], sizes = [8, 8], strides = [1, 1]} : vector<8x32xf32> to vector<8x8xf32>
    %134 = vector.shape_cast %133 : vector<8x8xf32> to vector<1x8x8xf32>
    %135 = vector.extract_strided_slice %108 {offsets = [0, 24], sizes = [8, 8], strides = [1, 1]} : vector<8x32xf32> to vector<8x8xf32>
    %136 = vector.shape_cast %135 : vector<8x8xf32> to vector<1x8x8xf32>
    %137 = tpu.concatenate %130, %132, %134, %136 in 0 : vector<1x8x8xf32>, vector<1x8x8xf32>, vector<1x8x8xf32>, vector<1x8x8xf32> -> vector<4x8x8xf32>
    %138 = arith.truncf %137 : vector<4x8x8xf32> to vector<4x8x8xbf16>
    %cst_40 = arith.constant dense<0.000000e+00> : vector<4x8x8xf32>
    %139 = tpu.matmul %118, %128, %cst_40 {dimension_numbers = #tpu.dot_dimension_numbers<[2], [2], [1], [1], [0, 0, 0, 1, 1, 1], [0], [0]>} : vector<4x8x8xbf16>, vector<4x8x8xbf16>, vector<4x8x8xf32> -> vector<4x8x8xf32>
    %cst_41 = arith.constant dense<0xFF800000> : vector<4x8xf32>
    %140 = vector.multi_reduction <maximumf>, %139, %cst_41 [2] : vector<4x8x8xf32> to vector<4x8xf32>
    %141 = vector.shape_cast %140 : vector<4x8xf32> to vector<4x8x1xf32>
    %142 = vector.broadcast %141 : vector<4x8x1xf32> to vector<4x8x8xf32>
    %143 = arith.subf %139, %142 : vector<4x8x8xf32>
    %144 = math.exp %143 : vector<4x8x8xf32>
    %cst_42 = arith.constant dense<0.000000e+00> : vector<4x8xf32>
    %145 = vector.multi_reduction <add>, %144, %cst_42 [2] : vector<4x8x8xf32> to vector<4x8xf32>
    %146 = vector.shape_cast %145 : vector<4x8xf32> to vector<4x8x1xf32>
    %147 = vector.broadcast %146 : vector<4x8x1xf32> to vector<4x8x8xf32>
    %148 = arith.divf %144, %147 : vector<4x8x8xf32>
    %149 = arith.truncf %148 : vector<4x8x8xf32> to vector<4x8x8xbf16>
    %cst_43 = arith.constant dense<0.000000e+00> : vector<4x8x8xf32>
    %150 = tpu.matmul %149, %138, %cst_43 {dimension_numbers = #tpu.dot_dimension_numbers<[2], [1], [1], [2], [0, 0, 0, 1, 1, 2], [0], [0]>} : vector<4x8x8xbf16>, vector<4x8x8xbf16>, vector<4x8x8xf32> -> vector<4x8x8xf32>
    %151 = arith.truncf %150 : vector<4x8x8xf32> to vector<4x8x8xbf16>
    %c0_44 = arith.constant 0 : index
    %c0_45 = arith.constant 0 : index
    %c0_46 = arith.constant 0 : index
    %152 = vector.load %arg13[%c0_44, %c0_45, %c0_46] : memref<4x8x32xbf16, #tpu.memory_space<vmem>>, vector<4x8x32xbf16>
    %cst_47 = arith.constant dense<0.000000e+00> : vector<4x8x32xf32>
    %153 = tpu.matmul %151, %152, %cst_47 {dimension_numbers = #tpu.dot_dimension_numbers<[2], [1], [1], [2], [0, 0, 0, 1, 1, 2], [0], [0]>} : vector<4x8x8xbf16>, vector<4x8x32xbf16>, vector<4x8x32xf32> -> vector<4x8x32xf32>
    %cst_48 = arith.constant dense<0.000000e+00> : vector<8x32xf32>
    %154 = vector.multi_reduction <add>, %153, %cst_48 [0] : vector<4x8x32xf32> to vector<8x32xf32>
    %c0_49 = arith.constant 0 : index
    %c0_50 = arith.constant 0 : index
    %155 = vector.load %arg14[%c0_49, %c0_50] : memref<1x32xf32, #tpu.memory_space<vmem>>, vector<1x32xf32>
    %156 = vector.broadcast %155 : vector<1x32xf32> to vector<8x32xf32>
    %157 = arith.addf %154, %156 : vector<8x32xf32>
    %158 = arith.addf %94, %157 : vector<8x32xf32>
    %c0_51 = arith.constant 0 : index
    %c0_52 = arith.constant 0 : index
    %159 = vector.load %arg15[%c0_51, %c0_52] : memref<1x32xf32, #tpu.memory_space<vmem>>, vector<1x32xf32>
    %c0_53 = arith.constant 0 : index
    %c0_54 = arith.constant 0 : index
    %160 = vector.load %arg16[%c0_53, %c0_54] : memref<1x32xf32, #tpu.memory_space<vmem>>, vector<1x32xf32>
    %cst_55 = arith.constant dense<0.000000e+00> : vector<8xf32>
    %161 = vector.multi_reduction <add>, %158, %cst_55 [1] : vector<8x32xf32> to vector<8xf32>
    %162 = vector.shape_cast %161 : vector<8xf32> to vector<8x1xf32>
    %cst_56 = arith.constant 3.200000e+01 : f32
    %163 = vector.broadcast %cst_56 : f32 to vector<8x1xf32>
    %164 = arith.divf %162, %163 : vector<8x1xf32>
    %165 = vector.broadcast %164 : vector<8x1xf32> to vector<8x32xf32>
    %166 = arith.subf %158, %165 : vector<8x32xf32>
    %167 = arith.mulf %166, %166 : vector<8x32xf32>
    %cst_57 = arith.constant dense<0.000000e+00> : vector<8xf32>
    %168 = vector.multi_reduction <add>, %167, %cst_57 [1] : vector<8x32xf32> to vector<8xf32>
    %169 = vector.shape_cast %168 : vector<8xf32> to vector<8x1xf32>
    %cst_58 = arith.constant 3.200000e+01 : f32
    %170 = vector.broadcast %cst_58 : f32 to vector<8x1xf32>
    %171 = arith.divf %169, %170 : vector<8x1xf32>
    %172 = vector.broadcast %164 : vector<8x1xf32> to vector<8x32xf32>
    %173 = arith.subf %158, %172 : vector<8x32xf32>
    %cst_59 = arith.constant 9.99999974E-6 : f32
    %174 = vector.broadcast %cst_59 : f32 to vector<8x1xf32>
    %175 = arith.addf %171, %174 : vector<8x1xf32>
    %176 = math.rsqrt %175 : vector<8x1xf32>
    %177 = vector.broadcast %176 : vector<8x1xf32> to vector<8x32xf32>
    %178 = arith.mulf %173, %177 : vector<8x32xf32>
    %179 = vector.broadcast %159 : vector<1x32xf32> to vector<8x32xf32>
    %180 = arith.mulf %178, %179 : vector<8x32xf32>
    %181 = vector.broadcast %160 : vector<1x32xf32> to vector<8x32xf32>
    %182 = arith.addf %180, %181 : vector<8x32xf32>
    %183 = arith.truncf %182 : vector<8x32xf32> to vector<8x32xbf16>
    %c0_60 = arith.constant 0 : index
    %c0_61 = arith.constant 0 : index
    %184 = vector.load %arg17[%c0_60, %c0_61] : memref<32x128xbf16, #tpu.memory_space<vmem>>, vector<32x128xbf16>
    %cst_62 = arith.constant dense<0.000000e+00> : vector<8x128xf32>
    %185 = tpu.matmul %183, %184, %cst_62 {dimension_numbers = #tpu.dot_dimension_numbers<[1], [0], [0], [1], [0, 0, 1, 1], [], []>} : vector<8x32xbf16>, vector<32x128xbf16>, vector<8x128xf32> -> vector<8x128xf32>
    %c0_63 = arith.constant 0 : index
    %c0_64 = arith.constant 0 : index
    %186 = vector.load %arg18[%c0_63, %c0_64] : memref<1x128xf32, #tpu.memory_space<vmem>>, vector<1x128xf32>
    %187 = vector.broadcast %186 : vector<1x128xf32> to vector<8x128xf32>
    %188 = arith.addf %185, %187 : vector<8x128xf32>
    %cst_65 = arith.constant 0.000000e+00 : f32
    %189 = vector.broadcast %cst_65 : f32 to vector<8x128xf32>
    %190 = arith.maximumf %188, %189 : vector<8x128xf32>
    %191 = arith.truncf %190 : vector<8x128xf32> to vector<8x128xbf16>
    %c0_66 = arith.constant 0 : index
    %c0_67 = arith.constant 0 : index
    %192 = vector.load %arg19[%c0_66, %c0_67] : memref<128x32xbf16, #tpu.memory_space<vmem>>, vector<128x32xbf16>
    %cst_68 = arith.constant dense<0.000000e+00> : vector<8x32xf32>
    %193 = tpu.matmul %191, %192, %cst_68 {dimension_numbers = #tpu.dot_dimension_numbers<[1], [0], [0], [1], [0, 0, 1, 1], [], []>} : vector<8x128xbf16>, vector<128x32xbf16>, vector<8x32xf32> -> vector<8x32xf32>
    %c0_69 = arith.constant 0 : index
    %c0_70 = arith.constant 0 : index
    %194 = vector.load %arg20[%c0_69, %c0_70] : memref<1x32xf32, #tpu.memory_space<vmem>>, vector<1x32xf32>
    %195 = vector.broadcast %194 : vector<1x32xf32> to vector<8x32xf32>
    %196 = arith.addf %193, %195 : vector<8x32xf32>
    %197 = arith.addf %182, %196 : vector<8x32xf32>
    %c0_71 = arith.constant 0 : index
    %c0_72 = arith.constant 0 : index
    %198 = vector.load %arg21[%c0_71, %c0_72] : memref<1x32xf32, #tpu.memory_space<vmem>>, vector<1x32xf32>
    %c0_73 = arith.constant 0 : index
    %c0_74 = arith.constant 0 : index
    %199 = vector.load %arg22[%c0_73, %c0_74] : memref<1x32xf32, #tpu.memory_space<vmem>>, vector<1x32xf32>
    %cst_75 = arith.constant dense<0.000000e+00> : vector<8xf32>
    %200 = vector.multi_reduction <add>, %197, %cst_75 [1] : vector<8x32xf32> to vector<8xf32>
    %201 = vector.shape_cast %200 : vector<8xf32> to vector<8x1xf32>
    %cst_76 = arith.constant 3.200000e+01 : f32
    %202 = vector.broadcast %cst_76 : f32 to vector<8x1xf32>
    %203 = arith.divf %201, %202 : vector<8x1xf32>
    %204 = vector.broadcast %203 : vector<8x1xf32> to vector<8x32xf32>
    %205 = arith.subf %197, %204 : vector<8x32xf32>
    %206 = arith.mulf %205, %205 : vector<8x32xf32>
    %cst_77 = arith.constant dense<0.000000e+00> : vector<8xf32>
    %207 = vector.multi_reduction <add>, %206, %cst_77 [1] : vector<8x32xf32> to vector<8xf32>
    %208 = vector.shape_cast %207 : vector<8xf32> to vector<8x1xf32>
    %cst_78 = arith.constant 3.200000e+01 : f32
    %209 = vector.broadcast %cst_78 : f32 to vector<8x1xf32>
    %210 = arith.divf %208, %209 : vector<8x1xf32>
    %211 = vector.broadcast %203 : vector<8x1xf32> to vector<8x32xf32>
    %212 = arith.subf %197, %211 : vector<8x32xf32>
    %cst_79 = arith.constant 9.99999974E-6 : f32
    %213 = vector.broadcast %cst_79 : f32 to vector<8x1xf32>
    %214 = arith.addf %210, %213 : vector<8x1xf32>
    %215 = math.rsqrt %214 : vector<8x1xf32>
    %216 = vector.broadcast %215 : vector<8x1xf32> to vector<8x32xf32>
    %217 = arith.mulf %212, %216 : vector<8x32xf32>
    %218 = vector.broadcast %198 : vector<1x32xf32> to vector<8x32xf32>
    %219 = arith.mulf %217, %218 : vector<8x32xf32>
    %220 = vector.broadcast %199 : vector<1x32xf32> to vector<8x32xf32>
    %221 = arith.addf %219, %220 : vector<8x32xf32>
    %c0_80 = arith.constant 0 : index
    %c0_81 = arith.constant 0 : index
    %c0_82 = arith.constant 0 : index
    %222 = vector.load %arg23[%c0_80, %c0_81, %c0_82] : memref<1x8x32xf32, #tpu.memory_space<vmem>>, vector<1x8x32xf32>
    %223 = vector.shape_cast %222 : vector<1x8x32xf32> to vector<8x32xf32>
    %224 = vector.shape_cast %221 : vector<8x32xf32> to vector<1x8x32xf32>
    tpu.vector_store %arg23[%c0_80, %c0_81, %c0_82], %224 {strides = array<i32>} : memref<1x8x32xf32, #tpu.memory_space<vmem>>, vector<1x8x32xf32>,
    return
  }
  func.func @transform_0(%arg0: i32) -> (i32, i32, i32) {
    %c0_i32 = arith.constant 0 : i32
    %c0_i32_0 = arith.constant 0 : i32
    %c0_i32_1 = arith.constant 0 : i32
    return %arg0, %c0_i32, %c0_i32_0 : i32, i32, i32
  }
  func.func @transform_1(%arg0: i32) -> (i32, i32, i32) {
    %c0_i32 = arith.constant 0 : i32
    %c0_i32_0 = arith.constant 0 : i32
    %c0_i32_1 = arith.constant 0 : i32
    return %arg0, %c0_i32, %c0_i32_0 : i32, i32, i32
  }
  func.func @transform_2(%arg0: i32) -> (i32, i32) {
    %c0_i32 = arith.constant 0 : i32
    %c0_i32_0 = arith.constant 0 : i32
    %c0_i32_1 = arith.constant 0 : i32
    return %c0_i32, %c0_i32_0 : i32, i32
  }
  func.func @transform_3(%arg0: i32) -> (i32, i32) {
    %c0_i32 = arith.constant 0 : i32
    %c0_i32_0 = arith.constant 0 : i32
    %c0_i32_1 = arith.constant 0 : i32
    return %c0_i32, %c0_i32_0 : i32, i32
  }
  func.func @transform_4(%arg0: i32) -> (i32, i32, i32) {
    %c0_i32 = arith.constant 0 : i32
    %c0_i32_0 = arith.constant 0 : i32
    %c0_i32_1 = arith.constant 0 : i32
    %c0_i32_2 = arith.constant 0 : i32
    return %c0_i32, %c0_i32_0, %c0_i32_1 : i32, i32, i32
  }
  func.func @transform_5(%arg0: i32) -> (i32, i32) {
    %c0_i32 = arith.constant 0 : i32
    %c0_i32_0 = arith.constant 0 : i32
    %c0_i32_1 = arith.constant 0 : i32
    return %c0_i32, %c0_i32_0 : i32, i32
  }
  func.func @transform_6(%arg0: i32) -> (i32, i32) {
    %c0_i32 = arith.constant 0 : i32
    %c0_i32_0 = arith.constant 0 : i32
    %c0_i32_1 = arith.constant 0 : i32
    return %c0_i32, %c0_i32_0 : i32, i32
  }
  func.func @transform_7(%arg0: i32) -> (i32, i32) {
    %c0_i32 = arith.constant 0 : i32
    %c0_i32_0 = arith.constant 0 : i32
    %c0_i32_1 = arith.constant 0 : i32
    return %c0_i32, %c0_i32_0 : i32, i32
  }
  func.func @transform_8(%arg0: i32) -> (i32, i32) {
    %c0_i32 = arith.constant 0 : i32
    %c0_i32_0 = arith.constant 0 : i32
    %c0_i32_1 = arith.constant 0 : i32
    return %c0_i32, %c0_i32_0 : i32, i32
  }
  func.func @transform_9(%arg0: i32) -> (i32, i32) {
    %c0_i32 = arith.constant 0 : i32
    %c0_i32_0 = arith.constant 0 : i32
    %c0_i32_1 = arith.constant 0 : i32
    return %c0_i32, %c0_i32_0 : i32, i32
  }
  func.func @transform_10(%arg0: i32) -> (i32, i32) {
    %c0_i32 = arith.constant 0 : i32
    %c0_i32_0 = arith.constant 0 : i32
    %c0_i32_1 = arith.constant 0 : i32
    return %c0_i32, %c0_i32_0 : i32, i32
  }
  func.func @transform_11(%arg0: i32) -> (i32, i32) {
    %c0_i32 = arith.constant 0 : i32
    %c0_i32_0 = arith.constant 0 : i32
    %c0_i32_1 = arith.constant 0 : i32
    return %c0_i32, %c0_i32_0 : i32, i32
  }
  func.func @transform_12(%arg0: i32) -> (i32, i32, i32) {
    %c0_i32 = arith.constant 0 : i32
    %c0_i32_0 = arith.constant 0 : i32
    %c0_i32_1 = arith.constant 0 : i32
    %c0_i32_2 = arith.constant 0 : i32
    return %c0_i32, %c0_i32_0, %c0_i32_1 : i32, i32, i32
  }
  func.func @transform_13(%arg0: i32) -> (i32, i32) {
    %c0_i32 = arith.constant 0 : i32
    %c0_i32_0 = arith.constant 0 : i32
    %c0_i32_1 = arith.constant 0 : i32
    return %c0_i32, %c0_i32_0 : i32, i32
  }
  func.func @transform_14(%arg0: i32) -> (i32, i32) {
    %c0_i32 = arith.constant 0 : i32
    %c0_i32_0 = arith.constant 0 : i32
    %c0_i32_1 = arith.constant 0 : i32
    return %c0_i32, %c0_i32_0 : i32, i32
  }
  func.func @transform_15(%arg0: i32) -> (i32, i32) {
    %c0_i32 = arith.constant 0 : i32
    %c0_i32_0 = arith.constant 0 : i32
    %c0_i32_1 = arith.constant 0 : i32
    return %c0_i32, %c0_i32_0 : i32, i32
  }
  func.func @transform_16(%arg0: i32) -> (i32, i32) {
    %c0_i32 = arith.constant 0 : i32
    %c0_i32_0 = arith.constant 0 : i32
    %c0_i32_1 = arith.constant 0 : i32
    return %c0_i32, %c0_i32_0 : i32, i32
  }
  func.func @transform_17(%arg0: i32) -> (i32, i32) {
    %c0_i32 = arith.constant 0 : i32
    %c0_i32_0 = arith.constant 0 : i32
    %c0_i32_1 = arith.constant 0 : i32
    return %c0_i32, %c0_i32_0 : i32, i32
  }
  func.func @transform_18(%arg0: i32) -> (i32, i32) {
    %c0_i32 = arith.constant 0 : i32
    %c0_i32_0 = arith.constant 0 : i32
    %c0_i32_1 = arith.constant 0 : i32
    return %c0_i32, %c0_i32_0 : i32, i32
  }
  func.func @transform_19(%arg0: i32) -> (i32, i32) {
    %c0_i32 = arith.constant 0 : i32
    %c0_i32_0 = arith.constant 0 : i32
    %c0_i32_1 = arith.constant 0 : i32
    return %c0_i32, %c0_i32_0 : i32, i32
  }
  func.func @transform_20(%arg0: i32) -> (i32, i32) {
    %c0_i32 = arith.constant 0 : i32
    %c0_i32_0 = arith.constant 0 : i32
    %c0_i32_1 = arith.constant 0 : i32
    return %c0_i32, %c0_i32_0 : i32, i32
  }
  func.func @transform_21(%arg0: i32) -> (i32, i32) {
    %c0_i32 = arith.constant 0 : i32
    %c0_i32_0 = arith.constant 0 : i32
    %c0_i32_1 = arith.constant 0 : i32
    return %c0_i32, %c0_i32_0 : i32, i32
  }
  func.func @transform_22(%arg0: i32) -> (i32, i32, i32) {
    %c0_i32 = arith.constant 0 : i32
    %c0_i32_0 = arith.constant 0 : i32
    %c0_i32_1 = arith.constant 0 : i32
    return %arg0, %c0_i32, %c0_i32_0 : i32, i32, i32
  }
}

module attributes {stable_mosaic.version = 11 : i64} {
  func.func @_decoder_layer_head_kernel(%arg0: i32, %arg1: memref<1x8x32xf32, #tpu.memory_space<vmem>>, %arg2: memref<1x8x32xf32, #tpu.memory_space<vmem>>, %arg3: memref<32x96xbf16, #tpu.memory_space<vmem>>, %arg4: memref<1x96xf32, #tpu.memory_space<vmem>>, %arg5: memref<4x8x32xbf16, #tpu.memory_space<vmem>>, %arg6: memref<1x32xf32, #tpu.memory_space<vmem>>, %arg7: memref<1x32xf32, #tpu.memory_space<vmem>>, %arg8: memref<1x32xf32, #tpu.memory_space<vmem>>, %arg9: memref<32x32xbf16, #tpu.memory_space<vmem>>, %arg10: memref<1x32xf32, #tpu.memory_space<vmem>>, %arg11: memref<32x64xbf16, #tpu.memory_space<vmem>>, %arg12: memref<1x64xf32, #tpu.memory_space<vmem>>, %arg13: memref<4x8x32xbf16, #tpu.memory_space<vmem>>, %arg14: memref<1x32xf32, #tpu.memory_space<vmem>>, %arg15: memref<1x32xf32, #tpu.memory_space<vmem>>, %arg16: memref<1x32xf32, #tpu.memory_space<vmem>>, %arg17: memref<32x128xbf16, #tpu.memory_space<vmem>>, %arg18: memref<1x128xf32, #tpu.memory_space<vmem>>, %arg19: memref<128x32xbf16, #tpu.memory_space<vmem>>, %arg20: memref<1x32xf32, #tpu.memory_space<vmem>>, %arg21: memref<1x32xf32, #tpu.memory_space<vmem>>, %arg22: memref<1x32xf32, #tpu.memory_space<vmem>>, %arg23: memref<1x32xbf16, #tpu.memory_space<vmem>>, %arg24: memref<1x1xf32, #tpu.memory_space<vmem>>, %arg25: memref<1x1x8xf32, #tpu.memory_space<vmem>>) attributes {dimension_semantics = [#tpu.dimension_semantics<parallel>], iteration_bounds = array<i64: 2>, scalar_prefetch = 0 : i64, scratch_operands = 0 : i64, tpu.core_type = #tpu.core_type<tc>, window_params = [{transform_indices = @transform_0, window_bounds = array<i64: 1, 8, 32>}, {transform_indices = @transform_1, window_bounds = array<i64: 1, 8, 32>}, {pipeline_mode = #tpu.pipeline_mode<synchronous>, transform_indices = @transform_2, window_bounds = array<i64: 32, 96>}, {pipeline_mode = #tpu.pipeline_mode<synchronous>, transform_indices = @transform_3, window_bounds = array<i64: 1, 96>}, {pipeline_mode = #tpu.pipeline_mode<synchronous>, transform_indices = @transform_4, window_bounds = array<i64: 4, 8, 32>}, {pipeline_mode = #tpu.pipeline_mode<synchronous>, transform_indices = @transform_5, window_bounds = array<i64: 1, 32>}, {pipeline_mode = #tpu.pipeline_mode<synchronous>, transform_indices = @transform_6, window_bounds = array<i64: 1, 32>}, {pipeline_mode = #tpu.pipeline_mode<synchronous>, transform_indices = @transform_7, window_bounds = array<i64: 1, 32>}, {pipeline_mode = #tpu.pipeline_mode<synchronous>, transform_indices = @transform_8, window_bounds = array<i64: 32, 32>}, {pipeline_mode = #tpu.pipeline_mode<synchronous>, transform_indices = @transform_9, window_bounds = array<i64: 1, 32>}, {pipeline_mode = #tpu.pipeline_mode<synchronous>, transform_indices = @transform_10, window_bounds = array<i64: 32, 64>}, {pipeline_mode = #tpu.pipeline_mode<synchronous>, transform_indices = @transform_11, window_bounds = array<i64: 1, 64>}, {pipeline_mode = #tpu.pipeline_mode<synchronous>, transform_indices = @transform_12, window_bounds = array<i64: 4, 8, 32>}, {pipeline_mode = #tpu.pipeline_mode<synchronous>, transform_indices = @transform_13, window_bounds = array<i64: 1, 32>}, {pipeline_mode = #tpu.pipeline_mode<synchronous>, transform_indices = @transform_14, window_bounds = array<i64: 1, 32>}, {pipeline_mode = #tpu.pipeline_mode<synchronous>, transform_indices = @transform_15, window_bounds = array<i64: 1, 32>}, {pipeline_mode = #tpu.pipeline_mode<synchronous>, transform_indices = @transform_16, window_bounds = array<i64: 32, 128>}, {pipeline_mode = #tpu.pipeline_mode<synchronous>, transform_indices = @transform_17, window_bounds = array<i64: 1, 128>}, {pipeline_mode = #tpu.pipeline_mode<synchronous>, transform_indices = @transform_18, window_bounds = array<i64: 128, 32>}, {pipeline_mode = #tpu.pipeline_mode<synchronous>, transform_indices = @transform_19, window_bounds = array<i64: 1, 32>}, {pipeline_mode = #tpu.pipeline_mode<synchronous>, transform_indices = @transform_20, window_bounds = array<i64: 1, 32>}, {pipeline_mode = #tpu.pipeline_mode<synchronous>, transform_indices = @transform_21, window_bounds = array<i64: 1, 32>}, {pipeline_mode = #tpu.pipeline_mode<synchronous>, transform_indices = @transform_22, window_bounds = array<i64: 1, 32>}, {pipeline_mode = #tpu.pipeline_mode<synchronous>, transform_indices = @transform_23, window_bounds = array<i64: 1, 1>}, {transform_indices = @transform_24, window_bounds = array<i64: 1, 1, 8>}]} {
    %c0 = arith.constant 0 : index
    %c0_0 = arith.constant 0 : index
    %c0_1 = arith.constant 0 : index
    %0 = vector.load %arg1[%c0, %c0_0, %c0_1] : memref<1x8x32xf32, #tpu.memory_space<vmem>>, vector<1x8x32xf32>
    %1 = vector.shape_cast %0 : vector<1x8x32xf32> to vector<8x32xf32>
    %c0_2 = arith.constant 0 : index
    %c0_3 = arith.constant 0 : index
    %c0_4 = arith.constant 0 : index
    %2 = vector.load %arg2[%c0_2, %c0_3, %c0_4] : memref<1x8x32xf32, #tpu.memory_space<vmem>>, vector<1x8x32xf32>
    %3 = vector.shape_cast %2 : vector<1x8x32xf32> to vector<8x32xf32>
    %4 = arith.truncf %1 : vector<8x32xf32> to vector<8x32xbf16>
    %c0_5 = arith.constant 0 : index
    %c0_6 = arith.constant 0 : index
    %5 = vector.load %arg3[%c0_5, %c0_6] : memref<32x96xbf16, #tpu.memory_space<vmem>>, vector<32x96xbf16>
    %cst = arith.constant dense<0.000000e+00> : vector<8x96xf32>
    %6 = tpu.matmul %4, %5, %cst {dimension_numbers = #tpu.dot_dimension_numbers<[1], [0], [0], [1], [0, 0, 1, 1], [], []>} : vector<8x32xbf16>, vector<32x96xbf16>, vector<8x96xf32> -> vector<8x96xf32>
    %c0_7 = arith.constant 0 : index
    %c0_8 = arith.constant 0 : index
    %7 = vector.load %arg4[%c0_7, %c0_8] : memref<1x96xf32, #tpu.memory_space<vmem>>, vector<1x96xf32>
    %8 = vector.broadcast %7 : vector<1x96xf32> to vector<8x96xf32>
    %9 = arith.addf %6, %8 : vector<8x96xf32>
    %10 = vector.extract_strided_slice %9 {offsets = [0, 0], sizes = [8, 32], strides = [1, 1]} : vector<8x96xf32> to vector<8x32xf32>
    %11 = vector.extract_strided_slice %9 {offsets = [0, 32], sizes = [8, 32], strides = [1, 1]} : vector<8x96xf32> to vector<8x32xf32>
    %12 = vector.extract_strided_slice %9 {offsets = [0, 64], sizes = [8, 32], strides = [1, 1]} : vector<8x96xf32> to vector<8x32xf32>
    %13 = vector.extract_strided_slice %10 {offsets = [0, 0], sizes = [8, 8], strides = [1, 1]} : vector<8x32xf32> to vector<8x8xf32>
    %14 = vector.shape_cast %13 : vector<8x8xf32> to vector<1x8x8xf32>
    %15 = vector.extract_strided_slice %10 {offsets = [0, 8], sizes = [8, 8], strides = [1, 1]} : vector<8x32xf32> to vector<8x8xf32>
    %16 = vector.shape_cast %15 : vector<8x8xf32> to vector<1x8x8xf32>
    %17 = vector.extract_strided_slice %10 {offsets = [0, 16], sizes = [8, 8], strides = [1, 1]} : vector<8x32xf32> to vector<8x8xf32>
    %18 = vector.shape_cast %17 : vector<8x8xf32> to vector<1x8x8xf32>
    %19 = vector.extract_strided_slice %10 {offsets = [0, 24], sizes = [8, 8], strides = [1, 1]} : vector<8x32xf32> to vector<8x8xf32>
    %20 = vector.shape_cast %19 : vector<8x8xf32> to vector<1x8x8xf32>
    %21 = tpu.concatenate %14, %16, %18, %20 in 0 : vector<1x8x8xf32>, vector<1x8x8xf32>, vector<1x8x8xf32>, vector<1x8x8xf32> -> vector<4x8x8xf32>
    %22 = arith.truncf %21 : vector<4x8x8xf32> to vector<4x8x8xbf16>
    %23 = vector.extract_strided_slice %11 {offsets = [0, 0], sizes = [8, 8], strides = [1, 1]} : vector<8x32xf32> to vector<8x8xf32>
    %24 = vector.shape_cast %23 : vector<8x8xf32> to vector<1x8x8xf32>
    %25 = vector.extract_strided_slice %11 {offsets = [0, 8], sizes = [8, 8], strides = [1, 1]} : vector<8x32xf32> to vector<8x8xf32>
    %26 = vector.shape_cast %25 : vector<8x8xf32> to vector<1x8x8xf32>
    %27 = vector.extract_strided_slice %11 {offsets = [0, 16], sizes = [8, 8], strides = [1, 1]} : vector<8x32xf32> to vector<8x8xf32>
    %28 = vector.shape_cast %27 : vector<8x8xf32> to vector<1x8x8xf32>
    %29 = vector.extract_strided_slice %11 {offsets = [0, 24], sizes = [8, 8], strides = [1, 1]} : vector<8x32xf32> to vector<8x8xf32>
    %30 = vector.shape_cast %29 : vector<8x8xf32> to vector<1x8x8xf32>
    %31 = tpu.concatenate %24, %26, %28, %30 in 0 : vector<1x8x8xf32>, vector<1x8x8xf32>, vector<1x8x8xf32>, vector<1x8x8xf32> -> vector<4x8x8xf32>
    %32 = arith.truncf %31 : vector<4x8x8xf32> to vector<4x8x8xbf16>
    %33 = vector.extract_strided_slice %12 {offsets = [0, 0], sizes = [8, 8], strides = [1, 1]} : vector<8x32xf32> to vector<8x8xf32>
    %34 = vector.shape_cast %33 : vector<8x8xf32> to vector<1x8x8xf32>
    %35 = vector.extract_strided_slice %12 {offsets = [0, 8], sizes = [8, 8], strides = [1, 1]} : vector<8x32xf32> to vector<8x8xf32>
    %36 = vector.shape_cast %35 : vector<8x8xf32> to vector<1x8x8xf32>
    %37 = vector.extract_strided_slice %12 {offsets = [0, 16], sizes = [8, 8], strides = [1, 1]} : vector<8x32xf32> to vector<8x8xf32>
    %38 = vector.shape_cast %37 : vector<8x8xf32> to vector<1x8x8xf32>
    %39 = vector.extract_strided_slice %12 {offsets = [0, 24], sizes = [8, 8], strides = [1, 1]} : vector<8x32xf32> to vector<8x8xf32>
    %40 = vector.shape_cast %39 : vector<8x8xf32> to vector<1x8x8xf32>
    %41 = tpu.concatenate %34, %36, %38, %40 in 0 : vector<1x8x8xf32>, vector<1x8x8xf32>, vector<1x8x8xf32>, vector<1x8x8xf32> -> vector<4x8x8xf32>
    %42 = arith.truncf %41 : vector<4x8x8xf32> to vector<4x8x8xbf16>
    %cst_9 = arith.constant dense<0.000000e+00> : vector<4x8x8xf32>
    %43 = tpu.matmul %22, %32, %cst_9 {dimension_numbers = #tpu.dot_dimension_numbers<[2], [2], [1], [1], [0, 0, 0, 1, 1, 1], [0], [0]>} : vector<4x8x8xbf16>, vector<4x8x8xbf16>, vector<4x8x8xf32> -> vector<4x8x8xf32>
    %44 = tpu.iota {dimensions = array<i32: 0>} : vector<8x8xi32>
    %45 = tpu.iota {dimensions = array<i32: 1>} : vector<8x8xi32>
    %46 = arith.cmpi sge, %44, %45 : vector<8x8xi32>
    %47 = vector.shape_cast %46 : vector<8x8xi1> to vector<1x8x8xi1>
    %cst_10 = arith.constant -1.000000e+30 : f32
    %48 = vector.shape_cast %47 : vector<1x8x8xi1> to vector<1x8x8xi1>
    %49 = vector.broadcast %48 : vector<1x8x8xi1> to vector<4x8x8xi1>
    %50 = vector.broadcast %cst_10 : f32 to vector<4x8x8xf32>
    %51 = arith.select %49, %43, %50 : vector<4x8x8xi1>, vector<4x8x8xf32>
    %cst_11 = arith.constant dense<0xFF800000> : vector<4x8xf32>
    %52 = vector.multi_reduction <maximumf>, %51, %cst_11 [2] : vector<4x8x8xf32> to vector<4x8xf32>
    %53 = vector.shape_cast %52 : vector<4x8xf32> to vector<4x8x1xf32>
    %54 = vector.broadcast %53 : vector<4x8x1xf32> to vector<4x8x8xf32>
    %55 = arith.subf %51, %54 : vector<4x8x8xf32>
    %56 = math.exp %55 : vector<4x8x8xf32>
    %cst_12 = arith.constant dense<0.000000e+00> : vector<4x8xf32>
    %57 = vector.multi_reduction <add>, %56, %cst_12 [2] : vector<4x8x8xf32> to vector<4x8xf32>
    %58 = vector.shape_cast %57 : vector<4x8xf32> to vector<4x8x1xf32>
    %59 = vector.broadcast %58 : vector<4x8x1xf32> to vector<4x8x8xf32>
    %60 = arith.divf %56, %59 : vector<4x8x8xf32>
    %61 = arith.truncf %60 : vector<4x8x8xf32> to vector<4x8x8xbf16>
    %cst_13 = arith.constant dense<0.000000e+00> : vector<4x8x8xf32>
    %62 = tpu.matmul %61, %42, %cst_13 {dimension_numbers = #tpu.dot_dimension_numbers<[2], [1], [1], [2], [0, 0, 0, 1, 1, 2], [0], [0]>} : vector<4x8x8xbf16>, vector<4x8x8xbf16>, vector<4x8x8xf32> -> vector<4x8x8xf32>
    %63 = arith.truncf %62 : vector<4x8x8xf32> to vector<4x8x8xbf16>
    %c0_14 = arith.constant 0 : index
    %c0_15 = arith.constant 0 : index
    %c0_16 = arith.constant 0 : index
    %64 = vector.load %arg5[%c0_14, %c0_15, %c0_16] : memref<4x8x32xbf16, #tpu.memory_space<vmem>>, vector<4x8x32xbf16>
    %cst_17 = arith.constant dense<0.000000e+00> : vector<4x8x32xf32>
    %65 = tpu.matmul %63, %64, %cst_17 {dimension_numbers = #tpu.dot_dimension_numbers<[2], [1], [1], [2], [0, 0, 0, 1, 1, 2], [0], [0]>} : vector<4x8x8xbf16>, vector<4x8x32xbf16>, vector<4x8x32xf32> -> vector<4x8x32xf32>
    %cst_18 = arith.constant dense<0.000000e+00> : vector<8x32xf32>
    %66 = vector.multi_reduction <add>, %65, %cst_18 [0] : vector<4x8x32xf32> to vector<8x32xf32>
    %c0_19 = arith.constant 0 : index
    %c0_20 = arith.constant 0 : index
    %67 = vector.load %arg6[%c0_19, %c0_20] : memref<1x32xf32, #tpu.memory_space<vmem>>, vector<1x32xf32>
    %68 = vector.broadcast %67 : vector<1x32xf32> to vector<8x32xf32>
    %69 = arith.addf %66, %68 : vector<8x32xf32>
    %70 = arith.addf %1, %69 : vector<8x32xf32>
    %c0_21 = arith.constant 0 : index
    %c0_22 = arith.constant 0 : index
    %71 = vector.load %arg7[%c0_21, %c0_22] : memref<1x32xf32, #tpu.memory_space<vmem>>, vector<1x32xf32>
    %c0_23 = arith.constant 0 : index
    %c0_24 = arith.constant 0 : index
    %72 = vector.load %arg8[%c0_23, %c0_24] : memref<1x32xf32, #tpu.memory_space<vmem>>, vector<1x32xf32>
    %cst_25 = arith.constant dense<0.000000e+00> : vector<8xf32>
    %73 = vector.multi_reduction <add>, %70, %cst_25 [1] : vector<8x32xf32> to vector<8xf32>
    %74 = vector.shape_cast %73 : vector<8xf32> to vector<8x1xf32>
    %cst_26 = arith.constant 3.200000e+01 : f32
    %75 = vector.broadcast %cst_26 : f32 to vector<8x1xf32>
    %76 = arith.divf %74, %75 : vector<8x1xf32>
    %77 = vector.broadcast %76 : vector<8x1xf32> to vector<8x32xf32>
    %78 = arith.subf %70, %77 : vector<8x32xf32>
    %79 = arith.mulf %78, %78 : vector<8x32xf32>
    %cst_27 = arith.constant dense<0.000000e+00> : vector<8xf32>
    %80 = vector.multi_reduction <add>, %79, %cst_27 [1] : vector<8x32xf32> to vector<8xf32>
    %81 = vector.shape_cast %80 : vector<8xf32> to vector<8x1xf32>
    %cst_28 = arith.constant 3.200000e+01 : f32
    %82 = vector.broadcast %cst_28 : f32 to vector<8x1xf32>
    %83 = arith.divf %81, %82 : vector<8x1xf32>
    %84 = vector.broadcast %76 : vector<8x1xf32> to vector<8x32xf32>
    %85 = arith.subf %70, %84 : vector<8x32xf32>
    %cst_29 = arith.constant 9.99999974E-6 : f32
    %86 = vector.broadcast %cst_29 : f32 to vector<8x1xf32>
    %87 = arith.addf %83, %86 : vector<8x1xf32>
    %88 = math.rsqrt %87 : vector<8x1xf32>
    %89 = vector.broadcast %88 : vector<8x1xf32> to vector<8x32xf32>
    %90 = arith.mulf %85, %89 : vector<8x32xf32>
    %91 = vector.broadcast %71 : vector<1x32xf32> to vector<8x32xf32>
    %92 = arith.mulf %90, %91 : vector<8x32xf32>
    %93 = vector.broadcast %72 : vector<1x32xf32> to vector<8x32xf32>
    %94 = arith.addf %92, %93 : vector<8x32xf32>
    %95 = arith.truncf %94 : vector<8x32xf32> to vector<8x32xbf16>
    %c0_30 = arith.constant 0 : index
    %c0_31 = arith.constant 0 : index
    %96 = vector.load %arg9[%c0_30, %c0_31] : memref<32x32xbf16, #tpu.memory_space<vmem>>, vector<32x32xbf16>
    %cst_32 = arith.constant dense<0.000000e+00> : vector<8x32xf32>
    %97 = tpu.matmul %95, %96, %cst_32 {dimension_numbers = #tpu.dot_dimension_numbers<[1], [0], [0], [1], [0, 0, 1, 1], [], []>} : vector<8x32xbf16>, vector<32x32xbf16>, vector<8x32xf32> -> vector<8x32xf32>
    %c0_33 = arith.constant 0 : index
    %c0_34 = arith.constant 0 : index
    %98 = vector.load %arg10[%c0_33, %c0_34] : memref<1x32xf32, #tpu.memory_space<vmem>>, vector<1x32xf32>
    %99 = vector.broadcast %98 : vector<1x32xf32> to vector<8x32xf32>
    %100 = arith.addf %97, %99 : vector<8x32xf32>
    %101 = arith.truncf %3 : vector<8x32xf32> to vector<8x32xbf16>
    %c0_35 = arith.constant 0 : index
    %c0_36 = arith.constant 0 : index
    %102 = vector.load %arg11[%c0_35, %c0_36] : memref<32x64xbf16, #tpu.memory_space<vmem>>, vector<32x64xbf16>
    %cst_37 = arith.constant dense<0.000000e+00> : vector<8x64xf32>
    %103 = tpu.matmul %101, %102, %cst_37 {dimension_numbers = #tpu.dot_dimension_numbers<[1], [0], [0], [1], [0, 0, 1, 1], [], []>} : vector<8x32xbf16>, vector<32x64xbf16>, vector<8x64xf32> -> vector<8x64xf32>
    %c0_38 = arith.constant 0 : index
    %c0_39 = arith.constant 0 : index
    %104 = vector.load %arg12[%c0_38, %c0_39] : memref<1x64xf32, #tpu.memory_space<vmem>>, vector<1x64xf32>
    %105 = vector.broadcast %104 : vector<1x64xf32> to vector<8x64xf32>
    %106 = arith.addf %103, %105 : vector<8x64xf32>
    %107 = vector.extract_strided_slice %106 {offsets = [0, 0], sizes = [8, 32], strides = [1, 1]} : vector<8x64xf32> to vector<8x32xf32>
    %108 = vector.extract_strided_slice %106 {offsets = [0, 32], sizes = [8, 32], strides = [1, 1]} : vector<8x64xf32> to vector<8x32xf32>
    %109 = vector.extract_strided_slice %100 {offsets = [0, 0], sizes = [8, 8], strides = [1, 1]} : vector<8x32xf32> to vector<8x8xf32>
    %110 = vector.shape_cast %109 : vector<8x8xf32> to vector<1x8x8xf32>
    %111 = vector.extract_strided_slice %100 {offsets = [0, 8], sizes = [8, 8], strides = [1, 1]} : vector<8x32xf32> to vector<8x8xf32>
    %112 = vector.shape_cast %111 : vector<8x8xf32> to vector<1x8x8xf32>
    %113 = vector.extract_strided_slice %100 {offsets = [0, 16], sizes = [8, 8], strides = [1, 1]} : vector<8x32xf32> to vector<8x8xf32>
    %114 = vector.shape_cast %113 : vector<8x8xf32> to vector<1x8x8xf32>
    %115 = vector.extract_strided_slice %100 {offsets = [0, 24], sizes = [8, 8], strides = [1, 1]} : vector<8x32xf32> to vector<8x8xf32>
    %116 = vector.shape_cast %115 : vector<8x8xf32> to vector<1x8x8xf32>
    %117 = tpu.concatenate %110, %112, %114, %116 in 0 : vector<1x8x8xf32>, vector<1x8x8xf32>, vector<1x8x8xf32>, vector<1x8x8xf32> -> vector<4x8x8xf32>
    %118 = arith.truncf %117 : vector<4x8x8xf32> to vector<4x8x8xbf16>
    %119 = vector.extract_strided_slice %107 {offsets = [0, 0], sizes = [8, 8], strides = [1, 1]} : vector<8x32xf32> to vector<8x8xf32>
    %120 = vector.shape_cast %119 : vector<8x8xf32> to vector<1x8x8xf32>
    %121 = vector.extract_strided_slice %107 {offsets = [0, 8], sizes = [8, 8], strides = [1, 1]} : vector<8x32xf32> to vector<8x8xf32>
    %122 = vector.shape_cast %121 : vector<8x8xf32> to vector<1x8x8xf32>
    %123 = vector.extract_strided_slice %107 {offsets = [0, 16], sizes = [8, 8], strides = [1, 1]} : vector<8x32xf32> to vector<8x8xf32>
    %124 = vector.shape_cast %123 : vector<8x8xf32> to vector<1x8x8xf32>
    %125 = vector.extract_strided_slice %107 {offsets = [0, 24], sizes = [8, 8], strides = [1, 1]} : vector<8x32xf32> to vector<8x8xf32>
    %126 = vector.shape_cast %125 : vector<8x8xf32> to vector<1x8x8xf32>
    %127 = tpu.concatenate %120, %122, %124, %126 in 0 : vector<1x8x8xf32>, vector<1x8x8xf32>, vector<1x8x8xf32>, vector<1x8x8xf32> -> vector<4x8x8xf32>
    %128 = arith.truncf %127 : vector<4x8x8xf32> to vector<4x8x8xbf16>
    %129 = vector.extract_strided_slice %108 {offsets = [0, 0], sizes = [8, 8], strides = [1, 1]} : vector<8x32xf32> to vector<8x8xf32>
    %130 = vector.shape_cast %129 : vector<8x8xf32> to vector<1x8x8xf32>
    %131 = vector.extract_strided_slice %108 {offsets = [0, 8], sizes = [8, 8], strides = [1, 1]} : vector<8x32xf32> to vector<8x8xf32>
    %132 = vector.shape_cast %131 : vector<8x8xf32> to vector<1x8x8xf32>
    %133 = vector.extract_strided_slice %108 {offsets = [0, 16], sizes = [8, 8], strides = [1, 1]} : vector<8x32xf32> to vector<8x8xf32>
    %134 = vector.shape_cast %133 : vector<8x8xf32> to vector<1x8x8xf32>
    %135 = vector.extract_strided_slice %108 {offsets = [0, 24], sizes = [8, 8], strides = [1, 1]} : vector<8x32xf32> to vector<8x8xf32>
    %136 = vector.shape_cast %135 : vector<8x8xf32> to vector<1x8x8xf32>
    %137 = tpu.concatenate %130, %132, %134, %136 in 0 : vector<1x8x8xf32>, vector<1x8x8xf32>, vector<1x8x8xf32>, vector<1x8x8xf32> -> vector<4x8x8xf32>
    %138 = arith.truncf %137 : vector<4x8x8xf32> to vector<4x8x8xbf16>
    %cst_40 = arith.constant dense<0.000000e+00> : vector<4x8x8xf32>
    %139 = tpu.matmul %118, %128, %cst_40 {dimension_numbers = #tpu.dot_dimension_numbers<[2], [2], [1], [1], [0, 0, 0, 1, 1, 1], [0], [0]>} : vector<4x8x8xbf16>, vector<4x8x8xbf16>, vector<4x8x8xf32> -> vector<4x8x8xf32>
    %cst_41 = arith.constant dense<0xFF800000> : vector<4x8xf32>
    %140 = vector.multi_reduction <maximumf>, %139, %cst_41 [2] : vector<4x8x8xf32> to vector<4x8xf32>
    %141 = vector.shape_cast %140 : vector<4x8xf32> to vector<4x8x1xf32>
    %142 = vector.broadcast %141 : vector<4x8x1xf32> to vector<4x8x8xf32>
    %143 = arith.subf %139, %142 : vector<4x8x8xf32>
    %144 = math.exp %143 : vector<4x8x8xf32>
    %cst_42 = arith.constant dense<0.000000e+00> : vector<4x8xf32>
    %145 = vector.multi_reduction <add>, %144, %cst_42 [2] : vector<4x8x8xf32> to vector<4x8xf32>
    %146 = vector.shape_cast %145 : vector<4x8xf32> to vector<4x8x1xf32>
    %147 = vector.broadcast %146 : vector<4x8x1xf32> to vector<4x8x8xf32>
    %148 = arith.divf %144, %147 : vector<4x8x8xf32>
    %149 = arith.truncf %148 : vector<4x8x8xf32> to vector<4x8x8xbf16>
    %cst_43 = arith.constant dense<0.000000e+00> : vector<4x8x8xf32>
    %150 = tpu.matmul %149, %138, %cst_43 {dimension_numbers = #tpu.dot_dimension_numbers<[2], [1], [1], [2], [0, 0, 0, 1, 1, 2], [0], [0]>} : vector<4x8x8xbf16>, vector<4x8x8xbf16>, vector<4x8x8xf32> -> vector<4x8x8xf32>
    %151 = arith.truncf %150 : vector<4x8x8xf32> to vector<4x8x8xbf16>
    %c0_44 = arith.constant 0 : index
    %c0_45 = arith.constant 0 : index
    %c0_46 = arith.constant 0 : index
    %152 = vector.load %arg13[%c0_44, %c0_45, %c0_46] : memref<4x8x32xbf16, #tpu.memory_space<vmem>>, vector<4x8x32xbf16>
    %cst_47 = arith.constant dense<0.000000e+00> : vector<4x8x32xf32>
    %153 = tpu.matmul %151, %152, %cst_47 {dimension_numbers = #tpu.dot_dimension_numbers<[2], [1], [1], [2], [0, 0, 0, 1, 1, 2], [0], [0]>} : vector<4x8x8xbf16>, vector<4x8x32xbf16>, vector<4x8x32xf32> -> vector<4x8x32xf32>
    %cst_48 = arith.constant dense<0.000000e+00> : vector<8x32xf32>
    %154 = vector.multi_reduction <add>, %153, %cst_48 [0] : vector<4x8x32xf32> to vector<8x32xf32>
    %c0_49 = arith.constant 0 : index
    %c0_50 = arith.constant 0 : index
    %155 = vector.load %arg14[%c0_49, %c0_50] : memref<1x32xf32, #tpu.memory_space<vmem>>, vector<1x32xf32>
    %156 = vector.broadcast %155 : vector<1x32xf32> to vector<8x32xf32>
    %157 = arith.addf %154, %156 : vector<8x32xf32>
    %158 = arith.addf %94, %157 : vector<8x32xf32>
    %c0_51 = arith.constant 0 : index
    %c0_52 = arith.constant 0 : index
    %159 = vector.load %arg15[%c0_51, %c0_52] : memref<1x32xf32, #tpu.memory_space<vmem>>, vector<1x32xf32>
    %c0_53 = arith.constant 0 : index
    %c0_54 = arith.constant 0 : index
    %160 = vector.load %arg16[%c0_53, %c0_54] : memref<1x32xf32, #tpu.memory_space<vmem>>, vector<1x32xf32>
    %cst_55 = arith.constant dense<0.000000e+00> : vector<8xf32>
    %161 = vector.multi_reduction <add>, %158, %cst_55 [1] : vector<8x32xf32> to vector<8xf32>
    %162 = vector.shape_cast %161 : vector<8xf32> to vector<8x1xf32>
    %cst_56 = arith.constant 3.200000e+01 : f32
    %163 = vector.broadcast %cst_56 : f32 to vector<8x1xf32>
    %164 = arith.divf %162, %163 : vector<8x1xf32>
    %165 = vector.broadcast %164 : vector<8x1xf32> to vector<8x32xf32>
    %166 = arith.subf %158, %165 : vector<8x32xf32>
    %167 = arith.mulf %166, %166 : vector<8x32xf32>
    %cst_57 = arith.constant dense<0.000000e+00> : vector<8xf32>
    %168 = vector.multi_reduction <add>, %167, %cst_57 [1] : vector<8x32xf32> to vector<8xf32>
    %169 = vector.shape_cast %168 : vector<8xf32> to vector<8x1xf32>
    %cst_58 = arith.constant 3.200000e+01 : f32
    %170 = vector.broadcast %cst_58 : f32 to vector<8x1xf32>
    %171 = arith.divf %169, %170 : vector<8x1xf32>
    %172 = vector.broadcast %164 : vector<8x1xf32> to vector<8x32xf32>
    %173 = arith.subf %158, %172 : vector<8x32xf32>
    %cst_59 = arith.constant 9.99999974E-6 : f32
    %174 = vector.broadcast %cst_59 : f32 to vector<8x1xf32>
    %175 = arith.addf %171, %174 : vector<8x1xf32>
    %176 = math.rsqrt %175 : vector<8x1xf32>
    %177 = vector.broadcast %176 : vector<8x1xf32> to vector<8x32xf32>
    %178 = arith.mulf %173, %177 : vector<8x32xf32>
    %179 = vector.broadcast %159 : vector<1x32xf32> to vector<8x32xf32>
    %180 = arith.mulf %178, %179 : vector<8x32xf32>
    %181 = vector.broadcast %160 : vector<1x32xf32> to vector<8x32xf32>
    %182 = arith.addf %180, %181 : vector<8x32xf32>
    %183 = arith.truncf %182 : vector<8x32xf32> to vector<8x32xbf16>
    %c0_60 = arith.constant 0 : index
    %c0_61 = arith.constant 0 : index
    %184 = vector.load %arg17[%c0_60, %c0_61] : memref<32x128xbf16, #tpu.memory_space<vmem>>, vector<32x128xbf16>
    %cst_62 = arith.constant dense<0.000000e+00> : vector<8x128xf32>
    %185 = tpu.matmul %183, %184, %cst_62 {dimension_numbers = #tpu.dot_dimension_numbers<[1], [0], [0], [1], [0, 0, 1, 1], [], []>} : vector<8x32xbf16>, vector<32x128xbf16>, vector<8x128xf32> -> vector<8x128xf32>
    %c0_63 = arith.constant 0 : index
    %c0_64 = arith.constant 0 : index
    %186 = vector.load %arg18[%c0_63, %c0_64] : memref<1x128xf32, #tpu.memory_space<vmem>>, vector<1x128xf32>
    %187 = vector.broadcast %186 : vector<1x128xf32> to vector<8x128xf32>
    %188 = arith.addf %185, %187 : vector<8x128xf32>
    %cst_65 = arith.constant 0.000000e+00 : f32
    %189 = vector.broadcast %cst_65 : f32 to vector<8x128xf32>
    %190 = arith.maximumf %188, %189 : vector<8x128xf32>
    %191 = arith.truncf %190 : vector<8x128xf32> to vector<8x128xbf16>
    %c0_66 = arith.constant 0 : index
    %c0_67 = arith.constant 0 : index
    %192 = vector.load %arg19[%c0_66, %c0_67] : memref<128x32xbf16, #tpu.memory_space<vmem>>, vector<128x32xbf16>
    %cst_68 = arith.constant dense<0.000000e+00> : vector<8x32xf32>
    %193 = tpu.matmul %191, %192, %cst_68 {dimension_numbers = #tpu.dot_dimension_numbers<[1], [0], [0], [1], [0, 0, 1, 1], [], []>} : vector<8x128xbf16>, vector<128x32xbf16>, vector<8x32xf32> -> vector<8x32xf32>
    %c0_69 = arith.constant 0 : index
    %c0_70 = arith.constant 0 : index
    %194 = vector.load %arg20[%c0_69, %c0_70] : memref<1x32xf32, #tpu.memory_space<vmem>>, vector<1x32xf32>
    %195 = vector.broadcast %194 : vector<1x32xf32> to vector<8x32xf32>
    %196 = arith.addf %193, %195 : vector<8x32xf32>
    %197 = arith.addf %182, %196 : vector<8x32xf32>
    %c0_71 = arith.constant 0 : index
    %c0_72 = arith.constant 0 : index
    %198 = vector.load %arg21[%c0_71, %c0_72] : memref<1x32xf32, #tpu.memory_space<vmem>>, vector<1x32xf32>
    %c0_73 = arith.constant 0 : index
    %c0_74 = arith.constant 0 : index
    %199 = vector.load %arg22[%c0_73, %c0_74] : memref<1x32xf32, #tpu.memory_space<vmem>>, vector<1x32xf32>
    %cst_75 = arith.constant dense<0.000000e+00> : vector<8xf32>
    %200 = vector.multi_reduction <add>, %197, %cst_75 [1] : vector<8x32xf32> to vector<8xf32>
    %201 = vector.shape_cast %200 : vector<8xf32> to vector<8x1xf32>
    %cst_76 = arith.constant 3.200000e+01 : f32
    %202 = vector.broadcast %cst_76 : f32 to vector<8x1xf32>
    %203 = arith.divf %201, %202 : vector<8x1xf32>
    %204 = vector.broadcast %203 : vector<8x1xf32> to vector<8x32xf32>
    %205 = arith.subf %197, %204 : vector<8x32xf32>
    %206 = arith.mulf %205, %205 : vector<8x32xf32>
    %cst_77 = arith.constant dense<0.000000e+00> : vector<8xf32>
    %207 = vector.multi_reduction <add>, %206, %cst_77 [1] : vector<8x32xf32> to vector<8xf32>
    %208 = vector.shape_cast %207 : vector<8xf32> to vector<8x1xf32>
    %cst_78 = arith.constant 3.200000e+01 : f32
    %209 = vector.broadcast %cst_78 : f32 to vector<8x1xf32>
    %210 = arith.divf %208, %209 : vector<8x1xf32>
    %211 = vector.broadcast %203 : vector<8x1xf32> to vector<8x32xf32>
    %212 = arith.subf %197, %211 : vector<8x32xf32>
    %cst_79 = arith.constant 9.99999974E-6 : f32
    %213 = vector.broadcast %cst_79 : f32 to vector<8x1xf32>
    %214 = arith.addf %210, %213 : vector<8x1xf32>
    %215 = math.rsqrt %214 : vector<8x1xf32>
    %216 = vector.broadcast %215 : vector<8x1xf32> to vector<8x32xf32>
    %217 = arith.mulf %212, %216 : vector<8x32xf32>
    %218 = vector.broadcast %198 : vector<1x32xf32> to vector<8x32xf32>
    %219 = arith.mulf %217, %218 : vector<8x32xf32>
    %220 = vector.broadcast %199 : vector<1x32xf32> to vector<8x32xf32>
    %221 = arith.addf %219, %220 : vector<8x32xf32>
    %c0_80 = arith.constant 0 : index
    %c0_81 = arith.constant 0 : index
    %222 = vector.load %arg23[%c0_80, %c0_81] : memref<1x32xbf16, #tpu.memory_space<vmem>>, vector<1x32xbf16>
    %223 = arith.truncf %221 : vector<8x32xf32> to vector<8x32xbf16>
    %cst_82 = arith.constant dense<0.000000e+00> : vector<1x8xf32>
    %224 = tpu.matmul %222, %223, %cst_82 {dimension_numbers = #tpu.dot_dimension_numbers<[1], [1], [0], [0], [0, 0, 1, 0], [], []>} : vector<1x32xbf16>, vector<8x32xbf16>, vector<1x8xf32> -> vector<1x8xf32>
    %c0_83 = arith.constant 0 : index
    %c0_84 = arith.constant 0 : index
    %225 = vector.load %arg24[%c0_83, %c0_84] : memref<1x1xf32, #tpu.memory_space<vmem>>, vector<1x1xf32>
    %226 = vector.broadcast %225 : vector<1x1xf32> to vector<1x8xf32>
    %227 = arith.addf %224, %226 : vector<1x8xf32>
    %c0_85 = arith.constant 0 : index
    %c0_86 = arith.constant 0 : index
    %c0_87 = arith.constant 0 : index
    %228 = vector.load %arg25[%c0_85, %c0_86, %c0_87] : memref<1x1x8xf32, #tpu.memory_space<vmem>>, vector<1x1x8xf32>
    %229 = vector.shape_cast %228 : vector<1x1x8xf32> to vector<1x8xf32>
    %230 = vector.shape_cast %227 : vector<1x8xf32> to vector<1x1x8xf32>
    tpu.vector_store %arg25[%c0_85, %c0_86, %c0_87], %230 {strides = array<i32>} : memref<1x1x8xf32, #tpu.memory_space<vmem>>, vector<1x1x8xf32>,
    return
  }
  func.func @transform_0(%arg0: i32) -> (i32, i32, i32) {
    %c0_i32 = arith.constant 0 : i32
    %c0_i32_0 = arith.constant 0 : i32
    %c0_i32_1 = arith.constant 0 : i32
    return %arg0, %c0_i32, %c0_i32_0 : i32, i32, i32
  }
  func.func @transform_1(%arg0: i32) -> (i32, i32, i32) {
    %c0_i32 = arith.constant 0 : i32
    %c0_i32_0 = arith.constant 0 : i32
    %c0_i32_1 = arith.constant 0 : i32
    return %arg0, %c0_i32, %c0_i32_0 : i32, i32, i32
  }
  func.func @transform_2(%arg0: i32) -> (i32, i32) {
    %c0_i32 = arith.constant 0 : i32
    %c0_i32_0 = arith.constant 0 : i32
    %c0_i32_1 = arith.constant 0 : i32
    return %c0_i32, %c0_i32_0 : i32, i32
  }
  func.func @transform_3(%arg0: i32) -> (i32, i32) {
    %c0_i32 = arith.constant 0 : i32
    %c0_i32_0 = arith.constant 0 : i32
    %c0_i32_1 = arith.constant 0 : i32
    return %c0_i32, %c0_i32_0 : i32, i32
  }
  func.func @transform_4(%arg0: i32) -> (i32, i32, i32) {
    %c0_i32 = arith.constant 0 : i32
    %c0_i32_0 = arith.constant 0 : i32
    %c0_i32_1 = arith.constant 0 : i32
    %c0_i32_2 = arith.constant 0 : i32
    return %c0_i32, %c0_i32_0, %c0_i32_1 : i32, i32, i32
  }
  func.func @transform_5(%arg0: i32) -> (i32, i32) {
    %c0_i32 = arith.constant 0 : i32
    %c0_i32_0 = arith.constant 0 : i32
    %c0_i32_1 = arith.constant 0 : i32
    return %c0_i32, %c0_i32_0 : i32, i32
  }
  func.func @transform_6(%arg0: i32) -> (i32, i32) {
    %c0_i32 = arith.constant 0 : i32
    %c0_i32_0 = arith.constant 0 : i32
    %c0_i32_1 = arith.constant 0 : i32
    return %c0_i32, %c0_i32_0 : i32, i32
  }
  func.func @transform_7(%arg0: i32) -> (i32, i32) {
    %c0_i32 = arith.constant 0 : i32
    %c0_i32_0 = arith.constant 0 : i32
    %c0_i32_1 = arith.constant 0 : i32
    return %c0_i32, %c0_i32_0 : i32, i32
  }
  func.func @transform_8(%arg0: i32) -> (i32, i32) {
    %c0_i32 = arith.constant 0 : i32
    %c0_i32_0 = arith.constant 0 : i32
    %c0_i32_1 = arith.constant 0 : i32
    return %c0_i32, %c0_i32_0 : i32, i32
  }
  func.func @transform_9(%arg0: i32) -> (i32, i32) {
    %c0_i32 = arith.constant 0 : i32
    %c0_i32_0 = arith.constant 0 : i32
    %c0_i32_1 = arith.constant 0 : i32
    return %c0_i32, %c0_i32_0 : i32, i32
  }
  func.func @transform_10(%arg0: i32) -> (i32, i32) {
    %c0_i32 = arith.constant 0 : i32
    %c0_i32_0 = arith.constant 0 : i32
    %c0_i32_1 = arith.constant 0 : i32
    return %c0_i32, %c0_i32_0 : i32, i32
  }
  func.func @transform_11(%arg0: i32) -> (i32, i32) {
    %c0_i32 = arith.constant 0 : i32
    %c0_i32_0 = arith.constant 0 : i32
    %c0_i32_1 = arith.constant 0 : i32
    return %c0_i32, %c0_i32_0 : i32, i32
  }
  func.func @transform_12(%arg0: i32) -> (i32, i32, i32) {
    %c0_i32 = arith.constant 0 : i32
    %c0_i32_0 = arith.constant 0 : i32
    %c0_i32_1 = arith.constant 0 : i32
    %c0_i32_2 = arith.constant 0 : i32
    return %c0_i32, %c0_i32_0, %c0_i32_1 : i32, i32, i32
  }
  func.func @transform_13(%arg0: i32) -> (i32, i32) {
    %c0_i32 = arith.constant 0 : i32
    %c0_i32_0 = arith.constant 0 : i32
    %c0_i32_1 = arith.constant 0 : i32
    return %c0_i32, %c0_i32_0 : i32, i32
  }
  func.func @transform_14(%arg0: i32) -> (i32, i32) {
    %c0_i32 = arith.constant 0 : i32
    %c0_i32_0 = arith.constant 0 : i32
    %c0_i32_1 = arith.constant 0 : i32
    return %c0_i32, %c0_i32_0 : i32, i32
  }
  func.func @transform_15(%arg0: i32) -> (i32, i32) {
    %c0_i32 = arith.constant 0 : i32
    %c0_i32_0 = arith.constant 0 : i32
    %c0_i32_1 = arith.constant 0 : i32
    return %c0_i32, %c0_i32_0 : i32, i32
  }
  func.func @transform_16(%arg0: i32) -> (i32, i32) {
    %c0_i32 = arith.constant 0 : i32
    %c0_i32_0 = arith.constant 0 : i32
    %c0_i32_1 = arith.constant 0 : i32
    return %c0_i32, %c0_i32_0 : i32, i32
  }
  func.func @transform_17(%arg0: i32) -> (i32, i32) {
    %c0_i32 = arith.constant 0 : i32
    %c0_i32_0 = arith.constant 0 : i32
    %c0_i32_1 = arith.constant 0 : i32
    return %c0_i32, %c0_i32_0 : i32, i32
  }
  func.func @transform_18(%arg0: i32) -> (i32, i32) {
    %c0_i32 = arith.constant 0 : i32
    %c0_i32_0 = arith.constant 0 : i32
    %c0_i32_1 = arith.constant 0 : i32
    return %c0_i32, %c0_i32_0 : i32, i32
  }
  func.func @transform_19(%arg0: i32) -> (i32, i32) {
    %c0_i32 = arith.constant 0 : i32
    %c0_i32_0 = arith.constant 0 : i32
    %c0_i32_1 = arith.constant 0 : i32
    return %c0_i32, %c0_i32_0 : i32, i32
  }
  func.func @transform_20(%arg0: i32) -> (i32, i32) {
    %c0_i32 = arith.constant 0 : i32
    %c0_i32_0 = arith.constant 0 : i32
    %c0_i32_1 = arith.constant 0 : i32
    return %c0_i32, %c0_i32_0 : i32, i32
  }
  func.func @transform_21(%arg0: i32) -> (i32, i32) {
    %c0_i32 = arith.constant 0 : i32
    %c0_i32_0 = arith.constant 0 : i32
    %c0_i32_1 = arith.constant 0 : i32
    return %c0_i32, %c0_i32_0 : i32, i32
  }
  func.func @transform_22(%arg0: i32) -> (i32, i32) {
    %c0_i32 = arith.constant 0 : i32
    %c0_i32_0 = arith.constant 0 : i32
    %c0_i32_1 = arith.constant 0 : i32
    return %c0_i32, %c0_i32_0 : i32, i32
  }
  func.func @transform_23(%arg0: i32) -> (i32, i32) {
    %c0_i32 = arith.constant 0 : i32
    %c0_i32_0 = arith.constant 0 : i32
    %c0_i32_1 = arith.constant 0 : i32
    return %c0_i32, %c0_i32_0 : i32, i32
  }
  func.func @transform_24(%arg0: i32) -> (i32, i32, i32) {
    %c0_i32 = arith.constant 0 : i32
    %c0_i32_0 = arith.constant 0 : i32
    %c0_i32_1 = arith.constant 0 : i32
    return %arg0, %c0_i32, %c0_i32_0 : i32, i32, i32
  }
}

</mosaic_0001>

<llo_original>
// kernel: transformer_decoder_forward.4
$region0: #{transformer_decoder_forward.4}
  #allocation0 [shape = 'u32[]', space=smem, size = 0x4, offset = 0x4, fixed_abs, tag = 'smem constant byte address 0x4 - core index']
  #allocation1 [shape = 'u32[144,128]{1,0:T(1,128)}', space=vmem, size = 0x12000, scoped, tag = 'internal scratch']
  %s0 = inlined_call_operand.vmem [shape: f32[2,8,4], index: 0, kind: input, shape index: {}]
  %s1 = inlined_call_operand.vmem [shape: bf16[4,32], index: 1, kind: input, shape index: {}]
  %s2 = inlined_call_operand.vmem [shape: f32[1,32], index: 2, kind: input, shape index: {}]
  %s3 = inlined_call_operand.vmem [shape: f32[8,32], index: 3, kind: input, shape index: {}]
  %s4 = inlined_call_operand.vmem [shape: f32[2,8,32], index: 4, kind: output, shape index: {}]
  %s5 = sld [smem:[#allocation0]]
  $region49: #{transformer_decoder_forward.4} parent=0
    _
  %s7 = ssub.s32 1, %s5
  %s8 = scalar_select 0, %s7, %s5
  loop: start=0, step=1, limit=4
  $region2: #{transformer_decoder_forward.4} parent=0 // loop_pre_header
    _
  $region3: #{transformer_decoder_forward.4} parent=0 // loop_header
    %s10 = sphi 0, %s14
    %p11 = scmp.ge.s32.totalorder %s10, 4
    %s20 = sphi 0, %s22
    %s23 = sphi 0, %s20
    %s24 = sphi 0, %s23
    %s40 = sphi 0, %s24
    %s44 = sphi 0, %s44
    %s46 = sphi 0, %s44
    %s47 = sphi 0, %s46
    %s61 = sphi 0, %s47
    %s65 = sphi 0, %s65
    %s67 = sphi 0, %s65
    %s68 = sphi 0, %s67
    %s82 = sphi 0, %s68
    %s86 = sphi 0, %s86
    %s88 = sphi 0, %s86
    %s89 = sphi 0, %s88
    %s103 = sphi 0, %s89
    %s109 = sphi 0, %s111
    %s112 = sphi 0, %s109
    %s113 = sphi 0, %s112
    %s129 = sphi 0, %s113
  $region4: #{transformer_decoder_forward.4} parent=0 // loop_header_branch
    %13 = sbr.rel (%p11) target = $region8
  $region5: #{transformer_decoder_forward.4} parent=0 // loop_body
    %s15 = ssub.s32 %s10, 1
    %s16 = ssub.s32 %s10, 2
    %s17 = sadd.s32 %s10, 1
    %s18 = ssub.s32 %s10, %s17
    %p19 = scmp.eq.s32.totalorder %s18, 0
    %s21 = sadd.s32 %s20, 1
    %s22 = scalar_select %p19, %s20, %s21
    %p25 = pneg %p19
    %p26 = scmp.eq.s32.totalorder %s10, 1
    %p27 = por %p25, %p26
    %p28 = scmp.ne.s32.totalorder %s20, %s23
    %p29 = scmp.eq.s32.totalorder %s10, 0
    %p30 = por %p28, %p29
    %p31 = scmp.ne.s32.totalorder %s20, %s23
    %p32 = scmp.eq.s32.totalorder %s15, 1
    %p33 = por %p31, %p32
    %p34 = scmp.ne.s32.totalorder %s23, %s24
    %p35 = scmp.eq.s32.totalorder %s15, 0
    %p36 = por %p34, %p35
    %p37 = scmp.ne.s32.totalorder %s23, %s24
    %p38 = scmp.eq.s32.totalorder %s16, 1
    %p39 = por %p37, %p38
    %p41 = scmp.ne.s32.totalorder %s24, %s40
    %p42 = scmp.eq.s32.totalorder %s16, 0
    %p43 = por %p41, %p42
    %s45 = sadd.s32 %s44, 1
    %p48 = scmp.eq.s32.totalorder %s10, 1
    %p49 = scmp.ne.s32.totalorder %s44, %s46
    %p50 = scmp.eq.s32.totalorder %s10, 0
    %p51 = por %p49, %p50
    %p52 = scmp.ne.s32.totalorder %s44, %s46
    %p53 = scmp.eq.s32.totalorder %s15, 1
    %p54 = por %p52, %p53
    %p55 = scmp.ne.s32.totalorder %s46, %s47
    %p56 = scmp.eq.s32.totalorder %s15, 0
    %p57 = por %p55, %p56
    %p58 = scmp.ne.s32.totalorder %s46, %s47
    %p59 = scmp.eq.s32.totalorder %s16, 1
    %p60 = por %p58, %p59
    %p62 = scmp.ne.s32.totalorder %s47, %s61
    %p63 = scmp.eq.s32.totalorder %s16, 0
    %p64 = por %p62, %p63
    %s66 = sadd.s32 %s65, 1
    %p69 = scmp.eq.s32.totalorder %s10, 1
    %p70 = scmp.ne.s32.totalorder %s65, %s67
    %p71 = scmp.eq.s32.totalorder %s10, 0
    %p72 = por %p70, %p71
    %p73 = scmp.ne.s32.totalorder %s65, %s67
    %p74 = scmp.eq.s32.totalorder %s15, 1
    %p75 = por %p73, %p74
    %p76 = scmp.ne.s32.totalorder %s67, %s68
    %p77 = scmp.eq.s32.totalorder %s15, 0
    %p78 = por %p76, %p77
    %p79 = scmp.ne.s32.totalorder %s67, %s68
    %p80 = scmp.eq.s32.totalorder %s16, 1
    %p81 = por %p79, %p80
    %p83 = scmp.ne.s32.totalorder %s68, %s82
    %p84 = scmp.eq.s32.totalorder %s16, 0
    %p85 = por %p83, %p84
    %s87 = sadd.s32 %s86, 1
    %p90 = scmp.eq.s32.totalorder %s10, 1
    %p91 = scmp.ne.s32.totalorder %s86, %s88
    %p92 = scmp.eq.s32.totalorder %s10, 0
    %p93 = por %p91, %p92
    %p94 = scmp.ne.s32.totalorder %s86, %s88
    %p95 = scmp.eq.s32.totalorder %s15, 1
    %p96 = por %p94, %p95
    %p97 = scmp.ne.s32.totalorder %s88, %s89
    %p98 = scmp.eq.s32.totalorder %s15, 0
    %p99 = por %p97, %p98
    %p100 = scmp.ne.s32.totalorder %s88, %s89
    %p101 = scmp.eq.s32.totalorder %s16, 1
    %p102 = por %p100, %p101
    %p104 = scmp.ne.s32.totalorder %s89, %s103
    %p105 = scmp.eq.s32.totalorder %s16, 0
    %p106 = por %p104, %p105
    %s107 = ssub.s32 %s10, %s17
    %p108 = scmp.eq.s32.totalorder %s107, 0
    %s110 = sadd.s32 %s109, 1
    %s111 = scalar_select %p108, %s109, %s110
    %p114 = pneg %p108
    %p115 = scmp.eq.s32.totalorder %s10, 1
    %p116 = por %p114, %p115
    %p117 = scmp.ne.s32.totalorder %s109, %s112
    %p118 = scmp.eq.s32.totalorder %s10, 0
    %p119 = por %p117, %p118
    %p120 = scmp.ne.s32.totalorder %s109, %s112
    %p121 = scmp.eq.s32.totalorder %s15, 1
    %p122 = por %p120, %p121
    %p123 = scmp.ne.s32.totalorder %s112, %s113
    %p124 = scmp.eq.s32.totalorder %s15, 0
    %p125 = por %p123, %p124
    %p126 = scmp.ne.s32.totalorder %s112, %s113
    %p127 = scmp.eq.s32.totalorder %s16, 1
    %p128 = por %p126, %p127
    %p130 = scmp.ne.s32.totalorder %s113, %s129
    %p131 = scmp.eq.s32.totalorder %s16, 0
    %p132 = por %p130, %p131
    %p133 = scmp.le.s32.totalorder 1, %s10
    %p134 = scmp.lt.s32.totalorder %s10, 3
    %p135 = pnand %p133, %p134
    %p136 = pneg %p135
    // Predicated region
    $region9: #{transformer_decoder_forward.4} parent=5 // pred_check
      _
    $region10: #{transformer_decoder_forward.4} parent=5 // pred_check_branch
      %138 = sbr.rel (%p135) target = $region12
    $region11: #{transformer_decoder_forward.4} parent=5 // pred_region
      %s139 = ssub.s32 %s10, 1
      // Predicated region
      $region13: #{transformer_decoder_forward.4} parent=11 // pred_check
        %p140 = pneg %p57
      $region14: #{transformer_decoder_forward.4} parent=11 // pred_check_branch
        %142 = sbr.rel (%p140) target = $region16
      $region15: #{transformer_decoder_forward.4} parent=11 // pred_region
        _
      $region16: #{transformer_decoder_forward.4} parent=11 // pred_fallthru
        _
      // Predicated region
      $region17: #{transformer_decoder_forward.4} parent=11 // pred_check
        %p143 = pneg %p78
      $region18: #{transformer_decoder_forward.4} parent=11 // pred_check_branch
        %145 = sbr.rel (%p143) target = $region20
      $region19: #{transformer_decoder_forward.4} parent=11 // pred_region
        _
      $region20: #{transformer_decoder_forward.4} parent=11 // pred_fallthru
        _
      // Predicated region
      $region21: #{transformer_decoder_forward.4} parent=11 // pred_check
        %p146 = pneg %p99
      $region22: #{transformer_decoder_forward.4} parent=11 // pred_check_branch
        %148 = sbr.rel (%p146) target = $region24
      $region23: #{transformer_decoder_forward.4} parent=11 // pred_region
        _
      $region24: #{transformer_decoder_forward.4} parent=11 // pred_fallthru
        _
    $region12: #{transformer_decoder_forward.4} parent=5 // pred_fallthru
      _
    %p149 = scmp.lt.s32.totalorder %s10, 2
    // Predicated region
    $region25: #{transformer_decoder_forward.4} parent=5 // pred_check
      %p150 = pneg %p149
    $region26: #{transformer_decoder_forward.4} parent=5 // pred_check_branch
      %152 = sbr.rel (%p150) target = $region28
    $region27: #{transformer_decoder_forward.4} parent=5 // pred_region
      // Predicated region
      $region29: #{transformer_decoder_forward.4} parent=27 // pred_check
        %p153 = pneg %p30
      $region30: #{transformer_decoder_forward.4} parent=27 // pred_check_branch
        %155 = sbr.rel (%p153) target = $region32
      $region31: #{transformer_decoder_forward.4} parent=27 // pred_region
        %p156 = scmp.lt.s32.totalorder %s10, 1
        %s157 = scalar_select %p156, %s10, 1
        %s158 = smul.addr %s157, 8
        %s159 = scalar_lea.vmem %s0, %s158
      $region32: #{transformer_decoder_forward.4} parent=27 // pred_fallthru
        _
    $region28: #{transformer_decoder_forward.4} parent=5 // pred_fallthru
      _
    %p160 = scmp.le.s32.totalorder 1, %s10
    %p161 = scmp.lt.s32.totalorder %s10, 3
    %p162 = pnand %p160, %p161
    %p163 = pneg %p162
    // Predicated region
    $region33: #{transformer_decoder_forward.4} parent=5 // pred_check
      _
    $region34: #{transformer_decoder_forward.4} parent=5 // pred_check_branch
      %165 = sbr.rel (%p162) target = $region36
    $region35: #{transformer_decoder_forward.4} parent=5 // pred_region
      %s166 = ssub.s32 %s10, 1
      %p167 = scmp.lt.s32.totalorder %s15, 1
      %s168 = scalar_select %p167, %s15, 1
      %s169 = smul.addr %s168, 8
      %s170 = scalar_lea.vmem %s0, %s169
      %p171 = pneg %p36
      %p172 = pneg %p33
      %p173 = pneg %p57
      %p174 = pneg %p54
      %p175 = pneg %p78
      %p176 = pneg %p75
      %p177 = pneg %p99
      %p178 = pneg %p96
      %p179 = pneg %p125
      %p180 = pneg %p122
      %p181 = scmp.lt.s32.totalorder %s15, 1
      %s182 = scalar_select %p181, %s15, 1
      %s183 = smul.addr %s182, 8
      %s184 = scalar_lea.vmem %s4, %s183
      %p185 = scmp.lt.s32.totalorder %s15, 1
      %s186 = scalar_select %p185, %s15, 1
      %s187 = smul.addr %s186, 8
      %s188 = scalar_lea.vmem %s0, %s187
      %p189 = scmp.lt.s32.totalorder %s15, 1
      %s190 = scalar_select %p189, %s15, 1
      %s191 = smul.addr %s190, 8
      %s192 = scalar_lea.vmem %s4, %s191
      %v193 = vld [vmem:[%s188] sm:$0xff]
      %v194 = vld [vmem:[%s1] sm:$0x1]
      %v195 = vunpack.c.l.bf16 %v194
      %197 = vset.pattern.permute.xlu0 0
      %198 = vperm.xlu0 %197, %v193
      %v199 = vpop.permute.xlu0 %198
      %v201 = vlaneseq
      %v202 = vshrl.u32 %v201, 7
      %v203 = vsub.s32 0, %v202
      %v204 = vrot.slane %v195, %v203
      %v205 = vmul.f32 %v199, %v204
      %206 = vset.pattern.permute.xlu0 1
      %207 = vperm.xlu0 %206, %v193
      %v208 = vpop.permute.xlu0 %207
      %v210 = vlaneseq
      %v211 = vshrl.u32 %v210, 7
      %v212 = vsub.s32 1, %v211
      %v213 = vrot.slane %v195, %v212
      %v214 = vmul.f32 %v208, %v213
      %v215 = vadd.f32 %v205, %v214
      %v216 = vld [vmem:[%s1] sm:$0x2]
      %v217 = vunpack.c.l.bf16 %v216
      %218 = vset.pattern.permute.xlu0 2
      %219 = vperm.xlu0 %218, %v193
      %v220 = vpop.permute.xlu0 %219
      %v222 = vlaneseq
      %v223 = vshrl.u32 %v222, 7
      %v224 = vsub.s32 2, %v223
      %v225 = vrot.slane %v217, %v224
      %v226 = vmul.f32 %v220, %v225
      %v227 = vadd.f32 %v215, %v226
      %228 = vset.pattern.permute.xlu0 3
      %229 = vperm.xlu0 %228, %v193
      %v230 = vpop.permute.xlu0 %229
      %v232 = vlaneseq
      %v233 = vshrl.u32 %v232, 7
      %v234 = vsub.s32 3, %v233
      %v235 = vrot.slane %v217, %v234
      %v236 = vmul.f32 %v230, %v235
      %v237 = vadd.f32 %v227, %v236
      %v238 = vld [vmem:[%s2] sm:$0x1]
      %v240 = vlaneseq
      %v241 = vshrl.u32 %v240, 7
      %v242 = vsub.s32 0, %v241
      %v243 = vrot.slane %v238, %v242
      %v245 = vadd.f32 %v237, %v243
      %v246 = vld [vmem:[%s3] sm:$0xff]
      %v247 = vadd.f32 %v245, %v246
      %vm248 = vcmask 261120
      %249 = vst.msk [vmem:[%s192] sm:$0xff] %vm248, %v247
      %p250 = scmp.lt.s32.totalorder %s15, 1
      %s251 = scalar_select %p250, %s15, 1
      %s252 = smul.addr %s251, 8
      %s253 = scalar_lea.vmem %s4, %s252
      // Predicated region
      $region37: #{transformer_decoder_forward.4} parent=35 // pred_check
        %p254 = pneg %p122
      $region38: #{transformer_decoder_forward.4} parent=35 // pred_check_branch
        %256 = sbr.rel (%p254) target = $region40
      $region39: #{transformer_decoder_forward.4} parent=35 // pred_region
        _
      $region40: #{transformer_decoder_forward.4} parent=35 // pred_fallthru
        _
    $region36: #{transformer_decoder_forward.4} parent=5 // pred_fallthru
      _
    %p257 = scmp.le.s32.totalorder 2, %s10
    // Predicated region
    $region41: #{transformer_decoder_forward.4} parent=5 // pred_check
      %p258 = pneg %p257
    $region42: #{transformer_decoder_forward.4} parent=5 // pred_check_branch
      %260 = sbr.rel (%p258) target = $region44
    $region43: #{transformer_decoder_forward.4} parent=5 // pred_region
      %s261 = ssub.s32 %s10, 2
      // Predicated region
      $region45: #{transformer_decoder_forward.4} parent=43 // pred_check
        %p262 = pneg %p128
      $region46: #{transformer_decoder_forward.4} parent=43 // pred_check_branch
        %264 = sbr.rel (%p262) target = $region48
      $region47: #{transformer_decoder_forward.4} parent=43 // pred_region
        %p265 = scmp.lt.s32.totalorder %s16, 1
        %s266 = scalar_select %p265, %s16, 1
        %s267 = smul.addr %s266, 8
        %s268 = scalar_lea.vmem %s4, %s267
      $region48: #{transformer_decoder_forward.4} parent=43 // pred_fallthru
        _
    $region44: #{transformer_decoder_forward.4} parent=5 // pred_fallthru
      _
  $region6: #{transformer_decoder_forward.4} parent=0 // loop_footer
    %s14 = sadd.s32 1, %s10
  $region7: #{transformer_decoder_forward.4} parent=0 // loop_footer_branch
    %9 = sbr.rel target = $region3
  $region8: #{transformer_decoder_forward.4} parent=0 // loop_exit
    _

// kernel: transformer_decoder_forward.6
$region0: #{transformer_decoder_forward.6}
  #allocation0 [shape = 'u32[]', space=smem, size = 0x4, offset = 0x4, fixed_abs, tag = 'smem constant byte address 0x4 - core index']
  #allocation1 [shape = 'u32[144,128]{1,0:T(1,128)}', space=vmem, size = 0x12000, scoped, tag = 'internal scratch']
  %s0 = inlined_call_operand.vmem [shape: f32[2,8,32], index: 0, kind: input, shape index: {}]
  %s1 = inlined_call_operand.vmem [shape: f32[2,8,32], index: 1, kind: input, shape index: {}]
  %s2 = inlined_call_operand.vmem [shape: bf16[32,96], index: 2, kind: input, shape index: {}]
  %s3 = inlined_call_operand.vmem [shape: f32[1,96], index: 3, kind: input, shape index: {}]
  %s4 = inlined_call_operand.vmem [shape: bf16[4,8,32], index: 4, kind: input, shape index: {}]
  %s5 = inlined_call_operand.vmem [shape: f32[1,32], index: 5, kind: input, shape index: {}]
  %s6 = inlined_call_operand.vmem [shape: f32[1,32], index: 6, kind: input, shape index: {}]
  %s7 = inlined_call_operand.vmem [shape: f32[1,32], index: 7, kind: input, shape index: {}]
  %s8 = inlined_call_operand.vmem [shape: bf16[32,32], index: 8, kind: input, shape index: {}]
  %s9 = inlined_call_operand.vmem [shape: f32[1,32], index: 9, kind: input, shape index: {}]
  %s10 = inlined_call_operand.vmem [shape: bf16[32,64], index: 10, kind: input, shape index: {}]
  %s11 = inlined_call_operand.vmem [shape: f32[1,64], index: 11, kind: input, shape index: {}]
  %s12 = inlined_call_operand.vmem [shape: bf16[4,8,32], index: 12, kind: input, shape index: {}]
  %s13 = inlined_call_operand.vmem [shape: f32[1,32], index: 13, kind: input, shape index: {}]
  %s14 = inlined_call_operand.vmem [shape: f32[1,32], index: 14, kind: input, shape index: {}]
  %s15 = inlined_call_operand.vmem [shape: f32[1,32], index: 15, kind: input, shape index: {}]
  %s16 = inlined_call_operand.vmem [shape: bf16[32,128], index: 16, kind: input, shape index: {}]
  %s17 = inlined_call_operand.vmem [shape: f32[1,128], index: 17, kind: input, shape index: {}]
  %s18 = inlined_call_operand.vmem [shape: bf16[128,32], index: 18, kind: input, shape index: {}]
  %s19 = inlined_call_operand.vmem [shape: f32[1,32], index: 19, kind: input, shape index: {}]
  %s20 = inlined_call_operand.vmem [shape: f32[1,32], index: 20, kind: input, shape index: {}]
  %s21 = inlined_call_operand.vmem [shape: f32[1,32], index: 21, kind: input, shape index: {}]
  %s22 = inlined_call_operand.vmem [shape: f32[2,8,32], index: 22, kind: output, shape index: {}]
  %s23 = sld [smem:[#allocation0]]
  $region121: #{transformer_decoder_forward.6} parent=0
    _
  %s25 = ssub.s32 1, %s23
  %s26 = scalar_select 0, %s25, %s23
  loop: start=0, step=1, limit=4
  $region2: #{transformer_decoder_forward.6} parent=0 // loop_pre_header
    _
  $region3: #{transformer_decoder_forward.6} parent=0 // loop_header
    %s28 = sphi 0, %s32
    %p29 = scmp.ge.s32.totalorder %s28, 4
    %s38 = sphi 0, %s40
    %s41 = sphi 0, %s38
    %s42 = sphi 0, %s41
    %s58 = sphi 0, %s42
    %s64 = sphi 0, %s66
    %s67 = sphi 0, %s64
    %s68 = sphi 0, %s67
    %s84 = sphi 0, %s68
    %s88 = sphi 0, %s88
    %s90 = sphi 0, %s88
    %s91 = sphi 0, %s90
    %s105 = sphi 0, %s91
    %s109 = sphi 0, %s109
    %s111 = sphi 0, %s109
    %s112 = sphi 0, %s111
    %s126 = sphi 0, %s112
    %s130 = sphi 0, %s130
    %s132 = sphi 0, %s130
    %s133 = sphi 0, %s132
    %s147 = sphi 0, %s133
    %s151 = sphi 0, %s151
    %s153 = sphi 0, %s151
    %s154 = sphi 0, %s153
    %s168 = sphi 0, %s154
    %s172 = sphi 0, %s172
    %s174 = sphi 0, %s172
    %s175 = sphi 0, %s174
    %s189 = sphi 0, %s175
    %s193 = sphi 0, %s193
    %s195 = sphi 0, %s193
    %s196 = sphi 0, %s195
    %s210 = sphi 0, %s196
    %s214 = sphi 0, %s214
    %s216 = sphi 0, %s214
    %s217 = sphi 0, %s216
    %s231 = sphi 0, %s217
    %s235 = sphi 0, %s235
    %s237 = sphi 0, %s235
    %s238 = sphi 0, %s237
    %s252 = sphi 0, %s238
    %s256 = sphi 0, %s256
    %s258 = sphi 0, %s256
    %s259 = sphi 0, %s258
    %s273 = sphi 0, %s259
    %s277 = sphi 0, %s277
    %s279 = sphi 0, %s277
    %s280 = sphi 0, %s279
    %s294 = sphi 0, %s280
    %s298 = sphi 0, %s298
    %s300 = sphi 0, %s298
    %s301 = sphi 0, %s300
    %s315 = sphi 0, %s301
    %s319 = sphi 0, %s319
    %s321 = sphi 0, %s319
    %s322 = sphi 0, %s321
    %s336 = sphi 0, %s322
    %s340 = sphi 0, %s340
    %s342 = sphi 0, %s340
    %s343 = sphi 0, %s342
    %s357 = sphi 0, %s343
    %s361 = sphi 0, %s361
    %s363 = sphi 0, %s361
    %s364 = sphi 0, %s363
    %s378 = sphi 0, %s364
    %s382 = sphi 0, %s382
    %s384 = sphi 0, %s382
    %s385 = sphi 0, %s384
    %s399 = sphi 0, %s385
    %s403 = sphi 0, %s403
    %s405 = sphi 0, %s403
    %s406 = sphi 0, %s405
    %s420 = sphi 0, %s406
    %s424 = sphi 0, %s424
    %s426 = sphi 0, %s424
    %s427 = sphi 0, %s426
    %s441 = sphi 0, %s427
    %s445 = sphi 0, %s445
    %s447 = sphi 0, %s445
    %s448 = sphi 0, %s447
    %s462 = sphi 0, %s448
    %s466 = sphi 0, %s466
    %s468 = sphi 0, %s466
    %s469 = sphi 0, %s468
    %s483 = sphi 0, %s469
    %s487 = sphi 0, %s487
    %s489 = sphi 0, %s487
    %s490 = sphi 0, %s489
    %s504 = sphi 0, %s490
    %s510 = sphi 0, %s512
    %s513 = sphi 0, %s510
    %s514 = sphi 0, %s513
    %s530 = sphi 0, %s514
  $region4: #{transformer_decoder_forward.6} parent=0 // loop_header_branch
    %31 = sbr.rel (%p29) target = $region8
  $region5: #{transformer_decoder_forward.6} parent=0 // loop_body
    %s33 = ssub.s32 %s28, 1
    %s34 = ssub.s32 %s28, 2
    %s35 = sadd.s32 %s28, 1
    %s36 = ssub.s32 %s28, %s35
    %p37 = scmp.eq.s32.totalorder %s36, 0
    %s39 = sadd.s32 %s38, 1
    %s40 = scalar_select %p37, %s38, %s39
    %p43 = pneg %p37
    %p44 = scmp.eq.s32.totalorder %s28, 1
    %p45 = por %p43, %p44
    %p46 = scmp.ne.s32.totalorder %s38, %s41
    %p47 = scmp.eq.s32.totalorder %s28, 0
    %p48 = por %p46, %p47
    %p49 = scmp.ne.s32.totalorder %s38, %s41
    %p50 = scmp.eq.s32.totalorder %s33, 1
    %p51 = por %p49, %p50
    %p52 = scmp.ne.s32.totalorder %s41, %s42
    %p53 = scmp.eq.s32.totalorder %s33, 0
    %p54 = por %p52, %p53
    %p55 = scmp.ne.s32.totalorder %s41, %s42
    %p56 = scmp.eq.s32.totalorder %s34, 1
    %p57 = por %p55, %p56
    %p59 = scmp.ne.s32.totalorder %s42, %s58
    %p60 = scmp.eq.s32.totalorder %s34, 0
    %p61 = por %p59, %p60
    %s62 = ssub.s32 %s28, %s35
    %p63 = scmp.eq.s32.totalorder %s62, 0
    %s65 = sadd.s32 %s64, 1
    %s66 = scalar_select %p63, %s64, %s65
    %p69 = pneg %p63
    %p70 = scmp.eq.s32.totalorder %s28, 1
    %p71 = por %p69, %p70
    %p72 = scmp.ne.s32.totalorder %s64, %s67
    %p73 = scmp.eq.s32.totalorder %s28, 0
    %p74 = por %p72, %p73
    %p75 = scmp.ne.s32.totalorder %s64, %s67
    %p76 = scmp.eq.s32.totalorder %s33, 1
    %p77 = por %p75, %p76
    %p78 = scmp.ne.s32.totalorder %s67, %s68
    %p79 = scmp.eq.s32.totalorder %s33, 0
    %p80 = por %p78, %p79
    %p81 = scmp.ne.s32.totalorder %s67, %s68
    %p82 = scmp.eq.s32.totalorder %s34, 1
    %p83 = por %p81, %p82
    %p85 = scmp.ne.s32.totalorder %s68, %s84
    %p86 = scmp.eq.s32.totalorder %s34, 0
    %p87 = por %p85, %p86
    %s89 = sadd.s32 %s88, 1
    %p92 = scmp.eq.s32.totalorder %s28, 1
    %p93 = scmp.ne.s32.totalorder %s88, %s90
    %p94 = scmp.eq.s32.totalorder %s28, 0
    %p95 = por %p93, %p94
    %p96 = scmp.ne.s32.totalorder %s88, %s90
    %p97 = scmp.eq.s32.totalorder %s33, 1
    %p98 = por %p96, %p97
    %p99 = scmp.ne.s32.totalorder %s90, %s91
    %p100 = scmp.eq.s32.totalorder %s33, 0
    %p101 = por %p99, %p100
    %p102 = scmp.ne.s32.totalorder %s90, %s91
    %p103 = scmp.eq.s32.totalorder %s34, 1
    %p104 = por %p102, %p103
    %p106 = scmp.ne.s32.totalorder %s91, %s105
    %p107 = scmp.eq.s32.totalorder %s34, 0
    %p108 = por %p106, %p107
    %s110 = sadd.s32 %s109, 1
    %p113 = scmp.eq.s32.totalorder %s28, 1
    %p114 = scmp.ne.s32.totalorder %s109, %s111
    %p115 = scmp.eq.s32.totalorder %s28, 0
    %p116 = por %p114, %p115
    %p117 = scmp.ne.s32.totalorder %s109, %s111
    %p118 = scmp.eq.s32.totalorder %s33, 1
    %p119 = por %p117, %p118
    %p120 = scmp.ne.s32.totalorder %s111, %s112
    %p121 = scmp.eq.s32.totalorder %s33, 0
    %p122 = por %p120, %p121
    %p123 = scmp.ne.s32.totalorder %s111, %s112
    %p124 = scmp.eq.s32.totalorder %s34, 1
    %p125 = por %p123, %p124
    %p127 = scmp.ne.s32.totalorder %s112, %s126
    %p128 = scmp.eq.s32.totalorder %s34, 0
    %p129 = por %p127, %p128
    %s131 = sadd.s32 %s130, 1
    %p134 = scmp.eq.s32.totalorder %s28, 1
    %p135 = scmp.ne.s32.totalorder %s130, %s132
    %p136 = scmp.eq.s32.totalorder %s28, 0
    %p137 = por %p135, %p136
    %p138 = scmp.ne.s32.totalorder %s130, %s132
    %p139 = scmp.eq.s32.totalorder %s33, 1
    %p140 = por %p138, %p139
    %p141 = scmp.ne.s32.totalorder %s132, %s133
    %p142 = scmp.eq.s32.totalorder %s33, 0
    %p143 = por %p141, %p142
    %p144 = scmp.ne.s32.totalorder %s132, %s133
    %p145 = scmp.eq.s32.totalorder %s34, 1
    %p146 = por %p144, %p145
    %p148 = scmp.ne.s32.totalorder %s133, %s147
    %p149 = scmp.eq.s32.totalorder %s34, 0
    %p150 = por %p148, %p149
    %s152 = sadd.s32 %s151, 1
    %p155 = scmp.eq.s32.totalorder %s28, 1
    %p156 = scmp.ne.s32.totalorder %s151, %s153
    %p157 = scmp.eq.s32.totalorder %s28, 0
    %p158 = por %p156, %p157
    %p159 = scmp.ne.s32.totalorder %s151, %s153
    %p160 = scmp.eq.s32.totalorder %s33, 1
    %p161 = por %p159, %p160
    %p162 = scmp.ne.s32.totalorder %s153, %s154
    %p163 = scmp.eq.s32.totalorder %s33, 0
    %p164 = por %p162, %p163
    %p165 = scmp.ne.s32.totalorder %s153, %s154
    %p166 = scmp.eq.s32.totalorder %s34, 1
    %p167 = por %p165, %p166
    %p169 = scmp.ne.s32.totalorder %s154, %s168
    %p170 = scmp.eq.s32.totalorder %s34, 0
    %p171 = por %p169, %p170
    %s173 = sadd.s32 %s172, 1
    %p176 = scmp.eq.s32.totalorder %s28, 1
    %p177 = scmp.ne.s32.totalorder %s172, %s174
    %p178 = scmp.eq.s32.totalorder %s28, 0
    %p179 = por %p177, %p178
    %p180 = scmp.ne.s32.totalorder %s172, %s174
    %p181 = scmp.eq.s32.totalorder %s33, 1
    %p182 = por %p180, %p181
    %p183 = scmp.ne.s32.totalorder %s174, %s175
    %p184 = scmp.eq.s32.totalorder %s33, 0
    %p185 = por %p183, %p184
    %p186 = scmp.ne.s32.totalorder %s174, %s175
    %p187 = scmp.eq.s32.totalorder %s34, 1
    %p188 = por %p186, %p187
    %p190 = scmp.ne.s32.totalorder %s175, %s189
    %p191 = scmp.eq.s32.totalorder %s34, 0
    %p192 = por %p190, %p191
    %s194 = sadd.s32 %s193, 1
    %p197 = scmp.eq.s32.totalorder %s28, 1
    %p198 = scmp.ne.s32.totalorder %s193, %s195
    %p199 = scmp.eq.s32.totalorder %s28, 0
    %p200 = por %p198, %p199
    %p201 = scmp.ne.s32.totalorder %s193, %s195
    %p202 = scmp.eq.s32.totalorder %s33, 1
    %p203 = por %p201, %p202
    %p204 = scmp.ne.s32.totalorder %s195, %s196
    %p205 = scmp.eq.s32.totalorder %s33, 0
    %p206 = por %p204, %p205
    %p207 = scmp.ne.s32.totalorder %s195, %s196
    %p208 = scmp.eq.s32.totalorder %s34, 1
    %p209 = por %p207, %p208
    %p211 = scmp.ne.s32.totalorder %s196, %s210
    %p212 = scmp.eq.s32.totalorder %s34, 0
    %p213 = por %p211, %p212
    %s215 = sadd.s32 %s214, 1
    %p218 = scmp.eq.s32.totalorder %s28, 1
    %p219 = scmp.ne.s32.totalorder %s214, %s216
    %p220 = scmp.eq.s32.totalorder %s28, 0
    %p221 = por %p219, %p220
    %p222 = scmp.ne.s32.totalorder %s214, %s216
    %p223 = scmp.eq.s32.totalorder %s33, 1
    %p224 = por %p222, %p223
    %p225 = scmp.ne.s32.totalorder %s216, %s217
    %p226 = scmp.eq.s32.totalorder %s33, 0
    %p227 = por %p225, %p226
    %p228 = scmp.ne.s32.totalorder %s216, %s217
    %p229 = scmp.eq.s32.totalorder %s34, 1
    %p230 = por %p228, %p229
    %p232 = scmp.ne.s32.totalorder %s217, %s231
    %p233 = scmp.eq.s32.totalorder %s34, 0
    %p234 = por %p232, %p233
    %s236 = sadd.s32 %s235, 1
    %p239 = scmp.eq.s32.totalorder %s28, 1
    %p240 = scmp.ne.s32.totalorder %s235, %s237
    %p241 = scmp.eq.s32.totalorder %s28, 0
    %p242 = por %p240, %p241
    %p243 = scmp.ne.s32.totalorder %s235, %s237
    %p244 = scmp.eq.s32.totalorder %s33, 1
    %p245 = por %p243, %p244
    %p246 = scmp.ne.s32.totalorder %s237, %s238
    %p247 = scmp.eq.s32.totalorder %s33, 0
    %p248 = por %p246, %p247
    %p249 = scmp.ne.s32.totalorder %s237, %s238
    %p250 = scmp.eq.s32.totalorder %s34, 1
    %p251 = por %p249, %p250
    %p253 = scmp.ne.s32.totalorder %s238, %s252
    %p254 = scmp.eq.s32.totalorder %s34, 0
    %p255 = por %p253, %p254
    %s257 = sadd.s32 %s256, 1
    %p260 = scmp.eq.s32.totalorder %s28, 1
    %p261 = scmp.ne.s32.totalorder %s256, %s258
    %p262 = scmp.eq.s32.totalorder %s28, 0
    %p263 = por %p261, %p262
    %p264 = scmp.ne.s32.totalorder %s256, %s258
    %p265 = scmp.eq.s32.totalorder %s33, 1
    %p266 = por %p264, %p265
    %p267 = scmp.ne.s32.totalorder %s258, %s259
    %p268 = scmp.eq.s32.totalorder %s33, 0
    %p269 = por %p267, %p268
    %p270 = scmp.ne.s32.totalorder %s258, %s259
    %p271 = scmp.eq.s32.totalorder %s34, 1
    %p272 = por %p270, %p271
    %p274 = scmp.ne.s32.totalorder %s259, %s273
    %p275 = scmp.eq.s32.totalorder %s34, 0
    %p276 = por %p274, %p275
    %s278 = sadd.s32 %s277, 1
    %p281 = scmp.eq.s32.totalorder %s28, 1
    %p282 = scmp.ne.s32.totalorder %s277, %s279
    %p283 = scmp.eq.s32.totalorder %s28, 0
    %p284 = por %p282, %p283
    %p285 = scmp.ne.s32.totalorder %s277, %s279
    %p286 = scmp.eq.s32.totalorder %s33, 1
    %p287 = por %p285, %p286
    %p288 = scmp.ne.s32.totalorder %s279, %s280
    %p289 = scmp.eq.s32.totalorder %s33, 0
    %p290 = por %p288, %p289
    %p291 = scmp.ne.s32.totalorder %s279, %s280
    %p292 = scmp.eq.s32.totalorder %s34, 1
    %p293 = por %p291, %p292
    %p295 = scmp.ne.s32.totalorder %s280, %s294
    %p296 = scmp.eq.s32.totalorder %s34, 0
    %p297 = por %p295, %p296
    %s299 = sadd.s32 %s298, 1
    %p302 = scmp.eq.s32.totalorder %s28, 1
    %p303 = scmp.ne.s32.totalorder %s298, %s300
    %p304 = scmp.eq.s32.totalorder %s28, 0
    %p305 = por %p303, %p304
    %p306 = scmp.ne.s32.totalorder %s298, %s300
    %p307 = scmp.eq.s32.totalorder %s33, 1
    %p308 = por %p306, %p307
    %p309 = scmp.ne.s32.totalorder %s300, %s301
    %p310 = scmp.eq.s32.totalorder %s33, 0
    %p311 = por %p309, %p310
    %p312 = scmp.ne.s32.totalorder %s300, %s301
    %p313 = scmp.eq.s32.totalorder %s34, 1
    %p314 = por %p312, %p313
    %p316 = scmp.ne.s32.totalorder %s301, %s315
    %p317 = scmp.eq.s32.totalorder %s34, 0
    %p318 = por %p316, %p317
    %s320 = sadd.s32 %s319, 1
    %p323 = scmp.eq.s32.totalorder %s28, 1
    %p324 = scmp.ne.s32.totalorder %s319, %s321
    %p325 = scmp.eq.s32.totalorder %s28, 0
    %p326 = por %p324, %p325
    %p327 = scmp.ne.s32.totalorder %s319, %s321
    %p328 = scmp.eq.s32.totalorder %s33, 1
    %p329 = por %p327, %p328
    %p330 = scmp.ne.s32.totalorder %s321, %s322
    %p331 = scmp.eq.s32.totalorder %s33, 0
    %p332 = por %p330, %p331
    %p333 = scmp.ne.s32.totalorder %s321, %s322
    %p334 = scmp.eq.s32.totalorder %s34, 1
    %p335 = por %p333, %p334
    %p337 = scmp.ne.s32.totalorder %s322, %s336
    %p338 = scmp.eq.s32.totalorder %s34, 0
    %p339 = por %p337, %p338
    %s341 = sadd.s32 %s340, 1
    %p344 = scmp.eq.s32.totalorder %s28, 1
    %p345 = scmp.ne.s32.totalorder %s340, %s342
    %p346 = scmp.eq.s32.totalorder %s28, 0
    %p347 = por %p345, %p346
    %p348 = scmp.ne.s32.totalorder %s340, %s342
    %p349 = scmp.eq.s32.totalorder %s33, 1
    %p350 = por %p348, %p349
    %p351 = scmp.ne.s32.totalorder %s342, %s343
    %p352 = scmp.eq.s32.totalorder %s33, 0
    %p353 = por %p351, %p352
    %p354 = scmp.ne.s32.totalorder %s342, %s343
    %p355 = scmp.eq.s32.totalorder %s34, 1
    %p356 = por %p354, %p355
    %p358 = scmp.ne.s32.totalorder %s343, %s357
    %p359 = scmp.eq.s32.totalorder %s34, 0
    %p360 = por %p358, %p359
    %s362 = sadd.s32 %s361, 1
    %p365 = scmp.eq.s32.totalorder %s28, 1
    %p366 = scmp.ne.s32.totalorder %s361, %s363
    %p367 = scmp.eq.s32.totalorder %s28, 0
    %p368 = por %p366, %p367
    %p369 = scmp.ne.s32.totalorder %s361, %s363
    %p370 = scmp.eq.s32.totalorder %s33, 1
    %p371 = por %p369, %p370
    %p372 = scmp.ne.s32.totalorder %s363, %s364
    %p373 = scmp.eq.s32.totalorder %s33, 0
    %p374 = por %p372, %p373
    %p375 = scmp.ne.s32.totalorder %s363, %s364
    %p376 = scmp.eq.s32.totalorder %s34, 1
    %p377 = por %p375, %p376
    %p379 = scmp.ne.s32.totalorder %s364, %s378
    %p380 = scmp.eq.s32.totalorder %s34, 0
    %p381 = por %p379, %p380
    %s383 = sadd.s32 %s382, 1
    %p386 = scmp.eq.s32.totalorder %s28, 1
    %p387 = scmp.ne.s32.totalorder %s382, %s384
    %p388 = scmp.eq.s32.totalorder %s28, 0
    %p389 = por %p387, %p388
    %p390 = scmp.ne.s32.totalorder %s382, %s384
    %p391 = scmp.eq.s32.totalorder %s33, 1
    %p392 = por %p390, %p391
    %p393 = scmp.ne.s32.totalorder %s384, %s385
    %p394 = scmp.eq.s32.totalorder %s33, 0
    %p395 = por %p393, %p394
    %p396 = scmp.ne.s32.totalorder %s384, %s385
    %p397 = scmp.eq.s32.totalorder %s34, 1
    %p398 = por %p396, %p397
    %p400 = scmp.ne.s32.totalorder %s385, %s399
    %p401 = scmp.eq.s32.totalorder %s34, 0
    %p402 = por %p400, %p401
    %s404 = sadd.s32 %s403, 1
    %p407 = scmp.eq.s32.totalorder %s28, 1
    %p408 = scmp.ne.s32.totalorder %s403, %s405
    %p409 = scmp.eq.s32.totalorder %s28, 0
    %p410 = por %p408, %p409
    %p411 = scmp.ne.s32.totalorder %s403, %s405
    %p412 = scmp.eq.s32.totalorder %s33, 1
    %p413 = por %p411, %p412
    %p414 = scmp.ne.s32.totalorder %s405, %s406
    %p415 = scmp.eq.s32.totalorder %s33, 0
    %p416 = por %p414, %p415
    %p417 = scmp.ne.s32.totalorder %s405, %s406
    %p418 = scmp.eq.s32.totalorder %s34, 1
    %p419 = por %p417, %p418
    %p421 = scmp.ne.s32.totalorder %s406, %s420
    %p422 = scmp.eq.s32.totalorder %s34, 0
    %p423 = por %p421, %p422
    %s425 = sadd.s32 %s424, 1
    %p428 = scmp.eq.s32.totalorder %s28, 1
    %p429 = scmp.ne.s32.totalorder %s424, %s426
    %p430 = scmp.eq.s32.totalorder %s28, 0
    %p431 = por %p429, %p430
    %p432 = scmp.ne.s32.totalorder %s424, %s426
    %p433 = scmp.eq.s32.totalorder %s33, 1
    %p434 = por %p432, %p433
    %p435 = scmp.ne.s32.totalorder %s426, %s427
    %p436 = scmp.eq.s32.totalorder %s33, 0
    %p437 = por %p435, %p436
    %p438 = scmp.ne.s32.totalorder %s426, %s427
    %p439 = scmp.eq.s32.totalorder %s34, 1
    %p440 = por %p438, %p439
    %p442 = scmp.ne.s32.totalorder %s427, %s441
    %p443 = scmp.eq.s32.totalorder %s34, 0
    %p444 = por %p442, %p443
    %s446 = sadd.s32 %s445, 1
    %p449 = scmp.eq.s32.totalorder %s28, 1
    %p450 = scmp.ne.s32.totalorder %s445, %s447
    %p451 = scmp.eq.s32.totalorder %s28, 0
    %p452 = por %p450, %p451
    %p453 = scmp.ne.s32.totalorder %s445, %s447
    %p454 = scmp.eq.s32.totalorder %s33, 1
    %p455 = por %p453, %p454
    %p456 = scmp.ne.s32.totalorder %s447, %s448
    %p457 = scmp.eq.s32.totalorder %s33, 0
    %p458 = por %p456, %p457
    %p459 = scmp.ne.s32.totalorder %s447, %s448
    %p460 = scmp.eq.s32.totalorder %s34, 1
    %p461 = por %p459, %p460
    %p463 = scmp.ne.s32.totalorder %s448, %s462
    %p464 = scmp.eq.s32.totalorder %s34, 0
    %p465 = por %p463, %p464
    %s467 = sadd.s32 %s466, 1
    %p470 = scmp.eq.s32.totalorder %s28, 1
    %p471 = scmp.ne.s32.totalorder %s466, %s468
    %p472 = scmp.eq.s32.totalorder %s28, 0
    %p473 = por %p471, %p472
    %p474 = scmp.ne.s32.totalorder %s466, %s468
    %p475 = scmp.eq.s32.totalorder %s33, 1
    %p476 = por %p474, %p475
    %p477 = scmp.ne.s32.totalorder %s468, %s469
    %p478 = scmp.eq.s32.totalorder %s33, 0
    %p479 = por %p477, %p478
    %p480 = scmp.ne.s32.totalorder %s468, %s469
    %p481 = scmp.eq.s32.totalorder %s34, 1
    %p482 = por %p480, %p481
    %p484 = scmp.ne.s32.totalorder %s469, %s483
    %p485 = scmp.eq.s32.totalorder %s34, 0
    %p486 = por %p484, %p485
    %s488 = sadd.s32 %s487, 1
    %p491 = scmp.eq.s32.totalorder %s28, 1
    %p492 = scmp.ne.s32.totalorder %s487, %s489
    %p493 = scmp.eq.s32.totalorder %s28, 0
    %p494 = por %p492, %p493
    %p495 = scmp.ne.s32.totalorder %s487, %s489
    %p496 = scmp.eq.s32.totalorder %s33, 1
    %p497 = por %p495, %p496
    %p498 = scmp.ne.s32.totalorder %s489, %s490
    %p499 = scmp.eq.s32.totalorder %s33, 0
    %p500 = por %p498, %p499
    %p501 = scmp.ne.s32.totalorder %s489, %s490
    %p502 = scmp.eq.s32.totalorder %s34, 1
    %p503 = por %p501, %p502
    %p505 = scmp.ne.s32.totalorder %s490, %s504
    %p506 = scmp.eq.s32.totalorder %s34, 0
    %p507 = por %p505, %p506
    %s508 = ssub.s32 %s28, %s35
    %p509 = scmp.eq.s32.totalorder %s508, 0
    %s511 = sadd.s32 %s510, 1
    %s512 = scalar_select %p509, %s510, %s511
    %p515 = pneg %p509
    %p516 = scmp.eq.s32.totalorder %s28, 1
    %p517 = por %p515, %p516
    %p518 = scmp.ne.s32.totalorder %s510, %s513
    %p519 = scmp.eq.s32.totalorder %s28, 0
    %p520 = por %p518, %p519
    %p521 = scmp.ne.s32.totalorder %s510, %s513
    %p522 = scmp.eq.s32.totalorder %s33, 1
    %p523 = por %p521, %p522
    %p524 = scmp.ne.s32.totalorder %s513, %s514
    %p525 = scmp.eq.s32.totalorder %s33, 0
    %p526 = por %p524, %p525
    %p527 = scmp.ne.s32.totalorder %s513, %s514
    %p528 = scmp.eq.s32.totalorder %s34, 1
    %p529 = por %p527, %p528
    %p531 = scmp.ne.s32.totalorder %s514, %s530
    %p532 = scmp.eq.s32.totalorder %s34, 0
    %p533 = por %p531, %p532
    %p534 = scmp.le.s32.totalorder 1, %s28
    %p535 = scmp.lt.s32.totalorder %s28, 3
    %p536 = pnand %p534, %p535
    %p537 = pneg %p536
    // Predicated region
    $region9: #{transformer_decoder_forward.6} parent=5 // pred_check
      _
    $region10: #{transformer_decoder_forward.6} parent=5 // pred_check_branch
      %539 = sbr.rel (%p536) target = $region12
    $region11: #{transformer_decoder_forward.6} parent=5 // pred_region
      %s540 = ssub.s32 %s28, 1
      // Predicated region
      $region13: #{transformer_decoder_forward.6} parent=11 // pred_check
        %p541 = pneg %p101
      $region14: #{transformer_decoder_forward.6} parent=11 // pred_check_branch
        %543 = sbr.rel (%p541) target = $region16
      $region15: #{transformer_decoder_forward.6} parent=11 // pred_region
        _
      $region16: #{transformer_decoder_forward.6} parent=11 // pred_fallthru
        _
      // Predicated region
      $region17: #{transformer_decoder_forward.6} parent=11 // pred_check
        %p544 = pneg %p122
      $region18: #{transformer_decoder_forward.6} parent=11 // pred_check_branch
        %546 = sbr.rel (%p544) target = $region20
      $region19: #{transformer_decoder_forward.6} parent=11 // pred_region
        _
      $region20: #{transformer_decoder_forward.6} parent=11 // pred_fallthru
        _
      // Predicated region
      $region21: #{transformer_decoder_forward.6} parent=11 // pred_check
        %p547 = pneg %p143
      $region22: #{transformer_decoder_forward.6} parent=11 // pred_check_branch
        %549 = sbr.rel (%p547) target = $region24
      $region23: #{transformer_decoder_forward.6} parent=11 // pred_region
        _
      $region24: #{transformer_decoder_forward.6} parent=11 // pred_fallthru
        _
      // Predicated region
      $region25: #{transformer_decoder_forward.6} parent=11 // pred_check
        %p550 = pneg %p164
      $region26: #{transformer_decoder_forward.6} parent=11 // pred_check_branch
        %552 = sbr.rel (%p550) target = $region28
      $region27: #{transformer_decoder_forward.6} parent=11 // pred_region
        _
      $region28: #{transformer_decoder_forward.6} parent=11 // pred_fallthru
        _
      // Predicated region
      $region29: #{transformer_decoder_forward.6} parent=11 // pred_check
        %p553 = pneg %p185
      $region30: #{transformer_decoder_forward.6} parent=11 // pred_check_branch
        %555 = sbr.rel (%p553) target = $region32
      $region31: #{transformer_decoder_forward.6} parent=11 // pred_region
        _
      $region32: #{transformer_decoder_forward.6} parent=11 // pred_fallthru
        _
      // Predicated region
      $region33: #{transformer_decoder_forward.6} parent=11 // pred_check
        %p556 = pneg %p206
      $region34: #{transformer_decoder_forward.6} parent=11 // pred_check_branch
        %558 = sbr.rel (%p556) target = $region36
      $region35: #{transformer_decoder_forward.6} parent=11 // pred_region
        _
      $region36: #{transformer_decoder_forward.6} parent=11 // pred_fallthru
        _
      // Predicated region
      $region37: #{transformer_decoder_forward.6} parent=11 // pred_check
        %p559 = pneg %p227
      $region38: #{transformer_decoder_forward.6} parent=11 // pred_check_branch
        %561 = sbr.rel (%p559) target = $region40
      $region39: #{transformer_decoder_forward.6} parent=11 // pred_region
        _
      $region40: #{transformer_decoder_forward.6} parent=11 // pred_fallthru
        _
      // Predicated region
      $region41: #{transformer_decoder_forward.6} parent=11 // pred_check
        %p562 = pneg %p248
      $region42: #{transformer_decoder_forward.6} parent=11 // pred_check_branch
        %564 = sbr.rel (%p562) target = $region44
      $region43: #{transformer_decoder_forward.6} parent=11 // pred_region
        _
      $region44: #{transformer_decoder_forward.6} parent=11 // pred_fallthru
        _
      // Predicated region
      $region45: #{transformer_decoder_forward.6} parent=11 // pred_check
        %p565 = pneg %p269
      $region46: #{transformer_decoder_forward.6} parent=11 // pred_check_branch
        %567 = sbr.rel (%p565) target = $region48
      $region47: #{transformer_decoder_forward.6} parent=11 // pred_region
        _
      $region48: #{transformer_decoder_forward.6} parent=11 // pred_fallthru
        _
      // Predicated region
      $region49: #{transformer_decoder_forward.6} parent=11 // pred_check
        %p568 = pneg %p290
      $region50: #{transformer_decoder_forward.6} parent=11 // pred_check_branch
        %570 = sbr.rel (%p568) target = $region52
      $region51: #{transformer_decoder_forward.6} parent=11 // pred_region
        _
      $region52: #{transformer_decoder_forward.6} parent=11 // pred_fallthru
        _
      // Predicated region
      $region53: #{transformer_decoder_forward.6} parent=11 // pred_check
        %p571 = pneg %p311
      $region54: #{transformer_decoder_forward.6} parent=11 // pred_check_branch
        %573 = sbr.rel (%p571) target = $region56
      $region55: #{transformer_decoder_forward.6} parent=11 // pred_region
        _
      $region56: #{transformer_decoder_forward.6} parent=11 // pred_fallthru
        _
      // Predicated region
      $region57: #{transformer_decoder_forward.6} parent=11 // pred_check
        %p574 = pneg %p332
      $region58: #{transformer_decoder_forward.6} parent=11 // pred_check_branch
        %576 = sbr.rel (%p574) target = $region60
      $region59: #{transformer_decoder_forward.6} parent=11 // pred_region
        _
      $region60: #{transformer_decoder_forward.6} parent=11 // pred_fallthru
        _
      // Predicated region
      $region61: #{transformer_decoder_forward.6} parent=11 // pred_check
        %p577 = pneg %p353
      $region62: #{transformer_decoder_forward.6} parent=11 // pred_check_branch
        %579 = sbr.rel (%p577) target = $region64
      $region63: #{transformer_decoder_forward.6} parent=11 // pred_region
        _
      $region64: #{transformer_decoder_forward.6} parent=11 // pred_fallthru
        _
      // Predicated region
      $region65: #{transformer_decoder_forward.6} parent=11 // pred_check
        %p580 = pneg %p374
      $region66: #{transformer_decoder_forward.6} parent=11 // pred_check_branch
        %582 = sbr.rel (%p580) target = $region68
      $region67: #{transformer_decoder_forward.6} parent=11 // pred_region
        _
      $region68: #{transformer_decoder_forward.6} parent=11 // pred_fallthru
        _
      // Predicated region
      $region69: #{transformer_decoder_forward.6} parent=11 // pred_check
        %p583 = pneg %p395
      $region70: #{transformer_decoder_forward.6} parent=11 // pred_check_branch
        %585 = sbr.rel (%p583) target = $region72
      $region71: #{transformer_decoder_forward.6} parent=11 // pred_region
        _
      $region72: #{transformer_decoder_forward.6} parent=11 // pred_fallthru
        _
      // Predicated region
      $region73: #{transformer_decoder_forward.6} parent=11 // pred_check
        %p586 = pneg %p416
      $region74: #{transformer_decoder_forward.6} parent=11 // pred_check_branch
        %588 = sbr.rel (%p586) target = $region76
      $region75: #{transformer_decoder_forward.6} parent=11 // pred_region
        _
      $region76: #{transformer_decoder_forward.6} parent=11 // pred_fallthru
        _
      // Predicated region
      $region77: #{transformer_decoder_forward.6} parent=11 // pred_check
        %p589 = pneg %p437
      $region78: #{transformer_decoder_forward.6} parent=11 // pred_check_branch
        %591 = sbr.rel (%p589) target = $region80
      $region79: #{transformer_decoder_forward.6} parent=11 // pred_region
        _
      $region80: #{transformer_decoder_forward.6} parent=11 // pred_fallthru
        _
      // Predicated region
      $region81: #{transformer_decoder_forward.6} parent=11 // pred_check
        %p592 = pneg %p458
      $region82: #{transformer_decoder_forward.6} parent=11 // pred_check_branch
        %594 = sbr.rel (%p592) target = $region84
      $region83: #{transformer_decoder_forward.6} parent=11 // pred_region
        _
      $region84: #{transformer_decoder_forward.6} parent=11 // pred_fallthru
        _
      // Predicated region
      $region85: #{transformer_decoder_forward.6} parent=11 // pred_check
        %p595 = pneg %p479
      $region86: #{transformer_decoder_forward.6} parent=11 // pred_check_branch
        %597 = sbr.rel (%p595) target = $region88
      $region87: #{transformer_decoder_forward.6} parent=11 // pred_region
        _
      $region88: #{transformer_decoder_forward.6} parent=11 // pred_fallthru
        _
      // Predicated region
      $region89: #{transformer_decoder_forward.6} parent=11 // pred_check
        %p598 = pneg %p500
      $region90: #{transformer_decoder_forward.6} parent=11 // pred_check_branch
        %600 = sbr.rel (%p598) target = $region92
      $region91: #{transformer_decoder_forward.6} parent=11 // pred_region
        _
      $region92: #{transformer_decoder_forward.6} parent=11 // pred_fallthru
        _
    $region12: #{transformer_decoder_forward.6} parent=5 // pred_fallthru
      _
    %p601 = scmp.lt.s32.totalorder %s28, 2
    // Predicated region
    $region93: #{transformer_decoder_forward.6} parent=5 // pred_check
      %p602 = pneg %p601
    $region94: #{transformer_decoder_forward.6} parent=5 // pred_check_branch
      %604 = sbr.rel (%p602) target = $region96
    $region95: #{transformer_decoder_forward.6} parent=5 // pred_region
      // Predicated region
      $region97: #{transformer_decoder_forward.6} parent=95 // pred_check
        %p605 = pneg %p48
      $region98: #{transformer_decoder_forward.6} parent=95 // pred_check_branch
        %607 = sbr.rel (%p605) target = $region100
      $region99: #{transformer_decoder_forward.6} parent=95 // pred_region
        %p608 = scmp.lt.s32.totalorder %s28, 1
        %s609 = scalar_select %p608, %s28, 1
        %s610 = smul.addr %s609, 8
        %s611 = scalar_lea.vmem %s0, %s610
      $region100: #{transformer_decoder_forward.6} parent=95 // pred_fallthru
        _
      // Predicated region
      $region101: #{transformer_decoder_forward.6} parent=95 // pred_check
        %p612 = pneg %p74
      $region102: #{transformer_decoder_forward.6} parent=95 // pred_check_branch
        %614 = sbr.rel (%p612) target = $region104
      $region103: #{transformer_decoder_forward.6} parent=95 // pred_region
        %p615 = scmp.lt.s32.totalorder %s28, 1
        %s616 = scalar_select %p615, %s28, 1
        %s617 = smul.addr %s616, 8
        %s618 = scalar_lea.vmem %s1, %s617
      $region104: #{transformer_decoder_forward.6} parent=95 // pred_fallthru
        _
    $region96: #{transformer_decoder_forward.6} parent=5 // pred_fallthru
      _
    %p619 = scmp.le.s32.totalorder 1, %s28
    %p620 = scmp.lt.s32.totalorder %s28, 3
    %p621 = pnand %p619, %p620
    %p622 = pneg %p621
    // Predicated region
    $region105: #{transformer_decoder_forward.6} parent=5 // pred_check
      _
    $region106: #{transformer_decoder_forward.6} parent=5 // pred_check_branch
      %624 = sbr.rel (%p621) target = $region108
    $region107: #{transformer_decoder_forward.6} parent=5 // pred_region
      %s625 = ssub.s32 %s28, 1
      %p626 = scmp.lt.s32.totalorder %s33, 1
      %s627 = scalar_select %p626, %s33, 1
      %s628 = smul.addr %s627, 8
      %s629 = scalar_lea.vmem %s0, %s628
      %p630 = pneg %p54
      %p631 = pneg %p51
      %p632 = scmp.lt.s32.totalorder %s33, 1
      %s633 = scalar_select %p632, %s33, 1
      %s634 = smul.addr %s633, 8
      %s635 = scalar_lea.vmem %s1, %s634
      %p636 = pneg %p80
      %p637 = pneg %p77
      %p638 = pneg %p101
      %p639 = pneg %p98
      %p640 = pneg %p122
      %p641 = pneg %p119
      %p642 = pneg %p143
      %p643 = pneg %p140
      %p644 = pneg %p164
      %p645 = pneg %p161
      %p646 = pneg %p185
      %p647 = pneg %p182
      %p648 = pneg %p206
      %p649 = pneg %p203
      %p650 = pneg %p227
      %p651 = pneg %p224
      %p652 = pneg %p248
      %p653 = pneg %p245
      %p654 = pneg %p269
      %p655 = pneg %p266
      %p656 = pneg %p290
      %p657 = pneg %p287
      %p658 = pneg %p311
      %p659 = pneg %p308
      %p660 = pneg %p332
      %p661 = pneg %p329
      %p662 = pneg %p353
      %p663 = pneg %p350
      %p664 = pneg %p374
      %p665 = pneg %p371
      %p666 = pneg %p395
      %p667 = pneg %p392
      %p668 = pneg %p416
      %p669 = pneg %p413
      %p670 = pneg %p437
      %p671 = pneg %p434
      %p672 = pneg %p458
      %p673 = pneg %p455
      %p674 = pneg %p479
      %p675 = pneg %p476
      %p676 = pneg %p500
      %p677 = pneg %p497
      %p678 = pneg %p526
      %p679 = pneg %p523
      %p680 = scmp.lt.s32.totalorder %s33, 1
      %s681 = scalar_select %p680, %s33, 1
      %s682 = smul.addr %s681, 8
      %s683 = scalar_lea.vmem %s22, %s682
      %p684 = scmp.lt.s32.totalorder %s33, 1
      %s685 = scalar_select %p684, %s33, 1
      %s686 = smul.addr %s685, 8
      %s687 = scalar_lea.vmem %s0, %s686
      %p688 = scmp.lt.s32.totalorder %s33, 1
      %s689 = scalar_select %p688, %s33, 1
      %s690 = smul.addr %s689, 8
      %s691 = scalar_lea.vmem %s1, %s690
      %p692 = scmp.lt.s32.totalorder %s33, 1
      %s693 = scalar_select %p692, %s33, 1
      %s694 = smul.addr %s693, 8
      %s695 = scalar_lea.vmem %s22, %s694
      %v697 = vld [vmem:[%s687] sm:$0xff]
      %v698 = vld [vmem:[%s691] sm:$0xff]
      %v699 = vpack.c.bf16 %v697, %v697
      %v700 = vld [vmem:[%s2] sm:$0xf]
      %v701 = vld [vmem:[%s2 + $0x4] sm:$0xf]
      %v702 = vld [vmem:[%s2 + $0x8] sm:$0xf]
      %v703 = vld [vmem:[%s2 + $0xc] sm:$0xf]
      %v704 = vld [vmem:[%s3] sm:$0x1]
      %v706 = vlaneseq
      %v707 = vshrl.u32 %v706, 7
      %v708 = vsub.s32 0, %v707
      %v709 = vrot.slane %v704, %v708
      %v715 = vunpack.c.l.b16 %v700
      %v716 = vunpack.c.l.b16 %v701
      %v717 = vunpack.c.l.b16 %v702
      %v718 = vunpack.c.l.b16 %v703
      %v719 = vpack.c.b16 %v716, %v715
      %v720 = vpack.c.b16 %v718, %v717
      %vm723 = vcmask 261120
      %v725 = vsel %vm723, %v699, 0
      %727 = vmatprep.subr.bf16.mxu0 0
      %728 = vmatpush1.bf16.msra.mxu0 %v719
      %729 = vmatprep.subr.bf16.mxu0 0
      %730 = vmatpush1.bf16.msra.mxu0 %v720
      %731 = vmatprep.subr.bf16.mxu0 0
      %732 = vmatpush1.bf16.msra.mxu0 0
      %733 = vmatprep.subr.bf16.mxu0 0
      %734 = vmatpush1.bf16.msra.mxu0 0
      %735 = vmatprep.subr.bf16.mxu0 0
      %736 = vmatpush1.bf16.msra.mxu0 0
      %737 = vmatprep.subr.bf16.mxu0 0
      %738 = vmatpush1.bf16.msra.mxu0 0
      %739 = vmatprep.subr.bf16.mxu0 0
      %740 = vmatpush1.bf16.msra.mxu0 0
      %741 = vmatprep.subr.bf16.mxu0 0
      %742 = vmatpush1.bf16.msra.mxu0 0
      %743 = vmatprep.subr.bf16.mxu0 0
      %744 = vmatpush1.bf16.msra.mxu0 0
      %745 = vmatprep.subr.bf16.mxu0 0
      %746 = vmatpush1.bf16.msra.mxu0 0
      %747 = vmatprep.subr.bf16.mxu0 0
      %748 = vmatpush1.bf16.msra.mxu0 0
      %749 = vmatprep.subr.bf16.mxu0 0
      %750 = vmatpush1.bf16.msra.mxu0 0
      %751 = vmatprep.subr.bf16.mxu0 0
      %752 = vmatpush1.bf16.msra.mxu0 0
      %753 = vmatprep.subr.bf16.mxu0 0
      %754 = vmatpush1.bf16.msra.mxu0 0
      %755 = vmatprep.subr.bf16.mxu0 0
      %756 = vmatpush1.bf16.msra.mxu0 0
      %757 = vmatprep.subr.bf16.mxu0 0
      %758 = vmatpush1.bf16.msra.mxu0 0
      %759 = vmatprep.mubr.bf16.mxu0 0
      %760 = vmatmul.mubr.bf16.gmra.mrb[0].mxu0 %v725
      %v761 = vpop.f32.mrb[0].mxu0
      %v762 = vadd.f32 %v709, %v761
      %v763 = vpop.f32.mrb[0].mxu0
      %v764 = vpop.f32.mrb[0].mxu0
      %v765 = vpop.f32.mrb[0].mxu0
      %766 = vdwg.mxu0
      %768 = vrot.lane.b32.xlu0 %v762, 120
      %v769 = vpop.permute.xlu0 %768
      %771 = vrot.lane.b32.xlu0 %v762, 112
      %v772 = vpop.permute.xlu0 %771
      %774 = vrot.lane.b32.xlu0 %v762, 104
      %v775 = vpop.permute.xlu0 %774
      %v777 = vpack.c.bf16 %v762, %v762
      %v778 = vpack.c.bf16 %v769, %v769
      %v779 = vpack.c.bf16 %v772, %v772
      %v780 = vpack.c.bf16 %v775, %v775
      %782 = vrot.lane.b32.xlu0 %v777, 96
      %v783 = vpop.permute.xlu0 %782
      %vm784 = vcmask 64512
      %v786 = vsel %vm784, %v777, 0
      %v789 = vsel %vm784, %v783, 0
      %791 = vmatprep.subr.bf16.mxu0 0
      %792 = vmatpush1.bf16.xpose.msra.mxu0 %v789
      %793 = vmatprep.subr.bf16.mxu0 0
      %794 = vmatpush1.bf16.xpose.msra.mxu0 0
      %795 = vmatprep.subr.bf16.mxu0 0
      %796 = vmatpush1.bf16.xpose.msra.mxu0 0
      %797 = vmatprep.subr.bf16.mxu0 0
      %798 = vmatpush1.bf16.xpose.msra.mxu0 0
      %799 = vmatprep.subr.bf16.mxu0 0
      %800 = vmatpush1.bf16.xpose.msra.mxu0 0
      %801 = vmatprep.subr.bf16.mxu0 0
      %802 = vmatpush1.bf16.xpose.msra.mxu0 0
      %803 = vmatprep.subr.bf16.mxu0 0
      %804 = vmatpush1.bf16.xpose.msra.mxu0 0
      %805 = vmatprep.subr.bf16.mxu0 0
      %806 = vmatpush1.bf16.xpose.msra.mxu0 0
      %807 = vmatprep.subr.bf16.mxu0 0
      %808 = vmatpush1.bf16.xpose.msra.mxu0 0
      %809 = vmatprep.subr.bf16.mxu0 0
      %810 = vmatpush1.bf16.xpose.msra.mxu0 0
      %811 = vmatprep.subr.bf16.mxu0 0
      %812 = vmatpush1.bf16.xpose.msra.mxu0 0
      %813 = vmatprep.subr.bf16.mxu0 0
      %814 = vmatpush1.bf16.xpose.msra.mxu0 0
      %815 = vmatprep.subr.bf16.mxu0 0
      %816 = vmatpush1.bf16.xpose.msra.mxu0 0
      %817 = vmatprep.subr.bf16.mxu0 0
      %818 = vmatpush1.bf16.xpose.msra.mxu0 0
      %819 = vmatprep.subr.bf16.mxu0 0
      %820 = vmatpush1.bf16.xpose.msra.mxu0 0
      %821 = vmatprep.subr.bf16.mxu0 0
      %822 = vmatpush1.bf16.xpose.msra.mxu0 0
      %823 = vmatprep.mubr.bf16.mxu0 0
      %824 = vmatmul.mubr.bf16.gmra.mrb[0].mxu0 %v786
      %v825 = vpop.f32.mrb[0].mxu0
      %v826 = vadd.f32 0.0, %v825
      %v827 = vpop.f32.mrb[0].mxu0
      %v828 = vpop.f32.mrb[0].mxu0
      %v829 = vpop.f32.mrb[0].mxu0
      %830 = vdwg.mxu0
      %832 = vrot.lane.b32.xlu0 %v778, 96
      %v833 = vpop.permute.xlu0 %832
      %v835 = vsel %vm784, %v778, 0
      %v838 = vsel %vm784, %v833, 0
      %840 = vmatprep.subr.bf16.mxu0 0
      %841 = vmatpush1.bf16.xpose.msra.mxu0 %v838
      %842 = vmatprep.subr.bf16.mxu0 0
      %843 = vmatpush1.bf16.xpose.msra.mxu0 0
      %844 = vmatprep.subr.bf16.mxu0 0
      %845 = vmatpush1.bf16.xpose.msra.mxu0 0
      %846 = vmatprep.subr.bf16.mxu0 0
      %847 = vmatpush1.bf16.xpose.msra.mxu0 0
      %848 = vmatprep.subr.bf16.mxu0 0
      %849 = vmatpush1.bf16.xpose.msra.mxu0 0
      %850 = vmatprep.subr.bf16.mxu0 0
      %851 = vmatpush1.bf16.xpose.msra.mxu0 0
      %852 = vmatprep.subr.bf16.mxu0 0
      %853 = vmatpush1.bf16.xpose.msra.mxu0 0
      %854 = vmatprep.subr.bf16.mxu0 0
      %855 = vmatpush1.bf16.xpose.msra.mxu0 0
      %856 = vmatprep.subr.bf16.mxu0 0
      %857 = vmatpush1.bf16.xpose.msra.mxu0 0
      %858 = vmatprep.subr.bf16.mxu0 0
      %859 = vmatpush1.bf16.xpose.msra.mxu0 0
      %860 = vmatprep.subr.bf16.mxu0 0
      %861 = vmatpush1.bf16.xpose.msra.mxu0 0
      %862 = vmatprep.subr.bf16.mxu0 0
      %863 = vmatpush1.bf16.xpose.msra.mxu0 0
      %864 = vmatprep.subr.bf16.mxu0 0
      %865 = vmatpush1.bf16.xpose.msra.mxu0 0
      %866 = vmatprep.subr.bf16.mxu0 0
      %867 = vmatpush1.bf16.xpose.msra.mxu0 0
      %868 = vmatprep.subr.bf16.mxu0 0
      %869 = vmatpush1.bf16.xpose.msra.mxu0 0
      %870 = vmatprep.subr.bf16.mxu0 0
      %871 = vmatpush1.bf16.xpose.msra.mxu0 0
      %872 = vmatprep.mubr.bf16.mxu0 0
      %873 = vmatmul.mubr.bf16.gmra.mrb[0].mxu0 %v835
      %v874 = vpop.f32.mrb[0].mxu0
      %v875 = vadd.f32 0.0, %v874
      %v876 = vpop.f32.mrb[0].mxu0
      %v877 = vpop.f32.mrb[0].mxu0
      %v878 = vpop.f32.mrb[0].mxu0
      %879 = vdwg.mxu0
      %881 = vrot.lane.b32.xlu0 %v779, 96
      %v882 = vpop.permute.xlu0 %881
      %v884 = vsel %vm784, %v779, 0
      %v887 = vsel %vm784, %v882, 0
      %889 = vmatprep.subr.bf16.mxu0 0
      %890 = vmatpush1.bf16.xpose.msra.mxu0 %v887
      %891 = vmatprep.subr.bf16.mxu0 0
      %892 = vmatpush1.bf16.xpose.msra.mxu0 0
      %893 = vmatprep.subr.bf16.mxu0 0
      %894 = vmatpush1.bf16.xpose.msra.mxu0 0
      %895 = vmatprep.subr.bf16.mxu0 0
      %896 = vmatpush1.bf16.xpose.msra.mxu0 0
      %897 = vmatprep.subr.bf16.mxu0 0
      %898 = vmatpush1.bf16.xpose.msra.mxu0 0
      %899 = vmatprep.subr.bf16.mxu0 0
      %900 = vmatpush1.bf16.xpose.msra.mxu0 0
      %901 = vmatprep.subr.bf16.mxu0 0
      %902 = vmatpush1.bf16.xpose.msra.mxu0 0
      %903 = vmatprep.subr.bf16.mxu0 0
      %904 = vmatpush1.bf16.xpose.msra.mxu0 0
      %905 = vmatprep.subr.bf16.mxu0 0
      %906 = vmatpush1.bf16.xpose.msra.mxu0 0
      %907 = vmatprep.subr.bf16.mxu0 0
      %908 = vmatpush1.bf16.xpose.msra.mxu0 0
      %909 = vmatprep.subr.bf16.mxu0 0
      %910 = vmatpush1.bf16.xpose.msra.mxu0 0
      %911 = vmatprep.subr.bf16.mxu0 0
      %912 = vmatpush1.bf16.xpose.msra.mxu0 0
      %913 = vmatprep.subr.bf16.mxu0 0
      %914 = vmatpush1.bf16.xpose.msra.mxu0 0
      %915 = vmatprep.subr.bf16.mxu0 0
      %916 = vmatpush1.bf16.xpose.msra.mxu0 0
      %917 = vmatprep.subr.bf16.mxu0 0
      %918 = vmatpush1.bf16.xpose.msra.mxu0 0
      %919 = vmatprep.subr.bf16.mxu0 0
      %920 = vmatpush1.bf16.xpose.msra.mxu0 0
      %921 = vmatprep.mubr.bf16.mxu0 0
      %922 = vmatmul.mubr.bf16.gmra.mrb[0].mxu0 %v884
      %v923 = vpop.f32.mrb[0].mxu0
      %v924 = vadd.f32 0.0, %v923
      %v925 = vpop.f32.mrb[0].mxu0
      %v926 = vpop.f32.mrb[0].mxu0
      %v927 = vpop.f32.mrb[0].mxu0
      %928 = vdwg.mxu0
      %930 = vrot.lane.b32.xlu0 %v780, 96
      %v931 = vpop.permute.xlu0 %930
      %v933 = vsel %vm784, %v780, 0
      %v936 = vsel %vm784, %v931, 0
      %938 = vmatprep.subr.bf16.mxu0 0
      %939 = vmatpush1.bf16.xpose.msra.mxu0 %v936
      %940 = vmatprep.subr.bf16.mxu0 0
      %941 = vmatpush1.bf16.xpose.msra.mxu0 0
      %942 = vmatprep.subr.bf16.mxu0 0
      %943 = vmatpush1.bf16.xpose.msra.mxu0 0
      %944 = vmatprep.subr.bf16.mxu0 0
      %945 = vmatpush1.bf16.xpose.msra.mxu0 0
      %946 = vmatprep.subr.bf16.mxu0 0
      %947 = vmatpush1.bf16.xpose.msra.mxu0 0
      %948 = vmatprep.subr.bf16.mxu0 0
      %949 = vmatpush1.bf16.xpose.msra.mxu0 0
      %950 = vmatprep.subr.bf16.mxu0 0
      %951 = vmatpush1.bf16.xpose.msra.mxu0 0
      %952 = vmatprep.subr.bf16.mxu0 0
      %953 = vmatpush1.bf16.xpose.msra.mxu0 0
      %954 = vmatprep.subr.bf16.mxu0 0
      %955 = vmatpush1.bf16.xpose.msra.mxu0 0
      %956 = vmatprep.subr.bf16.mxu0 0
      %957 = vmatpush1.bf16.xpose.msra.mxu0 0
      %958 = vmatprep.subr.bf16.mxu0 0
      %959 = vmatpush1.bf16.xpose.msra.mxu0 0
      %960 = vmatprep.subr.bf16.mxu0 0
      %961 = vmatpush1.bf16.xpose.msra.mxu0 0
      %962 = vmatprep.subr.bf16.mxu0 0
      %963 = vmatpush1.bf16.xpose.msra.mxu0 0
      %964 = vmatprep.subr.bf16.mxu0 0
      %965 = vmatpush1.bf16.xpose.msra.mxu0 0
      %966 = vmatprep.subr.bf16.mxu0 0
      %967 = vmatpush1.bf16.xpose.msra.mxu0 0
      %968 = vmatprep.subr.bf16.mxu0 0
      %969 = vmatpush1.bf16.xpose.msra.mxu0 0
      %970 = vmatprep.mubr.bf16.mxu0 0
      %971 = vmatmul.mubr.bf16.gmra.mrb[0].mxu0 %v933
      %v972 = vpop.f32.mrb[0].mxu0
      %v973 = vadd.f32 0.0, %v972
      %v974 = vpop.f32.mrb[0].mxu0
      %v975 = vpop.f32.mrb[0].mxu0
      %v976 = vpop.f32.mrb[0].mxu0
      %977 = vdwg.mxu0
      %v978 = vlaneseq
      %v979 = vshrl.u32 %v978, 7
      %v980 = vlaneseq
      %v981 = vand.u32 %v980, 127
      %vm982 = vcmp.ge.s32.totalorder %v979, %v981
      %v983 = vsel %vm982, 1, 0
      %vm984 = vcmp.eq.s32.totalorder %v983, 1
      %v985 = vsel %vm984, %v826, -1e+30
      %v986 = vsel %vm984, %v875, -1e+30
      %v987 = vsel %vm984, %v924, -1e+30
      %v988 = vsel %vm984, %v973, -1e+30
      %v989 = vsel %vm784, %v985, -inf
      %990 = vmax.xlane.f32.xlu0 %v989
      %v991 = vpop.xlane.xlu0 %990
      %v992 = vsel %vm784, %v986, -inf
      %993 = vmax.xlane.f32.xlu0 %v992
      %v994 = vpop.xlane.xlu0 %993
      %v995 = vsel %vm784, %v987, -inf
      %996 = vmax.xlane.f32.xlu0 %v995
      %v997 = vpop.xlane.xlu0 %996
      %v998 = vsel %vm784, %v988, -inf
      %999 = vmax.xlane.f32.xlu0 %v998
      %v1000 = vpop.xlane.xlu0 %999
      %v1001 = vsub.f32 %v985, %v991
      %v1002 = vsub.f32 %v986, %v994
      %v1003 = vsub.f32 %v987, %v997
      %v1004 = vsub.f32 %v988, %v1000
      %v1005 = vmul.f32 %v1001, 1.442695
      %v1006 = vpow.pop %v1005
      %v1007 = vmul.f32 %v1002, 1.442695
      %v1008 = vpow.pop %v1007
      %v1009 = vmul.f32 %v1003, 1.442695
      %v1010 = vpow.pop %v1009
      %v1011 = vmul.f32 %v1004, 1.442695
      %v1012 = vpow.pop %v1011
      %v1013 = vsel %vm784, %v1006, 0.0
      %1014 = vadd.xlane.f32.xlu0 %v1013
      %v1015 = vpop.xlane.xlu0 %1014
      %v1016 = vsel %vm784, %v1008, 0.0
      %1017 = vadd.xlane.f32.xlu0 %v1016
      %v1018 = vpop.xlane.xlu0 %1017
      %v1019 = vsel %vm784, %v1010, 0.0
      %1020 = vadd.xlane.f32.xlu0 %v1019
      %v1021 = vpop.xlane.xlu0 %1020
      %v1022 = vsel %vm784, %v1012, 0.0
      %1023 = vadd.xlane.f32.xlu0 %v1022
      %v1024 = vpop.xlane.xlu0 %1023
      %v1025 = vrcp.pop %v1015
      %v1026 = vmul.f32 %v1006, %v1025
      %v1027 = vrcp.pop %v1018
      %v1028 = vmul.f32 %v1008, %v1027
      %v1029 = vrcp.pop %v1021
      %v1030 = vmul.f32 %v1010, %v1029
      %v1031 = vrcp.pop %v1024
      %v1032 = vmul.f32 %v1012, %v1031
      %v1033 = vpack.c.bf16 %v1026, %v1026
      %v1034 = vpack.c.bf16 %v1028, %v1028
      %v1035 = vpack.c.bf16 %v1030, %v1030
      %v1036 = vpack.c.bf16 %v1032, %v1032
      %1037 = vrot.lane.b32.xlu0 %v777, 64
      %v1038 = vpop.permute.xlu0 %1037
      %v1040 = vsel %vm784, %v1033, 0
      %vm1042 = vcmask 1043456
      %v1044 = vsel %vm1042, %v1038, 0
      %1046 = vmatprep.subr.bf16.mxu0 0
      %1047 = vmatpush1.bf16.msra.mxu0 %v1044
      %1048 = vmatprep.subr.bf16.mxu0 0
      %1049 = vmatpush1.bf16.msra.mxu0 0
      %1050 = vmatprep.subr.bf16.mxu0 0
      %1051 = vmatpush1.bf16.msra.mxu0 0
      %1052 = vmatprep.subr.bf16.mxu0 0
      %1053 = vmatpush1.bf16.msra.mxu0 0
      %1054 = vmatprep.subr.bf16.mxu0 0
      %1055 = vmatpush1.bf16.msra.mxu0 0
      %1056 = vmatprep.subr.bf16.mxu0 0
      %1057 = vmatpush1.bf16.msra.mxu0 0
      %1058 = vmatprep.subr.bf16.mxu0 0
      %1059 = vmatpush1.bf16.msra.mxu0 0
      %1060 = vmatprep.subr.bf16.mxu0 0
      %1061 = vmatpush1.bf16.msra.mxu0 0
      %1062 = vmatprep.subr.bf16.mxu0 0
      %1063 = vmatpush1.bf16.msra.mxu0 0
      %1064 = vmatprep.subr.bf16.mxu0 0
      %1065 = vmatpush1.bf16.msra.mxu0 0
      %1066 = vmatprep.subr.bf16.mxu0 0
      %1067 = vmatpush1.bf16.msra.mxu0 0
      %1068 = vmatprep.subr.bf16.mxu0 0
      %1069 = vmatpush1.bf16.msra.mxu0 0
      %1070 = vmatprep.subr.bf16.mxu0 0
      %1071 = vmatpush1.bf16.msra.mxu0 0
      %1072 = vmatprep.subr.bf16.mxu0 0
      %1073 = vmatpush1.bf16.msra.mxu0 0
      %1074 = vmatprep.subr.bf16.mxu0 0
      %1075 = vmatpush1.bf16.msra.mxu0 0
      %1076 = vmatprep.subr.bf16.mxu0 0
      %1077 = vmatpush1.bf16.msra.mxu0 0
      %1078 = vmatprep.mubr.bf16.mxu0 0
      %1079 = vmatmul.mubr.bf16.gmra.mrb[0].mxu0 %v1040
      %v1080 = vpop.f32.mrb[0].mxu0
      %v1081 = vadd.f32 0.0, %v1080
      %v1082 = vpop.f32.mrb[0].mxu0
      %v1083 = vpop.f32.mrb[0].mxu0
      %v1084 = vpop.f32.mrb[0].mxu0
      %1085 = vdwg.mxu0
      %1086 = vrot.lane.b32.xlu0 %v778, 64
      %v1087 = vpop.permute.xlu0 %1086
      %v1089 = vsel %vm784, %v1034, 0
      %v1092 = vsel %vm1042, %v1087, 0
      %1094 = vmatprep.subr.bf16.mxu0 0
      %1095 = vmatpush1.bf16.msra.mxu0 %v1092
      %1096 = vmatprep.subr.bf16.mxu0 0
      %1097 = vmatpush1.bf16.msra.mxu0 0
      %1098 = vmatprep.subr.bf16.mxu0 0
      %1099 = vmatpush1.bf16.msra.mxu0 0
      %1100 = vmatprep.subr.bf16.mxu0 0
      %1101 = vmatpush1.bf16.msra.mxu0 0
      %1102 = vmatprep.subr.bf16.mxu0 0
      %1103 = vmatpush1.bf16.msra.mxu0 0
      %1104 = vmatprep.subr.bf16.mxu0 0
      %1105 = vmatpush1.bf16.msra.mxu0 0
      %1106 = vmatprep.subr.bf16.mxu0 0
      %1107 = vmatpush1.bf16.msra.mxu0 0
      %1108 = vmatprep.subr.bf16.mxu0 0
      %1109 = vmatpush1.bf16.msra.mxu0 0
      %1110 = vmatprep.subr.bf16.mxu0 0
      %1111 = vmatpush1.bf16.msra.mxu0 0
      %1112 = vmatprep.subr.bf16.mxu0 0
      %1113 = vmatpush1.bf16.msra.mxu0 0
      %1114 = vmatprep.subr.bf16.mxu0 0
      %1115 = vmatpush1.bf16.msra.mxu0 0
      %1116 = vmatprep.subr.bf16.mxu0 0
      %1117 = vmatpush1.bf16.msra.mxu0 0
      %1118 = vmatprep.subr.bf16.mxu0 0
      %1119 = vmatpush1.bf16.msra.mxu0 0
      %1120 = vmatprep.subr.bf16.mxu0 0
      %1121 = vmatpush1.bf16.msra.mxu0 0
      %1122 = vmatprep.subr.bf16.mxu0 0
      %1123 = vmatpush1.bf16.msra.mxu0 0
      %1124 = vmatprep.subr.bf16.mxu0 0
      %1125 = vmatpush1.bf16.msra.mxu0 0
      %1126 = vmatprep.mubr.bf16.mxu0 0
      %1127 = vmatmul.mubr.bf16.gmra.mrb[0].mxu0 %v1089
      %v1128 = vpop.f32.mrb[0].mxu0
      %v1129 = vadd.f32 0.0, %v1128
      %v1130 = vpop.f32.mrb[0].mxu0
      %v1131 = vpop.f32.mrb[0].mxu0
      %v1132 = vpop.f32.mrb[0].mxu0
      %1133 = vdwg.mxu0
      %1134 = vrot.lane.b32.xlu0 %v779, 64
      %v1135 = vpop.permute.xlu0 %1134
      %v1137 = vsel %vm784, %v1035, 0
      %v1140 = vsel %vm1042, %v1135, 0
      %1142 = vmatprep.subr.bf16.mxu0 0
      %1143 = vmatpush1.bf16.msra.mxu0 %v1140
      %1144 = vmatprep.subr.bf16.mxu0 0
      %1145 = vmatpush1.bf16.msra.mxu0 0
      %1146 = vmatprep.subr.bf16.mxu0 0
      %1147 = vmatpush1.bf16.msra.mxu0 0
      %1148 = vmatprep.subr.bf16.mxu0 0
      %1149 = vmatpush1.bf16.msra.mxu0 0
      %1150 = vmatprep.subr.bf16.mxu0 0
      %1151 = vmatpush1.bf16.msra.mxu0 0
      %1152 = vmatprep.subr.bf16.mxu0 0
      %1153 = vmatpush1.bf16.msra.mxu0 0
      %1154 = vmatprep.subr.bf16.mxu0 0
      %1155 = vmatpush1.bf16.msra.mxu0 0
      %1156 = vmatprep.subr.bf16.mxu0 0
      %1157 = vmatpush1.bf16.msra.mxu0 0
      %1158 = vmatprep.subr.bf16.mxu0 0
      %1159 = vmatpush1.bf16.msra.mxu0 0
      %1160 = vmatprep.subr.bf16.mxu0 0
      %1161 = vmatpush1.bf16.msra.mxu0 0
      %1162 = vmatprep.subr.bf16.mxu0 0
      %1163 = vmatpush1.bf16.msra.mxu0 0
      %1164 = vmatprep.subr.bf16.mxu0 0
      %1165 = vmatpush1.bf16.msra.mxu0 0
      %1166 = vmatprep.subr.bf16.mxu0 0
      %1167 = vmatpush1.bf16.msra.mxu0 0
      %1168 = vmatprep.subr.bf16.mxu0 0
      %1169 = vmatpush1.bf16.msra.mxu0 0
      %1170 = vmatprep.subr.bf16.mxu0 0
      %1171 = vmatpush1.bf16.msra.mxu0 0
      %1172 = vmatprep.subr.bf16.mxu0 0
      %1173 = vmatpush1.bf16.msra.mxu0 0
      %1174 = vmatprep.mubr.bf16.mxu0 0
      %1175 = vmatmul.mubr.bf16.gmra.mrb[0].mxu0 %v1137
      %v1176 = vpop.f32.mrb[0].mxu0
      %v1177 = vadd.f32 0.0, %v1176
      %v1178 = vpop.f32.mrb[0].mxu0
      %v1179 = vpop.f32.mrb[0].mxu0
      %v1180 = vpop.f32.mrb[0].mxu0
      %1181 = vdwg.mxu0
      %1182 = vrot.lane.b32.xlu0 %v780, 64
      %v1183 = vpop.permute.xlu0 %1182
      %v1185 = vsel %vm784, %v1036, 0
      %v1188 = vsel %vm1042, %v1183, 0
      %1190 = vmatprep.subr.bf16.mxu0 0
      %1191 = vmatpush1.bf16.msra.mxu0 %v1188
      %1192 = vmatprep.subr.bf16.mxu0 0
      %1193 = vmatpush1.bf16.msra.mxu0 0
      %1194 = vmatprep.subr.bf16.mxu0 0
      %1195 = vmatpush1.bf16.msra.mxu0 0
      %1196 = vmatprep.subr.bf16.mxu0 0
      %1197 = vmatpush1.bf16.msra.mxu0 0
      %1198 = vmatprep.subr.bf16.mxu0 0
      %1199 = vmatpush1.bf16.msra.mxu0 0
      %1200 = vmatprep.subr.bf16.mxu0 0
      %1201 = vmatpush1.bf16.msra.mxu0 0
      %1202 = vmatprep.subr.bf16.mxu0 0
      %1203 = vmatpush1.bf16.msra.mxu0 0
      %1204 = vmatprep.subr.bf16.mxu0 0
      %1205 = vmatpush1.bf16.msra.mxu0 0
      %1206 = vmatprep.subr.bf16.mxu0 0
      %1207 = vmatpush1.bf16.msra.mxu0 0
      %1208 = vmatprep.subr.bf16.mxu0 0
      %1209 = vmatpush1.bf16.msra.mxu0 0
      %1210 = vmatprep.subr.bf16.mxu0 0
      %1211 = vmatpush1.bf16.msra.mxu0 0
      %1212 = vmatprep.subr.bf16.mxu0 0
      %1213 = vmatpush1.bf16.msra.mxu0 0
      %1214 = vmatprep.subr.bf16.mxu0 0
      %1215 = vmatpush1.bf16.msra.mxu0 0
      %1216 = vmatprep.subr.bf16.mxu0 0
      %1217 = vmatpush1.bf16.msra.mxu0 0
      %1218 = vmatprep.subr.bf16.mxu0 0
      %1219 = vmatpush1.bf16.msra.mxu0 0
      %1220 = vmatprep.subr.bf16.mxu0 0
      %1221 = vmatpush1.bf16.msra.mxu0 0
      %1222 = vmatprep.mubr.bf16.mxu0 0
      %1223 = vmatmul.mubr.bf16.gmra.mrb[0].mxu0 %v1185
      %v1224 = vpop.f32.mrb[0].mxu0
      %v1225 = vadd.f32 0.0, %v1224
      %v1226 = vpop.f32.mrb[0].mxu0
      %v1227 = vpop.f32.mrb[0].mxu0
      %v1228 = vpop.f32.mrb[0].mxu0
      %1229 = vdwg.mxu0
      %v1230 = vpack.c.bf16 %v1081, %v1081
      %v1231 = vpack.c.bf16 %v1129, %v1129
      %v1232 = vpack.c.bf16 %v1177, %v1177
      %v1233 = vpack.c.bf16 %v1225, %v1225
      %v1234 = vld [vmem:[%s4] sm:$0xf]
      %v1235 = vld [vmem:[%s4 + $0x4] sm:$0xf]
      %v1236 = vld [vmem:[%s4 + $0x8] sm:$0xf]
      %v1237 = vld [vmem:[%s4 + $0xc] sm:$0xf]
      %v1239 = vsel %vm784, %v1230, 0
      %v1242 = vsel %vm1042, %v1234, 0
      %1244 = vmatprep.subr.bf16.mxu0 0
      %1245 = vmatpush1.bf16.msra.mxu0 %v1242
      %1246 = vmatprep.subr.bf16.mxu0 0
      %1247 = vmatpush1.bf16.msra.mxu0 0
      %1248 = vmatprep.subr.bf16.mxu0 0
      %1249 = vmatpush1.bf16.msra.mxu0 0
      %1250 = vmatprep.subr.bf16.mxu0 0
      %1251 = vmatpush1.bf16.msra.mxu0 0
      %1252 = vmatprep.subr.bf16.mxu0 0
      %1253 = vmatpush1.bf16.msra.mxu0 0
      %1254 = vmatprep.subr.bf16.mxu0 0
      %1255 = vmatpush1.bf16.msra.mxu0 0
      %1256 = vmatprep.subr.bf16.mxu0 0
      %1257 = vmatpush1.bf16.msra.mxu0 0
      %1258 = vmatprep.subr.bf16.mxu0 0
      %1259 = vmatpush1.bf16.msra.mxu0 0
      %1260 = vmatprep.subr.bf16.mxu0 0
      %1261 = vmatpush1.bf16.msra.mxu0 0
      %1262 = vmatprep.subr.bf16.mxu0 0
      %1263 = vmatpush1.bf16.msra.mxu0 0
      %1264 = vmatprep.subr.bf16.mxu0 0
      %1265 = vmatpush1.bf16.msra.mxu0 0
      %1266 = vmatprep.subr.bf16.mxu0 0
      %1267 = vmatpush1.bf16.msra.mxu0 0
      %1268 = vmatprep.subr.bf16.mxu0 0
      %1269 = vmatpush1.bf16.msra.mxu0 0
      %1270 = vmatprep.subr.bf16.mxu0 0
      %1271 = vmatpush1.bf16.msra.mxu0 0
      %1272 = vmatprep.subr.bf16.mxu0 0
      %1273 = vmatpush1.bf16.msra.mxu0 0
      %1274 = vmatprep.subr.bf16.mxu0 0
      %1275 = vmatpush1.bf16.msra.mxu0 0
      %1276 = vmatprep.mubr.bf16.mxu0 0
      %1277 = vmatmul.mubr.bf16.gmra.mrb[0].mxu0 %v1239
      %v1278 = vpop.f32.mrb[0].mxu0
      %v1279 = vadd.f32 0.0, %v1278
      %v1280 = vpop.f32.mrb[0].mxu0
      %v1281 = vpop.f32.mrb[0].mxu0
      %v1282 = vpop.f32.mrb[0].mxu0
      %1283 = vdwg.mxu0
      %v1285 = vsel %vm784, %v1231, 0
      %v1288 = vsel %vm1042, %v1235, 0
      %1290 = vmatprep.subr.bf16.mxu0 0
      %1291 = vmatpush1.bf16.msra.mxu0 %v1288
      %1292 = vmatprep.subr.bf16.mxu0 0
      %1293 = vmatpush1.bf16.msra.mxu0 0
      %1294 = vmatprep.subr.bf16.mxu0 0
      %1295 = vmatpush1.bf16.msra.mxu0 0
      %1296 = vmatprep.subr.bf16.mxu0 0
      %1297 = vmatpush1.bf16.msra.mxu0 0
      %1298 = vmatprep.subr.bf16.mxu0 0
      %1299 = vmatpush1.bf16.msra.mxu0 0
      %1300 = vmatprep.subr.bf16.mxu0 0
      %1301 = vmatpush1.bf16.msra.mxu0 0
      %1302 = vmatprep.subr.bf16.mxu0 0
      %1303 = vmatpush1.bf16.msra.mxu0 0
      %1304 = vmatprep.subr.bf16.mxu0 0
      %1305 = vmatpush1.bf16.msra.mxu0 0
      %1306 = vmatprep.subr.bf16.mxu0 0
      %1307 = vmatpush1.bf16.msra.mxu0 0
      %1308 = vmatprep.subr.bf16.mxu0 0
      %1309 = vmatpush1.bf16.msra.mxu0 0
      %1310 = vmatprep.subr.bf16.mxu0 0
      %1311 = vmatpush1.bf16.msra.mxu0 0
      %1312 = vmatprep.subr.bf16.mxu0 0
      %1313 = vmatpush1.bf16.msra.mxu0 0
      %1314 = vmatprep.subr.bf16.mxu0 0
      %1315 = vmatpush1.bf16.msra.mxu0 0
      %1316 = vmatprep.subr.bf16.mxu0 0
      %1317 = vmatpush1.bf16.msra.mxu0 0
      %1318 = vmatprep.subr.bf16.mxu0 0
      %1319 = vmatpush1.bf16.msra.mxu0 0
      %1320 = vmatprep.subr.bf16.mxu0 0
      %1321 = vmatpush1.bf16.msra.mxu0 0
      %1322 = vmatprep.mubr.bf16.mxu0 0
      %1323 = vmatmul.mubr.bf16.gmra.mrb[0].mxu0 %v1285
      %v1324 = vpop.f32.mrb[0].mxu0
      %v1325 = vadd.f32 0.0, %v1324
      %v1326 = vpop.f32.mrb[0].mxu0
      %v1327 = vpop.f32.mrb[0].mxu0
      %v1328 = vpop.f32.mrb[0].mxu0
      %1329 = vdwg.mxu0
      %v1331 = vsel %vm784, %v1232, 0
      %v1334 = vsel %vm1042, %v1236, 0
      %1336 = vmatprep.subr.bf16.mxu0 0
      %1337 = vmatpush1.bf16.msra.mxu0 %v1334
      %1338 = vmatprep.subr.bf16.mxu0 0
      %1339 = vmatpush1.bf16.msra.mxu0 0
      %1340 = vmatprep.subr.bf16.mxu0 0
      %1341 = vmatpush1.bf16.msra.mxu0 0
      %1342 = vmatprep.subr.bf16.mxu0 0
      %1343 = vmatpush1.bf16.msra.mxu0 0
      %1344 = vmatprep.subr.bf16.mxu0 0
      %1345 = vmatpush1.bf16.msra.mxu0 0
      %1346 = vmatprep.subr.bf16.mxu0 0
      %1347 = vmatpush1.bf16.msra.mxu0 0
      %1348 = vmatprep.subr.bf16.mxu0 0
      %1349 = vmatpush1.bf16.msra.mxu0 0
      %1350 = vmatprep.subr.bf16.mxu0 0
      %1351 = vmatpush1.bf16.msra.mxu0 0
      %1352 = vmatprep.subr.bf16.mxu0 0
      %1353 = vmatpush1.bf16.msra.mxu0 0
      %1354 = vmatprep.subr.bf16.mxu0 0
      %1355 = vmatpush1.bf16.msra.mxu0 0
      %1356 = vmatprep.subr.bf16.mxu0 0
      %1357 = vmatpush1.bf16.msra.mxu0 0
      %1358 = vmatprep.subr.bf16.mxu0 0
      %1359 = vmatpush1.bf16.msra.mxu0 0
      %1360 = vmatprep.subr.bf16.mxu0 0
      %1361 = vmatpush1.bf16.msra.mxu0 0
      %1362 = vmatprep.subr.bf16.mxu0 0
      %1363 = vmatpush1.bf16.msra.mxu0 0
      %1364 = vmatprep.subr.bf16.mxu0 0
      %1365 = vmatpush1.bf16.msra.mxu0 0
      %1366 = vmatprep.subr.bf16.mxu0 0
      %1367 = vmatpush1.bf16.msra.mxu0 0
      %1368 = vmatprep.mubr.bf16.mxu0 0
      %1369 = vmatmul.mubr.bf16.gmra.mrb[0].mxu0 %v1331
      %v1370 = vpop.f32.mrb[0].mxu0
      %v1371 = vadd.f32 0.0, %v1370
      %v1372 = vpop.f32.mrb[0].mxu0
      %v1373 = vpop.f32.mrb[0].mxu0
      %v1374 = vpop.f32.mrb[0].mxu0
      %1375 = vdwg.mxu0
      %v1377 = vsel %vm784, %v1233, 0
      %v1380 = vsel %vm1042, %v1237, 0
      %1382 = vmatprep.subr.bf16.mxu0 0
      %1383 = vmatpush1.bf16.msra.mxu0 %v1380
      %1384 = vmatprep.subr.bf16.mxu0 0
      %1385 = vmatpush1.bf16.msra.mxu0 0
      %1386 = vmatprep.subr.bf16.mxu0 0
      %1387 = vmatpush1.bf16.msra.mxu0 0
      %1388 = vmatprep.subr.bf16.mxu0 0
      %1389 = vmatpush1.bf16.msra.mxu0 0
      %1390 = vmatprep.subr.bf16.mxu0 0
      %1391 = vmatpush1.bf16.msra.mxu0 0
      %1392 = vmatprep.subr.bf16.mxu0 0
      %1393 = vmatpush1.bf16.msra.mxu0 0
      %1394 = vmatprep.subr.bf16.mxu0 0
      %1395 = vmatpush1.bf16.msra.mxu0 0
      %1396 = vmatprep.subr.bf16.mxu0 0
      %1397 = vmatpush1.bf16.msra.mxu0 0
      %1398 = vmatprep.subr.bf16.mxu0 0
      %1399 = vmatpush1.bf16.msra.mxu0 0
      %1400 = vmatprep.subr.bf16.mxu0 0
      %1401 = vmatpush1.bf16.msra.mxu0 0
      %1402 = vmatprep.subr.bf16.mxu0 0
      %1403 = vmatpush1.bf16.msra.mxu0 0
      %1404 = vmatprep.subr.bf16.mxu0 0
      %1405 = vmatpush1.bf16.msra.mxu0 0
      %1406 = vmatprep.subr.bf16.mxu0 0
      %1407 = vmatpush1.bf16.msra.mxu0 0
      %1408 = vmatprep.subr.bf16.mxu0 0
      %1409 = vmatpush1.bf16.msra.mxu0 0
      %1410 = vmatprep.subr.bf16.mxu0 0
      %1411 = vmatpush1.bf16.msra.mxu0 0
      %1412 = vmatprep.subr.bf16.mxu0 0
      %1413 = vmatpush1.bf16.msra.mxu0 0
      %1414 = vmatprep.mubr.bf16.mxu0 0
      %1415 = vmatmul.mubr.bf16.gmra.mrb[0].mxu0 %v1377
      %v1416 = vpop.f32.mrb[0].mxu0
      %v1417 = vadd.f32 0.0, %v1416
      %v1418 = vpop.f32.mrb[0].mxu0
      %v1419 = vpop.f32.mrb[0].mxu0
      %v1420 = vpop.f32.mrb[0].mxu0
      %1421 = vdwg.mxu0
      %v1422 = vsel %vm723, %v1279, 0.0
      %v1423 = vsel %vm723, %v1325, 0.0
      %v1424 = vadd.f32 %v1422, %v1423
      %v1425 = vsel %vm723, %v1371, 0.0
      %v1426 = vadd.f32 %v1424, %v1425
      %v1427 = vsel %vm723, %v1417, 0.0
      %v1428 = vadd.f32 %v1426, %v1427
      %v1429 = vld [vmem:[%s5] sm:$0x1]
      %v1431 = vlaneseq
      %v1432 = vshrl.u32 %v1431, 7
      %v1433 = vsub.s32 0, %v1432
      %v1434 = vrot.slane %v1429, %v1433
      %v1436 = vadd.f32 %v1428, %v1434
      %v1437 = vadd.f32 %v697, %v1436
      %v1438 = vld [vmem:[%s6] sm:$0x1]
      %v1439 = vld [vmem:[%s7] sm:$0x1]
      %v1440 = vsel %vm723, %v1437, 0.0
      %1441 = vadd.xlane.f32.xlu0 %v1440
      %v1442 = vpop.xlane.xlu0 %1441
      %v1443 = vrcp.pop 32.0
      %v1444 = vmul.f32 %v1442, %v1443
      %v1445 = vsub.f32 %v1437, %v1444
      %v1446 = vmul.f32 %v1445, %v1445
      %v1447 = vsel %vm723, %v1446, 0.0
      %1448 = vadd.xlane.f32.xlu0 %v1447
      %v1449 = vpop.xlane.xlu0 %1448
      %v1450 = vmul.f32 %v1449, %v1443
      %v1451 = vadd.f32 %v1450, 1e-05
      %v1452 = vrsqrt.pop %v1451
      %v1453 = vmul.f32 %v1445, %v1452
      %v1455 = vlaneseq
      %v1456 = vshrl.u32 %v1455, 7
      %v1457 = vsub.s32 0, %v1456
      %v1458 = vrot.slane %v1438, %v1457
      %v1460 = vmul.f32 %v1453, %v1458
      %v1462 = vlaneseq
      %v1463 = vshrl.u32 %v1462, 7
      %v1464 = vsub.s32 0, %v1463
      %v1465 = vrot.slane %v1439, %v1464
      %v1467 = vadd.f32 %v1460, %v1465
      %v1468 = vpack.c.bf16 %v1467, %v1467
      %v1469 = vld [vmem:[%s8] sm:$0xf]
      %v1470 = vld [vmem:[%s8 + $0x4] sm:$0xf]
      %v1471 = vld [vmem:[%s8 + $0x8] sm:$0xf]
      %v1472 = vld [vmem:[%s8 + $0xc] sm:$0xf]
      %v1473 = vld [vmem:[%s9] sm:$0x1]
      %v1475 = vlaneseq
      %v1476 = vshrl.u32 %v1475, 7
      %v1477 = vsub.s32 0, %v1476
      %v1478 = vrot.slane %v1473, %v1477
      %v1484 = vunpack.c.l.b16 %v1469
      %v1485 = vunpack.c.l.b16 %v1470
      %v1486 = vunpack.c.l.b16 %v1471
      %v1487 = vunpack.c.l.b16 %v1472
      %v1488 = vpack.c.b16 %v1485, %v1484
      %v1489 = vpack.c.b16 %v1487, %v1486
      %v1493 = vsel %vm723, %v1468, 0
      %1495 = vmatprep.subr.bf16.mxu0 0
      %1496 = vmatpush1.bf16.msra.mxu0 %v1488
      %1497 = vmatprep.subr.bf16.mxu0 0
      %1498 = vmatpush1.bf16.msra.mxu0 %v1489
      %1499 = vmatprep.subr.bf16.mxu0 0
      %1500 = vmatpush1.bf16.msra.mxu0 0
      %1501 = vmatprep.subr.bf16.mxu0 0
      %1502 = vmatpush1.bf16.msra.mxu0 0
      %1503 = vmatprep.subr.bf16.mxu0 0
      %1504 = vmatpush1.bf16.msra.mxu0 0
      %1505 = vmatprep.subr.bf16.mxu0 0
      %1506 = vmatpush1.bf16.msra.mxu0 0
      %1507 = vmatprep.subr.bf16.mxu0 0
      %1508 = vmatpush1.bf16.msra.mxu0 0
      %1509 = vmatprep.subr.bf16.mxu0 0
      %1510 = vmatpush1.bf16.msra.mxu0 0
      %1511 = vmatprep.subr.bf16.mxu0 0
      %1512 = vmatpush1.bf16.msra.mxu0 0
      %1513 = vmatprep.subr.bf16.mxu0 0
      %1514 = vmatpush1.bf16.msra.mxu0 0
      %1515 = vmatprep.subr.bf16.mxu0 0
      %1516 = vmatpush1.bf16.msra.mxu0 0
      %1517 = vmatprep.subr.bf16.mxu0 0
      %1518 = vmatpush1.bf16.msra.mxu0 0
      %1519 = vmatprep.subr.bf16.mxu0 0
      %1520 = vmatpush1.bf16.msra.mxu0 0
      %1521 = vmatprep.subr.bf16.mxu0 0
      %1522 = vmatpush1.bf16.msra.mxu0 0
      %1523 = vmatprep.subr.bf16.mxu0 0
      %1524 = vmatpush1.bf16.msra.mxu0 0
      %1525 = vmatprep.subr.bf16.mxu0 0
      %1526 = vmatpush1.bf16.msra.mxu0 0
      %1527 = vmatprep.mubr.bf16.mxu0 0
      %1528 = vmatmul.mubr.bf16.gmra.mrb[0].mxu0 %v1493
      %v1529 = vpop.f32.mrb[0].mxu0
      %v1530 = vadd.f32 %v1478, %v1529
      %v1531 = vpop.f32.mrb[0].mxu0
      %v1532 = vpop.f32.mrb[0].mxu0
      %v1533 = vpop.f32.mrb[0].mxu0
      %1534 = vdwg.mxu0
      %v1535 = vpack.c.bf16 %v698, %v698
      %v1536 = vld [vmem:[%s10] sm:$0xf]
      %v1537 = vld [vmem:[%s10 + $0x4] sm:$0xf]
      %v1538 = vld [vmem:[%s10 + $0x8] sm:$0xf]
      %v1539 = vld [vmem:[%s10 + $0xc] sm:$0xf]
      %v1540 = vld [vmem:[%s11] sm:$0x1]
      %v1542 = vlaneseq
      %v1543 = vshrl.u32 %v1542, 7
      %v1544 = vsub.s32 0, %v1543
      %v1545 = vrot.slane %v1540, %v1544
      %v1551 = vunpack.c.l.b16 %v1536
      %v1552 = vunpack.c.l.b16 %v1537
      %v1553 = vunpack.c.l.b16 %v1538
      %v1554 = vunpack.c.l.b16 %v1539
      %v1555 = vpack.c.b16 %v1552, %v1551
      %v1556 = vpack.c.b16 %v1554, %v1553
      %v1560 = vsel %vm723, %v1535, 0
      %1562 = vmatprep.subr.bf16.mxu0 0
      %1563 = vmatpush1.bf16.msra.mxu0 %v1555
      %1564 = vmatprep.subr.bf16.mxu0 0
      %1565 = vmatpush1.bf16.msra.mxu0 %v1556
      %1566 = vmatprep.subr.bf16.mxu0 0
      %1567 = vmatpush1.bf16.msra.mxu0 0
      %1568 = vmatprep.subr.bf16.mxu0 0
      %1569 = vmatpush1.bf16.msra.mxu0 0
      %1570 = vmatprep.subr.bf16.mxu0 0
      %1571 = vmatpush1.bf16.msra.mxu0 0
      %1572 = vmatprep.subr.bf16.mxu0 0
      %1573 = vmatpush1.bf16.msra.mxu0 0
      %1574 = vmatprep.subr.bf16.mxu0 0
      %1575 = vmatpush1.bf16.msra.mxu0 0
      %1576 = vmatprep.subr.bf16.mxu0 0
      %1577 = vmatpush1.bf16.msra.mxu0 0
      %1578 = vmatprep.subr.bf16.mxu0 0
      %1579 = vmatpush1.bf16.msra.mxu0 0
      %1580 = vmatprep.subr.bf16.mxu0 0
      %1581 = vmatpush1.bf16.msra.mxu0 0
      %1582 = vmatprep.subr.bf16.mxu0 0
      %1583 = vmatpush1.bf16.msra.mxu0 0
      %1584 = vmatprep.subr.bf16.mxu0 0
      %1585 = vmatpush1.bf16.msra.mxu0 0
      %1586 = vmatprep.subr.bf16.mxu0 0
      %1587 = vmatpush1.bf16.msra.mxu0 0
      %1588 = vmatprep.subr.bf16.mxu0 0
      %1589 = vmatpush1.bf16.msra.mxu0 0
      %1590 = vmatprep.subr.bf16.mxu0 0
      %1591 = vmatpush1.bf16.msra.mxu0 0
      %1592 = vmatprep.subr.bf16.mxu0 0
      %1593 = vmatpush1.bf16.msra.mxu0 0
      %1594 = vmatprep.mubr.bf16.mxu0 0
      %1595 = vmatmul.mubr.bf16.gmra.mrb[0].mxu0 %v1560
      %v1596 = vpop.f32.mrb[0].mxu0
      %v1597 = vadd.f32 %v1545, %v1596
      %v1598 = vpop.f32.mrb[0].mxu0
      %v1599 = vpop.f32.mrb[0].mxu0
      %v1600 = vpop.f32.mrb[0].mxu0
      %1601 = vdwg.mxu0
      %1603 = vrot.lane.b32.xlu0 %v1530, 120
      %v1604 = vpop.permute.xlu0 %1603
      %1606 = vrot.lane.b32.xlu0 %v1530, 112
      %v1607 = vpop.permute.xlu0 %1606
      %1609 = vrot.lane.b32.xlu0 %v1530, 104
      %v1610 = vpop.permute.xlu0 %1609
      %v1612 = vpack.c.bf16 %v1530, %v1530
      %v1613 = vpack.c.bf16 %v1604, %v1604
      %v1614 = vpack.c.bf16 %v1607, %v1607
      %v1615 = vpack.c.bf16 %v1610, %v1610
      %1617 = vrot.lane.b32.xlu0 %v1597, 120
      %v1618 = vpop.permute.xlu0 %1617
      %1620 = vrot.lane.b32.xlu0 %v1597, 112
      %v1621 = vpop.permute.xlu0 %1620
      %1623 = vrot.lane.b32.xlu0 %v1597, 104
      %v1624 = vpop.permute.xlu0 %1623
      %v1626 = vpack.c.bf16 %v1597, %v1597
      %v1627 = vpack.c.bf16 %v1618, %v1618
      %v1628 = vpack.c.bf16 %v1621, %v1621
      %v1629 = vpack.c.bf16 %v1624, %v1624
      %v1631 = vsel %vm784, %v1612, 0
      %v1634 = vsel %vm784, %v1626, 0
      %1636 = vmatprep.subr.bf16.mxu0 0
      %1637 = vmatpush1.bf16.xpose.msra.mxu0 %v1634
      %1638 = vmatprep.subr.bf16.mxu0 0
      %1639 = vmatpush1.bf16.xpose.msra.mxu0 0
      %1640 = vmatprep.subr.bf16.mxu0 0
      %1641 = vmatpush1.bf16.xpose.msra.mxu0 0
      %1642 = vmatprep.subr.bf16.mxu0 0
      %1643 = vmatpush1.bf16.xpose.msra.mxu0 0
      %1644 = vmatprep.subr.bf16.mxu0 0
      %1645 = vmatpush1.bf16.xpose.msra.mxu0 0
      %1646 = vmatprep.subr.bf16.mxu0 0
      %1647 = vmatpush1.bf16.xpose.msra.mxu0 0
      %1648 = vmatprep.subr.bf16.mxu0 0
      %1649 = vmatpush1.bf16.xpose.msra.mxu0 0
      %1650 = vmatprep.subr.bf16.mxu0 0
      %1651 = vmatpush1.bf16.xpose.msra.mxu0 0
      %1652 = vmatprep.subr.bf16.mxu0 0
      %1653 = vmatpush1.bf16.xpose.msra.mxu0 0
      %1654 = vmatprep.subr.bf16.mxu0 0
      %1655 = vmatpush1.bf16.xpose.msra.mxu0 0
      %1656 = vmatprep.subr.bf16.mxu0 0
      %1657 = vmatpush1.bf16.xpose.msra.mxu0 0
      %1658 = vmatprep.subr.bf16.mxu0 0
      %1659 = vmatpush1.bf16.xpose.msra.mxu0 0
      %1660 = vmatprep.subr.bf16.mxu0 0
      %1661 = vmatpush1.bf16.xpose.msra.mxu0 0
      %1662 = vmatprep.subr.bf16.mxu0 0
      %1663 = vmatpush1.bf16.xpose.msra.mxu0 0
      %1664 = vmatprep.subr.bf16.mxu0 0
      %1665 = vmatpush1.bf16.xpose.msra.mxu0 0
      %1666 = vmatprep.subr.bf16.mxu0 0
      %1667 = vmatpush1.bf16.xpose.msra.mxu0 0
      %1668 = vmatprep.mubr.bf16.mxu0 0
      %1669 = vmatmul.mubr.bf16.gmra.mrb[0].mxu0 %v1631
      %v1670 = vpop.f32.mrb[0].mxu0
      %v1671 = vadd.f32 0.0, %v1670
      %v1672 = vpop.f32.mrb[0].mxu0
      %v1673 = vpop.f32.mrb[0].mxu0
      %v1674 = vpop.f32.mrb[0].mxu0
      %1675 = vdwg.mxu0
      %v1677 = vsel %vm784, %v1613, 0
      %v1680 = vsel %vm784, %v1627, 0
      %1682 = vmatprep.subr.bf16.mxu0 0
      %1683 = vmatpush1.bf16.xpose.msra.mxu0 %v1680
      %1684 = vmatprep.subr.bf16.mxu0 0
      %1685 = vmatpush1.bf16.xpose.msra.mxu0 0
      %1686 = vmatprep.subr.bf16.mxu0 0
      %1687 = vmatpush1.bf16.xpose.msra.mxu0 0
      %1688 = vmatprep.subr.bf16.mxu0 0
      %1689 = vmatpush1.bf16.xpose.msra.mxu0 0
      %1690 = vmatprep.subr.bf16.mxu0 0
      %1691 = vmatpush1.bf16.xpose.msra.mxu0 0
      %1692 = vmatprep.subr.bf16.mxu0 0
      %1693 = vmatpush1.bf16.xpose.msra.mxu0 0
      %1694 = vmatprep.subr.bf16.mxu0 0
      %1695 = vmatpush1.bf16.xpose.msra.mxu0 0
      %1696 = vmatprep.subr.bf16.mxu0 0
      %1697 = vmatpush1.bf16.xpose.msra.mxu0 0
      %1698 = vmatprep.subr.bf16.mxu0 0
      %1699 = vmatpush1.bf16.xpose.msra.mxu0 0
      %1700 = vmatprep.subr.bf16.mxu0 0
      %1701 = vmatpush1.bf16.xpose.msra.mxu0 0
      %1702 = vmatprep.subr.bf16.mxu0 0
      %1703 = vmatpush1.bf16.xpose.msra.mxu0 0
      %1704 = vmatprep.subr.bf16.mxu0 0
      %1705 = vmatpush1.bf16.xpose.msra.mxu0 0
      %1706 = vmatprep.subr.bf16.mxu0 0
      %1707 = vmatpush1.bf16.xpose.msra.mxu0 0
      %1708 = vmatprep.subr.bf16.mxu0 0
      %1709 = vmatpush1.bf16.xpose.msra.mxu0 0
      %1710 = vmatprep.subr.bf16.mxu0 0
      %1711 = vmatpush1.bf16.xpose.msra.mxu0 0
      %1712 = vmatprep.subr.bf16.mxu0 0
      %1713 = vmatpush1.bf16.xpose.msra.mxu0 0
      %1714 = vmatprep.mubr.bf16.mxu0 0
      %1715 = vmatmul.mubr.bf16.gmra.mrb[0].mxu0 %v1677
      %v1716 = vpop.f32.mrb[0].mxu0
      %v1717 = vadd.f32 0.0, %v1716
      %v1718 = vpop.f32.mrb[0].mxu0
      %v1719 = vpop.f32.mrb[0].mxu0
      %v1720 = vpop.f32.mrb[0].mxu0
      %1721 = vdwg.mxu0
      %v1723 = vsel %vm784, %v1614, 0
      %v1726 = vsel %vm784, %v1628, 0
      %1728 = vmatprep.subr.bf16.mxu0 0
      %1729 = vmatpush1.bf16.xpose.msra.mxu0 %v1726
      %1730 = vmatprep.subr.bf16.mxu0 0
      %1731 = vmatpush1.bf16.xpose.msra.mxu0 0
      %1732 = vmatprep.subr.bf16.mxu0 0
      %1733 = vmatpush1.bf16.xpose.msra.mxu0 0
      %1734 = vmatprep.subr.bf16.mxu0 0
      %1735 = vmatpush1.bf16.xpose.msra.mxu0 0
      %1736 = vmatprep.subr.bf16.mxu0 0
      %1737 = vmatpush1.bf16.xpose.msra.mxu0 0
      %1738 = vmatprep.subr.bf16.mxu0 0
      %1739 = vmatpush1.bf16.xpose.msra.mxu0 0
      %1740 = vmatprep.subr.bf16.mxu0 0
      %1741 = vmatpush1.bf16.xpose.msra.mxu0 0
      %1742 = vmatprep.subr.bf16.mxu0 0
      %1743 = vmatpush1.bf16.xpose.msra.mxu0 0
      %1744 = vmatprep.subr.bf16.mxu0 0
      %1745 = vmatpush1.bf16.xpose.msra.mxu0 0
      %1746 = vmatprep.subr.bf16.mxu0 0
      %1747 = vmatpush1.bf16.xpose.msra.mxu0 0
      %1748 = vmatprep.subr.bf16.mxu0 0
      %1749 = vmatpush1.bf16.xpose.msra.mxu0 0
      %1750 = vmatprep.subr.bf16.mxu0 0
      %1751 = vmatpush1.bf16.xpose.msra.mxu0 0
      %1752 = vmatprep.subr.bf16.mxu0 0
      %1753 = vmatpush1.bf16.xpose.msra.mxu0 0
      %1754 = vmatprep.subr.bf16.mxu0 0
      %1755 = vmatpush1.bf16.xpose.msra.mxu0 0
      %1756 = vmatprep.subr.bf16.mxu0 0
      %1757 = vmatpush1.bf16.xpose.msra.mxu0 0
      %1758 = vmatprep.subr.bf16.mxu0 0
      %1759 = vmatpush1.bf16.xpose.msra.mxu0 0
      %1760 = vmatprep.mubr.bf16.mxu0 0
      %1761 = vmatmul.mubr.bf16.gmra.mrb[0].mxu0 %v1723
      %v1762 = vpop.f32.mrb[0].mxu0
      %v1763 = vadd.f32 0.0, %v1762
      %v1764 = vpop.f32.mrb[0].mxu0
      %v1765 = vpop.f32.mrb[0].mxu0
      %v1766 = vpop.f32.mrb[0].mxu0
      %1767 = vdwg.mxu0
      %v1769 = vsel %vm784, %v1615, 0
      %v1772 = vsel %vm784, %v1629, 0
      %1774 = vmatprep.subr.bf16.mxu0 0
      %1775 = vmatpush1.bf16.xpose.msra.mxu0 %v1772
      %1776 = vmatprep.subr.bf16.mxu0 0
      %1777 = vmatpush1.bf16.xpose.msra.mxu0 0
      %1778 = vmatprep.subr.bf16.mxu0 0
      %1779 = vmatpush1.bf16.xpose.msra.mxu0 0
      %1780 = vmatprep.subr.bf16.mxu0 0
      %1781 = vmatpush1.bf16.xpose.msra.mxu0 0
      %1782 = vmatprep.subr.bf16.mxu0 0
      %1783 = vmatpush1.bf16.xpose.msra.mxu0 0
      %1784 = vmatprep.subr.bf16.mxu0 0
      %1785 = vmatpush1.bf16.xpose.msra.mxu0 0
      %1786 = vmatprep.subr.bf16.mxu0 0
      %1787 = vmatpush1.bf16.xpose.msra.mxu0 0
      %1788 = vmatprep.subr.bf16.mxu0 0
      %1789 = vmatpush1.bf16.xpose.msra.mxu0 0
      %1790 = vmatprep.subr.bf16.mxu0 0
      %1791 = vmatpush1.bf16.xpose.msra.mxu0 0
      %1792 = vmatprep.subr.bf16.mxu0 0
      %1793 = vmatpush1.bf16.xpose.msra.mxu0 0
      %1794 = vmatprep.subr.bf16.mxu0 0
      %1795 = vmatpush1.bf16.xpose.msra.mxu0 0
      %1796 = vmatprep.subr.bf16.mxu0 0
      %1797 = vmatpush1.bf16.xpose.msra.mxu0 0
      %1798 = vmatprep.subr.bf16.mxu0 0
      %1799 = vmatpush1.bf16.xpose.msra.mxu0 0
      %1800 = vmatprep.subr.bf16.mxu0 0
      %1801 = vmatpush1.bf16.xpose.msra.mxu0 0
      %1802 = vmatprep.subr.bf16.mxu0 0
      %1803 = vmatpush1.bf16.xpose.msra.mxu0 0
      %1804 = vmatprep.subr.bf16.mxu0 0
      %1805 = vmatpush1.bf16.xpose.msra.mxu0 0
      %1806 = vmatprep.mubr.bf16.mxu0 0
      %1807 = vmatmul.mubr.bf16.gmra.mrb[0].mxu0 %v1769
      %v1808 = vpop.f32.mrb[0].mxu0
      %v1809 = vadd.f32 0.0, %v1808
      %v1810 = vpop.f32.mrb[0].mxu0
      %v1811 = vpop.f32.mrb[0].mxu0
      %v1812 = vpop.f32.mrb[0].mxu0
      %1813 = vdwg.mxu0
      %v1814 = vsel %vm784, %v1671, -inf
      %1815 = vmax.xlane.f32.xlu0 %v1814
      %v1816 = vpop.xlane.xlu0 %1815
      %v1817 = vsel %vm784, %v1717, -inf
      %1818 = vmax.xlane.f32.xlu0 %v1817
      %v1819 = vpop.xlane.xlu0 %1818
      %v1820 = vsel %vm784, %v1763, -inf
      %1821 = vmax.xlane.f32.xlu0 %v1820
      %v1822 = vpop.xlane.xlu0 %1821
      %v1823 = vsel %vm784, %v1809, -inf
      %1824 = vmax.xlane.f32.xlu0 %v1823
      %v1825 = vpop.xlane.xlu0 %1824
      %v1826 = vsub.f32 %v1671, %v1816
      %v1827 = vsub.f32 %v1717, %v1819
      %v1828 = vsub.f32 %v1763, %v1822
      %v1829 = vsub.f32 %v1809, %v1825
      %v1830 = vmul.f32 %v1826, 1.442695
      %v1831 = vpow.pop %v1830
      %v1832 = vmul.f32 %v1827, 1.442695
      %v1833 = vpow.pop %v1832
      %v1834 = vmul.f32 %v1828, 1.442695
      %v1835 = vpow.pop %v1834
      %v1836 = vmul.f32 %v1829, 1.442695
      %v1837 = vpow.pop %v1836
      %v1838 = vsel %vm784, %v1831, 0.0
      %1839 = vadd.xlane.f32.xlu0 %v1838
      %v1840 = vpop.xlane.xlu0 %1839
      %v1841 = vsel %vm784, %v1833, 0.0
      %1842 = vadd.xlane.f32.xlu0 %v1841
      %v1843 = vpop.xlane.xlu0 %1842
      %v1844 = vsel %vm784, %v1835, 0.0
      %1845 = vadd.xlane.f32.xlu0 %v1844
      %v1846 = vpop.xlane.xlu0 %1845
      %v1847 = vsel %vm784, %v1837, 0.0
      %1848 = vadd.xlane.f32.xlu0 %v1847
      %v1849 = vpop.xlane.xlu0 %1848
      %v1850 = vrcp.pop %v1840
      %v1851 = vmul.f32 %v1831, %v1850
      %v1852 = vrcp.pop %v1843
      %v1853 = vmul.f32 %v1833, %v1852
      %v1854 = vrcp.pop %v1846
      %v1855 = vmul.f32 %v1835, %v1854
      %v1856 = vrcp.pop %v1849
      %v1857 = vmul.f32 %v1837, %v1856
      %v1858 = vpack.c.bf16 %v1851, %v1851
      %v1859 = vpack.c.bf16 %v1853, %v1853
      %v1860 = vpack.c.bf16 %v1855, %v1855
      %v1861 = vpack.c.bf16 %v1857, %v1857
      %1863 = vrot.lane.b32.xlu0 %v1626, 96
      %v1864 = vpop.permute.xlu0 %1863
      %v1866 = vsel %vm784, %v1858, 0
      %v1869 = vsel %vm1042, %v1864, 0
      %1871 = vmatprep.subr.bf16.mxu0 0
      %1872 = vmatpush1.bf16.msra.mxu0 %v1869
      %1873 = vmatprep.subr.bf16.mxu0 0
      %1874 = vmatpush1.bf16.msra.mxu0 0
      %1875 = vmatprep.subr.bf16.mxu0 0
      %1876 = vmatpush1.bf16.msra.mxu0 0
      %1877 = vmatprep.subr.bf16.mxu0 0
      %1878 = vmatpush1.bf16.msra.mxu0 0
      %1879 = vmatprep.subr.bf16.mxu0 0
      %1880 = vmatpush1.bf16.msra.mxu0 0
      %1881 = vmatprep.subr.bf16.mxu0 0
      %1882 = vmatpush1.bf16.msra.mxu0 0
      %1883 = vmatprep.subr.bf16.mxu0 0
      %1884 = vmatpush1.bf16.msra.mxu0 0
      %1885 = vmatprep.subr.bf16.mxu0 0
      %1886 = vmatpush1.bf16.msra.mxu0 0
      %1887 = vmatprep.subr.bf16.mxu0 0
      %1888 = vmatpush1.bf16.msra.mxu0 0
      %1889 = vmatprep.subr.bf16.mxu0 0
      %1890 = vmatpush1.bf16.msra.mxu0 0
      %1891 = vmatprep.subr.bf16.mxu0 0
      %1892 = vmatpush1.bf16.msra.mxu0 0
      %1893 = vmatprep.subr.bf16.mxu0 0
      %1894 = vmatpush1.bf16.msra.mxu0 0
      %1895 = vmatprep.subr.bf16.mxu0 0
      %1896 = vmatpush1.bf16.msra.mxu0 0
      %1897 = vmatprep.subr.bf16.mxu0 0
      %1898 = vmatpush1.bf16.msra.mxu0 0
      %1899 = vmatprep.subr.bf16.mxu0 0
      %1900 = vmatpush1.bf16.msra.mxu0 0
      %1901 = vmatprep.subr.bf16.mxu0 0
      %1902 = vmatpush1.bf16.msra.mxu0 0
      %1903 = vmatprep.mubr.bf16.mxu0 0
      %1904 = vmatmul.mubr.bf16.gmra.mrb[0].mxu0 %v1866
      %v1905 = vpop.f32.mrb[0].mxu0
      %v1906 = vadd.f32 0.0, %v1905
      %v1907 = vpop.f32.mrb[0].mxu0
      %v1908 = vpop.f32.mrb[0].mxu0
      %v1909 = vpop.f32.mrb[0].mxu0
      %1910 = vdwg.mxu0
      %1912 = vrot.lane.b32.xlu0 %v1627, 96
      %v1913 = vpop.permute.xlu0 %1912
      %v1915 = vsel %vm784, %v1859, 0
      %v1918 = vsel %vm1042, %v1913, 0
      %1920 = vmatprep.subr.bf16.mxu0 0
      %1921 = vmatpush1.bf16.msra.mxu0 %v1918
      %1922 = vmatprep.subr.bf16.mxu0 0
      %1923 = vmatpush1.bf16.msra.mxu0 0
      %1924 = vmatprep.subr.bf16.mxu0 0
      %1925 = vmatpush1.bf16.msra.mxu0 0
      %1926 = vmatprep.subr.bf16.mxu0 0
      %1927 = vmatpush1.bf16.msra.mxu0 0
      %1928 = vmatprep.subr.bf16.mxu0 0
      %1929 = vmatpush1.bf16.msra.mxu0 0
      %1930 = vmatprep.subr.bf16.mxu0 0
      %1931 = vmatpush1.bf16.msra.mxu0 0
      %1932 = vmatprep.subr.bf16.mxu0 0
      %1933 = vmatpush1.bf16.msra.mxu0 0
      %1934 = vmatprep.subr.bf16.mxu0 0
      %1935 = vmatpush1.bf16.msra.mxu0 0
      %1936 = vmatprep.subr.bf16.mxu0 0
      %1937 = vmatpush1.bf16.msra.mxu0 0
      %1938 = vmatprep.subr.bf16.mxu0 0
      %1939 = vmatpush1.bf16.msra.mxu0 0
      %1940 = vmatprep.subr.bf16.mxu0 0
      %1941 = vmatpush1.bf16.msra.mxu0 0
      %1942 = vmatprep.subr.bf16.mxu0 0
      %1943 = vmatpush1.bf16.msra.mxu0 0
      %1944 = vmatprep.subr.bf16.mxu0 0
      %1945 = vmatpush1.bf16.msra.mxu0 0
      %1946 = vmatprep.subr.bf16.mxu0 0
      %1947 = vmatpush1.bf16.msra.mxu0 0
      %1948 = vmatprep.subr.bf16.mxu0 0
      %1949 = vmatpush1.bf16.msra.mxu0 0
      %1950 = vmatprep.subr.bf16.mxu0 0
      %1951 = vmatpush1.bf16.msra.mxu0 0
      %1952 = vmatprep.mubr.bf16.mxu0 0
      %1953 = vmatmul.mubr.bf16.gmra.mrb[0].mxu0 %v1915
      %v1954 = vpop.f32.mrb[0].mxu0
      %v1955 = vadd.f32 0.0, %v1954
      %v1956 = vpop.f32.mrb[0].mxu0
      %v1957 = vpop.f32.mrb[0].mxu0
      %v1958 = vpop.f32.mrb[0].mxu0
      %1959 = vdwg.mxu0
      %1961 = vrot.lane.b32.xlu0 %v1628, 96
      %v1962 = vpop.permute.xlu0 %1961
      %v1964 = vsel %vm784, %v1860, 0
      %v1967 = vsel %vm1042, %v1962, 0
      %1969 = vmatprep.subr.bf16.mxu0 0
      %1970 = vmatpush1.bf16.msra.mxu0 %v1967
      %1971 = vmatprep.subr.bf16.mxu0 0
      %1972 = vmatpush1.bf16.msra.mxu0 0
      %1973 = vmatprep.subr.bf16.mxu0 0
      %1974 = vmatpush1.bf16.msra.mxu0 0
      %1975 = vmatprep.subr.bf16.mxu0 0
      %1976 = vmatpush1.bf16.msra.mxu0 0
      %1977 = vmatprep.subr.bf16.mxu0 0
      %1978 = vmatpush1.bf16.msra.mxu0 0
      %1979 = vmatprep.subr.bf16.mxu0 0
      %1980 = vmatpush1.bf16.msra.mxu0 0
      %1981 = vmatprep.subr.bf16.mxu0 0
      %1982 = vmatpush1.bf16.msra.mxu0 0
      %1983 = vmatprep.subr.bf16.mxu0 0
      %1984 = vmatpush1.bf16.msra.mxu0 0
      %1985 = vmatprep.subr.bf16.mxu0 0
      %1986 = vmatpush1.bf16.msra.mxu0 0
      %1987 = vmatprep.subr.bf16.mxu0 0
      %1988 = vmatpush1.bf16.msra.mxu0 0
      %1989 = vmatprep.subr.bf16.mxu0 0
      %1990 = vmatpush1.bf16.msra.mxu0 0
      %1991 = vmatprep.subr.bf16.mxu0 0
      %1992 = vmatpush1.bf16.msra.mxu0 0
      %1993 = vmatprep.subr.bf16.mxu0 0
      %1994 = vmatpush1.bf16.msra.mxu0 0
      %1995 = vmatprep.subr.bf16.mxu0 0
      %1996 = vmatpush1.bf16.msra.mxu0 0
      %1997 = vmatprep.subr.bf16.mxu0 0
      %1998 = vmatpush1.bf16.msra.mxu0 0
      %1999 = vmatprep.subr.bf16.mxu0 0
      %2000 = vmatpush1.bf16.msra.mxu0 0
      %2001 = vmatprep.mubr.bf16.mxu0 0
      %2002 = vmatmul.mubr.bf16.gmra.mrb[0].mxu0 %v1964
      %v2003 = vpop.f32.mrb[0].mxu0
      %v2004 = vadd.f32 0.0, %v2003
      %v2005 = vpop.f32.mrb[0].mxu0
      %v2006 = vpop.f32.mrb[0].mxu0
      %v2007 = vpop.f32.mrb[0].mxu0
      %2008 = vdwg.mxu0
      %2010 = vrot.lane.b32.xlu0 %v1629, 96
      %v2011 = vpop.permute.xlu0 %2010
      %v2013 = vsel %vm784, %v1861, 0
      %v2016 = vsel %vm1042, %v2011, 0
      %2018 = vmatprep.subr.bf16.mxu0 0
      %2019 = vmatpush1.bf16.msra.mxu0 %v2016
      %2020 = vmatprep.subr.bf16.mxu0 0
      %2021 = vmatpush1.bf16.msra.mxu0 0
      %2022 = vmatprep.subr.bf16.mxu0 0
      %2023 = vmatpush1.bf16.msra.mxu0 0
      %2024 = vmatprep.subr.bf16.mxu0 0
      %2025 = vmatpush1.bf16.msra.mxu0 0
      %2026 = vmatprep.subr.bf16.mxu0 0
      %2027 = vmatpush1.bf16.msra.mxu0 0
      %2028 = vmatprep.subr.bf16.mxu0 0
      %2029 = vmatpush1.bf16.msra.mxu0 0
      %2030 = vmatprep.subr.bf16.mxu0 0
      %2031 = vmatpush1.bf16.msra.mxu0 0
      %2032 = vmatprep.subr.bf16.mxu0 0
      %2033 = vmatpush1.bf16.msra.mxu0 0
      %2034 = vmatprep.subr.bf16.mxu0 0
      %2035 = vmatpush1.bf16.msra.mxu0 0
      %2036 = vmatprep.subr.bf16.mxu0 0
      %2037 = vmatpush1.bf16.msra.mxu0 0
      %2038 = vmatprep.subr.bf16.mxu0 0
      %2039 = vmatpush1.bf16.msra.mxu0 0
      %2040 = vmatprep.subr.bf16.mxu0 0
      %2041 = vmatpush1.bf16.msra.mxu0 0
      %2042 = vmatprep.subr.bf16.mxu0 0
      %2043 = vmatpush1.bf16.msra.mxu0 0
      %2044 = vmatprep.subr.bf16.mxu0 0
      %2045 = vmatpush1.bf16.msra.mxu0 0
      %2046 = vmatprep.subr.bf16.mxu0 0
      %2047 = vmatpush1.bf16.msra.mxu0 0
      %2048 = vmatprep.subr.bf16.mxu0 0
      %2049 = vmatpush1.bf16.msra.mxu0 0
      %2050 = vmatprep.mubr.bf16.mxu0 0
      %2051 = vmatmul.mubr.bf16.gmra.mrb[0].mxu0 %v2013
      %v2052 = vpop.f32.mrb[0].mxu0
      %v2053 = vadd.f32 0.0, %v2052
      %v2054 = vpop.f32.mrb[0].mxu0
      %v2055 = vpop.f32.mrb[0].mxu0
      %v2056 = vpop.f32.mrb[0].mxu0
      %2057 = vdwg.mxu0
      %v2058 = vpack.c.bf16 %v1906, %v1906
      %v2059 = vpack.c.bf16 %v1955, %v1955
      %v2060 = vpack.c.bf16 %v2004, %v2004
      %v2061 = vpack.c.bf16 %v2053, %v2053
      %v2062 = vld [vmem:[%s12] sm:$0xf]
      %v2063 = vld [vmem:[%s12 + $0x4] sm:$0xf]
      %v2064 = vld [vmem:[%s12 + $0x8] sm:$0xf]
      %v2065 = vld [vmem:[%s12 + $0xc] sm:$0xf]
      %v2067 = vsel %vm784, %v2058, 0
      %v2070 = vsel %vm1042, %v2062, 0
      %2072 = vmatprep.subr.bf16.mxu0 0
      %2073 = vmatpush1.bf16.msra.mxu0 %v2070
      %2074 = vmatprep.subr.bf16.mxu0 0
      %2075 = vmatpush1.bf16.msra.mxu0 0
      %2076 = vmatprep.subr.bf16.mxu0 0
      %2077 = vmatpush1.bf16.msra.mxu0 0
      %2078 = vmatprep.subr.bf16.mxu0 0
      %2079 = vmatpush1.bf16.msra.mxu0 0
      %2080 = vmatprep.subr.bf16.mxu0 0
      %2081 = vmatpush1.bf16.msra.mxu0 0
      %2082 = vmatprep.subr.bf16.mxu0 0
      %2083 = vmatpush1.bf16.msra.mxu0 0
      %2084 = vmatprep.subr.bf16.mxu0 0
      %2085 = vmatpush1.bf16.msra.mxu0 0
      %2086 = vmatprep.subr.bf16.mxu0 0
      %2087 = vmatpush1.bf16.msra.mxu0 0
      %2088 = vmatprep.subr.bf16.mxu0 0
      %2089 = vmatpush1.bf16.msra.mxu0 0
      %2090 = vmatprep.subr.bf16.mxu0 0
      %2091 = vmatpush1.bf16.msra.mxu0 0
      %2092 = vmatprep.subr.bf16.mxu0 0
      %2093 = vmatpush1.bf16.msra.mxu0 0
      %2094 = vmatprep.subr.bf16.mxu0 0
      %2095 = vmatpush1.bf16.msra.mxu0 0
      %2096 = vmatprep.subr.bf16.mxu0 0
      %2097 = vmatpush1.bf16.msra.mxu0 0
      %2098 = vmatprep.subr.bf16.mxu0 0
      %2099 = vmatpush1.bf16.msra.mxu0 0
      %2100 = vmatprep.subr.bf16.mxu0 0
      %2101 = vmatpush1.bf16.msra.mxu0 0
      %2102 = vmatprep.subr.bf16.mxu0 0
      %2103 = vmatpush1.bf16.msra.mxu0 0
      %2104 = vmatprep.mubr.bf16.mxu0 0
      %2105 = vmatmul.mubr.bf16.gmra.mrb[0].mxu0 %v2067
      %v2106 = vpop.f32.mrb[0].mxu0
      %v2107 = vadd.f32 0.0, %v2106
      %v2108 = vpop.f32.mrb[0].mxu0
      %v2109 = vpop.f32.mrb[0].mxu0
      %v2110 = vpop.f32.mrb[0].mxu0
      %2111 = vdwg.mxu0
      %v2113 = vsel %vm784, %v2059, 0
      %v2116 = vsel %vm1042, %v2063, 0
      %2118 = vmatprep.subr.bf16.mxu0 0
      %2119 = vmatpush1.bf16.msra.mxu0 %v2116
      %2120 = vmatprep.subr.bf16.mxu0 0
      %2121 = vmatpush1.bf16.msra.mxu0 0
      %2122 = vmatprep.subr.bf16.mxu0 0
      %2123 = vmatpush1.bf16.msra.mxu0 0
      %2124 = vmatprep.subr.bf16.mxu0 0
      %2125 = vmatpush1.bf16.msra.mxu0 0
      %2126 = vmatprep.subr.bf16.mxu0 0
      %2127 = vmatpush1.bf16.msra.mxu0 0
      %2128 = vmatprep.subr.bf16.mxu0 0
      %2129 = vmatpush1.bf16.msra.mxu0 0
      %2130 = vmatprep.subr.bf16.mxu0 0
      %2131 = vmatpush1.bf16.msra.mxu0 0
      %2132 = vmatprep.subr.bf16.mxu0 0
      %2133 = vmatpush1.bf16.msra.mxu0 0
      %2134 = vmatprep.subr.bf16.mxu0 0
      %2135 = vmatpush1.bf16.msra.mxu0 0
      %2136 = vmatprep.subr.bf16.mxu0 0
      %2137 = vmatpush1.bf16.msra.mxu0 0
      %2138 = vmatprep.subr.bf16.mxu0 0
      %2139 = vmatpush1.bf16.msra.mxu0 0
      %2140 = vmatprep.subr.bf16.mxu0 0
      %2141 = vmatpush1.bf16.msra.mxu0 0
      %2142 = vmatprep.subr.bf16.mxu0 0
      %2143 = vmatpush1.bf16.msra.mxu0 0
      %2144 = vmatprep.subr.bf16.mxu0 0
      %2145 = vmatpush1.bf16.msra.mxu0 0
      %2146 = vmatprep.subr.bf16.mxu0 0
      %2147 = vmatpush1.bf16.msra.mxu0 0
      %2148 = vmatprep.subr.bf16.mxu0 0
      %2149 = vmatpush1.bf16.msra.mxu0 0
      %2150 = vmatprep.mubr.bf16.mxu0 0
      %2151 = vmatmul.mubr.bf16.gmra.mrb[0].mxu0 %v2113
      %v2152 = vpop.f32.mrb[0].mxu0
      %v2153 = vadd.f32 0.0, %v2152
      %v2154 = vpop.f32.mrb[0].mxu0
      %v2155 = vpop.f32.mrb[0].mxu0
      %v2156 = vpop.f32.mrb[0].mxu0
      %2157 = vdwg.mxu0
      %v2159 = vsel %vm784, %v2060, 0
      %v2162 = vsel %vm1042, %v2064, 0
      %2164 = vmatprep.subr.bf16.mxu0 0
      %2165 = vmatpush1.bf16.msra.mxu0 %v2162
      %2166 = vmatprep.subr.bf16.mxu0 0
      %2167 = vmatpush1.bf16.msra.mxu0 0
      %2168 = vmatprep.subr.bf16.mxu0 0
      %2169 = vmatpush1.bf16.msra.mxu0 0
      %2170 = vmatprep.subr.bf16.mxu0 0
      %2171 = vmatpush1.bf16.msra.mxu0 0
      %2172 = vmatprep.subr.bf16.mxu0 0
      %2173 = vmatpush1.bf16.msra.mxu0 0
      %2174 = vmatprep.subr.bf16.mxu0 0
      %2175 = vmatpush1.bf16.msra.mxu0 0
      %2176 = vmatprep.subr.bf16.mxu0 0
      %2177 = vmatpush1.bf16.msra.mxu0 0
      %2178 = vmatprep.subr.bf16.mxu0 0
      %2179 = vmatpush1.bf16.msra.mxu0 0
      %2180 = vmatprep.subr.bf16.mxu0 0
      %2181 = vmatpush1.bf16.msra.mxu0 0
      %2182 = vmatprep.subr.bf16.mxu0 0
      %2183 = vmatpush1.bf16.msra.mxu0 0
      %2184 = vmatprep.subr.bf16.mxu0 0
      %2185 = vmatpush1.bf16.msra.mxu0 0
      %2186 = vmatprep.subr.bf16.mxu0 0
      %2187 = vmatpush1.bf16.msra.mxu0 0
      %2188 = vmatprep.subr.bf16.mxu0 0
      %2189 = vmatpush1.bf16.msra.mxu0 0
      %2190 = vmatprep.subr.bf16.mxu0 0
      %2191 = vmatpush1.bf16.msra.mxu0 0
      %2192 = vmatprep.subr.bf16.mxu0 0
      %2193 = vmatpush1.bf16.msra.mxu0 0
      %2194 = vmatprep.subr.bf16.mxu0 0
      %2195 = vmatpush1.bf16.msra.mxu0 0
      %2196 = vmatprep.mubr.bf16.mxu0 0
      %2197 = vmatmul.mubr.bf16.gmra.mrb[0].mxu0 %v2159
      %v2198 = vpop.f32.mrb[0].mxu0
      %v2199 = vadd.f32 0.0, %v2198
      %v2200 = vpop.f32.mrb[0].mxu0
      %v2201 = vpop.f32.mrb[0].mxu0
      %v2202 = vpop.f32.mrb[0].mxu0
      %2203 = vdwg.mxu0
      %v2205 = vsel %vm784, %v2061, 0
      %v2208 = vsel %vm1042, %v2065, 0
      %2210 = vmatprep.subr.bf16.mxu0 0
      %2211 = vmatpush1.bf16.msra.mxu0 %v2208
      %2212 = vmatprep.subr.bf16.mxu0 0
      %2213 = vmatpush1.bf16.msra.mxu0 0
      %2214 = vmatprep.subr.bf16.mxu0 0
      %2215 = vmatpush1.bf16.msra.mxu0 0
      %2216 = vmatprep.subr.bf16.mxu0 0
      %2217 = vmatpush1.bf16.msra.mxu0 0
      %2218 = vmatprep.subr.bf16.mxu0 0
      %2219 = vmatpush1.bf16.msra.mxu0 0
      %2220 = vmatprep.subr.bf16.mxu0 0
      %2221 = vmatpush1.bf16.msra.mxu0 0
      %2222 = vmatprep.subr.bf16.mxu0 0
      %2223 = vmatpush1.bf16.msra.mxu0 0
      %2224 = vmatprep.subr.bf16.mxu0 0
      %2225 = vmatpush1.bf16.msra.mxu0 0
      %2226 = vmatprep.subr.bf16.mxu0 0
      %2227 = vmatpush1.bf16.msra.mxu0 0
      %2228 = vmatprep.subr.bf16.mxu0 0
      %2229 = vmatpush1.bf16.msra.mxu0 0
      %2230 = vmatprep.subr.bf16.mxu0 0
      %2231 = vmatpush1.bf16.msra.mxu0 0
      %2232 = vmatprep.subr.bf16.mxu0 0
      %2233 = vmatpush1.bf16.msra.mxu0 0
      %2234 = vmatprep.subr.bf16.mxu0 0
      %2235 = vmatpush1.bf16.msra.mxu0 0
      %2236 = vmatprep.subr.bf16.mxu0 0
      %2237 = vmatpush1.bf16.msra.mxu0 0
      %2238 = vmatprep.subr.bf16.mxu0 0
      %2239 = vmatpush1.bf16.msra.mxu0 0
      %2240 = vmatprep.subr.bf16.mxu0 0
      %2241 = vmatpush1.bf16.msra.mxu0 0
      %2242 = vmatprep.mubr.bf16.mxu0 0
      %2243 = vmatmul.mubr.bf16.gmra.mrb[0].mxu0 %v2205
      %v2244 = vpop.f32.mrb[0].mxu0
      %v2245 = vadd.f32 0.0, %v2244
      %v2246 = vpop.f32.mrb[0].mxu0
      %v2247 = vpop.f32.mrb[0].mxu0
      %v2248 = vpop.f32.mrb[0].mxu0
      %2249 = vdwg.mxu0
      %v2250 = vsel %vm723, %v2107, 0.0
      %v2251 = vsel %vm723, %v2153, 0.0
      %v2252 = vadd.f32 %v2250, %v2251
      %v2253 = vsel %vm723, %v2199, 0.0
      %v2254 = vadd.f32 %v2252, %v2253
      %v2255 = vsel %vm723, %v2245, 0.0
      %v2256 = vadd.f32 %v2254, %v2255
      %v2257 = vld [vmem:[%s13] sm:$0x1]
      %v2259 = vlaneseq
      %v2260 = vshrl.u32 %v2259, 7
      %v2261 = vsub.s32 0, %v2260
      %v2262 = vrot.slane %v2257, %v2261
      %v2264 = vadd.f32 %v2256, %v2262
      %v2265 = vadd.f32 %v1467, %v2264
      %v2266 = vld [vmem:[%s14] sm:$0x1]
      %v2267 = vld [vmem:[%s15] sm:$0x1]
      %v2268 = vsel %vm723, %v2265, 0.0
      %2269 = vadd.xlane.f32.xlu0 %v2268
      %v2270 = vpop.xlane.xlu0 %2269
      %v2271 = vmul.f32 %v2270, %v1443
      %v2272 = vsub.f32 %v2265, %v2271
      %v2273 = vmul.f32 %v2272, %v2272
      %v2274 = vsel %vm723, %v2273, 0.0
      %2275 = vadd.xlane.f32.xlu0 %v2274
      %v2276 = vpop.xlane.xlu0 %2275
      %v2277 = vmul.f32 %v2276, %v1443
      %v2278 = vadd.f32 %v2277, 1e-05
      %v2279 = vrsqrt.pop %v2278
      %v2280 = vmul.f32 %v2272, %v2279
      %v2282 = vlaneseq
      %v2283 = vshrl.u32 %v2282, 7
      %v2284 = vsub.s32 0, %v2283
      %v2285 = vrot.slane %v2266, %v2284
      %v2287 = vmul.f32 %v2280, %v2285
      %v2289 = vlaneseq
      %v2290 = vshrl.u32 %v2289, 7
      %v2291 = vsub.s32 0, %v2290
      %v2292 = vrot.slane %v2267, %v2291
      %v2294 = vadd.f32 %v2287, %v2292
      %v2295 = vpack.c.bf16 %v2294, %v2294
      %v2296 = vld [vmem:[%s16] sm:$0xf]
      %v2297 = vld [vmem:[%s16 + $0x4] sm:$0xf]
      %v2298 = vld [vmem:[%s16 + $0x8] sm:$0xf]
      %v2299 = vld [vmem:[%s16 + $0xc] sm:$0xf]
      %v2300 = vld [vmem:[%s17] sm:$0x1]
      %v2302 = vlaneseq
      %v2303 = vshrl.u32 %v2302, 7
      %v2304 = vsub.s32 0, %v2303
      %v2305 = vrot.slane %v2300, %v2304
      %v2311 = vunpack.c.l.b16 %v2296
      %v2312 = vunpack.c.l.b16 %v2297
      %v2313 = vunpack.c.l.b16 %v2298
      %v2314 = vunpack.c.l.b16 %v2299
      %v2315 = vpack.c.b16 %v2312, %v2311
      %v2316 = vpack.c.b16 %v2314, %v2313
      %v2320 = vsel %vm723, %v2295, 0
      %2322 = vmatprep.subr.bf16.mxu0 0
      %2323 = vmatpush1.bf16.msra.mxu0 %v2315
      %2324 = vmatprep.subr.bf16.mxu0 0
      %2325 = vmatpush1.bf16.msra.mxu0 %v2316
      %2326 = vmatprep.subr.bf16.mxu0 0
      %2327 = vmatpush1.bf16.msra.mxu0 0
      %2328 = vmatprep.subr.bf16.mxu0 0
      %2329 = vmatpush1.bf16.msra.mxu0 0
      %2330 = vmatprep.subr.bf16.mxu0 0
      %2331 = vmatpush1.bf16.msra.mxu0 0
      %2332 = vmatprep.subr.bf16.mxu0 0
      %2333 = vmatpush1.bf16.msra.mxu0 0
      %2334 = vmatprep.subr.bf16.mxu0 0
      %2335 = vmatpush1.bf16.msra.mxu0 0
      %2336 = vmatprep.subr.bf16.mxu0 0
      %2337 = vmatpush1.bf16.msra.mxu0 0
      %2338 = vmatprep.subr.bf16.mxu0 0
      %2339 = vmatpush1.bf16.msra.mxu0 0
      %2340 = vmatprep.subr.bf16.mxu0 0
      %2341 = vmatpush1.bf16.msra.mxu0 0
      %2342 = vmatprep.subr.bf16.mxu0 0
      %2343 = vmatpush1.bf16.msra.mxu0 0
      %2344 = vmatprep.subr.bf16.mxu0 0
      %2345 = vmatpush1.bf16.msra.mxu0 0
      %2346 = vmatprep.subr.bf16.mxu0 0
      %2347 = vmatpush1.bf16.msra.mxu0 0
      %2348 = vmatprep.subr.bf16.mxu0 0
      %2349 = vmatpush1.bf16.msra.mxu0 0
      %2350 = vmatprep.subr.bf16.mxu0 0
      %2351 = vmatpush1.bf16.msra.mxu0 0
      %2352 = vmatprep.subr.bf16.mxu0 0
      %2353 = vmatpush1.bf16.msra.mxu0 0
      %2354 = vmatprep.mubr.bf16.mxu0 0
      %2355 = vmatmul.mubr.bf16.gmra.mrb[0].mxu0 %v2320
      %v2356 = vpop.f32.mrb[0].mxu0
      %v2357 = vadd.f32 %v2305, %v2356
      %v2358 = vpop.f32.mrb[0].mxu0
      %v2359 = vpop.f32.mrb[0].mxu0
      %v2360 = vpop.f32.mrb[0].mxu0
      %2361 = vdwg.mxu0
      %v2362 = vmax.f32 %v2357, 0.0
      %v2363 = vpack.c.bf16 %v2362, %v2362
      %v2364 = vld [vmem:[%s18] sm:$0xf]
      %v2365 = vld [vmem:[%s18 + $0x4] sm:$0xf]
      %v2366 = vld [vmem:[%s18 + $0x8] sm:$0xf]
      %v2367 = vld [vmem:[%s18 + $0xc] sm:$0xf]
      %v2368 = vld [vmem:[%s18 + $0x10] sm:$0xf]
      %v2369 = vld [vmem:[%s18 + $0x14] sm:$0xf]
      %v2370 = vld [vmem:[%s18 + $0x18] sm:$0xf]
      %v2371 = vld [vmem:[%s18 + $0x1c] sm:$0xf]
      %v2372 = vld [vmem:[%s18 + $0x20] sm:$0xf]
      %v2373 = vld [vmem:[%s18 + $0x24] sm:$0xf]
      %v2374 = vld [vmem:[%s18 + $0x28] sm:$0xf]
      %v2375 = vld [vmem:[%s18 + $0x2c] sm:$0xf]
      %v2376 = vld [vmem:[%s18 + $0x30] sm:$0xf]
      %v2377 = vld [vmem:[%s18 + $0x34] sm:$0xf]
      %v2378 = vld [vmem:[%s18 + $0x38] sm:$0xf]
      %v2379 = vld [vmem:[%s18 + $0x3c] sm:$0xf]
      %v2380 = vld [vmem:[%s19] sm:$0x1]
      %v2382 = vlaneseq
      %v2383 = vshrl.u32 %v2382, 7
      %v2384 = vsub.s32 0, %v2383
      %v2385 = vrot.slane %v2380, %v2384
      %v2403 = vunpack.c.l.b16 %v2364
      %v2404 = vunpack.c.l.b16 %v2365
      %v2405 = vunpack.c.l.b16 %v2366
      %v2406 = vunpack.c.l.b16 %v2367
      %v2407 = vunpack.c.l.b16 %v2368
      %v2408 = vunpack.c.l.b16 %v2369
      %v2409 = vunpack.c.l.b16 %v2370
      %v2410 = vunpack.c.l.b16 %v2371
      %v2411 = vunpack.c.l.b16 %v2372
      %v2412 = vunpack.c.l.b16 %v2373
      %v2413 = vunpack.c.l.b16 %v2374
      %v2414 = vunpack.c.l.b16 %v2375
      %v2415 = vunpack.c.l.b16 %v2376
      %v2416 = vunpack.c.l.b16 %v2377
      %v2417 = vunpack.c.l.b16 %v2378
      %v2418 = vunpack.c.l.b16 %v2379
      %v2419 = vpack.c.b16 %v2404, %v2403
      %v2420 = vpack.c.b16 %v2406, %v2405
      %v2421 = vpack.c.b16 %v2408, %v2407
      %v2422 = vpack.c.b16 %v2410, %v2409
      %v2423 = vpack.c.b16 %v2412, %v2411
      %v2424 = vpack.c.b16 %v2414, %v2413
      %v2425 = vpack.c.b16 %v2416, %v2415
      %v2426 = vpack.c.b16 %v2418, %v2417
      %2435 = vmatprep.subr.bf16.mxu0 0
      %2436 = vmatpush1.bf16.msra.mxu0 %v2419
      %2437 = vmatprep.subr.bf16.mxu0 0
      %2438 = vmatpush1.bf16.msra.mxu0 %v2420
      %2439 = vmatprep.subr.bf16.mxu0 0
      %2440 = vmatpush1.bf16.msra.mxu0 %v2421
      %2441 = vmatprep.subr.bf16.mxu0 0
      %2442 = vmatpush1.bf16.msra.mxu0 %v2422
      %2443 = vmatprep.subr.bf16.mxu0 0
      %2444 = vmatpush1.bf16.msra.mxu0 %v2423
      %2445 = vmatprep.subr.bf16.mxu0 0
      %2446 = vmatpush1.bf16.msra.mxu0 %v2424
      %2447 = vmatprep.subr.bf16.mxu0 0
      %2448 = vmatpush1.bf16.msra.mxu0 %v2425
      %2449 = vmatprep.subr.bf16.mxu0 0
      %2450 = vmatpush1.bf16.msra.mxu0 %v2426
      %2451 = vmatprep.subr.bf16.mxu0 0
      %2452 = vmatpush1.bf16.msra.mxu0 0
      %2453 = vmatprep.subr.bf16.mxu0 0
      %2454 = vmatpush1.bf16.msra.mxu0 0
      %2455 = vmatprep.subr.bf16.mxu0 0
      %2456 = vmatpush1.bf16.msra.mxu0 0
      %2457 = vmatprep.subr.bf16.mxu0 0
      %2458 = vmatpush1.bf16.msra.mxu0 0
      %2459 = vmatprep.subr.bf16.mxu0 0
      %2460 = vmatpush1.bf16.msra.mxu0 0
      %2461 = vmatprep.subr.bf16.mxu0 0
      %2462 = vmatpush1.bf16.msra.mxu0 0
      %2463 = vmatprep.subr.bf16.mxu0 0
      %2464 = vmatpush1.bf16.msra.mxu0 0
      %2465 = vmatprep.subr.bf16.mxu0 0
      %2466 = vmatpush1.bf16.msra.mxu0 0
      %2467 = vmatprep.mubr.bf16.mxu0 0
      %2468 = vmatmul.mubr.bf16.gmra.mrb[0].mxu0 %v2363
      %v2469 = vpop.f32.mrb[0].mxu0
      %v2470 = vadd.f32 %v2385, %v2469
      %v2471 = vpop.f32.mrb[0].mxu0
      %v2472 = vpop.f32.mrb[0].mxu0
      %v2473 = vpop.f32.mrb[0].mxu0
      %2474 = vdwg.mxu0
      %v2475 = vadd.f32 %v2294, %v2470
      %v2476 = vld [vmem:[%s20] sm:$0x1]
      %v2477 = vld [vmem:[%s21] sm:$0x1]
      %v2478 = vsel %vm723, %v2475, 0.0
      %2479 = vadd.xlane.f32.xlu0 %v2478
      %v2480 = vpop.xlane.xlu0 %2479
      %v2481 = vmul.f32 %v2480, %v1443
      %v2482 = vsub.f32 %v2475, %v2481
      %v2483 = vmul.f32 %v2482, %v2482
      %v2484 = vsel %vm723, %v2483, 0.0
      %2485 = vadd.xlane.f32.xlu0 %v2484
      %v2486 = vpop.xlane.xlu0 %2485
      %v2487 = vmul.f32 %v2486, %v1443
      %v2488 = vadd.f32 %v2487, 1e-05
      %v2489 = vrsqrt.pop %v2488
      %v2490 = vmul.f32 %v2482, %v2489
      %v2492 = vlaneseq
      %v2493 = vshrl.u32 %v2492, 7
      %v2494 = vsub.s32 0, %v2493
      %v2495 = vrot.slane %v2476, %v2494
      %v2497 = vmul.f32 %v2490, %v2495
      %v2499 = vlaneseq
      %v2500 = vshrl.u32 %v2499, 7
      %v2501 = vsub.s32 0, %v2500
      %v2502 = vrot.slane %v2477, %v2501
      %v2504 = vadd.f32 %v2497, %v2502
      %2505 = vst.msk [vmem:[%s695] sm:$0xff] %vm723, %v2504
      %p2506 = scmp.lt.s32.totalorder %s33, 1
      %s2507 = scalar_select %p2506, %s33, 1
      %s2508 = smul.addr %s2507, 8
      %s2509 = scalar_lea.vmem %s22, %s2508
      // Predicated region
      $region109: #{transformer_decoder_forward.6} parent=107 // pred_check
        %p2510 = pneg %p523
      $region110: #{transformer_decoder_forward.6} parent=107 // pred_check_branch
        %2512 = sbr.rel (%p2510) target = $region112
      $region111: #{transformer_decoder_forward.6} parent=107 // pred_region
        _
      $region112: #{transformer_decoder_forward.6} parent=107 // pred_fallthru
        _
    $region108: #{transformer_decoder_forward.6} parent=5 // pred_fallthru
      _
    %p2513 = scmp.le.s32.totalorder 2, %s28
    // Predicated region
    $region113: #{transformer_decoder_forward.6} parent=5 // pred_check
      %p2514 = pneg %p2513
    $region114: #{transformer_decoder_forward.6} parent=5 // pred_check_branch
      %2516 = sbr.rel (%p2514) target = $region116
    $region115: #{transformer_decoder_forward.6} parent=5 // pred_region
      %s2517 = ssub.s32 %s28, 2
      // Predicated region
      $region117: #{transformer_decoder_forward.6} parent=115 // pred_check
        %p2518 = pneg %p529
      $region118: #{transformer_decoder_forward.6} parent=115 // pred_check_branch
        %2520 = sbr.rel (%p2518) target = $region120
      $region119: #{transformer_decoder_forward.6} parent=115 // pred_region
        %p2521 = scmp.lt.s32.totalorder %s34, 1
        %s2522 = scalar_select %p2521, %s34, 1
        %s2523 = smul.addr %s2522, 8
        %s2524 = scalar_lea.vmem %s22, %s2523
      $region120: #{transformer_decoder_forward.6} parent=115 // pred_fallthru
        _
    $region116: #{transformer_decoder_forward.6} parent=5 // pred_fallthru
      _
  $region6: #{transformer_decoder_forward.6} parent=0 // loop_footer
    %s32 = sadd.s32 1, %s28
  $region7: #{transformer_decoder_forward.6} parent=0 // loop_footer_branch
    %27 = sbr.rel target = $region3
  $region8: #{transformer_decoder_forward.6} parent=0 // loop_exit
    _

// kernel: transformer_decoder_forward.7
$region0: #{transformer_decoder_forward.7}
  #allocation0 [shape = 'u32[]', space=smem, size = 0x4, offset = 0x4, fixed_abs, tag = 'smem constant byte address 0x4 - core index']
  #allocation1 [shape = 'u32[144,128]{1,0:T(1,128)}', space=vmem, size = 0x12000, scoped, tag = 'internal scratch']
  #allocation2 [shape = 'f32[1,1]{1,0:T(1,128)S(1)}', space=vmem, size = 0x200, scoped, tag = 'scoped memory for transformer_decoder_forward.7']
  %s0 = inlined_call_operand.vmem [shape: f32[2,8,32], index: 0, kind: input, shape index: {}]
  %s1 = inlined_call_operand.vmem [shape: f32[2,8,32], index: 1, kind: input, shape index: {}]
  %s2 = inlined_call_operand.vmem [shape: bf16[32,96], index: 2, kind: input, shape index: {}]
  %s3 = inlined_call_operand.vmem [shape: f32[1,96], index: 3, kind: input, shape index: {}]
  %s4 = inlined_call_operand.vmem [shape: bf16[4,8,32], index: 4, kind: input, shape index: {}]
  %s5 = inlined_call_operand.vmem [shape: f32[1,32], index: 5, kind: input, shape index: {}]
  %s6 = inlined_call_operand.vmem [shape: f32[1,32], index: 6, kind: input, shape index: {}]
  %s7 = inlined_call_operand.vmem [shape: f32[1,32], index: 7, kind: input, shape index: {}]
  %s8 = inlined_call_operand.vmem [shape: bf16[32,32], index: 8, kind: input, shape index: {}]
  %s9 = inlined_call_operand.vmem [shape: f32[1,32], index: 9, kind: input, shape index: {}]
  %s10 = inlined_call_operand.vmem [shape: bf16[32,64], index: 10, kind: input, shape index: {}]
  %s11 = inlined_call_operand.vmem [shape: f32[1,64], index: 11, kind: input, shape index: {}]
  %s12 = inlined_call_operand.vmem [shape: bf16[4,8,32], index: 12, kind: input, shape index: {}]
  %s13 = inlined_call_operand.vmem [shape: f32[1,32], index: 13, kind: input, shape index: {}]
  %s14 = inlined_call_operand.vmem [shape: f32[1,32], index: 14, kind: input, shape index: {}]
  %s15 = inlined_call_operand.vmem [shape: f32[1,32], index: 15, kind: input, shape index: {}]
  %s16 = inlined_call_operand.vmem [shape: bf16[32,128], index: 16, kind: input, shape index: {}]
  %s17 = inlined_call_operand.vmem [shape: f32[1,128], index: 17, kind: input, shape index: {}]
  %s18 = inlined_call_operand.vmem [shape: bf16[128,32], index: 18, kind: input, shape index: {}]
  %s19 = inlined_call_operand.vmem [shape: f32[1,32], index: 19, kind: input, shape index: {}]
  %s20 = inlined_call_operand.vmem [shape: f32[1,32], index: 20, kind: input, shape index: {}]
  %s21 = inlined_call_operand.vmem [shape: f32[1,32], index: 21, kind: input, shape index: {}]
  %s22 = inlined_call_operand.hbm [shape: bf16[1,32], index: 22, kind: input, shape index: {}]
  %s23 = inlined_call_operand.<no memory space> [shape: f32[1,1], index: 23, kind: input, shape index: {}]
  %s24 = inlined_call_operand.hbm [shape: f32[2,1,8], index: 24, kind: output, shape index: {}]
  %s25 = sld [smem:[#allocation0]]
  $region133: #{transformer_decoder_forward.7} parent=0
    _
  %s27 = ssub.s32 1, %s25
  %s28 = scalar_select 0, %s27, %s25
  %v29 = vstv %s23
  %30 = vst [vmem:[#allocation2] sm:$0x1] %v29
  $region1: #{transformer_decoder_forward.7} parent=0
    #allocation3 [shape = 'u8[512]{0}', space=vmem, size = 0x400, scoped, tag = 'input window, operand 22, single buffered']
    #allocation4 [shape = 's32[2]{0}', space=sflag, size = 0x8, scoped, tag = 'scoped memory for transformer_decoder_forward.7']
    #allocation5 [shape = 's32[2]{0}', space=sflag, size = 0x8, scoped, tag = 'scoped memory for transformer_decoder_forward.7']
    #allocation6 [shape = 'u8[1024]{0}', space=vmem, size = 0x400, scoped, tag = 'output window, operand 0']
    %31 = vsyncpa [#allocation4], 0
    %32 = vsyncpa [#allocation5], 0
    %s33 = scalar_lea.sflag [#allocation5], 1
    %34 = vsyncpa %s33, 0
    loop: start=0, step=1, limit=4
    $region2: #{transformer_decoder_forward.7} parent=1 // loop_pre_header
      _
    $region3: #{transformer_decoder_forward.7} parent=1 // loop_header
      %s36 = sphi 0, %s40
      %p37 = scmp.ge.s32.totalorder %s36, 4
      %s46 = sphi 0, %s48
      %s49 = sphi 0, %s46
      %s50 = sphi 0, %s49
      %s66 = sphi 0, %s50
      %s72 = sphi 0, %s74
      %s75 = sphi 0, %s72
      %s76 = sphi 0, %s75
      %s92 = sphi 0, %s76
      %s96 = sphi 0, %s96
      %s98 = sphi 0, %s96
      %s99 = sphi 0, %s98
      %s113 = sphi 0, %s99
      %s117 = sphi 0, %s117
      %s119 = sphi 0, %s117
      %s120 = sphi 0, %s119
      %s134 = sphi 0, %s120
      %s138 = sphi 0, %s138
      %s140 = sphi 0, %s138
      %s141 = sphi 0, %s140
      %s155 = sphi 0, %s141
      %s159 = sphi 0, %s159
      %s161 = sphi 0, %s159
      %s162 = sphi 0, %s161
      %s176 = sphi 0, %s162
      %s180 = sphi 0, %s180
      %s182 = sphi 0, %s180
      %s183 = sphi 0, %s182
      %s197 = sphi 0, %s183
      %s201 = sphi 0, %s201
      %s203 = sphi 0, %s201
      %s204 = sphi 0, %s203
      %s218 = sphi 0, %s204
      %s222 = sphi 0, %s222
      %s224 = sphi 0, %s222
      %s225 = sphi 0, %s224
      %s239 = sphi 0, %s225
      %s243 = sphi 0, %s243
      %s245 = sphi 0, %s243
      %s246 = sphi 0, %s245
      %s260 = sphi 0, %s246
      %s264 = sphi 0, %s264
      %s266 = sphi 0, %s264
      %s267 = sphi 0, %s266
      %s281 = sphi 0, %s267
      %s285 = sphi 0, %s285
      %s287 = sphi 0, %s285
      %s288 = sphi 0, %s287
      %s302 = sphi 0, %s288
      %s306 = sphi 0, %s306
      %s308 = sphi 0, %s306
      %s309 = sphi 0, %s308
      %s323 = sphi 0, %s309
      %s327 = sphi 0, %s327
      %s329 = sphi 0, %s327
      %s330 = sphi 0, %s329
      %s344 = sphi 0, %s330
      %s348 = sphi 0, %s348
      %s350 = sphi 0, %s348
      %s351 = sphi 0, %s350
      %s365 = sphi 0, %s351
      %s369 = sphi 0, %s369
      %s371 = sphi 0, %s369
      %s372 = sphi 0, %s371
      %s386 = sphi 0, %s372
      %s390 = sphi 0, %s390
      %s392 = sphi 0, %s390
      %s393 = sphi 0, %s392
      %s407 = sphi 0, %s393
      %s411 = sphi 0, %s411
      %s413 = sphi 0, %s411
      %s414 = sphi 0, %s413
      %s428 = sphi 0, %s414
      %s432 = sphi 0, %s432
      %s434 = sphi 0, %s432
      %s435 = sphi 0, %s434
      %s449 = sphi 0, %s435
      %s453 = sphi 0, %s453
      %s455 = sphi 0, %s453
      %s456 = sphi 0, %s455
      %s470 = sphi 0, %s456
      %s474 = sphi 0, %s474
      %s476 = sphi 0, %s474
      %s477 = sphi 0, %s476
      %s491 = sphi 0, %s477
      %s495 = sphi 0, %s495
      %s497 = sphi 0, %s495
      %s498 = sphi 0, %s497
      %s512 = sphi 0, %s498
      %s516 = sphi 0, %s516
      %s518 = sphi 0, %s516
      %s519 = sphi 0, %s518
      %s533 = sphi 0, %s519
      %s537 = sphi 0, %s537
      %s539 = sphi 0, %s537
      %s540 = sphi 0, %s539
      %s554 = sphi 0, %s540
      %s560 = sphi 0, %s562
      %s563 = sphi 0, %s560
      %s564 = sphi 0, %s563
      %s580 = sphi 0, %s564
    $region4: #{transformer_decoder_forward.7} parent=1 // loop_header_branch
      %39 = sbr.rel (%p37) target = $region8
    $region5: #{transformer_decoder_forward.7} parent=1 // loop_body
      %s41 = ssub.s32 %s36, 1
      %s42 = ssub.s32 %s36, 2
      %s43 = sadd.s32 %s36, 1
      %s44 = ssub.s32 %s36, %s43
      %p45 = scmp.eq.s32.totalorder %s44, 0
      %s47 = sadd.s32 %s46, 1
      %s48 = scalar_select %p45, %s46, %s47
      %p51 = pneg %p45
      %p52 = scmp.eq.s32.totalorder %s36, 1
      %p53 = por %p51, %p52
      %p54 = scmp.ne.s32.totalorder %s46, %s49
      %p55 = scmp.eq.s32.totalorder %s36, 0
      %p56 = por %p54, %p55
      %p57 = scmp.ne.s32.totalorder %s46, %s49
      %p58 = scmp.eq.s32.totalorder %s41, 1
      %p59 = por %p57, %p58
      %p60 = scmp.ne.s32.totalorder %s49, %s50
      %p61 = scmp.eq.s32.totalorder %s41, 0
      %p62 = por %p60, %p61
      %p63 = scmp.ne.s32.totalorder %s49, %s50
      %p64 = scmp.eq.s32.totalorder %s42, 1
      %p65 = por %p63, %p64
      %p67 = scmp.ne.s32.totalorder %s50, %s66
      %p68 = scmp.eq.s32.totalorder %s42, 0
      %p69 = por %p67, %p68
      %s70 = ssub.s32 %s36, %s43
      %p71 = scmp.eq.s32.totalorder %s70, 0
      %s73 = sadd.s32 %s72, 1
      %s74 = scalar_select %p71, %s72, %s73
      %p77 = pneg %p71
      %p78 = scmp.eq.s32.totalorder %s36, 1
      %p79 = por %p77, %p78
      %p80 = scmp.ne.s32.totalorder %s72, %s75
      %p81 = scmp.eq.s32.totalorder %s36, 0
      %p82 = por %p80, %p81
      %p83 = scmp.ne.s32.totalorder %s72, %s75
      %p84 = scmp.eq.s32.totalorder %s41, 1
      %p85 = por %p83, %p84
      %p86 = scmp.ne.s32.totalorder %s75, %s76
      %p87 = scmp.eq.s32.totalorder %s41, 0
      %p88 = por %p86, %p87
      %p89 = scmp.ne.s32.totalorder %s75, %s76
      %p90 = scmp.eq.s32.totalorder %s42, 1
      %p91 = por %p89, %p90
      %p93 = scmp.ne.s32.totalorder %s76, %s92
      %p94 = scmp.eq.s32.totalorder %s42, 0
      %p95 = por %p93, %p94
      %s97 = sadd.s32 %s96, 1
      %p100 = scmp.eq.s32.totalorder %s36, 1
      %p101 = scmp.ne.s32.totalorder %s96, %s98
      %p102 = scmp.eq.s32.totalorder %s36, 0
      %p103 = por %p101, %p102
      %p104 = scmp.ne.s32.totalorder %s96, %s98
      %p105 = scmp.eq.s32.totalorder %s41, 1
      %p106 = por %p104, %p105
      %p107 = scmp.ne.s32.totalorder %s98, %s99
      %p108 = scmp.eq.s32.totalorder %s41, 0
      %p109 = por %p107, %p108
      %p110 = scmp.ne.s32.totalorder %s98, %s99
      %p111 = scmp.eq.s32.totalorder %s42, 1
      %p112 = por %p110, %p111
      %p114 = scmp.ne.s32.totalorder %s99, %s113
      %p115 = scmp.eq.s32.totalorder %s42, 0
      %p116 = por %p114, %p115
      %s118 = sadd.s32 %s117, 1
      %p121 = scmp.eq.s32.totalorder %s36, 1
      %p122 = scmp.ne.s32.totalorder %s117, %s119
      %p123 = scmp.eq.s32.totalorder %s36, 0
      %p124 = por %p122, %p123
      %p125 = scmp.ne.s32.totalorder %s117, %s119
      %p126 = scmp.eq.s32.totalorder %s41, 1
      %p127 = por %p125, %p126
      %p128 = scmp.ne.s32.totalorder %s119, %s120
      %p129 = scmp.eq.s32.totalorder %s41, 0
      %p130 = por %p128, %p129
      %p131 = scmp.ne.s32.totalorder %s119, %s120
      %p132 = scmp.eq.s32.totalorder %s42, 1
      %p133 = por %p131, %p132
      %p135 = scmp.ne.s32.totalorder %s120, %s134
      %p136 = scmp.eq.s32.totalorder %s42, 0
      %p137 = por %p135, %p136
      %s139 = sadd.s32 %s138, 1
      %p142 = scmp.eq.s32.totalorder %s36, 1
      %p143 = scmp.ne.s32.totalorder %s138, %s140
      %p144 = scmp.eq.s32.totalorder %s36, 0
      %p145 = por %p143, %p144
      %p146 = scmp.ne.s32.totalorder %s138, %s140
      %p147 = scmp.eq.s32.totalorder %s41, 1
      %p148 = por %p146, %p147
      %p149 = scmp.ne.s32.totalorder %s140, %s141
      %p150 = scmp.eq.s32.totalorder %s41, 0
      %p151 = por %p149, %p150
      %p152 = scmp.ne.s32.totalorder %s140, %s141
      %p153 = scmp.eq.s32.totalorder %s42, 1
      %p154 = por %p152, %p153
      %p156 = scmp.ne.s32.totalorder %s141, %s155
      %p157 = scmp.eq.s32.totalorder %s42, 0
      %p158 = por %p156, %p157
      %s160 = sadd.s32 %s159, 1
      %p163 = scmp.eq.s32.totalorder %s36, 1
      %p164 = scmp.ne.s32.totalorder %s159, %s161
      %p165 = scmp.eq.s32.totalorder %s36, 0
      %p166 = por %p164, %p165
      %p167 = scmp.ne.s32.totalorder %s159, %s161
      %p168 = scmp.eq.s32.totalorder %s41, 1
      %p169 = por %p167, %p168
      %p170 = scmp.ne.s32.totalorder %s161, %s162
      %p171 = scmp.eq.s32.totalorder %s41, 0
      %p172 = por %p170, %p171
      %p173 = scmp.ne.s32.totalorder %s161, %s162
      %p174 = scmp.eq.s32.totalorder %s42, 1
      %p175 = por %p173, %p174
      %p177 = scmp.ne.s32.totalorder %s162, %s176
      %p178 = scmp.eq.s32.totalorder %s42, 0
      %p179 = por %p177, %p178
      %s181 = sadd.s32 %s180, 1
      %p184 = scmp.eq.s32.totalorder %s36, 1
      %p185 = scmp.ne.s32.totalorder %s180, %s182
      %p186 = scmp.eq.s32.totalorder %s36, 0
      %p187 = por %p185, %p186
      %p188 = scmp.ne.s32.totalorder %s180, %s182
      %p189 = scmp.eq.s32.totalorder %s41, 1
      %p190 = por %p188, %p189
      %p191 = scmp.ne.s32.totalorder %s182, %s183
      %p192 = scmp.eq.s32.totalorder %s41, 0
      %p193 = por %p191, %p192
      %p194 = scmp.ne.s32.totalorder %s182, %s183
      %p195 = scmp.eq.s32.totalorder %s42, 1
      %p196 = por %p194, %p195
      %p198 = scmp.ne.s32.totalorder %s183, %s197
      %p199 = scmp.eq.s32.totalorder %s42, 0
      %p200 = por %p198, %p199
      %s202 = sadd.s32 %s201, 1
      %p205 = scmp.eq.s32.totalorder %s36, 1
      %p206 = scmp.ne.s32.totalorder %s201, %s203
      %p207 = scmp.eq.s32.totalorder %s36, 0
      %p208 = por %p206, %p207
      %p209 = scmp.ne.s32.totalorder %s201, %s203
      %p210 = scmp.eq.s32.totalorder %s41, 1
      %p211 = por %p209, %p210
      %p212 = scmp.ne.s32.totalorder %s203, %s204
      %p213 = scmp.eq.s32.totalorder %s41, 0
      %p214 = por %p212, %p213
      %p215 = scmp.ne.s32.totalorder %s203, %s204
      %p216 = scmp.eq.s32.totalorder %s42, 1
      %p217 = por %p215, %p216
      %p219 = scmp.ne.s32.totalorder %s204, %s218
      %p220 = scmp.eq.s32.totalorder %s42, 0
      %p221 = por %p219, %p220
      %s223 = sadd.s32 %s222, 1
      %p226 = scmp.eq.s32.totalorder %s36, 1
      %p227 = scmp.ne.s32.totalorder %s222, %s224
      %p228 = scmp.eq.s32.totalorder %s36, 0
      %p229 = por %p227, %p228
      %p230 = scmp.ne.s32.totalorder %s222, %s224
      %p231 = scmp.eq.s32.totalorder %s41, 1
      %p232 = por %p230, %p231
      %p233 = scmp.ne.s32.totalorder %s224, %s225
      %p234 = scmp.eq.s32.totalorder %s41, 0
      %p235 = por %p233, %p234
      %p236 = scmp.ne.s32.totalorder %s224, %s225
      %p237 = scmp.eq.s32.totalorder %s42, 1
      %p238 = por %p236, %p237
      %p240 = scmp.ne.s32.totalorder %s225, %s239
      %p241 = scmp.eq.s32.totalorder %s42, 0
      %p242 = por %p240, %p241
      %s244 = sadd.s32 %s243, 1
      %p247 = scmp.eq.s32.totalorder %s36, 1
      %p248 = scmp.ne.s32.totalorder %s243, %s245
      %p249 = scmp.eq.s32.totalorder %s36, 0
      %p250 = por %p248, %p249
      %p251 = scmp.ne.s32.totalorder %s243, %s245
      %p252 = scmp.eq.s32.totalorder %s41, 1
      %p253 = por %p251, %p252
      %p254 = scmp.ne.s32.totalorder %s245, %s246
      %p255 = scmp.eq.s32.totalorder %s41, 0
      %p256 = por %p254, %p255
      %p257 = scmp.ne.s32.totalorder %s245, %s246
      %p258 = scmp.eq.s32.totalorder %s42, 1
      %p259 = por %p257, %p258
      %p261 = scmp.ne.s32.totalorder %s246, %s260
      %p262 = scmp.eq.s32.totalorder %s42, 0
      %p263 = por %p261, %p262
      %s265 = sadd.s32 %s264, 1
      %p268 = scmp.eq.s32.totalorder %s36, 1
      %p269 = scmp.ne.s32.totalorder %s264, %s266
      %p270 = scmp.eq.s32.totalorder %s36, 0
      %p271 = por %p269, %p270
      %p272 = scmp.ne.s32.totalorder %s264, %s266
      %p273 = scmp.eq.s32.totalorder %s41, 1
      %p274 = por %p272, %p273
      %p275 = scmp.ne.s32.totalorder %s266, %s267
      %p276 = scmp.eq.s32.totalorder %s41, 0
      %p277 = por %p275, %p276
      %p278 = scmp.ne.s32.totalorder %s266, %s267
      %p279 = scmp.eq.s32.totalorder %s42, 1
      %p280 = por %p278, %p279
      %p282 = scmp.ne.s32.totalorder %s267, %s281
      %p283 = scmp.eq.s32.totalorder %s42, 0
      %p284 = por %p282, %p283
      %s286 = sadd.s32 %s285, 1
      %p289 = scmp.eq.s32.totalorder %s36, 1
      %p290 = scmp.ne.s32.totalorder %s285, %s287
      %p291 = scmp.eq.s32.totalorder %s36, 0
      %p292 = por %p290, %p291
      %p293 = scmp.ne.s32.totalorder %s285, %s287
      %p294 = scmp.eq.s32.totalorder %s41, 1
      %p295 = por %p293, %p294
      %p296 = scmp.ne.s32.totalorder %s287, %s288
      %p297 = scmp.eq.s32.totalorder %s41, 0
      %p298 = por %p296, %p297
      %p299 = scmp.ne.s32.totalorder %s287, %s288
      %p300 = scmp.eq.s32.totalorder %s42, 1
      %p301 = por %p299, %p300
      %p303 = scmp.ne.s32.totalorder %s288, %s302
      %p304 = scmp.eq.s32.totalorder %s42, 0
      %p305 = por %p303, %p304
      %s307 = sadd.s32 %s306, 1
      %p310 = scmp.eq.s32.totalorder %s36, 1
      %p311 = scmp.ne.s32.totalorder %s306, %s308
      %p312 = scmp.eq.s32.totalorder %s36, 0
      %p313 = por %p311, %p312
      %p314 = scmp.ne.s32.totalorder %s306, %s308
      %p315 = scmp.eq.s32.totalorder %s41, 1
      %p316 = por %p314, %p315
      %p317 = scmp.ne.s32.totalorder %s308, %s309
      %p318 = scmp.eq.s32.totalorder %s41, 0
      %p319 = por %p317, %p318
      %p320 = scmp.ne.s32.totalorder %s308, %s309
      %p321 = scmp.eq.s32.totalorder %s42, 1
      %p322 = por %p320, %p321
      %p324 = scmp.ne.s32.totalorder %s309, %s323
      %p325 = scmp.eq.s32.totalorder %s42, 0
      %p326 = por %p324, %p325
      %s328 = sadd.s32 %s327, 1
      %p331 = scmp.eq.s32.totalorder %s36, 1
      %p332 = scmp.ne.s32.totalorder %s327, %s329
      %p333 = scmp.eq.s32.totalorder %s36, 0
      %p334 = por %p332, %p333
      %p335 = scmp.ne.s32.totalorder %s327, %s329
      %p336 = scmp.eq.s32.totalorder %s41, 1
      %p337 = por %p335, %p336
      %p338 = scmp.ne.s32.totalorder %s329, %s330
      %p339 = scmp.eq.s32.totalorder %s41, 0
      %p340 = por %p338, %p339
      %p341 = scmp.ne.s32.totalorder %s329, %s330
      %p342 = scmp.eq.s32.totalorder %s42, 1
      %p343 = por %p341, %p342
      %p345 = scmp.ne.s32.totalorder %s330, %s344
      %p346 = scmp.eq.s32.totalorder %s42, 0
      %p347 = por %p345, %p346
      %s349 = sadd.s32 %s348, 1
      %p352 = scmp.eq.s32.totalorder %s36, 1
      %p353 = scmp.ne.s32.totalorder %s348, %s350
      %p354 = scmp.eq.s32.totalorder %s36, 0
      %p355 = por %p353, %p354
      %p356 = scmp.ne.s32.totalorder %s348, %s350
      %p357 = scmp.eq.s32.totalorder %s41, 1
      %p358 = por %p356, %p357
      %p359 = scmp.ne.s32.totalorder %s350, %s351
      %p360 = scmp.eq.s32.totalorder %s41, 0
      %p361 = por %p359, %p360
      %p362 = scmp.ne.s32.totalorder %s350, %s351
      %p363 = scmp.eq.s32.totalorder %s42, 1
      %p364 = por %p362, %p363
      %p366 = scmp.ne.s32.totalorder %s351, %s365
      %p367 = scmp.eq.s32.totalorder %s42, 0
      %p368 = por %p366, %p367
      %s370 = sadd.s32 %s369, 1
      %p373 = scmp.eq.s32.totalorder %s36, 1
      %p374 = scmp.ne.s32.totalorder %s369, %s371
      %p375 = scmp.eq.s32.totalorder %s36, 0
      %p376 = por %p374, %p375
      %p377 = scmp.ne.s32.totalorder %s369, %s371
      %p378 = scmp.eq.s32.totalorder %s41, 1
      %p379 = por %p377, %p378
      %p380 = scmp.ne.s32.totalorder %s371, %s372
      %p381 = scmp.eq.s32.totalorder %s41, 0
      %p382 = por %p380, %p381
      %p383 = scmp.ne.s32.totalorder %s371, %s372
      %p384 = scmp.eq.s32.totalorder %s42, 1
      %p385 = por %p383, %p384
      %p387 = scmp.ne.s32.totalorder %s372, %s386
      %p388 = scmp.eq.s32.totalorder %s42, 0
      %p389 = por %p387, %p388
      %s391 = sadd.s32 %s390, 1
      %p394 = scmp.eq.s32.totalorder %s36, 1
      %p395 = scmp.ne.s32.totalorder %s390, %s392
      %p396 = scmp.eq.s32.totalorder %s36, 0
      %p397 = por %p395, %p396
      %p398 = scmp.ne.s32.totalorder %s390, %s392
      %p399 = scmp.eq.s32.totalorder %s41, 1
      %p400 = por %p398, %p399
      %p401 = scmp.ne.s32.totalorder %s392, %s393
      %p402 = scmp.eq.s32.totalorder %s41, 0
      %p403 = por %p401, %p402
      %p404 = scmp.ne.s32.totalorder %s392, %s393
      %p405 = scmp.eq.s32.totalorder %s42, 1
      %p406 = por %p404, %p405
      %p408 = scmp.ne.s32.totalorder %s393, %s407
      %p409 = scmp.eq.s32.totalorder %s42, 0
      %p410 = por %p408, %p409
      %s412 = sadd.s32 %s411, 1
      %p415 = scmp.eq.s32.totalorder %s36, 1
      %p416 = scmp.ne.s32.totalorder %s411, %s413
      %p417 = scmp.eq.s32.totalorder %s36, 0
      %p418 = por %p416, %p417
      %p419 = scmp.ne.s32.totalorder %s411, %s413
      %p420 = scmp.eq.s32.totalorder %s41, 1
      %p421 = por %p419, %p420
      %p422 = scmp.ne.s32.totalorder %s413, %s414
      %p423 = scmp.eq.s32.totalorder %s41, 0
      %p424 = por %p422, %p423
      %p425 = scmp.ne.s32.totalorder %s413, %s414
      %p426 = scmp.eq.s32.totalorder %s42, 1
      %p427 = por %p425, %p426
      %p429 = scmp.ne.s32.totalorder %s414, %s428
      %p430 = scmp.eq.s32.totalorder %s42, 0
      %p431 = por %p429, %p430
      %s433 = sadd.s32 %s432, 1
      %p436 = scmp.eq.s32.totalorder %s36, 1
      %p437 = scmp.ne.s32.totalorder %s432, %s434
      %p438 = scmp.eq.s32.totalorder %s36, 0
      %p439 = por %p437, %p438
      %p440 = scmp.ne.s32.totalorder %s432, %s434
      %p441 = scmp.eq.s32.totalorder %s41, 1
      %p442 = por %p440, %p441
      %p443 = scmp.ne.s32.totalorder %s434, %s435
      %p444 = scmp.eq.s32.totalorder %s41, 0
      %p445 = por %p443, %p444
      %p446 = scmp.ne.s32.totalorder %s434, %s435
      %p447 = scmp.eq.s32.totalorder %s42, 1
      %p448 = por %p446, %p447
      %p450 = scmp.ne.s32.totalorder %s435, %s449
      %p451 = scmp.eq.s32.totalorder %s42, 0
      %p452 = por %p450, %p451
      %s454 = sadd.s32 %s453, 1
      %p457 = scmp.eq.s32.totalorder %s36, 1
      %p458 = scmp.ne.s32.totalorder %s453, %s455
      %p459 = scmp.eq.s32.totalorder %s36, 0
      %p460 = por %p458, %p459
      %p461 = scmp.ne.s32.totalorder %s453, %s455
      %p462 = scmp.eq.s32.totalorder %s41, 1
      %p463 = por %p461, %p462
      %p464 = scmp.ne.s32.totalorder %s455, %s456
      %p465 = scmp.eq.s32.totalorder %s41, 0
      %p466 = por %p464, %p465
      %p467 = scmp.ne.s32.totalorder %s455, %s456
      %p468 = scmp.eq.s32.totalorder %s42, 1
      %p469 = por %p467, %p468
      %p471 = scmp.ne.s32.totalorder %s456, %s470
      %p472 = scmp.eq.s32.totalorder %s42, 0
      %p473 = por %p471, %p472
      %s475 = sadd.s32 %s474, 1
      %p478 = scmp.eq.s32.totalorder %s36, 1
      %p479 = scmp.ne.s32.totalorder %s474, %s476
      %p480 = scmp.eq.s32.totalorder %s36, 0
      %p481 = por %p479, %p480
      %p482 = scmp.ne.s32.totalorder %s474, %s476
      %p483 = scmp.eq.s32.totalorder %s41, 1
      %p484 = por %p482, %p483
      %p485 = scmp.ne.s32.totalorder %s476, %s477
      %p486 = scmp.eq.s32.totalorder %s41, 0
      %p487 = por %p485, %p486
      %p488 = scmp.ne.s32.totalorder %s476, %s477
      %p489 = scmp.eq.s32.totalorder %s42, 1
      %p490 = por %p488, %p489
      %p492 = scmp.ne.s32.totalorder %s477, %s491
      %p493 = scmp.eq.s32.totalorder %s42, 0
      %p494 = por %p492, %p493
      %s496 = sadd.s32 %s495, 1
      %p499 = scmp.eq.s32.totalorder %s36, 1
      %p500 = scmp.ne.s32.totalorder %s495, %s497
      %p501 = scmp.eq.s32.totalorder %s36, 0
      %p502 = por %p500, %p501
      %p503 = scmp.ne.s32.totalorder %s495, %s497
      %p504 = scmp.eq.s32.totalorder %s41, 1
      %p505 = por %p503, %p504
      %p506 = scmp.ne.s32.totalorder %s497, %s498
      %p507 = scmp.eq.s32.totalorder %s41, 0
      %p508 = por %p506, %p507
      %p509 = scmp.ne.s32.totalorder %s497, %s498
      %p510 = scmp.eq.s32.totalorder %s42, 1
      %p511 = por %p509, %p510
      %p513 = scmp.ne.s32.totalorder %s498, %s512
      %p514 = scmp.eq.s32.totalorder %s42, 0
      %p515 = por %p513, %p514
      %s517 = sadd.s32 %s516, 1
      %p520 = scmp.eq.s32.totalorder %s36, 1
      %p521 = scmp.ne.s32.totalorder %s516, %s518
      %p522 = scmp.eq.s32.totalorder %s36, 0
      %p523 = por %p521, %p522
      %p524 = scmp.ne.s32.totalorder %s516, %s518
      %p525 = scmp.eq.s32.totalorder %s41, 1
      %p526 = por %p524, %p525
      %p527 = scmp.ne.s32.totalorder %s518, %s519
      %p528 = scmp.eq.s32.totalorder %s41, 0
      %p529 = por %p527, %p528
      %p530 = scmp.ne.s32.totalorder %s518, %s519
      %p531 = scmp.eq.s32.totalorder %s42, 1
      %p532 = por %p530, %p531
      %p534 = scmp.ne.s32.totalorder %s519, %s533
      %p535 = scmp.eq.s32.totalorder %s42, 0
      %p536 = por %p534, %p535
      %s538 = sadd.s32 %s537, 1
      %p541 = scmp.eq.s32.totalorder %s36, 1
      %p542 = scmp.ne.s32.totalorder %s537, %s539
      %p543 = scmp.eq.s32.totalorder %s36, 0
      %p544 = por %p542, %p543
      %p545 = scmp.ne.s32.totalorder %s537, %s539
      %p546 = scmp.eq.s32.totalorder %s41, 1
      %p547 = por %p545, %p546
      %p548 = scmp.ne.s32.totalorder %s539, %s540
      %p549 = scmp.eq.s32.totalorder %s41, 0
      %p550 = por %p548, %p549
      %p551 = scmp.ne.s32.totalorder %s539, %s540
      %p552 = scmp.eq.s32.totalorder %s42, 1
      %p553 = por %p551, %p552
      %p555 = scmp.ne.s32.totalorder %s540, %s554
      %p556 = scmp.eq.s32.totalorder %s42, 0
      %p557 = por %p555, %p556
      %s558 = ssub.s32 %s36, %s43
      %p559 = scmp.eq.s32.totalorder %s558, 0
      %s561 = sadd.s32 %s560, 1
      %s562 = scalar_select %p559, %s560, %s561
      %p565 = pneg %p559
      %p566 = scmp.eq.s32.totalorder %s36, 1
      %p567 = por %p565, %p566
      %p568 = scmp.ne.s32.totalorder %s560, %s563
      %p569 = scmp.eq.s32.totalorder %s36, 0
      %p570 = por %p568, %p569
      %p571 = scmp.ne.s32.totalorder %s560, %s563
      %p572 = scmp.eq.s32.totalorder %s41, 1
      %p573 = por %p571, %p572
      %p574 = scmp.ne.s32.totalorder %s563, %s564
      %p575 = scmp.eq.s32.totalorder %s41, 0
      %p576 = por %p574, %p575
      %p577 = scmp.ne.s32.totalorder %s563, %s564
      %p578 = scmp.eq.s32.totalorder %s42, 1
      %p579 = por %p577, %p578
      %p581 = scmp.ne.s32.totalorder %s564, %s580
      %p582 = scmp.eq.s32.totalorder %s42, 0
      %p583 = por %p581, %p582
      %p584 = scmp.le.s32.totalorder 1, %s36
      %p585 = scmp.lt.s32.totalorder %s36, 3
      %p586 = pnand %p584, %p585
      %p587 = pneg %p586
      // Predicated region
      $region9: #{transformer_decoder_forward.7} parent=5 // pred_check
        _
      $region10: #{transformer_decoder_forward.7} parent=5 // pred_check_branch
        %589 = sbr.rel (%p586) target = $region12
      $region11: #{transformer_decoder_forward.7} parent=5 // pred_region
        %s590 = ssub.s32 %s36, 1
        // Predicated region
        $region13: #{transformer_decoder_forward.7} parent=11 // pred_check
          %p591 = pneg %p109
        $region14: #{transformer_decoder_forward.7} parent=11 // pred_check_branch
          %593 = sbr.rel (%p591) target = $region16
        $region15: #{transformer_decoder_forward.7} parent=11 // pred_region
          _
        $region16: #{transformer_decoder_forward.7} parent=11 // pred_fallthru
          _
        // Predicated region
        $region17: #{transformer_decoder_forward.7} parent=11 // pred_check
          %p594 = pneg %p130
        $region18: #{transformer_decoder_forward.7} parent=11 // pred_check_branch
          %596 = sbr.rel (%p594) target = $region20
        $region19: #{transformer_decoder_forward.7} parent=11 // pred_region
          _
        $region20: #{transformer_decoder_forward.7} parent=11 // pred_fallthru
          _
        // Predicated region
        $region21: #{transformer_decoder_forward.7} parent=11 // pred_check
          %p597 = pneg %p151
        $region22: #{transformer_decoder_forward.7} parent=11 // pred_check_branch
          %599 = sbr.rel (%p597) target = $region24
        $region23: #{transformer_decoder_forward.7} parent=11 // pred_region
          _
        $region24: #{transformer_decoder_forward.7} parent=11 // pred_fallthru
          _
        // Predicated region
        $region25: #{transformer_decoder_forward.7} parent=11 // pred_check
          %p600 = pneg %p172
        $region26: #{transformer_decoder_forward.7} parent=11 // pred_check_branch
          %602 = sbr.rel (%p600) target = $region28
        $region27: #{transformer_decoder_forward.7} parent=11 // pred_region
          _
        $region28: #{transformer_decoder_forward.7} parent=11 // pred_fallthru
          _
        // Predicated region
        $region29: #{transformer_decoder_forward.7} parent=11 // pred_check
          %p603 = pneg %p193
        $region30: #{transformer_decoder_forward.7} parent=11 // pred_check_branch
          %605 = sbr.rel (%p603) target = $region32
        $region31: #{transformer_decoder_forward.7} parent=11 // pred_region
          _
        $region32: #{transformer_decoder_forward.7} parent=11 // pred_fallthru
          _
        // Predicated region
        $region33: #{transformer_decoder_forward.7} parent=11 // pred_check
          %p606 = pneg %p214
        $region34: #{transformer_decoder_forward.7} parent=11 // pred_check_branch
          %608 = sbr.rel (%p606) target = $region36
        $region35: #{transformer_decoder_forward.7} parent=11 // pred_region
          _
        $region36: #{transformer_decoder_forward.7} parent=11 // pred_fallthru
          _
        // Predicated region
        $region37: #{transformer_decoder_forward.7} parent=11 // pred_check
          %p609 = pneg %p235
        $region38: #{transformer_decoder_forward.7} parent=11 // pred_check_branch
          %611 = sbr.rel (%p609) target = $region40
        $region39: #{transformer_decoder_forward.7} parent=11 // pred_region
          _
        $region40: #{transformer_decoder_forward.7} parent=11 // pred_fallthru
          _
        // Predicated region
        $region41: #{transformer_decoder_forward.7} parent=11 // pred_check
          %p612 = pneg %p256
        $region42: #{transformer_decoder_forward.7} parent=11 // pred_check_branch
          %614 = sbr.rel (%p612) target = $region44
        $region43: #{transformer_decoder_forward.7} parent=11 // pred_region
          _
        $region44: #{transformer_decoder_forward.7} parent=11 // pred_fallthru
          _
        // Predicated region
        $region45: #{transformer_decoder_forward.7} parent=11 // pred_check
          %p615 = pneg %p277
        $region46: #{transformer_decoder_forward.7} parent=11 // pred_check_branch
          %617 = sbr.rel (%p615) target = $region48
        $region47: #{transformer_decoder_forward.7} parent=11 // pred_region
          _
        $region48: #{transformer_decoder_forward.7} parent=11 // pred_fallthru
          _
        // Predicated region
        $region49: #{transformer_decoder_forward.7} parent=11 // pred_check
          %p618 = pneg %p298
        $region50: #{transformer_decoder_forward.7} parent=11 // pred_check_branch
          %620 = sbr.rel (%p618) target = $region52
        $region51: #{transformer_decoder_forward.7} parent=11 // pred_region
          _
        $region52: #{transformer_decoder_forward.7} parent=11 // pred_fallthru
          _
        // Predicated region
        $region53: #{transformer_decoder_forward.7} parent=11 // pred_check
          %p621 = pneg %p319
        $region54: #{transformer_decoder_forward.7} parent=11 // pred_check_branch
          %623 = sbr.rel (%p621) target = $region56
        $region55: #{transformer_decoder_forward.7} parent=11 // pred_region
          _
        $region56: #{transformer_decoder_forward.7} parent=11 // pred_fallthru
          _
        // Predicated region
        $region57: #{transformer_decoder_forward.7} parent=11 // pred_check
          %p624 = pneg %p340
        $region58: #{transformer_decoder_forward.7} parent=11 // pred_check_branch
          %626 = sbr.rel (%p624) target = $region60
        $region59: #{transformer_decoder_forward.7} parent=11 // pred_region
          _
        $region60: #{transformer_decoder_forward.7} parent=11 // pred_fallthru
          _
        // Predicated region
        $region61: #{transformer_decoder_forward.7} parent=11 // pred_check
          %p627 = pneg %p361
        $region62: #{transformer_decoder_forward.7} parent=11 // pred_check_branch
          %629 = sbr.rel (%p627) target = $region64
        $region63: #{transformer_decoder_forward.7} parent=11 // pred_region
          _
        $region64: #{transformer_decoder_forward.7} parent=11 // pred_fallthru
          _
        // Predicated region
        $region65: #{transformer_decoder_forward.7} parent=11 // pred_check
          %p630 = pneg %p382
        $region66: #{transformer_decoder_forward.7} parent=11 // pred_check_branch
          %632 = sbr.rel (%p630) target = $region68
        $region67: #{transformer_decoder_forward.7} parent=11 // pred_region
          _
        $region68: #{transformer_decoder_forward.7} parent=11 // pred_fallthru
          _
        // Predicated region
        $region69: #{transformer_decoder_forward.7} parent=11 // pred_check
          %p633 = pneg %p403
        $region70: #{transformer_decoder_forward.7} parent=11 // pred_check_branch
          %635 = sbr.rel (%p633) target = $region72
        $region71: #{transformer_decoder_forward.7} parent=11 // pred_region
          _
        $region72: #{transformer_decoder_forward.7} parent=11 // pred_fallthru
          _
        // Predicated region
        $region73: #{transformer_decoder_forward.7} parent=11 // pred_check
          %p636 = pneg %p424
        $region74: #{transformer_decoder_forward.7} parent=11 // pred_check_branch
          %638 = sbr.rel (%p636) target = $region76
        $region75: #{transformer_decoder_forward.7} parent=11 // pred_region
          _
        $region76: #{transformer_decoder_forward.7} parent=11 // pred_fallthru
          _
        // Predicated region
        $region77: #{transformer_decoder_forward.7} parent=11 // pred_check
          %p639 = pneg %p445
        $region78: #{transformer_decoder_forward.7} parent=11 // pred_check_branch
          %641 = sbr.rel (%p639) target = $region80
        $region79: #{transformer_decoder_forward.7} parent=11 // pred_region
          _
        $region80: #{transformer_decoder_forward.7} parent=11 // pred_fallthru
          _
        // Predicated region
        $region81: #{transformer_decoder_forward.7} parent=11 // pred_check
          %p642 = pneg %p466
        $region82: #{transformer_decoder_forward.7} parent=11 // pred_check_branch
          %644 = sbr.rel (%p642) target = $region84
        $region83: #{transformer_decoder_forward.7} parent=11 // pred_region
          _
        $region84: #{transformer_decoder_forward.7} parent=11 // pred_fallthru
          _
        // Predicated region
        $region85: #{transformer_decoder_forward.7} parent=11 // pred_check
          %p645 = pneg %p487
        $region86: #{transformer_decoder_forward.7} parent=11 // pred_check_branch
          %647 = sbr.rel (%p645) target = $region88
        $region87: #{transformer_decoder_forward.7} parent=11 // pred_region
          _
        $region88: #{transformer_decoder_forward.7} parent=11 // pred_fallthru
          _
        // Predicated region
        $region89: #{transformer_decoder_forward.7} parent=11 // pred_check
          %p648 = pneg %p508
        $region90: #{transformer_decoder_forward.7} parent=11 // pred_check_branch
          %650 = sbr.rel (%p648) target = $region92
        $region91: #{transformer_decoder_forward.7} parent=11 // pred_region
          _
        $region92: #{transformer_decoder_forward.7} parent=11 // pred_fallthru
          _
        // Predicated region
        $region93: #{transformer_decoder_forward.7} parent=11 // pred_check
          %p651 = pneg %p529
        $region94: #{transformer_decoder_forward.7} parent=11 // pred_check_branch
          %653 = sbr.rel (%p651) target = $region96
        $region95: #{transformer_decoder_forward.7} parent=11 // pred_region
          %s655 = ssub.s32 16, 16
          %656 = vsyncadd [#allocation4], %s655
          %s658 = sshll.u32 [#allocation3], 4
          %s659 = int_to_ptr.vmem [resolvable:$true] %s658
          %661 = dma.hbm_to_vmem [thread:$0]  %s22, 16, %s659, [#allocation4]
        $region96: #{transformer_decoder_forward.7} parent=11 // pred_fallthru
          _
        // Predicated region
        $region97: #{transformer_decoder_forward.7} parent=11 // pred_check
          %p662 = pneg %p550
        $region98: #{transformer_decoder_forward.7} parent=11 // pred_check_branch
          %664 = sbr.rel (%p662) target = $region100
        $region99: #{transformer_decoder_forward.7} parent=11 // pred_region
          _
        $region100: #{transformer_decoder_forward.7} parent=11 // pred_fallthru
          _
      $region12: #{transformer_decoder_forward.7} parent=5 // pred_fallthru
        _
      %p665 = scmp.lt.s32.totalorder %s36, 2
      // Predicated region
      $region101: #{transformer_decoder_forward.7} parent=5 // pred_check
        %p666 = pneg %p665
      $region102: #{transformer_decoder_forward.7} parent=5 // pred_check_branch
        %668 = sbr.rel (%p666) target = $region104
      $region103: #{transformer_decoder_forward.7} parent=5 // pred_region
        // Predicated region
        $region105: #{transformer_decoder_forward.7} parent=103 // pred_check
          %p669 = pneg %p56
        $region106: #{transformer_decoder_forward.7} parent=103 // pred_check_branch
          %671 = sbr.rel (%p669) target = $region108
        $region107: #{transformer_decoder_forward.7} parent=103 // pred_region
          %p672 = scmp.lt.s32.totalorder %s36, 1
          %s673 = scalar_select %p672, %s36, 1
          %s674 = smul.addr %s673, 8
          %s675 = scalar_lea.vmem %s0, %s674
        $region108: #{transformer_decoder_forward.7} parent=103 // pred_fallthru
          _
        // Predicated region
        $region109: #{transformer_decoder_forward.7} parent=103 // pred_check
          %p676 = pneg %p82
        $region110: #{transformer_decoder_forward.7} parent=103 // pred_check_branch
          %678 = sbr.rel (%p676) target = $region112
        $region111: #{transformer_decoder_forward.7} parent=103 // pred_region
          %p679 = scmp.lt.s32.totalorder %s36, 1
          %s680 = scalar_select %p679, %s36, 1
          %s681 = smul.addr %s680, 8
          %s682 = scalar_lea.vmem %s1, %s681
        $region112: #{transformer_decoder_forward.7} parent=103 // pred_fallthru
          _
      $region104: #{transformer_decoder_forward.7} parent=5 // pred_fallthru
        _
      %p683 = scmp.le.s32.totalorder 1, %s36
      %p684 = scmp.lt.s32.totalorder %s36, 3
      %p685 = pnand %p683, %p684
      %p686 = pneg %p685
      // Predicated region
      $region113: #{transformer_decoder_forward.7} parent=5 // pred_check
        _
      $region114: #{transformer_decoder_forward.7} parent=5 // pred_check_branch
        %688 = sbr.rel (%p685) target = $region116
      $region115: #{transformer_decoder_forward.7} parent=5 // pred_region
        %s689 = ssub.s32 %s36, 1
        // Predicated region
        $region117: #{transformer_decoder_forward.7} parent=115 // pred_check
          %p690 = pneg %p529
        $region118: #{transformer_decoder_forward.7} parent=115 // pred_check_branch
          %692 = sbr.rel (%p690) target = $region120
        $region119: #{transformer_decoder_forward.7} parent=115 // pred_region
          %693 = dma.done [#allocation4], 16
        $region120: #{transformer_decoder_forward.7} parent=115 // pred_fallthru
          _
        %p694 = scmp.lt.s32.totalorder %s41, 1
        %s695 = scalar_select %p694, %s41, 1
        %s696 = smul.addr %s695, 8
        %s697 = scalar_lea.vmem %s0, %s696
        %p698 = pneg %p62
        %p699 = pneg %p59
        %p700 = scmp.lt.s32.totalorder %s41, 1
        %s701 = scalar_select %p700, %s41, 1
        %s702 = smul.addr %s701, 8
        %s703 = scalar_lea.vmem %s1, %s702
        %p704 = pneg %p88
        %p705 = pneg %p85
        %p706 = pneg %p109
        %p707 = pneg %p106
        %p708 = pneg %p130
        %p709 = pneg %p127
        %p710 = pneg %p151
        %p711 = pneg %p148
        %p712 = pneg %p172
        %p713 = pneg %p169
        %p714 = pneg %p193
        %p715 = pneg %p190
        %p716 = pneg %p214
        %p717 = pneg %p211
        %p718 = pneg %p235
        %p719 = pneg %p232
        %p720 = pneg %p256
        %p721 = pneg %p253
        %p722 = pneg %p277
        %p723 = pneg %p274
        %p724 = pneg %p298
        %p725 = pneg %p295
        %p726 = pneg %p319
        %p727 = pneg %p316
        %p728 = pneg %p340
        %p729 = pneg %p337
        %p730 = pneg %p361
        %p731 = pneg %p358
        %p732 = pneg %p382
        %p733 = pneg %p379
        %p734 = pneg %p403
        %p735 = pneg %p400
        %p736 = pneg %p424
        %p737 = pneg %p421
        %p738 = pneg %p445
        %p739 = pneg %p442
        %p740 = pneg %p466
        %p741 = pneg %p463
        %p742 = pneg %p487
        %p743 = pneg %p484
        %p744 = pneg %p508
        %p745 = pneg %p505
        %p746 = pneg %p529
        %p747 = pneg %p526
        %p748 = pneg %p550
        %p749 = pneg %p547
        %p750 = pneg %p576
        %p751 = pneg %p573
        %s752 = sand.u32 %s563, 1
        %s753 = scalar_lea.sflag [#allocation5], %s752
        %s754 = sand.u32 %s563, 1
        %s755 = scalar_lea.vmem [#allocation6], %s754
        %p756 = scmp.lt.s32.totalorder %s41, 1
        %s757 = scalar_select %p756, %s41, 1
        %s758 = smul.addr %s757, 8
        %s759 = scalar_lea.vmem %s0, %s758
        %p760 = scmp.lt.s32.totalorder %s41, 1
        %s761 = scalar_select %p760, %s41, 1
        %s762 = smul.addr %s761, 8
        %s763 = scalar_lea.vmem %s1, %s762
        %v765 = vld [vmem:[%s759] sm:$0xff]
        %v766 = vld [vmem:[%s763] sm:$0xff]
        %v767 = vpack.c.bf16 %v765, %v765
        %v768 = vld [vmem:[%s2] sm:$0xf]
        %v769 = vld [vmem:[%s2 + $0x4] sm:$0xf]
        %v770 = vld [vmem:[%s2 + $0x8] sm:$0xf]
        %v771 = vld [vmem:[%s2 + $0xc] sm:$0xf]
        %v772 = vld [vmem:[%s3] sm:$0x1]
        %v774 = vlaneseq
        %v775 = vshrl.u32 %v774, 7
        %v776 = vsub.s32 0, %v775
        %v777 = vrot.slane %v772, %v776
        %v783 = vunpack.c.l.b16 %v768
        %v784 = vunpack.c.l.b16 %v769
        %v785 = vunpack.c.l.b16 %v770
        %v786 = vunpack.c.l.b16 %v771
        %v787 = vpack.c.b16 %v784, %v783
        %v788 = vpack.c.b16 %v786, %v785
        %vm791 = vcmask 261120
        %v793 = vsel %vm791, %v767, 0
        %795 = vmatprep.subr.bf16.mxu0 0
        %796 = vmatpush1.bf16.msra.mxu0 %v787
        %797 = vmatprep.subr.bf16.mxu0 0
        %798 = vmatpush1.bf16.msra.mxu0 %v788
        %799 = vmatprep.subr.bf16.mxu0 0
        %800 = vmatpush1.bf16.msra.mxu0 0
        %801 = vmatprep.subr.bf16.mxu0 0
        %802 = vmatpush1.bf16.msra.mxu0 0
        %803 = vmatprep.subr.bf16.mxu0 0
        %804 = vmatpush1.bf16.msra.mxu0 0
        %805 = vmatprep.subr.bf16.mxu0 0
        %806 = vmatpush1.bf16.msra.mxu0 0
        %807 = vmatprep.subr.bf16.mxu0 0
        %808 = vmatpush1.bf16.msra.mxu0 0
        %809 = vmatprep.subr.bf16.mxu0 0
        %810 = vmatpush1.bf16.msra.mxu0 0
        %811 = vmatprep.subr.bf16.mxu0 0
        %812 = vmatpush1.bf16.msra.mxu0 0
        %813 = vmatprep.subr.bf16.mxu0 0
        %814 = vmatpush1.bf16.msra.mxu0 0
        %815 = vmatprep.subr.bf16.mxu0 0
        %816 = vmatpush1.bf16.msra.mxu0 0
        %817 = vmatprep.subr.bf16.mxu0 0
        %818 = vmatpush1.bf16.msra.mxu0 0
        %819 = vmatprep.subr.bf16.mxu0 0
        %820 = vmatpush1.bf16.msra.mxu0 0
        %821 = vmatprep.subr.bf16.mxu0 0
        %822 = vmatpush1.bf16.msra.mxu0 0
        %823 = vmatprep.subr.bf16.mxu0 0
        %824 = vmatpush1.bf16.msra.mxu0 0
        %825 = vmatprep.subr.bf16.mxu0 0
        %826 = vmatpush1.bf16.msra.mxu0 0
        %827 = vmatprep.mubr.bf16.mxu0 0
        %828 = vmatmul.mubr.bf16.gmra.mrb[0].mxu0 %v793
        %v829 = vpop.f32.mrb[0].mxu0
        %v830 = vadd.f32 %v777, %v829
        %v831 = vpop.f32.mrb[0].mxu0
        %v832 = vpop.f32.mrb[0].mxu0
        %v833 = vpop.f32.mrb[0].mxu0
        %834 = vdwg.mxu0
        %836 = vrot.lane.b32.xlu0 %v830, 120
        %v837 = vpop.permute.xlu0 %836
        %839 = vrot.lane.b32.xlu0 %v830, 112
        %v840 = vpop.permute.xlu0 %839
        %842 = vrot.lane.b32.xlu0 %v830, 104
        %v843 = vpop.permute.xlu0 %842
        %v845 = vpack.c.bf16 %v830, %v830
        %v846 = vpack.c.bf16 %v837, %v837
        %v847 = vpack.c.bf16 %v840, %v840
        %v848 = vpack.c.bf16 %v843, %v843
        %850 = vrot.lane.b32.xlu0 %v845, 96
        %v851 = vpop.permute.xlu0 %850
        %vm852 = vcmask 64512
        %v854 = vsel %vm852, %v845, 0
        %v857 = vsel %vm852, %v851, 0
        %859 = vmatprep.subr.bf16.mxu0 0
        %860 = vmatpush1.bf16.xpose.msra.mxu0 %v857
        %861 = vmatprep.subr.bf16.mxu0 0
        %862 = vmatpush1.bf16.xpose.msra.mxu0 0
        %863 = vmatprep.subr.bf16.mxu0 0
        %864 = vmatpush1.bf16.xpose.msra.mxu0 0
        %865 = vmatprep.subr.bf16.mxu0 0
        %866 = vmatpush1.bf16.xpose.msra.mxu0 0
        %867 = vmatprep.subr.bf16.mxu0 0
        %868 = vmatpush1.bf16.xpose.msra.mxu0 0
        %869 = vmatprep.subr.bf16.mxu0 0
        %870 = vmatpush1.bf16.xpose.msra.mxu0 0
        %871 = vmatprep.subr.bf16.mxu0 0
        %872 = vmatpush1.bf16.xpose.msra.mxu0 0
        %873 = vmatprep.subr.bf16.mxu0 0
        %874 = vmatpush1.bf16.xpose.msra.mxu0 0
        %875 = vmatprep.subr.bf16.mxu0 0
        %876 = vmatpush1.bf16.xpose.msra.mxu0 0
        %877 = vmatprep.subr.bf16.mxu0 0
        %878 = vmatpush1.bf16.xpose.msra.mxu0 0
        %879 = vmatprep.subr.bf16.mxu0 0
        %880 = vmatpush1.bf16.xpose.msra.mxu0 0
        %881 = vmatprep.subr.bf16.mxu0 0
        %882 = vmatpush1.bf16.xpose.msra.mxu0 0
        %883 = vmatprep.subr.bf16.mxu0 0
        %884 = vmatpush1.bf16.xpose.msra.mxu0 0
        %885 = vmatprep.subr.bf16.mxu0 0
        %886 = vmatpush1.bf16.xpose.msra.mxu0 0
        %887 = vmatprep.subr.bf16.mxu0 0
        %888 = vmatpush1.bf16.xpose.msra.mxu0 0
        %889 = vmatprep.subr.bf16.mxu0 0
        %890 = vmatpush1.bf16.xpose.msra.mxu0 0
        %891 = vmatprep.mubr.bf16.mxu0 0
        %892 = vmatmul.mubr.bf16.gmra.mrb[0].mxu0 %v854
        %v893 = vpop.f32.mrb[0].mxu0
        %v894 = vadd.f32 0.0, %v893
        %v895 = vpop.f32.mrb[0].mxu0
        %v896 = vpop.f32.mrb[0].mxu0
        %v897 = vpop.f32.mrb[0].mxu0
        %898 = vdwg.mxu0
        %900 = vrot.lane.b32.xlu0 %v846, 96
        %v901 = vpop.permute.xlu0 %900
        %v903 = vsel %vm852, %v846, 0
        %v906 = vsel %vm852, %v901, 0
        %908 = vmatprep.subr.bf16.mxu0 0
        %909 = vmatpush1.bf16.xpose.msra.mxu0 %v906
        %910 = vmatprep.subr.bf16.mxu0 0
        %911 = vmatpush1.bf16.xpose.msra.mxu0 0
        %912 = vmatprep.subr.bf16.mxu0 0
        %913 = vmatpush1.bf16.xpose.msra.mxu0 0
        %914 = vmatprep.subr.bf16.mxu0 0
        %915 = vmatpush1.bf16.xpose.msra.mxu0 0
        %916 = vmatprep.subr.bf16.mxu0 0
        %917 = vmatpush1.bf16.xpose.msra.mxu0 0
        %918 = vmatprep.subr.bf16.mxu0 0
        %919 = vmatpush1.bf16.xpose.msra.mxu0 0
        %920 = vmatprep.subr.bf16.mxu0 0
        %921 = vmatpush1.bf16.xpose.msra.mxu0 0
        %922 = vmatprep.subr.bf16.mxu0 0
        %923 = vmatpush1.bf16.xpose.msra.mxu0 0
        %924 = vmatprep.subr.bf16.mxu0 0
        %925 = vmatpush1.bf16.xpose.msra.mxu0 0
        %926 = vmatprep.subr.bf16.mxu0 0
        %927 = vmatpush1.bf16.xpose.msra.mxu0 0
        %928 = vmatprep.subr.bf16.mxu0 0
        %929 = vmatpush1.bf16.xpose.msra.mxu0 0
        %930 = vmatprep.subr.bf16.mxu0 0
        %931 = vmatpush1.bf16.xpose.msra.mxu0 0
        %932 = vmatprep.subr.bf16.mxu0 0
        %933 = vmatpush1.bf16.xpose.msra.mxu0 0
        %934 = vmatprep.subr.bf16.mxu0 0
        %935 = vmatpush1.bf16.xpose.msra.mxu0 0
        %936 = vmatprep.subr.bf16.mxu0 0
        %937 = vmatpush1.bf16.xpose.msra.mxu0 0
        %938 = vmatprep.subr.bf16.mxu0 0
        %939 = vmatpush1.bf16.xpose.msra.mxu0 0
        %940 = vmatprep.mubr.bf16.mxu0 0
        %941 = vmatmul.mubr.bf16.gmra.mrb[0].mxu0 %v903
        %v942 = vpop.f32.mrb[0].mxu0
        %v943 = vadd.f32 0.0, %v942
        %v944 = vpop.f32.mrb[0].mxu0
        %v945 = vpop.f32.mrb[0].mxu0
        %v946 = vpop.f32.mrb[0].mxu0
        %947 = vdwg.mxu0
        %949 = vrot.lane.b32.xlu0 %v847, 96
        %v950 = vpop.permute.xlu0 %949
        %v952 = vsel %vm852, %v847, 0
        %v955 = vsel %vm852, %v950, 0
        %957 = vmatprep.subr.bf16.mxu0 0
        %958 = vmatpush1.bf16.xpose.msra.mxu0 %v955
        %959 = vmatprep.subr.bf16.mxu0 0
        %960 = vmatpush1.bf16.xpose.msra.mxu0 0
        %961 = vmatprep.subr.bf16.mxu0 0
        %962 = vmatpush1.bf16.xpose.msra.mxu0 0
        %963 = vmatprep.subr.bf16.mxu0 0
        %964 = vmatpush1.bf16.xpose.msra.mxu0 0
        %965 = vmatprep.subr.bf16.mxu0 0
        %966 = vmatpush1.bf16.xpose.msra.mxu0 0
        %967 = vmatprep.subr.bf16.mxu0 0
        %968 = vmatpush1.bf16.xpose.msra.mxu0 0
        %969 = vmatprep.subr.bf16.mxu0 0
        %970 = vmatpush1.bf16.xpose.msra.mxu0 0
        %971 = vmatprep.subr.bf16.mxu0 0
        %972 = vmatpush1.bf16.xpose.msra.mxu0 0
        %973 = vmatprep.subr.bf16.mxu0 0
        %974 = vmatpush1.bf16.xpose.msra.mxu0 0
        %975 = vmatprep.subr.bf16.mxu0 0
        %976 = vmatpush1.bf16.xpose.msra.mxu0 0
        %977 = vmatprep.subr.bf16.mxu0 0
        %978 = vmatpush1.bf16.xpose.msra.mxu0 0
        %979 = vmatprep.subr.bf16.mxu0 0
        %980 = vmatpush1.bf16.xpose.msra.mxu0 0
        %981 = vmatprep.subr.bf16.mxu0 0
        %982 = vmatpush1.bf16.xpose.msra.mxu0 0
        %983 = vmatprep.subr.bf16.mxu0 0
        %984 = vmatpush1.bf16.xpose.msra.mxu0 0
        %985 = vmatprep.subr.bf16.mxu0 0
        %986 = vmatpush1.bf16.xpose.msra.mxu0 0
        %987 = vmatprep.subr.bf16.mxu0 0
        %988 = vmatpush1.bf16.xpose.msra.mxu0 0
        %989 = vmatprep.mubr.bf16.mxu0 0
        %990 = vmatmul.mubr.bf16.gmra.mrb[0].mxu0 %v952
        %v991 = vpop.f32.mrb[0].mxu0
        %v992 = vadd.f32 0.0, %v991
        %v993 = vpop.f32.mrb[0].mxu0
        %v994 = vpop.f32.mrb[0].mxu0
        %v995 = vpop.f32.mrb[0].mxu0
        %996 = vdwg.mxu0
        %998 = vrot.lane.b32.xlu0 %v848, 96
        %v999 = vpop.permute.xlu0 %998
        %v1001 = vsel %vm852, %v848, 0
        %v1004 = vsel %vm852, %v999, 0
        %1006 = vmatprep.subr.bf16.mxu0 0
        %1007 = vmatpush1.bf16.xpose.msra.mxu0 %v1004
        %1008 = vmatprep.subr.bf16.mxu0 0
        %1009 = vmatpush1.bf16.xpose.msra.mxu0 0
        %1010 = vmatprep.subr.bf16.mxu0 0
        %1011 = vmatpush1.bf16.xpose.msra.mxu0 0
        %1012 = vmatprep.subr.bf16.mxu0 0
        %1013 = vmatpush1.bf16.xpose.msra.mxu0 0
        %1014 = vmatprep.subr.bf16.mxu0 0
        %1015 = vmatpush1.bf16.xpose.msra.mxu0 0
        %1016 = vmatprep.subr.bf16.mxu0 0
        %1017 = vmatpush1.bf16.xpose.msra.mxu0 0
        %1018 = vmatprep.subr.bf16.mxu0 0
        %1019 = vmatpush1.bf16.xpose.msra.mxu0 0
        %1020 = vmatprep.subr.bf16.mxu0 0
        %1021 = vmatpush1.bf16.xpose.msra.mxu0 0
        %1022 = vmatprep.subr.bf16.mxu0 0
        %1023 = vmatpush1.bf16.xpose.msra.mxu0 0
        %1024 = vmatprep.subr.bf16.mxu0 0
        %1025 = vmatpush1.bf16.xpose.msra.mxu0 0
        %1026 = vmatprep.subr.bf16.mxu0 0
        %1027 = vmatpush1.bf16.xpose.msra.mxu0 0
        %1028 = vmatprep.subr.bf16.mxu0 0
        %1029 = vmatpush1.bf16.xpose.msra.mxu0 0
        %1030 = vmatprep.subr.bf16.mxu0 0
        %1031 = vmatpush1.bf16.xpose.msra.mxu0 0
        %1032 = vmatprep.subr.bf16.mxu0 0
        %1033 = vmatpush1.bf16.xpose.msra.mxu0 0
        %1034 = vmatprep.subr.bf16.mxu0 0
        %1035 = vmatpush1.bf16.xpose.msra.mxu0 0
        %1036 = vmatprep.subr.bf16.mxu0 0
        %1037 = vmatpush1.bf16.xpose.msra.mxu0 0
        %1038 = vmatprep.mubr.bf16.mxu0 0
        %1039 = vmatmul.mubr.bf16.gmra.mrb[0].mxu0 %v1001
        %v1040 = vpop.f32.mrb[0].mxu0
        %v1041 = vadd.f32 0.0, %v1040
        %v1042 = vpop.f32.mrb[0].mxu0
        %v1043 = vpop.f32.mrb[0].mxu0
        %v1044 = vpop.f32.mrb[0].mxu0
        %1045 = vdwg.mxu0
        %v1046 = vlaneseq
        %v1047 = vshrl.u32 %v1046, 7
        %v1048 = vlaneseq
        %v1049 = vand.u32 %v1048, 127
        %vm1050 = vcmp.ge.s32.totalorder %v1047, %v1049
        %v1051 = vsel %vm1050, 1, 0
        %vm1052 = vcmp.eq.s32.totalorder %v1051, 1
        %v1053 = vsel %vm1052, %v894, -1e+30
        %v1054 = vsel %vm1052, %v943, -1e+30
        %v1055 = vsel %vm1052, %v992, -1e+30
        %v1056 = vsel %vm1052, %v1041, -1e+30
        %v1057 = vsel %vm852, %v1053, -inf
        %1058 = vmax.xlane.f32.xlu0 %v1057
        %v1059 = vpop.xlane.xlu0 %1058
        %v1060 = vsel %vm852, %v1054, -inf
        %1061 = vmax.xlane.f32.xlu0 %v1060
        %v1062 = vpop.xlane.xlu0 %1061
        %v1063 = vsel %vm852, %v1055, -inf
        %1064 = vmax.xlane.f32.xlu0 %v1063
        %v1065 = vpop.xlane.xlu0 %1064
        %v1066 = vsel %vm852, %v1056, -inf
        %1067 = vmax.xlane.f32.xlu0 %v1066
        %v1068 = vpop.xlane.xlu0 %1067
        %v1069 = vsub.f32 %v1053, %v1059
        %v1070 = vsub.f32 %v1054, %v1062
        %v1071 = vsub.f32 %v1055, %v1065
        %v1072 = vsub.f32 %v1056, %v1068
        %v1073 = vmul.f32 %v1069, 1.442695
        %v1074 = vpow.pop %v1073
        %v1075 = vmul.f32 %v1070, 1.442695
        %v1076 = vpow.pop %v1075
        %v1077 = vmul.f32 %v1071, 1.442695
        %v1078 = vpow.pop %v1077
        %v1079 = vmul.f32 %v1072, 1.442695
        %v1080 = vpow.pop %v1079
        %v1081 = vsel %vm852, %v1074, 0.0
        %1082 = vadd.xlane.f32.xlu0 %v1081
        %v1083 = vpop.xlane.xlu0 %1082
        %v1084 = vsel %vm852, %v1076, 0.0
        %1085 = vadd.xlane.f32.xlu0 %v1084
        %v1086 = vpop.xlane.xlu0 %1085
        %v1087 = vsel %vm852, %v1078, 0.0
        %1088 = vadd.xlane.f32.xlu0 %v1087
        %v1089 = vpop.xlane.xlu0 %1088
        %v1090 = vsel %vm852, %v1080, 0.0
        %1091 = vadd.xlane.f32.xlu0 %v1090
        %v1092 = vpop.xlane.xlu0 %1091
        %v1093 = vrcp.pop %v1083
        %v1094 = vmul.f32 %v1074, %v1093
        %v1095 = vrcp.pop %v1086
        %v1096 = vmul.f32 %v1076, %v1095
        %v1097 = vrcp.pop %v1089
        %v1098 = vmul.f32 %v1078, %v1097
        %v1099 = vrcp.pop %v1092
        %v1100 = vmul.f32 %v1080, %v1099
        %v1101 = vpack.c.bf16 %v1094, %v1094
        %v1102 = vpack.c.bf16 %v1096, %v1096
        %v1103 = vpack.c.bf16 %v1098, %v1098
        %v1104 = vpack.c.bf16 %v1100, %v1100
        %1105 = vrot.lane.b32.xlu0 %v845, 64
        %v1106 = vpop.permute.xlu0 %1105
        %v1108 = vsel %vm852, %v1101, 0
        %vm1110 = vcmask 1043456
        %v1112 = vsel %vm1110, %v1106, 0
        %1114 = vmatprep.subr.bf16.mxu0 0
        %1115 = vmatpush1.bf16.msra.mxu0 %v1112
        %1116 = vmatprep.subr.bf16.mxu0 0
        %1117 = vmatpush1.bf16.msra.mxu0 0
        %1118 = vmatprep.subr.bf16.mxu0 0
        %1119 = vmatpush1.bf16.msra.mxu0 0
        %1120 = vmatprep.subr.bf16.mxu0 0
        %1121 = vmatpush1.bf16.msra.mxu0 0
        %1122 = vmatprep.subr.bf16.mxu0 0
        %1123 = vmatpush1.bf16.msra.mxu0 0
        %1124 = vmatprep.subr.bf16.mxu0 0
        %1125 = vmatpush1.bf16.msra.mxu0 0
        %1126 = vmatprep.subr.bf16.mxu0 0
        %1127 = vmatpush1.bf16.msra.mxu0 0
        %1128 = vmatprep.subr.bf16.mxu0 0
        %1129 = vmatpush1.bf16.msra.mxu0 0
        %1130 = vmatprep.subr.bf16.mxu0 0
        %1131 = vmatpush1.bf16.msra.mxu0 0
        %1132 = vmatprep.subr.bf16.mxu0 0
        %1133 = vmatpush1.bf16.msra.mxu0 0
        %1134 = vmatprep.subr.bf16.mxu0 0
        %1135 = vmatpush1.bf16.msra.mxu0 0
        %1136 = vmatprep.subr.bf16.mxu0 0
        %1137 = vmatpush1.bf16.msra.mxu0 0
        %1138 = vmatprep.subr.bf16.mxu0 0
        %1139 = vmatpush1.bf16.msra.mxu0 0
        %1140 = vmatprep.subr.bf16.mxu0 0
        %1141 = vmatpush1.bf16.msra.mxu0 0
        %1142 = vmatprep.subr.bf16.mxu0 0
        %1143 = vmatpush1.bf16.msra.mxu0 0
        %1144 = vmatprep.subr.bf16.mxu0 0
        %1145 = vmatpush1.bf16.msra.mxu0 0
        %1146 = vmatprep.mubr.bf16.mxu0 0
        %1147 = vmatmul.mubr.bf16.gmra.mrb[0].mxu0 %v1108
        %v1148 = vpop.f32.mrb[0].mxu0
        %v1149 = vadd.f32 0.0, %v1148
        %v1150 = vpop.f32.mrb[0].mxu0
        %v1151 = vpop.f32.mrb[0].mxu0
        %v1152 = vpop.f32.mrb[0].mxu0
        %1153 = vdwg.mxu0
        %1154 = vrot.lane.b32.xlu0 %v846, 64
        %v1155 = vpop.permute.xlu0 %1154
        %v1157 = vsel %vm852, %v1102, 0
        %v1160 = vsel %vm1110, %v1155, 0
        %1162 = vmatprep.subr.bf16.mxu0 0
        %1163 = vmatpush1.bf16.msra.mxu0 %v1160
        %1164 = vmatprep.subr.bf16.mxu0 0
        %1165 = vmatpush1.bf16.msra.mxu0 0
        %1166 = vmatprep.subr.bf16.mxu0 0
        %1167 = vmatpush1.bf16.msra.mxu0 0
        %1168 = vmatprep.subr.bf16.mxu0 0
        %1169 = vmatpush1.bf16.msra.mxu0 0
        %1170 = vmatprep.subr.bf16.mxu0 0
        %1171 = vmatpush1.bf16.msra.mxu0 0
        %1172 = vmatprep.subr.bf16.mxu0 0
        %1173 = vmatpush1.bf16.msra.mxu0 0
        %1174 = vmatprep.subr.bf16.mxu0 0
        %1175 = vmatpush1.bf16.msra.mxu0 0
        %1176 = vmatprep.subr.bf16.mxu0 0
        %1177 = vmatpush1.bf16.msra.mxu0 0
        %1178 = vmatprep.subr.bf16.mxu0 0
        %1179 = vmatpush1.bf16.msra.mxu0 0
        %1180 = vmatprep.subr.bf16.mxu0 0
        %1181 = vmatpush1.bf16.msra.mxu0 0
        %1182 = vmatprep.subr.bf16.mxu0 0
        %1183 = vmatpush1.bf16.msra.mxu0 0
        %1184 = vmatprep.subr.bf16.mxu0 0
        %1185 = vmatpush1.bf16.msra.mxu0 0
        %1186 = vmatprep.subr.bf16.mxu0 0
        %1187 = vmatpush1.bf16.msra.mxu0 0
        %1188 = vmatprep.subr.bf16.mxu0 0
        %1189 = vmatpush1.bf16.msra.mxu0 0
        %1190 = vmatprep.subr.bf16.mxu0 0
        %1191 = vmatpush1.bf16.msra.mxu0 0
        %1192 = vmatprep.subr.bf16.mxu0 0
        %1193 = vmatpush1.bf16.msra.mxu0 0
        %1194 = vmatprep.mubr.bf16.mxu0 0
        %1195 = vmatmul.mubr.bf16.gmra.mrb[0].mxu0 %v1157
        %v1196 = vpop.f32.mrb[0].mxu0
        %v1197 = vadd.f32 0.0, %v1196
        %v1198 = vpop.f32.mrb[0].mxu0
        %v1199 = vpop.f32.mrb[0].mxu0
        %v1200 = vpop.f32.mrb[0].mxu0
        %1201 = vdwg.mxu0
        %1202 = vrot.lane.b32.xlu0 %v847, 64
        %v1203 = vpop.permute.xlu0 %1202
        %v1205 = vsel %vm852, %v1103, 0
        %v1208 = vsel %vm1110, %v1203, 0
        %1210 = vmatprep.subr.bf16.mxu0 0
        %1211 = vmatpush1.bf16.msra.mxu0 %v1208
        %1212 = vmatprep.subr.bf16.mxu0 0
        %1213 = vmatpush1.bf16.msra.mxu0 0
        %1214 = vmatprep.subr.bf16.mxu0 0
        %1215 = vmatpush1.bf16.msra.mxu0 0
        %1216 = vmatprep.subr.bf16.mxu0 0
        %1217 = vmatpush1.bf16.msra.mxu0 0
        %1218 = vmatprep.subr.bf16.mxu0 0
        %1219 = vmatpush1.bf16.msra.mxu0 0
        %1220 = vmatprep.subr.bf16.mxu0 0
        %1221 = vmatpush1.bf16.msra.mxu0 0
        %1222 = vmatprep.subr.bf16.mxu0 0
        %1223 = vmatpush1.bf16.msra.mxu0 0
        %1224 = vmatprep.subr.bf16.mxu0 0
        %1225 = vmatpush1.bf16.msra.mxu0 0
        %1226 = vmatprep.subr.bf16.mxu0 0
        %1227 = vmatpush1.bf16.msra.mxu0 0
        %1228 = vmatprep.subr.bf16.mxu0 0
        %1229 = vmatpush1.bf16.msra.mxu0 0
        %1230 = vmatprep.subr.bf16.mxu0 0
        %1231 = vmatpush1.bf16.msra.mxu0 0
        %1232 = vmatprep.subr.bf16.mxu0 0
        %1233 = vmatpush1.bf16.msra.mxu0 0
        %1234 = vmatprep.subr.bf16.mxu0 0
        %1235 = vmatpush1.bf16.msra.mxu0 0
        %1236 = vmatprep.subr.bf16.mxu0 0
        %1237 = vmatpush1.bf16.msra.mxu0 0
        %1238 = vmatprep.subr.bf16.mxu0 0
        %1239 = vmatpush1.bf16.msra.mxu0 0
        %1240 = vmatprep.subr.bf16.mxu0 0
        %1241 = vmatpush1.bf16.msra.mxu0 0
        %1242 = vmatprep.mubr.bf16.mxu0 0
        %1243 = vmatmul.mubr.bf16.gmra.mrb[0].mxu0 %v1205
        %v1244 = vpop.f32.mrb[0].mxu0
        %v1245 = vadd.f32 0.0, %v1244
        %v1246 = vpop.f32.mrb[0].mxu0
        %v1247 = vpop.f32.mrb[0].mxu0
        %v1248 = vpop.f32.mrb[0].mxu0
        %1249 = vdwg.mxu0
        %1250 = vrot.lane.b32.xlu0 %v848, 64
        %v1251 = vpop.permute.xlu0 %1250
        %v1253 = vsel %vm852, %v1104, 0
        %v1256 = vsel %vm1110, %v1251, 0
        %1258 = vmatprep.subr.bf16.mxu0 0
        %1259 = vmatpush1.bf16.msra.mxu0 %v1256
        %1260 = vmatprep.subr.bf16.mxu0 0
        %1261 = vmatpush1.bf16.msra.mxu0 0
        %1262 = vmatprep.subr.bf16.mxu0 0
        %1263 = vmatpush1.bf16.msra.mxu0 0
        %1264 = vmatprep.subr.bf16.mxu0 0
        %1265 = vmatpush1.bf16.msra.mxu0 0
        %1266 = vmatprep.subr.bf16.mxu0 0
        %1267 = vmatpush1.bf16.msra.mxu0 0
        %1268 = vmatprep.subr.bf16.mxu0 0
        %1269 = vmatpush1.bf16.msra.mxu0 0
        %1270 = vmatprep.subr.bf16.mxu0 0
        %1271 = vmatpush1.bf16.msra.mxu0 0
        %1272 = vmatprep.subr.bf16.mxu0 0
        %1273 = vmatpush1.bf16.msra.mxu0 0
        %1274 = vmatprep.subr.bf16.mxu0 0
        %1275 = vmatpush1.bf16.msra.mxu0 0
        %1276 = vmatprep.subr.bf16.mxu0 0
        %1277 = vmatpush1.bf16.msra.mxu0 0
        %1278 = vmatprep.subr.bf16.mxu0 0
        %1279 = vmatpush1.bf16.msra.mxu0 0
        %1280 = vmatprep.subr.bf16.mxu0 0
        %1281 = vmatpush1.bf16.msra.mxu0 0
        %1282 = vmatprep.subr.bf16.mxu0 0
        %1283 = vmatpush1.bf16.msra.mxu0 0
        %1284 = vmatprep.subr.bf16.mxu0 0
        %1285 = vmatpush1.bf16.msra.mxu0 0
        %1286 = vmatprep.subr.bf16.mxu0 0
        %1287 = vmatpush1.bf16.msra.mxu0 0
        %1288 = vmatprep.subr.bf16.mxu0 0
        %1289 = vmatpush1.bf16.msra.mxu0 0
        %1290 = vmatprep.mubr.bf16.mxu0 0
        %1291 = vmatmul.mubr.bf16.gmra.mrb[0].mxu0 %v1253
        %v1292 = vpop.f32.mrb[0].mxu0
        %v1293 = vadd.f32 0.0, %v1292
        %v1294 = vpop.f32.mrb[0].mxu0
        %v1295 = vpop.f32.mrb[0].mxu0
        %v1296 = vpop.f32.mrb[0].mxu0
        %1297 = vdwg.mxu0
        %v1298 = vpack.c.bf16 %v1149, %v1149
        %v1299 = vpack.c.bf16 %v1197, %v1197
        %v1300 = vpack.c.bf16 %v1245, %v1245
        %v1301 = vpack.c.bf16 %v1293, %v1293
        %v1302 = vld [vmem:[%s4] sm:$0xf]
        %v1303 = vld [vmem:[%s4 + $0x4] sm:$0xf]
        %v1304 = vld [vmem:[%s4 + $0x8] sm:$0xf]
        %v1305 = vld [vmem:[%s4 + $0xc] sm:$0xf]
        %v1307 = vsel %vm852, %v1298, 0
        %v1310 = vsel %vm1110, %v1302, 0
        %1312 = vmatprep.subr.bf16.mxu0 0
        %1313 = vmatpush1.bf16.msra.mxu0 %v1310
        %1314 = vmatprep.subr.bf16.mxu0 0
        %1315 = vmatpush1.bf16.msra.mxu0 0
        %1316 = vmatprep.subr.bf16.mxu0 0
        %1317 = vmatpush1.bf16.msra.mxu0 0
        %1318 = vmatprep.subr.bf16.mxu0 0
        %1319 = vmatpush1.bf16.msra.mxu0 0
        %1320 = vmatprep.subr.bf16.mxu0 0
        %1321 = vmatpush1.bf16.msra.mxu0 0
        %1322 = vmatprep.subr.bf16.mxu0 0
        %1323 = vmatpush1.bf16.msra.mxu0 0
        %1324 = vmatprep.subr.bf16.mxu0 0
        %1325 = vmatpush1.bf16.msra.mxu0 0
        %1326 = vmatprep.subr.bf16.mxu0 0
        %1327 = vmatpush1.bf16.msra.mxu0 0
        %1328 = vmatprep.subr.bf16.mxu0 0
        %1329 = vmatpush1.bf16.msra.mxu0 0
        %1330 = vmatprep.subr.bf16.mxu0 0
        %1331 = vmatpush1.bf16.msra.mxu0 0
        %1332 = vmatprep.subr.bf16.mxu0 0
        %1333 = vmatpush1.bf16.msra.mxu0 0
        %1334 = vmatprep.subr.bf16.mxu0 0
        %1335 = vmatpush1.bf16.msra.mxu0 0
        %1336 = vmatprep.subr.bf16.mxu0 0
        %1337 = vmatpush1.bf16.msra.mxu0 0
        %1338 = vmatprep.subr.bf16.mxu0 0
        %1339 = vmatpush1.bf16.msra.mxu0 0
        %1340 = vmatprep.subr.bf16.mxu0 0
        %1341 = vmatpush1.bf16.msra.mxu0 0
        %1342 = vmatprep.subr.bf16.mxu0 0
        %1343 = vmatpush1.bf16.msra.mxu0 0
        %1344 = vmatprep.mubr.bf16.mxu0 0
        %1345 = vmatmul.mubr.bf16.gmra.mrb[0].mxu0 %v1307
        %v1346 = vpop.f32.mrb[0].mxu0
        %v1347 = vadd.f32 0.0, %v1346
        %v1348 = vpop.f32.mrb[0].mxu0
        %v1349 = vpop.f32.mrb[0].mxu0
        %v1350 = vpop.f32.mrb[0].mxu0
        %1351 = vdwg.mxu0
        %v1353 = vsel %vm852, %v1299, 0
        %v1356 = vsel %vm1110, %v1303, 0
        %1358 = vmatprep.subr.bf16.mxu0 0
        %1359 = vmatpush1.bf16.msra.mxu0 %v1356
        %1360 = vmatprep.subr.bf16.mxu0 0
        %1361 = vmatpush1.bf16.msra.mxu0 0
        %1362 = vmatprep.subr.bf16.mxu0 0
        %1363 = vmatpush1.bf16.msra.mxu0 0
        %1364 = vmatprep.subr.bf16.mxu0 0
        %1365 = vmatpush1.bf16.msra.mxu0 0
        %1366 = vmatprep.subr.bf16.mxu0 0
        %1367 = vmatpush1.bf16.msra.mxu0 0
        %1368 = vmatprep.subr.bf16.mxu0 0
        %1369 = vmatpush1.bf16.msra.mxu0 0
        %1370 = vmatprep.subr.bf16.mxu0 0
        %1371 = vmatpush1.bf16.msra.mxu0 0
        %1372 = vmatprep.subr.bf16.mxu0 0
        %1373 = vmatpush1.bf16.msra.mxu0 0
        %1374 = vmatprep.subr.bf16.mxu0 0
        %1375 = vmatpush1.bf16.msra.mxu0 0
        %1376 = vmatprep.subr.bf16.mxu0 0
        %1377 = vmatpush1.bf16.msra.mxu0 0
        %1378 = vmatprep.subr.bf16.mxu0 0
        %1379 = vmatpush1.bf16.msra.mxu0 0
        %1380 = vmatprep.subr.bf16.mxu0 0
        %1381 = vmatpush1.bf16.msra.mxu0 0
        %1382 = vmatprep.subr.bf16.mxu0 0
        %1383 = vmatpush1.bf16.msra.mxu0 0
        %1384 = vmatprep.subr.bf16.mxu0 0
        %1385 = vmatpush1.bf16.msra.mxu0 0
        %1386 = vmatprep.subr.bf16.mxu0 0
        %1387 = vmatpush1.bf16.msra.mxu0 0
        %1388 = vmatprep.subr.bf16.mxu0 0
        %1389 = vmatpush1.bf16.msra.mxu0 0
        %1390 = vmatprep.mubr.bf16.mxu0 0
        %1391 = vmatmul.mubr.bf16.gmra.mrb[0].mxu0 %v1353
        %v1392 = vpop.f32.mrb[0].mxu0
        %v1393 = vadd.f32 0.0, %v1392
        %v1394 = vpop.f32.mrb[0].mxu0
        %v1395 = vpop.f32.mrb[0].mxu0
        %v1396 = vpop.f32.mrb[0].mxu0
        %1397 = vdwg.mxu0
        %v1399 = vsel %vm852, %v1300, 0
        %v1402 = vsel %vm1110, %v1304, 0
        %1404 = vmatprep.subr.bf16.mxu0 0
        %1405 = vmatpush1.bf16.msra.mxu0 %v1402
        %1406 = vmatprep.subr.bf16.mxu0 0
        %1407 = vmatpush1.bf16.msra.mxu0 0
        %1408 = vmatprep.subr.bf16.mxu0 0
        %1409 = vmatpush1.bf16.msra.mxu0 0
        %1410 = vmatprep.subr.bf16.mxu0 0
        %1411 = vmatpush1.bf16.msra.mxu0 0
        %1412 = vmatprep.subr.bf16.mxu0 0
        %1413 = vmatpush1.bf16.msra.mxu0 0
        %1414 = vmatprep.subr.bf16.mxu0 0
        %1415 = vmatpush1.bf16.msra.mxu0 0
        %1416 = vmatprep.subr.bf16.mxu0 0
        %1417 = vmatpush1.bf16.msra.mxu0 0
        %1418 = vmatprep.subr.bf16.mxu0 0
        %1419 = vmatpush1.bf16.msra.mxu0 0
        %1420 = vmatprep.subr.bf16.mxu0 0
        %1421 = vmatpush1.bf16.msra.mxu0 0
        %1422 = vmatprep.subr.bf16.mxu0 0
        %1423 = vmatpush1.bf16.msra.mxu0 0
        %1424 = vmatprep.subr.bf16.mxu0 0
        %1425 = vmatpush1.bf16.msra.mxu0 0
        %1426 = vmatprep.subr.bf16.mxu0 0
        %1427 = vmatpush1.bf16.msra.mxu0 0
        %1428 = vmatprep.subr.bf16.mxu0 0
        %1429 = vmatpush1.bf16.msra.mxu0 0
        %1430 = vmatprep.subr.bf16.mxu0 0
        %1431 = vmatpush1.bf16.msra.mxu0 0
        %1432 = vmatprep.subr.bf16.mxu0 0
        %1433 = vmatpush1.bf16.msra.mxu0 0
        %1434 = vmatprep.subr.bf16.mxu0 0
        %1435 = vmatpush1.bf16.msra.mxu0 0
        %1436 = vmatprep.mubr.bf16.mxu0 0
        %1437 = vmatmul.mubr.bf16.gmra.mrb[0].mxu0 %v1399
        %v1438 = vpop.f32.mrb[0].mxu0
        %v1439 = vadd.f32 0.0, %v1438
        %v1440 = vpop.f32.mrb[0].mxu0
        %v1441 = vpop.f32.mrb[0].mxu0
        %v1442 = vpop.f32.mrb[0].mxu0
        %1443 = vdwg.mxu0
        %v1445 = vsel %vm852, %v1301, 0
        %v1448 = vsel %vm1110, %v1305, 0
        %1450 = vmatprep.subr.bf16.mxu0 0
        %1451 = vmatpush1.bf16.msra.mxu0 %v1448
        %1452 = vmatprep.subr.bf16.mxu0 0
        %1453 = vmatpush1.bf16.msra.mxu0 0
        %1454 = vmatprep.subr.bf16.mxu0 0
        %1455 = vmatpush1.bf16.msra.mxu0 0
        %1456 = vmatprep.subr.bf16.mxu0 0
        %1457 = vmatpush1.bf16.msra.mxu0 0
        %1458 = vmatprep.subr.bf16.mxu0 0
        %1459 = vmatpush1.bf16.msra.mxu0 0
        %1460 = vmatprep.subr.bf16.mxu0 0
        %1461 = vmatpush1.bf16.msra.mxu0 0
        %1462 = vmatprep.subr.bf16.mxu0 0
        %1463 = vmatpush1.bf16.msra.mxu0 0
        %1464 = vmatprep.subr.bf16.mxu0 0
        %1465 = vmatpush1.bf16.msra.mxu0 0
        %1466 = vmatprep.subr.bf16.mxu0 0
        %1467 = vmatpush1.bf16.msra.mxu0 0
        %1468 = vmatprep.subr.bf16.mxu0 0
        %1469 = vmatpush1.bf16.msra.mxu0 0
        %1470 = vmatprep.subr.bf16.mxu0 0
        %1471 = vmatpush1.bf16.msra.mxu0 0
        %1472 = vmatprep.subr.bf16.mxu0 0
        %1473 = vmatpush1.bf16.msra.mxu0 0
        %1474 = vmatprep.subr.bf16.mxu0 0
        %1475 = vmatpush1.bf16.msra.mxu0 0
        %1476 = vmatprep.subr.bf16.mxu0 0
        %1477 = vmatpush1.bf16.msra.mxu0 0
        %1478 = vmatprep.subr.bf16.mxu0 0
        %1479 = vmatpush1.bf16.msra.mxu0 0
        %1480 = vmatprep.subr.bf16.mxu0 0
        %1481 = vmatpush1.bf16.msra.mxu0 0
        %1482 = vmatprep.mubr.bf16.mxu0 0
        %1483 = vmatmul.mubr.bf16.gmra.mrb[0].mxu0 %v1445
        %v1484 = vpop.f32.mrb[0].mxu0
        %v1485 = vadd.f32 0.0, %v1484
        %v1486 = vpop.f32.mrb[0].mxu0
        %v1487 = vpop.f32.mrb[0].mxu0
        %v1488 = vpop.f32.mrb[0].mxu0
        %1489 = vdwg.mxu0
        %v1490 = vsel %vm791, %v1347, 0.0
        %v1491 = vsel %vm791, %v1393, 0.0
        %v1492 = vadd.f32 %v1490, %v1491
        %v1493 = vsel %vm791, %v1439, 0.0
        %v1494 = vadd.f32 %v1492, %v1493
        %v1495 = vsel %vm791, %v1485, 0.0
        %v1496 = vadd.f32 %v1494, %v1495
        %v1497 = vld [vmem:[%s5] sm:$0x1]
        %v1499 = vlaneseq
        %v1500 = vshrl.u32 %v1499, 7
        %v1501 = vsub.s32 0, %v1500
        %v1502 = vrot.slane %v1497, %v1501
        %v1504 = vadd.f32 %v1496, %v1502
        %v1505 = vadd.f32 %v765, %v1504
        %v1506 = vld [vmem:[%s6] sm:$0x1]
        %v1507 = vld [vmem:[%s7] sm:$0x1]
        %v1508 = vsel %vm791, %v1505, 0.0
        %1509 = vadd.xlane.f32.xlu0 %v1508
        %v1510 = vpop.xlane.xlu0 %1509
        %v1511 = vrcp.pop 32.0
        %v1512 = vmul.f32 %v1510, %v1511
        %v1513 = vsub.f32 %v1505, %v1512
        %v1514 = vmul.f32 %v1513, %v1513
        %v1515 = vsel %vm791, %v1514, 0.0
        %1516 = vadd.xlane.f32.xlu0 %v1515
        %v1517 = vpop.xlane.xlu0 %1516
        %v1518 = vmul.f32 %v1517, %v1511
        %v1519 = vadd.f32 %v1518, 1e-05
        %v1520 = vrsqrt.pop %v1519
        %v1521 = vmul.f32 %v1513, %v1520
        %v1523 = vlaneseq
        %v1524 = vshrl.u32 %v1523, 7
        %v1525 = vsub.s32 0, %v1524
        %v1526 = vrot.slane %v1506, %v1525
        %v1528 = vmul.f32 %v1521, %v1526
        %v1530 = vlaneseq
        %v1531 = vshrl.u32 %v1530, 7
        %v1532 = vsub.s32 0, %v1531
        %v1533 = vrot.slane %v1507, %v1532
        %v1535 = vadd.f32 %v1528, %v1533
        %v1536 = vpack.c.bf16 %v1535, %v1535
        %v1537 = vld [vmem:[%s8] sm:$0xf]
        %v1538 = vld [vmem:[%s8 + $0x4] sm:$0xf]
        %v1539 = vld [vmem:[%s8 + $0x8] sm:$0xf]
        %v1540 = vld [vmem:[%s8 + $0xc] sm:$0xf]
        %v1541 = vld [vmem:[%s9] sm:$0x1]
        %v1543 = vlaneseq
        %v1544 = vshrl.u32 %v1543, 7
        %v1545 = vsub.s32 0, %v1544
        %v1546 = vrot.slane %v1541, %v1545
        %v1552 = vunpack.c.l.b16 %v1537
        %v1553 = vunpack.c.l.b16 %v1538
        %v1554 = vunpack.c.l.b16 %v1539
        %v1555 = vunpack.c.l.b16 %v1540
        %v1556 = vpack.c.b16 %v1553, %v1552
        %v1557 = vpack.c.b16 %v1555, %v1554
        %v1561 = vsel %vm791, %v1536, 0
        %1563 = vmatprep.subr.bf16.mxu0 0
        %1564 = vmatpush1.bf16.msra.mxu0 %v1556
        %1565 = vmatprep.subr.bf16.mxu0 0
        %1566 = vmatpush1.bf16.msra.mxu0 %v1557
        %1567 = vmatprep.subr.bf16.mxu0 0
        %1568 = vmatpush1.bf16.msra.mxu0 0
        %1569 = vmatprep.subr.bf16.mxu0 0
        %1570 = vmatpush1.bf16.msra.mxu0 0
        %1571 = vmatprep.subr.bf16.mxu0 0
        %1572 = vmatpush1.bf16.msra.mxu0 0
        %1573 = vmatprep.subr.bf16.mxu0 0
        %1574 = vmatpush1.bf16.msra.mxu0 0
        %1575 = vmatprep.subr.bf16.mxu0 0
        %1576 = vmatpush1.bf16.msra.mxu0 0
        %1577 = vmatprep.subr.bf16.mxu0 0
        %1578 = vmatpush1.bf16.msra.mxu0 0
        %1579 = vmatprep.subr.bf16.mxu0 0
        %1580 = vmatpush1.bf16.msra.mxu0 0
        %1581 = vmatprep.subr.bf16.mxu0 0
        %1582 = vmatpush1.bf16.msra.mxu0 0
        %1583 = vmatprep.subr.bf16.mxu0 0
        %1584 = vmatpush1.bf16.msra.mxu0 0
        %1585 = vmatprep.subr.bf16.mxu0 0
        %1586 = vmatpush1.bf16.msra.mxu0 0
        %1587 = vmatprep.subr.bf16.mxu0 0
        %1588 = vmatpush1.bf16.msra.mxu0 0
        %1589 = vmatprep.subr.bf16.mxu0 0
        %1590 = vmatpush1.bf16.msra.mxu0 0
        %1591 = vmatprep.subr.bf16.mxu0 0
        %1592 = vmatpush1.bf16.msra.mxu0 0
        %1593 = vmatprep.subr.bf16.mxu0 0
        %1594 = vmatpush1.bf16.msra.mxu0 0
        %1595 = vmatprep.mubr.bf16.mxu0 0
        %1596 = vmatmul.mubr.bf16.gmra.mrb[0].mxu0 %v1561
        %v1597 = vpop.f32.mrb[0].mxu0
        %v1598 = vadd.f32 %v1546, %v1597
        %v1599 = vpop.f32.mrb[0].mxu0
        %v1600 = vpop.f32.mrb[0].mxu0
        %v1601 = vpop.f32.mrb[0].mxu0
        %1602 = vdwg.mxu0
        %v1603 = vpack.c.bf16 %v766, %v766
        %v1604 = vld [vmem:[%s10] sm:$0xf]
        %v1605 = vld [vmem:[%s10 + $0x4] sm:$0xf]
        %v1606 = vld [vmem:[%s10 + $0x8] sm:$0xf]
        %v1607 = vld [vmem:[%s10 + $0xc] sm:$0xf]
        %v1608 = vld [vmem:[%s11] sm:$0x1]
        %v1610 = vlaneseq
        %v1611 = vshrl.u32 %v1610, 7
        %v1612 = vsub.s32 0, %v1611
        %v1613 = vrot.slane %v1608, %v1612
        %v1619 = vunpack.c.l.b16 %v1604
        %v1620 = vunpack.c.l.b16 %v1605
        %v1621 = vunpack.c.l.b16 %v1606
        %v1622 = vunpack.c.l.b16 %v1607
        %v1623 = vpack.c.b16 %v1620, %v1619
        %v1624 = vpack.c.b16 %v1622, %v1621
        %v1628 = vsel %vm791, %v1603, 0
        %1630 = vmatprep.subr.bf16.mxu0 0
        %1631 = vmatpush1.bf16.msra.mxu0 %v1623
        %1632 = vmatprep.subr.bf16.mxu0 0
        %1633 = vmatpush1.bf16.msra.mxu0 %v1624
        %1634 = vmatprep.subr.bf16.mxu0 0
        %1635 = vmatpush1.bf16.msra.mxu0 0
        %1636 = vmatprep.subr.bf16.mxu0 0
        %1637 = vmatpush1.bf16.msra.mxu0 0
        %1638 = vmatprep.subr.bf16.mxu0 0
        %1639 = vmatpush1.bf16.msra.mxu0 0
        %1640 = vmatprep.subr.bf16.mxu0 0
        %1641 = vmatpush1.bf16.msra.mxu0 0
        %1642 = vmatprep.subr.bf16.mxu0 0
        %1643 = vmatpush1.bf16.msra.mxu0 0
        %1644 = vmatprep.subr.bf16.mxu0 0
        %1645 = vmatpush1.bf16.msra.mxu0 0
        %1646 = vmatprep.subr.bf16.mxu0 0
        %1647 = vmatpush1.bf16.msra.mxu0 0
        %1648 = vmatprep.subr.bf16.mxu0 0
        %1649 = vmatpush1.bf16.msra.mxu0 0
        %1650 = vmatprep.subr.bf16.mxu0 0
        %1651 = vmatpush1.bf16.msra.mxu0 0
        %1652 = vmatprep.subr.bf16.mxu0 0
        %1653 = vmatpush1.bf16.msra.mxu0 0
        %1654 = vmatprep.subr.bf16.mxu0 0
        %1655 = vmatpush1.bf16.msra.mxu0 0
        %1656 = vmatprep.subr.bf16.mxu0 0
        %1657 = vmatpush1.bf16.msra.mxu0 0
        %1658 = vmatprep.subr.bf16.mxu0 0
        %1659 = vmatpush1.bf16.msra.mxu0 0
        %1660 = vmatprep.subr.bf16.mxu0 0
        %1661 = vmatpush1.bf16.msra.mxu0 0
        %1662 = vmatprep.mubr.bf16.mxu0 0
        %1663 = vmatmul.mubr.bf16.gmra.mrb[0].mxu0 %v1628
        %v1664 = vpop.f32.mrb[0].mxu0
        %v1665 = vadd.f32 %v1613, %v1664
        %v1666 = vpop.f32.mrb[0].mxu0
        %v1667 = vpop.f32.mrb[0].mxu0
        %v1668 = vpop.f32.mrb[0].mxu0
        %1669 = vdwg.mxu0
        %1671 = vrot.lane.b32.xlu0 %v1598, 120
        %v1672 = vpop.permute.xlu0 %1671
        %1674 = vrot.lane.b32.xlu0 %v1598, 112
        %v1675 = vpop.permute.xlu0 %1674
        %1677 = vrot.lane.b32.xlu0 %v1598, 104
        %v1678 = vpop.permute.xlu0 %1677
        %v1680 = vpack.c.bf16 %v1598, %v1598
        %v1681 = vpack.c.bf16 %v1672, %v1672
        %v1682 = vpack.c.bf16 %v1675, %v1675
        %v1683 = vpack.c.bf16 %v1678, %v1678
        %1685 = vrot.lane.b32.xlu0 %v1665, 120
        %v1686 = vpop.permute.xlu0 %1685
        %1688 = vrot.lane.b32.xlu0 %v1665, 112
        %v1689 = vpop.permute.xlu0 %1688
        %1691 = vrot.lane.b32.xlu0 %v1665, 104
        %v1692 = vpop.permute.xlu0 %1691
        %v1694 = vpack.c.bf16 %v1665, %v1665
        %v1695 = vpack.c.bf16 %v1686, %v1686
        %v1696 = vpack.c.bf16 %v1689, %v1689
        %v1697 = vpack.c.bf16 %v1692, %v1692
        %v1699 = vsel %vm852, %v1680, 0
        %v1702 = vsel %vm852, %v1694, 0
        %1704 = vmatprep.subr.bf16.mxu0 0
        %1705 = vmatpush1.bf16.xpose.msra.mxu0 %v1702
        %1706 = vmatprep.subr.bf16.mxu0 0
        %1707 = vmatpush1.bf16.xpose.msra.mxu0 0
        %1708 = vmatprep.subr.bf16.mxu0 0
        %1709 = vmatpush1.bf16.xpose.msra.mxu0 0
        %1710 = vmatprep.subr.bf16.mxu0 0
        %1711 = vmatpush1.bf16.xpose.msra.mxu0 0
        %1712 = vmatprep.subr.bf16.mxu0 0
        %1713 = vmatpush1.bf16.xpose.msra.mxu0 0
        %1714 = vmatprep.subr.bf16.mxu0 0
        %1715 = vmatpush1.bf16.xpose.msra.mxu0 0
        %1716 = vmatprep.subr.bf16.mxu0 0
        %1717 = vmatpush1.bf16.xpose.msra.mxu0 0
        %1718 = vmatprep.subr.bf16.mxu0 0
        %1719 = vmatpush1.bf16.xpose.msra.mxu0 0
        %1720 = vmatprep.subr.bf16.mxu0 0
        %1721 = vmatpush1.bf16.xpose.msra.mxu0 0
        %1722 = vmatprep.subr.bf16.mxu0 0
        %1723 = vmatpush1.bf16.xpose.msra.mxu0 0
        %1724 = vmatprep.subr.bf16.mxu0 0
        %1725 = vmatpush1.bf16.xpose.msra.mxu0 0
        %1726 = vmatprep.subr.bf16.mxu0 0
        %1727 = vmatpush1.bf16.xpose.msra.mxu0 0
        %1728 = vmatprep.subr.bf16.mxu0 0
        %1729 = vmatpush1.bf16.xpose.msra.mxu0 0
        %1730 = vmatprep.subr.bf16.mxu0 0
        %1731 = vmatpush1.bf16.xpose.msra.mxu0 0
        %1732 = vmatprep.subr.bf16.mxu0 0
        %1733 = vmatpush1.bf16.xpose.msra.mxu0 0
        %1734 = vmatprep.subr.bf16.mxu0 0
        %1735 = vmatpush1.bf16.xpose.msra.mxu0 0
        %1736 = vmatprep.mubr.bf16.mxu0 0
        %1737 = vmatmul.mubr.bf16.gmra.mrb[0].mxu0 %v1699
        %v1738 = vpop.f32.mrb[0].mxu0
        %v1739 = vadd.f32 0.0, %v1738
        %v1740 = vpop.f32.mrb[0].mxu0
        %v1741 = vpop.f32.mrb[0].mxu0
        %v1742 = vpop.f32.mrb[0].mxu0
        %1743 = vdwg.mxu0
        %v1745 = vsel %vm852, %v1681, 0
        %v1748 = vsel %vm852, %v1695, 0
        %1750 = vmatprep.subr.bf16.mxu0 0
        %1751 = vmatpush1.bf16.xpose.msra.mxu0 %v1748
        %1752 = vmatprep.subr.bf16.mxu0 0
        %1753 = vmatpush1.bf16.xpose.msra.mxu0 0
        %1754 = vmatprep.subr.bf16.mxu0 0
        %1755 = vmatpush1.bf16.xpose.msra.mxu0 0
        %1756 = vmatprep.subr.bf16.mxu0 0
        %1757 = vmatpush1.bf16.xpose.msra.mxu0 0
        %1758 = vmatprep.subr.bf16.mxu0 0
        %1759 = vmatpush1.bf16.xpose.msra.mxu0 0
        %1760 = vmatprep.subr.bf16.mxu0 0
        %1761 = vmatpush1.bf16.xpose.msra.mxu0 0
        %1762 = vmatprep.subr.bf16.mxu0 0
        %1763 = vmatpush1.bf16.xpose.msra.mxu0 0
        %1764 = vmatprep.subr.bf16.mxu0 0
        %1765 = vmatpush1.bf16.xpose.msra.mxu0 0
        %1766 = vmatprep.subr.bf16.mxu0 0
        %1767 = vmatpush1.bf16.xpose.msra.mxu0 0
        %1768 = vmatprep.subr.bf16.mxu0 0
        %1769 = vmatpush1.bf16.xpose.msra.mxu0 0
        %1770 = vmatprep.subr.bf16.mxu0 0
        %1771 = vmatpush1.bf16.xpose.msra.mxu0 0
        %1772 = vmatprep.subr.bf16.mxu0 0
        %1773 = vmatpush1.bf16.xpose.msra.mxu0 0
        %1774 = vmatprep.subr.bf16.mxu0 0
        %1775 = vmatpush1.bf16.xpose.msra.mxu0 0
        %1776 = vmatprep.subr.bf16.mxu0 0
        %1777 = vmatpush1.bf16.xpose.msra.mxu0 0
        %1778 = vmatprep.subr.bf16.mxu0 0
        %1779 = vmatpush1.bf16.xpose.msra.mxu0 0
        %1780 = vmatprep.subr.bf16.mxu0 0
        %1781 = vmatpush1.bf16.xpose.msra.mxu0 0
        %1782 = vmatprep.mubr.bf16.mxu0 0
        %1783 = vmatmul.mubr.bf16.gmra.mrb[0].mxu0 %v1745
        %v1784 = vpop.f32.mrb[0].mxu0
        %v1785 = vadd.f32 0.0, %v1784
        %v1786 = vpop.f32.mrb[0].mxu0
        %v1787 = vpop.f32.mrb[0].mxu0
        %v1788 = vpop.f32.mrb[0].mxu0
        %1789 = vdwg.mxu0
        %v1791 = vsel %vm852, %v1682, 0
        %v1794 = vsel %vm852, %v1696, 0
        %1796 = vmatprep.subr.bf16.mxu0 0
        %1797 = vmatpush1.bf16.xpose.msra.mxu0 %v1794
        %1798 = vmatprep.subr.bf16.mxu0 0
        %1799 = vmatpush1.bf16.xpose.msra.mxu0 0
        %1800 = vmatprep.subr.bf16.mxu0 0
        %1801 = vmatpush1.bf16.xpose.msra.mxu0 0
        %1802 = vmatprep.subr.bf16.mxu0 0
        %1803 = vmatpush1.bf16.xpose.msra.mxu0 0
        %1804 = vmatprep.subr.bf16.mxu0 0
        %1805 = vmatpush1.bf16.xpose.msra.mxu0 0
        %1806 = vmatprep.subr.bf16.mxu0 0
        %1807 = vmatpush1.bf16.xpose.msra.mxu0 0
        %1808 = vmatprep.subr.bf16.mxu0 0
        %1809 = vmatpush1.bf16.xpose.msra.mxu0 0
        %1810 = vmatprep.subr.bf16.mxu0 0
        %1811 = vmatpush1.bf16.xpose.msra.mxu0 0
        %1812 = vmatprep.subr.bf16.mxu0 0
        %1813 = vmatpush1.bf16.xpose.msra.mxu0 0
        %1814 = vmatprep.subr.bf16.mxu0 0
        %1815 = vmatpush1.bf16.xpose.msra.mxu0 0
        %1816 = vmatprep.subr.bf16.mxu0 0
        %1817 = vmatpush1.bf16.xpose.msra.mxu0 0
        %1818 = vmatprep.subr.bf16.mxu0 0
        %1819 = vmatpush1.bf16.xpose.msra.mxu0 0
        %1820 = vmatprep.subr.bf16.mxu0 0
        %1821 = vmatpush1.bf16.xpose.msra.mxu0 0
        %1822 = vmatprep.subr.bf16.mxu0 0
        %1823 = vmatpush1.bf16.xpose.msra.mxu0 0
        %1824 = vmatprep.subr.bf16.mxu0 0
        %1825 = vmatpush1.bf16.xpose.msra.mxu0 0
        %1826 = vmatprep.subr.bf16.mxu0 0
        %1827 = vmatpush1.bf16.xpose.msra.mxu0 0
        %1828 = vmatprep.mubr.bf16.mxu0 0
        %1829 = vmatmul.mubr.bf16.gmra.mrb[0].mxu0 %v1791
        %v1830 = vpop.f32.mrb[0].mxu0
        %v1831 = vadd.f32 0.0, %v1830
        %v1832 = vpop.f32.mrb[0].mxu0
        %v1833 = vpop.f32.mrb[0].mxu0
        %v1834 = vpop.f32.mrb[0].mxu0
        %1835 = vdwg.mxu0
        %v1837 = vsel %vm852, %v1683, 0
        %v1840 = vsel %vm852, %v1697, 0
        %1842 = vmatprep.subr.bf16.mxu0 0
        %1843 = vmatpush1.bf16.xpose.msra.mxu0 %v1840
        %1844 = vmatprep.subr.bf16.mxu0 0
        %1845 = vmatpush1.bf16.xpose.msra.mxu0 0
        %1846 = vmatprep.subr.bf16.mxu0 0
        %1847 = vmatpush1.bf16.xpose.msra.mxu0 0
        %1848 = vmatprep.subr.bf16.mxu0 0
        %1849 = vmatpush1.bf16.xpose.msra.mxu0 0
        %1850 = vmatprep.subr.bf16.mxu0 0
        %1851 = vmatpush1.bf16.xpose.msra.mxu0 0
        %1852 = vmatprep.subr.bf16.mxu0 0
        %1853 = vmatpush1.bf16.xpose.msra.mxu0 0
        %1854 = vmatprep.subr.bf16.mxu0 0
        %1855 = vmatpush1.bf16.xpose.msra.mxu0 0
        %1856 = vmatprep.subr.bf16.mxu0 0
        %1857 = vmatpush1.bf16.xpose.msra.mxu0 0
        %1858 = vmatprep.subr.bf16.mxu0 0
        %1859 = vmatpush1.bf16.xpose.msra.mxu0 0
        %1860 = vmatprep.subr.bf16.mxu0 0
        %1861 = vmatpush1.bf16.xpose.msra.mxu0 0
        %1862 = vmatprep.subr.bf16.mxu0 0
        %1863 = vmatpush1.bf16.xpose.msra.mxu0 0
        %1864 = vmatprep.subr.bf16.mxu0 0
        %1865 = vmatpush1.bf16.xpose.msra.mxu0 0
        %1866 = vmatprep.subr.bf16.mxu0 0
        %1867 = vmatpush1.bf16.xpose.msra.mxu0 0
        %1868 = vmatprep.subr.bf16.mxu0 0
        %1869 = vmatpush1.bf16.xpose.msra.mxu0 0
        %1870 = vmatprep.subr.bf16.mxu0 0
        %1871 = vmatpush1.bf16.xpose.msra.mxu0 0
        %1872 = vmatprep.subr.bf16.mxu0 0
        %1873 = vmatpush1.bf16.xpose.msra.mxu0 0
        %1874 = vmatprep.mubr.bf16.mxu0 0
        %1875 = vmatmul.mubr.bf16.gmra.mrb[0].mxu0 %v1837
        %v1876 = vpop.f32.mrb[0].mxu0
        %v1877 = vadd.f32 0.0, %v1876
        %v1878 = vpop.f32.mrb[0].mxu0
        %v1879 = vpop.f32.mrb[0].mxu0
        %v1880 = vpop.f32.mrb[0].mxu0
        %1881 = vdwg.mxu0
        %v1882 = vsel %vm852, %v1739, -inf
        %1883 = vmax.xlane.f32.xlu0 %v1882
        %v1884 = vpop.xlane.xlu0 %1883
        %v1885 = vsel %vm852, %v1785, -inf
        %1886 = vmax.xlane.f32.xlu0 %v1885
        %v1887 = vpop.xlane.xlu0 %1886
        %v1888 = vsel %vm852, %v1831, -inf
        %1889 = vmax.xlane.f32.xlu0 %v1888
        %v1890 = vpop.xlane.xlu0 %1889
        %v1891 = vsel %vm852, %v1877, -inf
        %1892 = vmax.xlane.f32.xlu0 %v1891
        %v1893 = vpop.xlane.xlu0 %1892
        %v1894 = vsub.f32 %v1739, %v1884
        %v1895 = vsub.f32 %v1785, %v1887
        %v1896 = vsub.f32 %v1831, %v1890
        %v1897 = vsub.f32 %v1877, %v1893
        %v1898 = vmul.f32 %v1894, 1.442695
        %v1899 = vpow.pop %v1898
        %v1900 = vmul.f32 %v1895, 1.442695
        %v1901 = vpow.pop %v1900
        %v1902 = vmul.f32 %v1896, 1.442695
        %v1903 = vpow.pop %v1902
        %v1904 = vmul.f32 %v1897, 1.442695
        %v1905 = vpow.pop %v1904
        %v1906 = vsel %vm852, %v1899, 0.0
        %1907 = vadd.xlane.f32.xlu0 %v1906
        %v1908 = vpop.xlane.xlu0 %1907
        %v1909 = vsel %vm852, %v1901, 0.0
        %1910 = vadd.xlane.f32.xlu0 %v1909
        %v1911 = vpop.xlane.xlu0 %1910
        %v1912 = vsel %vm852, %v1903, 0.0
        %1913 = vadd.xlane.f32.xlu0 %v1912
        %v1914 = vpop.xlane.xlu0 %1913
        %v1915 = vsel %vm852, %v1905, 0.0
        %1916 = vadd.xlane.f32.xlu0 %v1915
        %v1917 = vpop.xlane.xlu0 %1916
        %v1918 = vrcp.pop %v1908
        %v1919 = vmul.f32 %v1899, %v1918
        %v1920 = vrcp.pop %v1911
        %v1921 = vmul.f32 %v1901, %v1920
        %v1922 = vrcp.pop %v1914
        %v1923 = vmul.f32 %v1903, %v1922
        %v1924 = vrcp.pop %v1917
        %v1925 = vmul.f32 %v1905, %v1924
        %v1926 = vpack.c.bf16 %v1919, %v1919
        %v1927 = vpack.c.bf16 %v1921, %v1921
        %v1928 = vpack.c.bf16 %v1923, %v1923
        %v1929 = vpack.c.bf16 %v1925, %v1925
        %1931 = vrot.lane.b32.xlu0 %v1694, 96
        %v1932 = vpop.permute.xlu0 %1931
        %v1934 = vsel %vm852, %v1926, 0
        %v1937 = vsel %vm1110, %v1932, 0
        %1939 = vmatprep.subr.bf16.mxu0 0
        %1940 = vmatpush1.bf16.msra.mxu0 %v1937
        %1941 = vmatprep.subr.bf16.mxu0 0
        %1942 = vmatpush1.bf16.msra.mxu0 0
        %1943 = vmatprep.subr.bf16.mxu0 0
        %1944 = vmatpush1.bf16.msra.mxu0 0
        %1945 = vmatprep.subr.bf16.mxu0 0
        %1946 = vmatpush1.bf16.msra.mxu0 0
        %1947 = vmatprep.subr.bf16.mxu0 0
        %1948 = vmatpush1.bf16.msra.mxu0 0
        %1949 = vmatprep.subr.bf16.mxu0 0
        %1950 = vmatpush1.bf16.msra.mxu0 0
        %1951 = vmatprep.subr.bf16.mxu0 0
        %1952 = vmatpush1.bf16.msra.mxu0 0
        %1953 = vmatprep.subr.bf16.mxu0 0
        %1954 = vmatpush1.bf16.msra.mxu0 0
        %1955 = vmatprep.subr.bf16.mxu0 0
        %1956 = vmatpush1.bf16.msra.mxu0 0
        %1957 = vmatprep.subr.bf16.mxu0 0
        %1958 = vmatpush1.bf16.msra.mxu0 0
        %1959 = vmatprep.subr.bf16.mxu0 0
        %1960 = vmatpush1.bf16.msra.mxu0 0
        %1961 = vmatprep.subr.bf16.mxu0 0
        %1962 = vmatpush1.bf16.msra.mxu0 0
        %1963 = vmatprep.subr.bf16.mxu0 0
        %1964 = vmatpush1.bf16.msra.mxu0 0
        %1965 = vmatprep.subr.bf16.mxu0 0
        %1966 = vmatpush1.bf16.msra.mxu0 0
        %1967 = vmatprep.subr.bf16.mxu0 0
        %1968 = vmatpush1.bf16.msra.mxu0 0
        %1969 = vmatprep.subr.bf16.mxu0 0
        %1970 = vmatpush1.bf16.msra.mxu0 0
        %1971 = vmatprep.mubr.bf16.mxu0 0
        %1972 = vmatmul.mubr.bf16.gmra.mrb[0].mxu0 %v1934
        %v1973 = vpop.f32.mrb[0].mxu0
        %v1974 = vadd.f32 0.0, %v1973
        %v1975 = vpop.f32.mrb[0].mxu0
        %v1976 = vpop.f32.mrb[0].mxu0
        %v1977 = vpop.f32.mrb[0].mxu0
        %1978 = vdwg.mxu0
        %1980 = vrot.lane.b32.xlu0 %v1695, 96
        %v1981 = vpop.permute.xlu0 %1980
        %v1983 = vsel %vm852, %v1927, 0
        %v1986 = vsel %vm1110, %v1981, 0
        %1988 = vmatprep.subr.bf16.mxu0 0
        %1989 = vmatpush1.bf16.msra.mxu0 %v1986
        %1990 = vmatprep.subr.bf16.mxu0 0
        %1991 = vmatpush1.bf16.msra.mxu0 0
        %1992 = vmatprep.subr.bf16.mxu0 0
        %1993 = vmatpush1.bf16.msra.mxu0 0
        %1994 = vmatprep.subr.bf16.mxu0 0
        %1995 = vmatpush1.bf16.msra.mxu0 0
        %1996 = vmatprep.subr.bf16.mxu0 0
        %1997 = vmatpush1.bf16.msra.mxu0 0
        %1998 = vmatprep.subr.bf16.mxu0 0
        %1999 = vmatpush1.bf16.msra.mxu0 0
        %2000 = vmatprep.subr.bf16.mxu0 0
        %2001 = vmatpush1.bf16.msra.mxu0 0
        %2002 = vmatprep.subr.bf16.mxu0 0
        %2003 = vmatpush1.bf16.msra.mxu0 0
        %2004 = vmatprep.subr.bf16.mxu0 0
        %2005 = vmatpush1.bf16.msra.mxu0 0
        %2006 = vmatprep.subr.bf16.mxu0 0
        %2007 = vmatpush1.bf16.msra.mxu0 0
        %2008 = vmatprep.subr.bf16.mxu0 0
        %2009 = vmatpush1.bf16.msra.mxu0 0
        %2010 = vmatprep.subr.bf16.mxu0 0
        %2011 = vmatpush1.bf16.msra.mxu0 0
        %2012 = vmatprep.subr.bf16.mxu0 0
        %2013 = vmatpush1.bf16.msra.mxu0 0
        %2014 = vmatprep.subr.bf16.mxu0 0
        %2015 = vmatpush1.bf16.msra.mxu0 0
        %2016 = vmatprep.subr.bf16.mxu0 0
        %2017 = vmatpush1.bf16.msra.mxu0 0
        %2018 = vmatprep.subr.bf16.mxu0 0
        %2019 = vmatpush1.bf16.msra.mxu0 0
        %2020 = vmatprep.mubr.bf16.mxu0 0
        %2021 = vmatmul.mubr.bf16.gmra.mrb[0].mxu0 %v1983
        %v2022 = vpop.f32.mrb[0].mxu0
        %v2023 = vadd.f32 0.0, %v2022
        %v2024 = vpop.f32.mrb[0].mxu0
        %v2025 = vpop.f32.mrb[0].mxu0
        %v2026 = vpop.f32.mrb[0].mxu0
        %2027 = vdwg.mxu0
        %2029 = vrot.lane.b32.xlu0 %v1696, 96
        %v2030 = vpop.permute.xlu0 %2029
        %v2032 = vsel %vm852, %v1928, 0
        %v2035 = vsel %vm1110, %v2030, 0
        %2037 = vmatprep.subr.bf16.mxu0 0
        %2038 = vmatpush1.bf16.msra.mxu0 %v2035
        %2039 = vmatprep.subr.bf16.mxu0 0
        %2040 = vmatpush1.bf16.msra.mxu0 0
        %2041 = vmatprep.subr.bf16.mxu0 0
        %2042 = vmatpush1.bf16.msra.mxu0 0
        %2043 = vmatprep.subr.bf16.mxu0 0
        %2044 = vmatpush1.bf16.msra.mxu0 0
        %2045 = vmatprep.subr.bf16.mxu0 0
        %2046 = vmatpush1.bf16.msra.mxu0 0
        %2047 = vmatprep.subr.bf16.mxu0 0
        %2048 = vmatpush1.bf16.msra.mxu0 0
        %2049 = vmatprep.subr.bf16.mxu0 0
        %2050 = vmatpush1.bf16.msra.mxu0 0
        %2051 = vmatprep.subr.bf16.mxu0 0
        %2052 = vmatpush1.bf16.msra.mxu0 0
        %2053 = vmatprep.subr.bf16.mxu0 0
        %2054 = vmatpush1.bf16.msra.mxu0 0
        %2055 = vmatprep.subr.bf16.mxu0 0
        %2056 = vmatpush1.bf16.msra.mxu0 0
        %2057 = vmatprep.subr.bf16.mxu0 0
        %2058 = vmatpush1.bf16.msra.mxu0 0
        %2059 = vmatprep.subr.bf16.mxu0 0
        %2060 = vmatpush1.bf16.msra.mxu0 0
        %2061 = vmatprep.subr.bf16.mxu0 0
        %2062 = vmatpush1.bf16.msra.mxu0 0
        %2063 = vmatprep.subr.bf16.mxu0 0
        %2064 = vmatpush1.bf16.msra.mxu0 0
        %2065 = vmatprep.subr.bf16.mxu0 0
        %2066 = vmatpush1.bf16.msra.mxu0 0
        %2067 = vmatprep.subr.bf16.mxu0 0
        %2068 = vmatpush1.bf16.msra.mxu0 0
        %2069 = vmatprep.mubr.bf16.mxu0 0
        %2070 = vmatmul.mubr.bf16.gmra.mrb[0].mxu0 %v2032
        %v2071 = vpop.f32.mrb[0].mxu0
        %v2072 = vadd.f32 0.0, %v2071
        %v2073 = vpop.f32.mrb[0].mxu0
        %v2074 = vpop.f32.mrb[0].mxu0
        %v2075 = vpop.f32.mrb[0].mxu0
        %2076 = vdwg.mxu0
        %2078 = vrot.lane.b32.xlu0 %v1697, 96
        %v2079 = vpop.permute.xlu0 %2078
        %v2081 = vsel %vm852, %v1929, 0
        %v2084 = vsel %vm1110, %v2079, 0
        %2086 = vmatprep.subr.bf16.mxu0 0
        %2087 = vmatpush1.bf16.msra.mxu0 %v2084
        %2088 = vmatprep.subr.bf16.mxu0 0
        %2089 = vmatpush1.bf16.msra.mxu0 0
        %2090 = vmatprep.subr.bf16.mxu0 0
        %2091 = vmatpush1.bf16.msra.mxu0 0
        %2092 = vmatprep.subr.bf16.mxu0 0
        %2093 = vmatpush1.bf16.msra.mxu0 0
        %2094 = vmatprep.subr.bf16.mxu0 0
        %2095 = vmatpush1.bf16.msra.mxu0 0
        %2096 = vmatprep.subr.bf16.mxu0 0
        %2097 = vmatpush1.bf16.msra.mxu0 0
        %2098 = vmatprep.subr.bf16.mxu0 0
        %2099 = vmatpush1.bf16.msra.mxu0 0
        %2100 = vmatprep.subr.bf16.mxu0 0
        %2101 = vmatpush1.bf16.msra.mxu0 0
        %2102 = vmatprep.subr.bf16.mxu0 0
        %2103 = vmatpush1.bf16.msra.mxu0 0
        %2104 = vmatprep.subr.bf16.mxu0 0
        %2105 = vmatpush1.bf16.msra.mxu0 0
        %2106 = vmatprep.subr.bf16.mxu0 0
        %2107 = vmatpush1.bf16.msra.mxu0 0
        %2108 = vmatprep.subr.bf16.mxu0 0
        %2109 = vmatpush1.bf16.msra.mxu0 0
        %2110 = vmatprep.subr.bf16.mxu0 0
        %2111 = vmatpush1.bf16.msra.mxu0 0
        %2112 = vmatprep.subr.bf16.mxu0 0
        %2113 = vmatpush1.bf16.msra.mxu0 0
        %2114 = vmatprep.subr.bf16.mxu0 0
        %2115 = vmatpush1.bf16.msra.mxu0 0
        %2116 = vmatprep.subr.bf16.mxu0 0
        %2117 = vmatpush1.bf16.msra.mxu0 0
        %2118 = vmatprep.mubr.bf16.mxu0 0
        %2119 = vmatmul.mubr.bf16.gmra.mrb[0].mxu0 %v2081
        %v2120 = vpop.f32.mrb[0].mxu0
        %v2121 = vadd.f32 0.0, %v2120
        %v2122 = vpop.f32.mrb[0].mxu0
        %v2123 = vpop.f32.mrb[0].mxu0
        %v2124 = vpop.f32.mrb[0].mxu0
        %2125 = vdwg.mxu0
        %v2126 = vpack.c.bf16 %v1974, %v1974
        %v2127 = vpack.c.bf16 %v2023, %v2023
        %v2128 = vpack.c.bf16 %v2072, %v2072
        %v2129 = vpack.c.bf16 %v2121, %v2121
        %v2130 = vld [vmem:[%s12] sm:$0xf]
        %v2131 = vld [vmem:[%s12 + $0x4] sm:$0xf]
        %v2132 = vld [vmem:[%s12 + $0x8] sm:$0xf]
        %v2133 = vld [vmem:[%s12 + $0xc] sm:$0xf]
        %v2135 = vsel %vm852, %v2126, 0
        %v2138 = vsel %vm1110, %v2130, 0
        %2140 = vmatprep.subr.bf16.mxu0 0
        %2141 = vmatpush1.bf16.msra.mxu0 %v2138
        %2142 = vmatprep.subr.bf16.mxu0 0
        %2143 = vmatpush1.bf16.msra.mxu0 0
        %2144 = vmatprep.subr.bf16.mxu0 0
        %2145 = vmatpush1.bf16.msra.mxu0 0
        %2146 = vmatprep.subr.bf16.mxu0 0
        %2147 = vmatpush1.bf16.msra.mxu0 0
        %2148 = vmatprep.subr.bf16.mxu0 0
        %2149 = vmatpush1.bf16.msra.mxu0 0
        %2150 = vmatprep.subr.bf16.mxu0 0
        %2151 = vmatpush1.bf16.msra.mxu0 0
        %2152 = vmatprep.subr.bf16.mxu0 0
        %2153 = vmatpush1.bf16.msra.mxu0 0
        %2154 = vmatprep.subr.bf16.mxu0 0
        %2155 = vmatpush1.bf16.msra.mxu0 0
        %2156 = vmatprep.subr.bf16.mxu0 0
        %2157 = vmatpush1.bf16.msra.mxu0 0
        %2158 = vmatprep.subr.bf16.mxu0 0
        %2159 = vmatpush1.bf16.msra.mxu0 0
        %2160 = vmatprep.subr.bf16.mxu0 0
        %2161 = vmatpush1.bf16.msra.mxu0 0
        %2162 = vmatprep.subr.bf16.mxu0 0
        %2163 = vmatpush1.bf16.msra.mxu0 0
        %2164 = vmatprep.subr.bf16.mxu0 0
        %2165 = vmatpush1.bf16.msra.mxu0 0
        %2166 = vmatprep.subr.bf16.mxu0 0
        %2167 = vmatpush1.bf16.msra.mxu0 0
        %2168 = vmatprep.subr.bf16.mxu0 0
        %2169 = vmatpush1.bf16.msra.mxu0 0
        %2170 = vmatprep.subr.bf16.mxu0 0
        %2171 = vmatpush1.bf16.msra.mxu0 0
        %2172 = vmatprep.mubr.bf16.mxu0 0
        %2173 = vmatmul.mubr.bf16.gmra.mrb[0].mxu0 %v2135
        %v2174 = vpop.f32.mrb[0].mxu0
        %v2175 = vadd.f32 0.0, %v2174
        %v2176 = vpop.f32.mrb[0].mxu0
        %v2177 = vpop.f32.mrb[0].mxu0
        %v2178 = vpop.f32.mrb[0].mxu0
        %2179 = vdwg.mxu0
        %v2181 = vsel %vm852, %v2127, 0
        %v2184 = vsel %vm1110, %v2131, 0
        %2186 = vmatprep.subr.bf16.mxu0 0
        %2187 = vmatpush1.bf16.msra.mxu0 %v2184
        %2188 = vmatprep.subr.bf16.mxu0 0
        %2189 = vmatpush1.bf16.msra.mxu0 0
        %2190 = vmatprep.subr.bf16.mxu0 0
        %2191 = vmatpush1.bf16.msra.mxu0 0
        %2192 = vmatprep.subr.bf16.mxu0 0
        %2193 = vmatpush1.bf16.msra.mxu0 0
        %2194 = vmatprep.subr.bf16.mxu0 0
        %2195 = vmatpush1.bf16.msra.mxu0 0
        %2196 = vmatprep.subr.bf16.mxu0 0
        %2197 = vmatpush1.bf16.msra.mxu0 0
        %2198 = vmatprep.subr.bf16.mxu0 0
        %2199 = vmatpush1.bf16.msra.mxu0 0
        %2200 = vmatprep.subr.bf16.mxu0 0
        %2201 = vmatpush1.bf16.msra.mxu0 0
        %2202 = vmatprep.subr.bf16.mxu0 0
        %2203 = vmatpush1.bf16.msra.mxu0 0
        %2204 = vmatprep.subr.bf16.mxu0 0
        %2205 = vmatpush1.bf16.msra.mxu0 0
        %2206 = vmatprep.subr.bf16.mxu0 0
        %2207 = vmatpush1.bf16.msra.mxu0 0
        %2208 = vmatprep.subr.bf16.mxu0 0
        %2209 = vmatpush1.bf16.msra.mxu0 0
        %2210 = vmatprep.subr.bf16.mxu0 0
        %2211 = vmatpush1.bf16.msra.mxu0 0
        %2212 = vmatprep.subr.bf16.mxu0 0
        %2213 = vmatpush1.bf16.msra.mxu0 0
        %2214 = vmatprep.subr.bf16.mxu0 0
        %2215 = vmatpush1.bf16.msra.mxu0 0
        %2216 = vmatprep.subr.bf16.mxu0 0
        %2217 = vmatpush1.bf16.msra.mxu0 0
        %2218 = vmatprep.mubr.bf16.mxu0 0
        %2219 = vmatmul.mubr.bf16.gmra.mrb[0].mxu0 %v2181
        %v2220 = vpop.f32.mrb[0].mxu0
        %v2221 = vadd.f32 0.0, %v2220
        %v2222 = vpop.f32.mrb[0].mxu0
        %v2223 = vpop.f32.mrb[0].mxu0
        %v2224 = vpop.f32.mrb[0].mxu0
        %2225 = vdwg.mxu0
        %v2227 = vsel %vm852, %v2128, 0
        %v2230 = vsel %vm1110, %v2132, 0
        %2232 = vmatprep.subr.bf16.mxu0 0
        %2233 = vmatpush1.bf16.msra.mxu0 %v2230
        %2234 = vmatprep.subr.bf16.mxu0 0
        %2235 = vmatpush1.bf16.msra.mxu0 0
        %2236 = vmatprep.subr.bf16.mxu0 0
        %2237 = vmatpush1.bf16.msra.mxu0 0
        %2238 = vmatprep.subr.bf16.mxu0 0
        %2239 = vmatpush1.bf16.msra.mxu0 0
        %2240 = vmatprep.subr.bf16.mxu0 0
        %2241 = vmatpush1.bf16.msra.mxu0 0
        %2242 = vmatprep.subr.bf16.mxu0 0
        %2243 = vmatpush1.bf16.msra.mxu0 0
        %2244 = vmatprep.subr.bf16.mxu0 0
        %2245 = vmatpush1.bf16.msra.mxu0 0
        %2246 = vmatprep.subr.bf16.mxu0 0
        %2247 = vmatpush1.bf16.msra.mxu0 0
        %2248 = vmatprep.subr.bf16.mxu0 0
        %2249 = vmatpush1.bf16.msra.mxu0 0
        %2250 = vmatprep.subr.bf16.mxu0 0
        %2251 = vmatpush1.bf16.msra.mxu0 0
        %2252 = vmatprep.subr.bf16.mxu0 0
        %2253 = vmatpush1.bf16.msra.mxu0 0
        %2254 = vmatprep.subr.bf16.mxu0 0
        %2255 = vmatpush1.bf16.msra.mxu0 0
        %2256 = vmatprep.subr.bf16.mxu0 0
        %2257 = vmatpush1.bf16.msra.mxu0 0
        %2258 = vmatprep.subr.bf16.mxu0 0
        %2259 = vmatpush1.bf16.msra.mxu0 0
        %2260 = vmatprep.subr.bf16.mxu0 0
        %2261 = vmatpush1.bf16.msra.mxu0 0
        %2262 = vmatprep.subr.bf16.mxu0 0
        %2263 = vmatpush1.bf16.msra.mxu0 0
        %2264 = vmatprep.mubr.bf16.mxu0 0
        %2265 = vmatmul.mubr.bf16.gmra.mrb[0].mxu0 %v2227
        %v2266 = vpop.f32.mrb[0].mxu0
        %v2267 = vadd.f32 0.0, %v2266
        %v2268 = vpop.f32.mrb[0].mxu0
        %v2269 = vpop.f32.mrb[0].mxu0
        %v2270 = vpop.f32.mrb[0].mxu0
        %2271 = vdwg.mxu0
        %v2273 = vsel %vm852, %v2129, 0
        %v2276 = vsel %vm1110, %v2133, 0
        %2278 = vmatprep.subr.bf16.mxu0 0
        %2279 = vmatpush1.bf16.msra.mxu0 %v2276
        %2280 = vmatprep.subr.bf16.mxu0 0
        %2281 = vmatpush1.bf16.msra.mxu0 0
        %2282 = vmatprep.subr.bf16.mxu0 0
        %2283 = vmatpush1.bf16.msra.mxu0 0
        %2284 = vmatprep.subr.bf16.mxu0 0
        %2285 = vmatpush1.bf16.msra.mxu0 0
        %2286 = vmatprep.subr.bf16.mxu0 0
        %2287 = vmatpush1.bf16.msra.mxu0 0
        %2288 = vmatprep.subr.bf16.mxu0 0
        %2289 = vmatpush1.bf16.msra.mxu0 0
        %2290 = vmatprep.subr.bf16.mxu0 0
        %2291 = vmatpush1.bf16.msra.mxu0 0
        %2292 = vmatprep.subr.bf16.mxu0 0
        %2293 = vmatpush1.bf16.msra.mxu0 0
        %2294 = vmatprep.subr.bf16.mxu0 0
        %2295 = vmatpush1.bf16.msra.mxu0 0
        %2296 = vmatprep.subr.bf16.mxu0 0
        %2297 = vmatpush1.bf16.msra.mxu0 0
        %2298 = vmatprep.subr.bf16.mxu0 0
        %2299 = vmatpush1.bf16.msra.mxu0 0
        %2300 = vmatprep.subr.bf16.mxu0 0
        %2301 = vmatpush1.bf16.msra.mxu0 0
        %2302 = vmatprep.subr.bf16.mxu0 0
        %2303 = vmatpush1.bf16.msra.mxu0 0
        %2304 = vmatprep.subr.bf16.mxu0 0
        %2305 = vmatpush1.bf16.msra.mxu0 0
        %2306 = vmatprep.subr.bf16.mxu0 0
        %2307 = vmatpush1.bf16.msra.mxu0 0
        %2308 = vmatprep.subr.bf16.mxu0 0
        %2309 = vmatpush1.bf16.msra.mxu0 0
        %2310 = vmatprep.mubr.bf16.mxu0 0
        %2311 = vmatmul.mubr.bf16.gmra.mrb[0].mxu0 %v2273
        %v2312 = vpop.f32.mrb[0].mxu0
        %v2313 = vadd.f32 0.0, %v2312
        %v2314 = vpop.f32.mrb[0].mxu0
        %v2315 = vpop.f32.mrb[0].mxu0
        %v2316 = vpop.f32.mrb[0].mxu0
        %2317 = vdwg.mxu0
        %v2318 = vsel %vm791, %v2175, 0.0
        %v2319 = vsel %vm791, %v2221, 0.0
        %v2320 = vadd.f32 %v2318, %v2319
        %v2321 = vsel %vm791, %v2267, 0.0
        %v2322 = vadd.f32 %v2320, %v2321
        %v2323 = vsel %vm791, %v2313, 0.0
        %v2324 = vadd.f32 %v2322, %v2323
        %v2325 = vld [vmem:[%s13] sm:$0x1]
        %v2327 = vlaneseq
        %v2328 = vshrl.u32 %v2327, 7
        %v2329 = vsub.s32 0, %v2328
        %v2330 = vrot.slane %v2325, %v2329
        %v2332 = vadd.f32 %v2324, %v2330
        %v2333 = vadd.f32 %v1535, %v2332
        %v2334 = vld [vmem:[%s14] sm:$0x1]
        %v2335 = vld [vmem:[%s15] sm:$0x1]
        %v2336 = vsel %vm791, %v2333, 0.0
        %2337 = vadd.xlane.f32.xlu0 %v2336
        %v2338 = vpop.xlane.xlu0 %2337
        %v2339 = vmul.f32 %v2338, %v1511
        %v2340 = vsub.f32 %v2333, %v2339
        %v2341 = vmul.f32 %v2340, %v2340
        %v2342 = vsel %vm791, %v2341, 0.0
        %2343 = vadd.xlane.f32.xlu0 %v2342
        %v2344 = vpop.xlane.xlu0 %2343
        %v2345 = vmul.f32 %v2344, %v1511
        %v2346 = vadd.f32 %v2345, 1e-05
        %v2347 = vrsqrt.pop %v2346
        %v2348 = vmul.f32 %v2340, %v2347
        %v2350 = vlaneseq
        %v2351 = vshrl.u32 %v2350, 7
        %v2352 = vsub.s32 0, %v2351
        %v2353 = vrot.slane %v2334, %v2352
        %v2355 = vmul.f32 %v2348, %v2353
        %v2357 = vlaneseq
        %v2358 = vshrl.u32 %v2357, 7
        %v2359 = vsub.s32 0, %v2358
        %v2360 = vrot.slane %v2335, %v2359
        %v2362 = vadd.f32 %v2355, %v2360
        %v2363 = vpack.c.bf16 %v2362, %v2362
        %v2364 = vld [vmem:[%s16] sm:$0xf]
        %v2365 = vld [vmem:[%s16 + $0x4] sm:$0xf]
        %v2366 = vld [vmem:[%s16 + $0x8] sm:$0xf]
        %v2367 = vld [vmem:[%s16 + $0xc] sm:$0xf]
        %v2368 = vld [vmem:[%s17] sm:$0x1]
        %v2370 = vlaneseq
        %v2371 = vshrl.u32 %v2370, 7
        %v2372 = vsub.s32 0, %v2371
        %v2373 = vrot.slane %v2368, %v2372
        %v2379 = vunpack.c.l.b16 %v2364
        %v2380 = vunpack.c.l.b16 %v2365
        %v2381 = vunpack.c.l.b16 %v2366
        %v2382 = vunpack.c.l.b16 %v2367
        %v2383 = vpack.c.b16 %v2380, %v2379
        %v2384 = vpack.c.b16 %v2382, %v2381
        %v2388 = vsel %vm791, %v2363, 0
        %2390 = vmatprep.subr.bf16.mxu0 0
        %2391 = vmatpush1.bf16.msra.mxu0 %v2383
        %2392 = vmatprep.subr.bf16.mxu0 0
        %2393 = vmatpush1.bf16.msra.mxu0 %v2384
        %2394 = vmatprep.subr.bf16.mxu0 0
        %2395 = vmatpush1.bf16.msra.mxu0 0
        %2396 = vmatprep.subr.bf16.mxu0 0
        %2397 = vmatpush1.bf16.msra.mxu0 0
        %2398 = vmatprep.subr.bf16.mxu0 0
        %2399 = vmatpush1.bf16.msra.mxu0 0
        %2400 = vmatprep.subr.bf16.mxu0 0
        %2401 = vmatpush1.bf16.msra.mxu0 0
        %2402 = vmatprep.subr.bf16.mxu0 0
        %2403 = vmatpush1.bf16.msra.mxu0 0
        %2404 = vmatprep.subr.bf16.mxu0 0
        %2405 = vmatpush1.bf16.msra.mxu0 0
        %2406 = vmatprep.subr.bf16.mxu0 0
        %2407 = vmatpush1.bf16.msra.mxu0 0
        %2408 = vmatprep.subr.bf16.mxu0 0
        %2409 = vmatpush1.bf16.msra.mxu0 0
        %2410 = vmatprep.subr.bf16.mxu0 0
        %2411 = vmatpush1.bf16.msra.mxu0 0
        %2412 = vmatprep.subr.bf16.mxu0 0
        %2413 = vmatpush1.bf16.msra.mxu0 0
        %2414 = vmatprep.subr.bf16.mxu0 0
        %2415 = vmatpush1.bf16.msra.mxu0 0
        %2416 = vmatprep.subr.bf16.mxu0 0
        %2417 = vmatpush1.bf16.msra.mxu0 0
        %2418 = vmatprep.subr.bf16.mxu0 0
        %2419 = vmatpush1.bf16.msra.mxu0 0
        %2420 = vmatprep.subr.bf16.mxu0 0
        %2421 = vmatpush1.bf16.msra.mxu0 0
        %2422 = vmatprep.mubr.bf16.mxu0 0
        %2423 = vmatmul.mubr.bf16.gmra.mrb[0].mxu0 %v2388
        %v2424 = vpop.f32.mrb[0].mxu0
        %v2425 = vadd.f32 %v2373, %v2424
        %v2426 = vpop.f32.mrb[0].mxu0
        %v2427 = vpop.f32.mrb[0].mxu0
        %v2428 = vpop.f32.mrb[0].mxu0
        %2429 = vdwg.mxu0
        %v2430 = vmax.f32 %v2425, 0.0
        %v2431 = vpack.c.bf16 %v2430, %v2430
        %v2432 = vld [vmem:[%s18] sm:$0xf]
        %v2433 = vld [vmem:[%s18 + $0x4] sm:$0xf]
        %v2434 = vld [vmem:[%s18 + $0x8] sm:$0xf]
        %v2435 = vld [vmem:[%s18 + $0xc] sm:$0xf]
        %v2436 = vld [vmem:[%s18 + $0x10] sm:$0xf]
        %v2437 = vld [vmem:[%s18 + $0x14] sm:$0xf]
        %v2438 = vld [vmem:[%s18 + $0x18] sm:$0xf]
        %v2439 = vld [vmem:[%s18 + $0x1c] sm:$0xf]
        %v2440 = vld [vmem:[%s18 + $0x20] sm:$0xf]
        %v2441 = vld [vmem:[%s18 + $0x24] sm:$0xf]
        %v2442 = vld [vmem:[%s18 + $0x28] sm:$0xf]
        %v2443 = vld [vmem:[%s18 + $0x2c] sm:$0xf]
        %v2444 = vld [vmem:[%s18 + $0x30] sm:$0xf]
        %v2445 = vld [vmem:[%s18 + $0x34] sm:$0xf]
        %v2446 = vld [vmem:[%s18 + $0x38] sm:$0xf]
        %v2447 = vld [vmem:[%s18 + $0x3c] sm:$0xf]
        %v2448 = vld [vmem:[%s19] sm:$0x1]
        %v2450 = vlaneseq
        %v2451 = vshrl.u32 %v2450, 7
        %v2452 = vsub.s32 0, %v2451
        %v2453 = vrot.slane %v2448, %v2452
        %v2471 = vunpack.c.l.b16 %v2432
        %v2472 = vunpack.c.l.b16 %v2433
        %v2473 = vunpack.c.l.b16 %v2434
        %v2474 = vunpack.c.l.b16 %v2435
        %v2475 = vunpack.c.l.b16 %v2436
        %v2476 = vunpack.c.l.b16 %v2437
        %v2477 = vunpack.c.l.b16 %v2438
        %v2478 = vunpack.c.l.b16 %v2439
        %v2479 = vunpack.c.l.b16 %v2440
        %v2480 = vunpack.c.l.b16 %v2441
        %v2481 = vunpack.c.l.b16 %v2442
        %v2482 = vunpack.c.l.b16 %v2443
        %v2483 = vunpack.c.l.b16 %v2444
        %v2484 = vunpack.c.l.b16 %v2445
        %v2485 = vunpack.c.l.b16 %v2446
        %v2486 = vunpack.c.l.b16 %v2447
        %v2487 = vpack.c.b16 %v2472, %v2471
        %v2488 = vpack.c.b16 %v2474, %v2473
        %v2489 = vpack.c.b16 %v2476, %v2475
        %v2490 = vpack.c.b16 %v2478, %v2477
        %v2491 = vpack.c.b16 %v2480, %v2479
        %v2492 = vpack.c.b16 %v2482, %v2481
        %v2493 = vpack.c.b16 %v2484, %v2483
        %v2494 = vpack.c.b16 %v2486, %v2485
        %2503 = vmatprep.subr.bf16.mxu0 0
        %2504 = vmatpush1.bf16.msra.mxu0 %v2487
        %2505 = vmatprep.subr.bf16.mxu0 0
        %2506 = vmatpush1.bf16.msra.mxu0 %v2488
        %2507 = vmatprep.subr.bf16.mxu0 0
        %2508 = vmatpush1.bf16.msra.mxu0 %v2489
        %2509 = vmatprep.subr.bf16.mxu0 0
        %2510 = vmatpush1.bf16.msra.mxu0 %v2490
        %2511 = vmatprep.subr.bf16.mxu0 0
        %2512 = vmatpush1.bf16.msra.mxu0 %v2491
        %2513 = vmatprep.subr.bf16.mxu0 0
        %2514 = vmatpush1.bf16.msra.mxu0 %v2492
        %2515 = vmatprep.subr.bf16.mxu0 0
        %2516 = vmatpush1.bf16.msra.mxu0 %v2493
        %2517 = vmatprep.subr.bf16.mxu0 0
        %2518 = vmatpush1.bf16.msra.mxu0 %v2494
        %2519 = vmatprep.subr.bf16.mxu0 0
        %2520 = vmatpush1.bf16.msra.mxu0 0
        %2521 = vmatprep.subr.bf16.mxu0 0
        %2522 = vmatpush1.bf16.msra.mxu0 0
        %2523 = vmatprep.subr.bf16.mxu0 0
        %2524 = vmatpush1.bf16.msra.mxu0 0
        %2525 = vmatprep.subr.bf16.mxu0 0
        %2526 = vmatpush1.bf16.msra.mxu0 0
        %2527 = vmatprep.subr.bf16.mxu0 0
        %2528 = vmatpush1.bf16.msra.mxu0 0
        %2529 = vmatprep.subr.bf16.mxu0 0
        %2530 = vmatpush1.bf16.msra.mxu0 0
        %2531 = vmatprep.subr.bf16.mxu0 0
        %2532 = vmatpush1.bf16.msra.mxu0 0
        %2533 = vmatprep.subr.bf16.mxu0 0
        %2534 = vmatpush1.bf16.msra.mxu0 0
        %2535 = vmatprep.mubr.bf16.mxu0 0
        %2536 = vmatmul.mubr.bf16.gmra.mrb[0].mxu0 %v2431
        %v2537 = vpop.f32.mrb[0].mxu0
        %v2538 = vadd.f32 %v2453, %v2537
        %v2539 = vpop.f32.mrb[0].mxu0
        %v2540 = vpop.f32.mrb[0].mxu0
        %v2541 = vpop.f32.mrb[0].mxu0
        %2542 = vdwg.mxu0
        %v2543 = vadd.f32 %v2362, %v2538
        %v2544 = vld [vmem:[%s20] sm:$0x1]
        %v2545 = vld [vmem:[%s21] sm:$0x1]
        %v2546 = vsel %vm791, %v2543, 0.0
        %2547 = vadd.xlane.f32.xlu0 %v2546
        %v2548 = vpop.xlane.xlu0 %2547
        %v2549 = vmul.f32 %v2548, %v1511
        %v2550 = vsub.f32 %v2543, %v2549
        %v2551 = vmul.f32 %v2550, %v2550
        %v2552 = vsel %vm791, %v2551, 0.0
        %2553 = vadd.xlane.f32.xlu0 %v2552
        %v2554 = vpop.xlane.xlu0 %2553
        %v2555 = vmul.f32 %v2554, %v1511
        %v2556 = vadd.f32 %v2555, 1e-05
        %v2557 = vrsqrt.pop %v2556
        %v2558 = vmul.f32 %v2550, %v2557
        %v2560 = vlaneseq
        %v2561 = vshrl.u32 %v2560, 7
        %v2562 = vsub.s32 0, %v2561
        %v2563 = vrot.slane %v2544, %v2562
        %v2565 = vmul.f32 %v2558, %v2563
        %v2567 = vlaneseq
        %v2568 = vshrl.u32 %v2567, 7
        %v2569 = vsub.s32 0, %v2568
        %v2570 = vrot.slane %v2545, %v2569
        %v2572 = vadd.f32 %v2565, %v2570
        %v2573 = vld [vmem:[#allocation3] sm:$0x1]
        %v2574 = vpack.c.bf16 %v2572, %v2572
        %v2575 = vld [vmem:[#allocation2] sm:$0x1]
        %2577 = vset.pattern.permute.xlu0 0
        %2578 = vperm.xlu0 %2577, %v2575
        %v2579 = vpop.permute.xlu0 %2578
        %v2581 = vlaneseq
        %v2582 = vshrl.u32 %v2581, 7
        %v2583 = vsub.s32 0, %v2582
        %v2584 = vrot.slane %v2579, %v2583
        %v2586 = vsel %vm791, %v2573, 0
        %v2589 = vsel %vm791, %v2574, 0
        %2591 = vmatprep.subr.bf16.mxu0 0
        %2592 = vmatpush1.bf16.xpose.msra.mxu0 %v2589
        %2593 = vmatprep.subr.bf16.mxu0 0
        %2594 = vmatpush1.bf16.xpose.msra.mxu0 0
        %2595 = vmatprep.subr.bf16.mxu0 0
        %2596 = vmatpush1.bf16.xpose.msra.mxu0 0
        %2597 = vmatprep.subr.bf16.mxu0 0
        %2598 = vmatpush1.bf16.xpose.msra.mxu0 0
        %2599 = vmatprep.subr.bf16.mxu0 0
        %2600 = vmatpush1.bf16.xpose.msra.mxu0 0
        %2601 = vmatprep.subr.bf16.mxu0 0
        %2602 = vmatpush1.bf16.xpose.msra.mxu0 0
        %2603 = vmatprep.subr.bf16.mxu0 0
        %2604 = vmatpush1.bf16.xpose.msra.mxu0 0
        %2605 = vmatprep.subr.bf16.mxu0 0
        %2606 = vmatpush1.bf16.xpose.msra.mxu0 0
        %2607 = vmatprep.subr.bf16.mxu0 0
        %2608 = vmatpush1.bf16.xpose.msra.mxu0 0
        %2609 = vmatprep.subr.bf16.mxu0 0
        %2610 = vmatpush1.bf16.xpose.msra.mxu0 0
        %2611 = vmatprep.subr.bf16.mxu0 0
        %2612 = vmatpush1.bf16.xpose.msra.mxu0 0
        %2613 = vmatprep.subr.bf16.mxu0 0
        %2614 = vmatpush1.bf16.xpose.msra.mxu0 0
        %2615 = vmatprep.subr.bf16.mxu0 0
        %2616 = vmatpush1.bf16.xpose.msra.mxu0 0
        %2617 = vmatprep.subr.bf16.mxu0 0
        %2618 = vmatpush1.bf16.xpose.msra.mxu0 0
        %2619 = vmatprep.subr.bf16.mxu0 0
        %2620 = vmatpush1.bf16.xpose.msra.mxu0 0
        %2621 = vmatprep.subr.bf16.mxu0 0
        %2622 = vmatpush1.bf16.xpose.msra.mxu0 0
        %2623 = vmatprep.mubr.bf16.mxu0 0
        %2624 = vmatmul.mubr.bf16.gmra.mrb[0].mxu0 %v2586
        %v2625 = vpop.f32.mrb[0].mxu0
        %v2626 = vadd.f32 %v2584, %v2625
        %v2627 = vpop.f32.mrb[0].mxu0
        %v2628 = vpop.f32.mrb[0].mxu0
        %v2629 = vpop.f32.mrb[0].mxu0
        %2630 = vdwg.mxu0
        %vm2631 = vcmask 57344
        %2632 = vst.msk [vmem:[%s755] sm:$0x1] %vm2631, %v2626
        %s2633 = sand.u32 %s563, 1
        %s2634 = scalar_lea.sflag [#allocation5], %s2633
        %s2635 = sand.u32 %s563, 1
        %s2636 = scalar_lea.vmem [#allocation6], %s2635
        // Predicated region
        $region121: #{transformer_decoder_forward.7} parent=115 // pred_check
          %p2637 = pneg %p573
        $region122: #{transformer_decoder_forward.7} parent=115 // pred_check_branch
          %2639 = sbr.rel (%p2637) target = $region124
        $region123: #{transformer_decoder_forward.7} parent=115 // pred_region
          %s2641 = ssub.s32 16, 16
          %2642 = vsyncadd %s2634, %s2641
          %s2643 = smul.addr %s41, 16
          %s2644 = scalar_lea.hbm %s24, %s2643
          %s2646 = sshll.u32 %s2636, 4
          %s2647 = int_to_ptr.vmem [resolvable:$true] %s2646
          %2649 = dma.vmem_to_hbm [thread:$0]  %s2647, 16, %s2644, %s2634
        $region124: #{transformer_decoder_forward.7} parent=115 // pred_fallthru
          _
      $region116: #{transformer_decoder_forward.7} parent=5 // pred_fallthru
        _
      %p2650 = scmp.le.s32.totalorder 2, %s36
      // Predicated region
      $region125: #{transformer_decoder_forward.7} parent=5 // pred_check
        %p2651 = pneg %p2650
      $region126: #{transformer_decoder_forward.7} parent=5 // pred_check_branch
        %2653 = sbr.rel (%p2651) target = $region128
      $region127: #{transformer_decoder_forward.7} parent=5 // pred_region
        %s2654 = ssub.s32 %s36, 2
        // Predicated region
        $region129: #{transformer_decoder_forward.7} parent=127 // pred_check
          %p2655 = pneg %p579
        $region130: #{transformer_decoder_forward.7} parent=127 // pred_check_branch
          %2657 = sbr.rel (%p2655) target = $region132
        $region131: #{transformer_decoder_forward.7} parent=127 // pred_region
          %s2658 = sand.u32 %s564, 1
          %s2659 = scalar_lea.sflag [#allocation5], %s2658
          %s2660 = sand.u32 %s564, 1
          %s2661 = scalar_lea.vmem [#allocation6], %s2660
          %2662 = dma.done %s2659, 16
        $region132: #{transformer_decoder_forward.7} parent=127 // pred_fallthru
          _
      $region128: #{transformer_decoder_forward.7} parent=5 // pred_fallthru
        _
    $region6: #{transformer_decoder_forward.7} parent=1 // loop_footer
      %s40 = sadd.s32 1, %s36
    $region7: #{transformer_decoder_forward.7} parent=1 // loop_footer_branch
      %35 = sbr.rel target = $region3
    $region8: #{transformer_decoder_forward.7} parent=1 // loop_exit
      _
    %2663 = vsyncpa [#allocation4], 1
    %s2664 = scalar_lea.sflag [#allocation4], 1
    %2665 = vsyncpa %s2664, 1
    %2666 = vsyncpa [#allocation5], 1
    %s2667 = scalar_lea.sflag [#allocation5], 1
    %2668 = vsyncpa %s2667, 1

</llo_original>
